<compile_context>
chip_gen: v5e
topology: v5e:2x2
jax: 0.10.0
libtpu: 0.0.40
codegen_flags: <defaults>
</compile_context>

<pallas_src>
import jax
import jax.numpy as jnp
from jax import lax
from jax.experimental import pallas as pl
from jax.experimental.pallas import tpu as pltpu

# ---- module hyper-parameters (mirror nn_cf_gpt.py) ----
N_EMBD = 32
N_HEAD = 3
HEAD_SIZE = N_EMBD // N_HEAD          # 10
CAT_SIZE = N_HEAD * HEAD_SIZE         # 30
FF_HIDDEN = 4 * N_EMBD                # 128
N_LAYER = 3
BLOCK_SIZE = 256
VOCAB_SIZE = 65                       # len(chars) of the char-level corpus
VOCAB_PAD = 128                       # lane-dense logits (65 -> 128 lanes)
LN_EPS = 1e-5
NEG_MASK = -1e30                      # large finite negative for causal masking


def _layernorm(x, gamma, beta):
    # PyTorch nn.LayerNorm: biased variance, eps=1e-5
    mean = jnp.mean(x, axis=-1, keepdims=True)
    var = jnp.mean((x - mean) ** 2, axis=-1, keepdims=True)
    return (x - mean) * lax.rsqrt(var + LN_EPS) * gamma + beta


def gpt_kernel(idx_ref,                      # (BB, T, 1) int32 tokens
               tok_ref,                      # (VOCAB_PAD, C)  token embedding (padded rows)
               pos_ref,                      # (T, C)          positional embedding
               wqk_ref,                      # (L*H, C, C)     Wq @ Wk^T per (layer, head)
               wvp_ref,                      # (L*H, C, C)     Wv @ Wproj_rows per (layer, head)
               bproj_ref,                    # (L, 1, C)
               w1_ref, b1_ref,               # (L, C, 4C), (L, 1, 4C)
               w2_ref, b2_ref,               # (L, 4C, C), (L, 1, C)
               g1_ref, be1_ref,              # (L, 1, C)  ln1
               g2_ref, be2_ref,              # (L, 1, C)  ln2
               gf_ref, bef_ref,              # (1, C)     ln_f
               wlm_ref, blm_ref,             # (C, VOCAB_PAD), (1, VOCAB_PAD)
               out_ref):                     # (BB, T, VOCAB_PAD)
    BB, T, _ = idx_ref.shape
    C = N_EMBD
    M = BB * T

    # ---- embeddings: one-hot gather on the MXU + positional add ----
    ids = idx_ref[...].reshape(M, 1)
    vcol = lax.broadcasted_iota(jnp.int32, (M, VOCAB_PAD), 1)
    onehot = (vcol == ids).astype(jnp.float32)                       # (M, 128)
    x = jnp.dot(onehot, tok_ref[...], preferred_element_type=jnp.float32)   # (M, C)
    x = (x.reshape(BB, T, C) + pos_ref[...][None, :, :]).reshape(M, C)

    # ---- causal mask built once, broadcast over the batch slab ----
    rows = lax.broadcasted_iota(jnp.int32, (T, T), 0)
    cols = lax.broadcasted_iota(jnp.int32, (T, T), 1)
    causal = (rows >= cols)[None, :, :]                              # (1, T, T)

    scale = HEAD_SIZE ** -0.5

    for l in range(N_LAYER):              # static unroll; weights stay VMEM-resident
        # ---------------- self-attention branch ----------------
        xn = _layernorm(x, g1_ref[l], be1_ref[l])                    # (M, C)
        xn3 = xn.reshape(BB, T, C)
        sa = x + bproj_ref[l]             # residual + proj bias; heads accumulate below
        for h in range(N_HEAD):
            hh = l * N_HEAD + h
            # scores: q@k^T == xn (Wq Wk^T) xn^T   -> no lane-misaligned q/k slices
            s = jnp.dot(xn, wqk_ref[hh], preferred_element_type=jnp.float32)   # (M, C)
            # folded value-projection: v' = xn (Wv Wproj_rows)  -> (M, C)
            vp = jnp.dot(xn, wvp_ref[hh], preferred_element_type=jnp.float32)
            wei = jnp.einsum('btc,bsc->bts', s.reshape(BB, T, C), xn3,
                             preferred_element_type=jnp.float32) * scale       # (BB,T,T)
            wei = jnp.where(causal, wei, NEG_MASK)
            m = jnp.max(wei, axis=-1, keepdims=True)
            p = jnp.exp(wei - m)
            p = p * pl.reciprocal(jnp.sum(p, axis=-1, keepdims=True), approx=True)
            sa = sa + jnp.einsum('bts,bsc->btc', p, vp.reshape(BB, T, C),
                                 preferred_element_type=jnp.float32).reshape(M, C)
        x = sa                            # (attention / proj dropout: identity in eval)

        # ---------------- feed-forward branch ----------------
        xn2 = _layernorm(x, g2_ref[l], be2_ref[l])
        h1 = jnp.dot(xn2, w1_ref[l], preferred_element_type=jnp.float32) + b1_ref[l]
        h1 = jnp.maximum(h1, 0.0)                                    # ReLU
        x = x + jnp.dot(h1, w2_ref[l], preferred_element_type=jnp.float32) + b2_ref[l]
        # (ffwd dropout: identity in eval mode)

    # ---- final LayerNorm + lane-dense lm_head ----
    xf = _layernorm(x, gf_ref[...], bef_ref[...])
    logits = jnp.dot(xf, wlm_ref[...], preferred_element_type=jnp.float32) + blm_ref[...]
    out_ref[...] = logits.reshape(BB, T, VOCAB_PAD).astype(out_ref.dtype)


# ---------------- wrapper-side tiling policy ----------------
def _vmem_estimate_bytes(BB, T):
    M = BB * T
    acts = 4 * M * (2 * VOCAB_PAD + FF_HIDDEN + 12 * N_EMBD)   # one-hot, logits, h1, (M,C) temps
    scores = 4 * BB * T * T * 3                                # wei / p / mask headroom
    io = 4 * 2 * (BB * T + BB * T * VOCAB_PAD)                 # double-buffered idx + logits
    weights = 1 << 20                                          # < 1 MiB resident weights
    return acts + scores + io + weights


def _min_grid_steps():
    # Generation-aware: on a 2-TensorCore chip (v7x) keep >= 2 steps per core so
    # the "parallel" batch axis can be sharded and the idx/logits DMA overlapped;
    # on single-TC chips (v5e/v6e) a 1-step grid minimizes per-step overhead.
    try:
        kind = jax.devices()[0].device_kind.lower()
    except Exception:
        return 1
    return 4 if "v7" in kind else 1


def _choose_bb(B, T, min_steps, budget_bytes=24 * 1024 * 1024):
    divs = [d for d in range(B, 0, -1) if B % d == 0]
    fitting = [d for d in divs if _vmem_estimate_bytes(d, T) <= budget_bytes] or [1]
    for d in fitting:                      # largest BB that still gives min_steps steps
        if B // d >= min_steps:
            return d
    return fitting[0]


def gpt_forward(idx, params, block_batch=None):
    """idx: (B, T) int tokens. Returns logits (B, T, VOCAB_SIZE) float32."""
    B, T = idx.shape
    assert T <= BLOCK_SIZE
    BB = _choose_bb(B, T, _min_grid_steps()) if block_batch is None else block_batch
    assert B % BB == 0

    # ---- wrapper-side weight folding (exact algebra, done once) ----
    wqk, wvp = [], []
    for l in range(N_LAYER):
        for h in range(N_HEAD):
            wqk.append(params["wq"][l, h] @ params["wk"][l, h].T)                   # (C, C)
            wvp.append(params["wv"][l, h] @
                       params["wproj"][l, h * HEAD_SIZE:(h + 1) * HEAD_SIZE, :])    # (C, C)
    wqk = jnp.stack(wqk)                                   # (L*H, C, C)
    wvp = jnp.stack(wvp)                                   # (L*H, C, C)

    tok_pad = jnp.zeros((VOCAB_PAD, N_EMBD), jnp.float32).at[:VOCAB_SIZE].set(
        params["tok_table"])
    wlm_pad = jnp.zeros((N_EMBD, VOCAB_PAD), jnp.float32).at[:, :VOCAB_SIZE].set(
        params["wlm"])
    blm_pad = jnp.zeros((1, VOCAB_PAD), jnp.float32).at[:, :VOCAB_SIZE].set(
        params["blm"])
    pos_t = params["pos_table"][:T]

    idx3 = idx.astype(jnp.int32).reshape(B, T, 1)

    def full_spec(a):
        nd = a.ndim
        return pl.BlockSpec(a.shape, lambda b, _n=nd: (0,) * _n)

    weight_args = (tok_pad, pos_t, wqk, wvp, params["bproj"],
                   params["w1"], params["b1"], params["w2"], params["b2"],
                   params["g1"], params["be1"], params["g2"], params["be2"],
                   params["gf"], params["bef"], wlm_pad, blm_pad)

    in_specs = [pl.BlockSpec((BB, T, 1), lambda b: (b, 0, 0))] + \
               [full_spec(w) for w in weight_args]

    logits_pad = pl.pallas_call(
        gpt_kernel,
        out_shape=jax.ShapeDtypeStruct((B, T, VOCAB_PAD), jnp.float32),
        grid_spec=pl.GridSpec(
            grid=(B // BB,),
            in_specs=in_specs,
            out_specs=pl.BlockSpec((BB, T, VOCAB_PAD), lambda b: (b, 0, 0)),
        ),
        compiler_params=pltpu.CompilerParams(
            dimension_semantics=("parallel",),
            vmem_limit_bytes=32 * 1024 * 1024),
    )(idx3, *weight_args)

    return logits_pad[:, :, :VOCAB_SIZE]


# ---------------- pure-JAX reference (for verification) ----------------
def gpt_reference(idx, p):
    B, T = idx.shape

    def ln(v, g, b):
        mu = jnp.mean(v, -1, keepdims=True)
        var = jnp.mean((v - mu) ** 2, -1, keepdims=True)
        return (v - mu) * lax.rsqrt(var + LN_EPS) * g + b

    x = p["tok_table"][idx] + p["pos_table"][:T][None]
    causal = jnp.tril(jnp.ones((T, T), bool))
    for l in range(N_LAYER):
        xn = ln(x, p["g1"][l], p["be1"][l])
        heads = []
        for h in range(N_HEAD):
            q = xn @ p["wq"][l, h]
            k = xn @ p["wk"][l, h]
            v = xn @ p["wv"][l, h]
            wei = (q @ jnp.swapaxes(k, -1, -2)) * HEAD_SIZE ** -0.5
            wei = jnp.where(causal, wei, -jnp.inf)
            wei = jax.nn.softmax(wei, axis=-1)
            heads.append(wei @ v)
        sa = jnp.concatenate(heads, -1) @ p["wproj"][l] + p["bproj"][l]
        x = x + sa
        xn2 = ln(x, p["g2"][l], p["be2"][l])
        x = x + jnp.maximum(xn2 @ p["w1"][l] + p["b1"][l], 0.0) @ p["w2"][l] + p["b2"][l]
    xf = ln(x, p["gf"], p["bef"])
    return xf @ p["wlm"] + p["blm"]


def make_params(key):
    ks = jax.random.split(key, 16)
    s = 0.02
    nrm = lambda k, shape: jax.random.normal(k, shape, jnp.float32) * s
    return {
        "tok_table": nrm(ks[0], (VOCAB_SIZE, N_EMBD)),
        "pos_table": nrm(ks[1], (BLOCK_SIZE, N_EMBD)),
        "wq": nrm(ks[2], (N_LAYER, N_HEAD, N_EMBD, HEAD_SIZE)),
        "wk": nrm(ks[3], (N_LAYER, N_HEAD, N_EMBD, HEAD_SIZE)),
        "wv": nrm(ks[4], (N_LAYER, N_HEAD, N_EMBD, HEAD_SIZE)),
        "wproj": nrm(ks[5], (N_LAYER, CAT_SIZE, N_EMBD)),
        "bproj": nrm(ks[6], (N_LAYER, 1, N_EMBD)),
        "w1": nrm(ks[7], (N_LAYER, N_EMBD, FF_HIDDEN)),
        "b1": nrm(ks[8], (N_LAYER, 1, FF_HIDDEN)),
        "w2": nrm(ks[9], (N_LAYER, FF_HIDDEN, N_EMBD)),
        "b2": nrm(ks[10], (N_LAYER, 1, N_EMBD)),
        "g1": jnp.ones((N_LAYER, 1, N_EMBD), jnp.float32),
        "be1": jnp.zeros((N_LAYER, 1, N_EMBD), jnp.float32),
        "g2": jnp.ones((N_LAYER, 1, N_EMBD), jnp.float32),
        "be2": jnp.zeros((N_LAYER, 1, N_EMBD), jnp.float32),
        "gf": jnp.ones((1, N_EMBD), jnp.float32),
        "bef": jnp.zeros((1, N_EMBD), jnp.float32),
        "wlm": nrm(ks[11], (N_EMBD, VOCAB_SIZE)),
        "blm": nrm(ks[12], (1, VOCAB_SIZE)),
    }


if __name__ == "__main__":
    key = jax.random.PRNGKey(0)
    kidx, kp = jax.random.split(key)
    B, T = 8, 16                                 # T <= block_size (256), T % 8 == 0
    idx = jax.random.randint(kidx, (B, T), 0, VOCAB_SIZE, dtype=jnp.int32)
    params = make_params(kp)

    logits = gpt_forward(idx, params)            # whole model in one pallas_call
    logits = jax.block_until_ready(logits)

    ref = gpt_reference(idx, params)
    assert logits.shape == (B, T, VOCAB_SIZE)
    # tolerance allows for the approx (EUP) reciprocal in the softmax, compounded
    # over 3 layers
    assert jnp.allclose(logits, ref, atol=3e-3, rtol=3e-3), (
        "mismatch vs reference, max abs diff = "
        f"{float(jnp.max(jnp.abs(logits - ref)))}")
    print("KERNEL_OK")
</pallas_src>

<mosaic_0001>
module attributes {stable_mosaic.version = 11 : i64} {
  func.func @gpt_kernel(%arg0: i32, %arg1: memref<8x16x1xi32, #tpu.memory_space<vmem>>, %arg2: memref<128x32xf32, #tpu.memory_space<vmem>>, %arg3: memref<16x32xf32, #tpu.memory_space<vmem>>, %arg4: memref<9x32x32xf32, #tpu.memory_space<vmem>>, %arg5: memref<9x32x32xf32, #tpu.memory_space<vmem>>, %arg6: memref<3x1x32xf32, #tpu.memory_space<vmem>>, %arg7: memref<3x32x128xf32, #tpu.memory_space<vmem>>, %arg8: memref<3x1x128xf32, #tpu.memory_space<vmem>>, %arg9: memref<3x128x32xf32, #tpu.memory_space<vmem>>, %arg10: memref<3x1x32xf32, #tpu.memory_space<vmem>>, %arg11: memref<3x1x32xf32, #tpu.memory_space<vmem>>, %arg12: memref<3x1x32xf32, #tpu.memory_space<vmem>>, %arg13: memref<3x1x32xf32, #tpu.memory_space<vmem>>, %arg14: memref<3x1x32xf32, #tpu.memory_space<vmem>>, %arg15: memref<1x32xf32, #tpu.memory_space<vmem>>, %arg16: memref<1x32xf32, #tpu.memory_space<vmem>>, %arg17: memref<32x128xf32, #tpu.memory_space<vmem>>, %arg18: memref<1x128xf32, #tpu.memory_space<vmem>>, %arg19: memref<8x16x128xf32, #tpu.memory_space<vmem>>) attributes {dimension_semantics = [#tpu.dimension_semantics<parallel>], iteration_bounds = array<i64: 1>, scalar_prefetch = 0 : i64, scratch_operands = 0 : i64, tpu.core_type = #tpu.core_type<tc>, window_params = [{transform_indices = @transform_0, window_bounds = array<i64: 8, 16, 1>}, {pipeline_mode = #tpu.pipeline_mode<synchronous>, transform_indices = @transform_1, window_bounds = array<i64: 128, 32>}, {pipeline_mode = #tpu.pipeline_mode<synchronous>, transform_indices = @transform_2, window_bounds = array<i64: 16, 32>}, {pipeline_mode = #tpu.pipeline_mode<synchronous>, transform_indices = @transform_3, window_bounds = array<i64: 9, 32, 32>}, {pipeline_mode = #tpu.pipeline_mode<synchronous>, transform_indices = @transform_4, window_bounds = array<i64: 9, 32, 32>}, {pipeline_mode = #tpu.pipeline_mode<synchronous>, transform_indices = @transform_5, window_bounds = array<i64: 3, 1, 32>}, {pipeline_mode = #tpu.pipeline_mode<synchronous>, transform_indices = @transform_6, window_bounds = array<i64: 3, 32, 128>}, {pipeline_mode = #tpu.pipeline_mode<synchronous>, transform_indices = @transform_7, window_bounds = array<i64: 3, 1, 128>}, {pipeline_mode = #tpu.pipeline_mode<synchronous>, transform_indices = @transform_8, window_bounds = array<i64: 3, 128, 32>}, {pipeline_mode = #tpu.pipeline_mode<synchronous>, transform_indices = @transform_9, window_bounds = array<i64: 3, 1, 32>}, {pipeline_mode = #tpu.pipeline_mode<synchronous>, transform_indices = @transform_10, window_bounds = array<i64: 3, 1, 32>}, {pipeline_mode = #tpu.pipeline_mode<synchronous>, transform_indices = @transform_11, window_bounds = array<i64: 3, 1, 32>}, {pipeline_mode = #tpu.pipeline_mode<synchronous>, transform_indices = @transform_12, window_bounds = array<i64: 3, 1, 32>}, {pipeline_mode = #tpu.pipeline_mode<synchronous>, transform_indices = @transform_13, window_bounds = array<i64: 3, 1, 32>}, {pipeline_mode = #tpu.pipeline_mode<synchronous>, transform_indices = @transform_14, window_bounds = array<i64: 1, 32>}, {pipeline_mode = #tpu.pipeline_mode<synchronous>, transform_indices = @transform_15, window_bounds = array<i64: 1, 32>}, {pipeline_mode = #tpu.pipeline_mode<synchronous>, transform_indices = @transform_16, window_bounds = array<i64: 32, 128>}, {pipeline_mode = #tpu.pipeline_mode<synchronous>, transform_indices = @transform_17, window_bounds = array<i64: 1, 128>}, {transform_indices = @transform_18, window_bounds = array<i64: 8, 16, 128>}]} {
    %c0 = arith.constant 0 : index
    %c0_0 = arith.constant 0 : index
    %c0_1 = arith.constant 0 : index
    %0 = vector.load %arg1[%c0, %c0_0, %c0_1] : memref<8x16x1xi32, #tpu.memory_space<vmem>>, vector<8x16x1xi32>
    %1 = vector.shape_cast %0 : vector<8x16x1xi32> to vector<128x1xi32>
    %2 = tpu.iota {dimensions = array<i32: 1>} : vector<128x128xi32>
    %3 = vector.broadcast %1 : vector<128x1xi32> to vector<128x128xi32>
    %4 = arith.cmpi eq, %2, %3 : vector<128x128xi32>
    %5 = arith.extui %4 : vector<128x128xi1> to vector<128x128xi32>
    %6 = arith.sitofp %5 : vector<128x128xi32> to vector<128x128xf32>
    %c0_2 = arith.constant 0 : index
    %c0_3 = arith.constant 0 : index
    %7 = vector.load %arg2[%c0_2, %c0_3] : memref<128x32xf32, #tpu.memory_space<vmem>>, vector<128x32xf32>
    %cst = arith.constant dense<0.000000e+00> : vector<128x32xf32>
    %8 = tpu.matmul %6, %7, %cst {dimension_numbers = #tpu.dot_dimension_numbers<[1], [0], [0], [1], [0, 0, 1, 1], [], []>} : vector<128x128xf32>, vector<128x32xf32>, vector<128x32xf32> -> vector<128x32xf32>
    %9 = vector.shape_cast %8 : vector<128x32xf32> to vector<8x16x32xf32>
    %c0_4 = arith.constant 0 : index
    %c0_5 = arith.constant 0 : index
    %10 = vector.load %arg3[%c0_4, %c0_5] : memref<16x32xf32, #tpu.memory_space<vmem>>, vector<16x32xf32>
    %11 = vector.shape_cast %10 : vector<16x32xf32> to vector<1x16x32xf32>
    %12 = vector.broadcast %11 : vector<1x16x32xf32> to vector<8x16x32xf32>
    %13 = arith.addf %9, %12 : vector<8x16x32xf32>
    %14 = vector.shape_cast %13 : vector<8x16x32xf32> to vector<128x32xf32>
    %15 = tpu.iota {dimensions = array<i32: 0>} : vector<16x16xi32>
    %16 = tpu.iota {dimensions = array<i32: 1>} : vector<16x16xi32>
    %17 = arith.cmpi sge, %15, %16 : vector<16x16xi32>
    %18 = vector.shape_cast %17 : vector<16x16xi1> to vector<1x16x16xi1>
    %c0_6 = arith.constant 0 : index
    %c0_7 = arith.constant 0 : index
    %c0_8 = arith.constant 0 : index
    %19 = vector.load %arg11[%c0_6, %c0_7, %c0_8] : memref<3x1x32xf32, #tpu.memory_space<vmem>>, vector<1x1x32xf32>
    %20 = vector.shape_cast %19 : vector<1x1x32xf32> to vector<1x32xf32>
    %c0_9 = arith.constant 0 : index
    %c0_10 = arith.constant 0 : index
    %c0_11 = arith.constant 0 : index
    %21 = vector.load %arg12[%c0_9, %c0_10, %c0_11] : memref<3x1x32xf32, #tpu.memory_space<vmem>>, vector<1x1x32xf32>
    %22 = vector.shape_cast %21 : vector<1x1x32xf32> to vector<1x32xf32>
    %cst_12 = arith.constant dense<0.000000e+00> : vector<128xf32>
    %23 = vector.multi_reduction <add>, %14, %cst_12 [1] : vector<128x32xf32> to vector<128xf32>
    %24 = vector.shape_cast %23 : vector<128xf32> to vector<128x1xf32>
    %cst_13 = arith.constant 3.200000e+01 : f32
    %25 = vector.broadcast %cst_13 : f32 to vector<128x1xf32>
    %26 = arith.divf %24, %25 : vector<128x1xf32>
    %27 = vector.broadcast %26 : vector<128x1xf32> to vector<128x32xf32>
    %28 = arith.subf %14, %27 : vector<128x32xf32>
    %29 = arith.mulf %28, %28 : vector<128x32xf32>
    %cst_14 = arith.constant dense<0.000000e+00> : vector<128xf32>
    %30 = vector.multi_reduction <add>, %29, %cst_14 [1] : vector<128x32xf32> to vector<128xf32>
    %31 = vector.shape_cast %30 : vector<128xf32> to vector<128x1xf32>
    %cst_15 = arith.constant 3.200000e+01 : f32
    %32 = vector.broadcast %cst_15 : f32 to vector<128x1xf32>
    %33 = arith.divf %31, %32 : vector<128x1xf32>
    %34 = vector.broadcast %26 : vector<128x1xf32> to vector<128x32xf32>
    %35 = arith.subf %14, %34 : vector<128x32xf32>
    %cst_16 = arith.constant 9.99999974E-6 : f32
    %36 = vector.broadcast %cst_16 : f32 to vector<128x1xf32>
    %37 = arith.addf %33, %36 : vector<128x1xf32>
    %38 = math.rsqrt %37 : vector<128x1xf32>
    %39 = vector.broadcast %38 : vector<128x1xf32> to vector<128x32xf32>
    %40 = arith.mulf %35, %39 : vector<128x32xf32>
    %41 = vector.broadcast %20 : vector<1x32xf32> to vector<128x32xf32>
    %42 = arith.mulf %40, %41 : vector<128x32xf32>
    %43 = vector.broadcast %22 : vector<1x32xf32> to vector<128x32xf32>
    %44 = arith.addf %42, %43 : vector<128x32xf32>
    %45 = vector.shape_cast %44 : vector<128x32xf32> to vector<8x16x32xf32>
    %c0_17 = arith.constant 0 : index
    %c0_18 = arith.constant 0 : index
    %c0_19 = arith.constant 0 : index
    %46 = vector.load %arg6[%c0_17, %c0_18, %c0_19] : memref<3x1x32xf32, #tpu.memory_space<vmem>>, vector<1x1x32xf32>
    %47 = vector.shape_cast %46 : vector<1x1x32xf32> to vector<1x32xf32>
    %48 = vector.broadcast %47 : vector<1x32xf32> to vector<128x32xf32>
    %49 = arith.addf %14, %48 : vector<128x32xf32>
    %c0_20 = arith.constant 0 : index
    %c0_21 = arith.constant 0 : index
    %c0_22 = arith.constant 0 : index
    %50 = vector.load %arg4[%c0_20, %c0_21, %c0_22] : memref<9x32x32xf32, #tpu.memory_space<vmem>>, vector<1x32x32xf32>
    %51 = vector.shape_cast %50 : vector<1x32x32xf32> to vector<32x32xf32>
    %cst_23 = arith.constant dense<0.000000e+00> : vector<128x32xf32>
    %52 = tpu.matmul %44, %51, %cst_23 {dimension_numbers = #tpu.dot_dimension_numbers<[1], [0], [0], [1], [0, 0, 1, 1], [], []>} : vector<128x32xf32>, vector<32x32xf32>, vector<128x32xf32> -> vector<128x32xf32>
    %c0_24 = arith.constant 0 : index
    %c0_25 = arith.constant 0 : index
    %c0_26 = arith.constant 0 : index
    %53 = vector.load %arg5[%c0_24, %c0_25, %c0_26] : memref<9x32x32xf32, #tpu.memory_space<vmem>>, vector<1x32x32xf32>
    %54 = vector.shape_cast %53 : vector<1x32x32xf32> to vector<32x32xf32>
    %cst_27 = arith.constant dense<0.000000e+00> : vector<128x32xf32>
    %55 = tpu.matmul %44, %54, %cst_27 {dimension_numbers = #tpu.dot_dimension_numbers<[1], [0], [0], [1], [0, 0, 1, 1], [], []>} : vector<128x32xf32>, vector<32x32xf32>, vector<128x32xf32> -> vector<128x32xf32>
    %56 = vector.shape_cast %52 : vector<128x32xf32> to vector<8x16x32xf32>
    "tpu.trace_start"() <{level = 10 : i32, message = "btc,bsc->bts"}> : () -> ()
    %cst_28 = arith.constant dense<0.000000e+00> : vector<8x16x16xf32>
    %57 = tpu.matmul %56, %45, %cst_28 {dimension_numbers = #tpu.dot_dimension_numbers<[2], [2], [1], [1], [0, 0, 0, 1, 1, 1], [0], [0]>} : vector<8x16x32xf32>, vector<8x16x32xf32>, vector<8x16x16xf32> -> vector<8x16x16xf32>
    "tpu.trace_stop"() : () -> ()
    %cst_29 = arith.constant 0.316227764 : f32
    %58 = vector.broadcast %cst_29 : f32 to vector<8x16x16xf32>
    %59 = arith.mulf %57, %58 : vector<8x16x16xf32>
    %cst_30 = arith.constant -1.000000e+30 : f32
    %60 = vector.shape_cast %18 : vector<1x16x16xi1> to vector<1x16x16xi1>
    %61 = vector.broadcast %60 : vector<1x16x16xi1> to vector<8x16x16xi1>
    %62 = vector.broadcast %cst_30 : f32 to vector<8x16x16xf32>
    %63 = arith.select %61, %59, %62 : vector<8x16x16xi1>, vector<8x16x16xf32>
    %cst_31 = arith.constant dense<0xFF800000> : vector<8x16xf32>
    %64 = vector.multi_reduction <maximumf>, %63, %cst_31 [2] : vector<8x16x16xf32> to vector<8x16xf32>
    %65 = vector.shape_cast %64 : vector<8x16xf32> to vector<8x16x1xf32>
    %66 = vector.broadcast %65 : vector<8x16x1xf32> to vector<8x16x16xf32>
    %67 = arith.subf %63, %66 : vector<8x16x16xf32>
    %68 = math.exp %67 : vector<8x16x16xf32>
    %cst_32 = arith.constant dense<0.000000e+00> : vector<8x16xf32>
    %69 = vector.multi_reduction <add>, %68, %cst_32 [2] : vector<8x16x16xf32> to vector<8x16xf32>
    %70 = vector.shape_cast %69 : vector<8x16xf32> to vector<8x16x1xf32>
    %71 = tpu.reciprocal %70 {approx = true} : vector<8x16x1xf32> -> vector<8x16x1xf32>
    %72 = vector.broadcast %71 : vector<8x16x1xf32> to vector<8x16x16xf32>
    %73 = arith.mulf %68, %72 : vector<8x16x16xf32>
    %74 = vector.shape_cast %55 : vector<128x32xf32> to vector<8x16x32xf32>
    "tpu.trace_start"() <{level = 10 : i32, message = "bts,bsc->btc"}> : () -> ()
    %cst_33 = arith.constant dense<0.000000e+00> : vector<8x16x32xf32>
    %75 = tpu.matmul %73, %74, %cst_33 {dimension_numbers = #tpu.dot_dimension_numbers<[2], [1], [1], [2], [0, 0, 0, 1, 1, 2], [0], [0]>} : vector<8x16x16xf32>, vector<8x16x32xf32>, vector<8x16x32xf32> -> vector<8x16x32xf32>
    "tpu.trace_stop"() : () -> ()
    %76 = vector.shape_cast %75 : vector<8x16x32xf32> to vector<128x32xf32>
    %77 = arith.addf %49, %76 : vector<128x32xf32>
    %c1 = arith.constant 1 : index
    %c0_34 = arith.constant 0 : index
    %c0_35 = arith.constant 0 : index
    %78 = vector.load %arg4[%c1, %c0_34, %c0_35] : memref<9x32x32xf32, #tpu.memory_space<vmem>>, vector<1x32x32xf32>
    %79 = vector.shape_cast %78 : vector<1x32x32xf32> to vector<32x32xf32>
    %cst_36 = arith.constant dense<0.000000e+00> : vector<128x32xf32>
    %80 = tpu.matmul %44, %79, %cst_36 {dimension_numbers = #tpu.dot_dimension_numbers<[1], [0], [0], [1], [0, 0, 1, 1], [], []>} : vector<128x32xf32>, vector<32x32xf32>, vector<128x32xf32> -> vector<128x32xf32>
    %c1_37 = arith.constant 1 : index
    %c0_38 = arith.constant 0 : index
    %c0_39 = arith.constant 0 : index
    %81 = vector.load %arg5[%c1_37, %c0_38, %c0_39] : memref<9x32x32xf32, #tpu.memory_space<vmem>>, vector<1x32x32xf32>
    %82 = vector.shape_cast %81 : vector<1x32x32xf32> to vector<32x32xf32>
    %cst_40 = arith.constant dense<0.000000e+00> : vector<128x32xf32>
    %83 = tpu.matmul %44, %82, %cst_40 {dimension_numbers = #tpu.dot_dimension_numbers<[1], [0], [0], [1], [0, 0, 1, 1], [], []>} : vector<128x32xf32>, vector<32x32xf32>, vector<128x32xf32> -> vector<128x32xf32>
    %84 = vector.shape_cast %80 : vector<128x32xf32> to vector<8x16x32xf32>
    "tpu.trace_start"() <{level = 10 : i32, message = "btc,bsc->bts"}> : () -> ()
    %cst_41 = arith.constant dense<0.000000e+00> : vector<8x16x16xf32>
    %85 = tpu.matmul %84, %45, %cst_41 {dimension_numbers = #tpu.dot_dimension_numbers<[2], [2], [1], [1], [0, 0, 0, 1, 1, 1], [0], [0]>} : vector<8x16x32xf32>, vector<8x16x32xf32>, vector<8x16x16xf32> -> vector<8x16x16xf32>
    "tpu.trace_stop"() : () -> ()
    %cst_42 = arith.constant 0.316227764 : f32
    %86 = vector.broadcast %cst_42 : f32 to vector<8x16x16xf32>
    %87 = arith.mulf %85, %86 : vector<8x16x16xf32>
    %cst_43 = arith.constant -1.000000e+30 : f32
    %88 = vector.shape_cast %18 : vector<1x16x16xi1> to vector<1x16x16xi1>
    %89 = vector.broadcast %88 : vector<1x16x16xi1> to vector<8x16x16xi1>
    %90 = vector.broadcast %cst_43 : f32 to vector<8x16x16xf32>
    %91 = arith.select %89, %87, %90 : vector<8x16x16xi1>, vector<8x16x16xf32>
    %cst_44 = arith.constant dense<0xFF800000> : vector<8x16xf32>
    %92 = vector.multi_reduction <maximumf>, %91, %cst_44 [2] : vector<8x16x16xf32> to vector<8x16xf32>
    %93 = vector.shape_cast %92 : vector<8x16xf32> to vector<8x16x1xf32>
    %94 = vector.broadcast %93 : vector<8x16x1xf32> to vector<8x16x16xf32>
    %95 = arith.subf %91, %94 : vector<8x16x16xf32>
    %96 = math.exp %95 : vector<8x16x16xf32>
    %cst_45 = arith.constant dense<0.000000e+00> : vector<8x16xf32>
    %97 = vector.multi_reduction <add>, %96, %cst_45 [2] : vector<8x16x16xf32> to vector<8x16xf32>
    %98 = vector.shape_cast %97 : vector<8x16xf32> to vector<8x16x1xf32>
    %99 = tpu.reciprocal %98 {approx = true} : vector<8x16x1xf32> -> vector<8x16x1xf32>
    %100 = vector.broadcast %99 : vector<8x16x1xf32> to vector<8x16x16xf32>
    %101 = arith.mulf %96, %100 : vector<8x16x16xf32>
    %102 = vector.shape_cast %83 : vector<128x32xf32> to vector<8x16x32xf32>
    "tpu.trace_start"() <{level = 10 : i32, message = "bts,bsc->btc"}> : () -> ()
    %cst_46 = arith.constant dense<0.000000e+00> : vector<8x16x32xf32>
    %103 = tpu.matmul %101, %102, %cst_46 {dimension_numbers = #tpu.dot_dimension_numbers<[2], [1], [1], [2], [0, 0, 0, 1, 1, 2], [0], [0]>} : vector<8x16x16xf32>, vector<8x16x32xf32>, vector<8x16x32xf32> -> vector<8x16x32xf32>
    "tpu.trace_stop"() : () -> ()
    %104 = vector.shape_cast %103 : vector<8x16x32xf32> to vector<128x32xf32>
    %105 = arith.addf %77, %104 : vector<128x32xf32>
    %c2 = arith.constant 2 : index
    %c0_47 = arith.constant 0 : index
    %c0_48 = arith.constant 0 : index
    %106 = vector.load %arg4[%c2, %c0_47, %c0_48] : memref<9x32x32xf32, #tpu.memory_space<vmem>>, vector<1x32x32xf32>
    %107 = vector.shape_cast %106 : vector<1x32x32xf32> to vector<32x32xf32>
    %cst_49 = arith.constant dense<0.000000e+00> : vector<128x32xf32>
    %108 = tpu.matmul %44, %107, %cst_49 {dimension_numbers = #tpu.dot_dimension_numbers<[1], [0], [0], [1], [0, 0, 1, 1], [], []>} : vector<128x32xf32>, vector<32x32xf32>, vector<128x32xf32> -> vector<128x32xf32>
    %c2_50 = arith.constant 2 : index
    %c0_51 = arith.constant 0 : index
    %c0_52 = arith.constant 0 : index
    %109 = vector.load %arg5[%c2_50, %c0_51, %c0_52] : memref<9x32x32xf32, #tpu.memory_space<vmem>>, vector<1x32x32xf32>
    %110 = vector.shape_cast %109 : vector<1x32x32xf32> to vector<32x32xf32>
    %cst_53 = arith.constant dense<0.000000e+00> : vector<128x32xf32>
    %111 = tpu.matmul %44, %110, %cst_53 {dimension_numbers = #tpu.dot_dimension_numbers<[1], [0], [0], [1], [0, 0, 1, 1], [], []>} : vector<128x32xf32>, vector<32x32xf32>, vector<128x32xf32> -> vector<128x32xf32>
    %112 = vector.shape_cast %108 : vector<128x32xf32> to vector<8x16x32xf32>
    "tpu.trace_start"() <{level = 10 : i32, message = "btc,bsc->bts"}> : () -> ()
    %cst_54 = arith.constant dense<0.000000e+00> : vector<8x16x16xf32>
    %113 = tpu.matmul %112, %45, %cst_54 {dimension_numbers = #tpu.dot_dimension_numbers<[2], [2], [1], [1], [0, 0, 0, 1, 1, 1], [0], [0]>} : vector<8x16x32xf32>, vector<8x16x32xf32>, vector<8x16x16xf32> -> vector<8x16x16xf32>
    "tpu.trace_stop"() : () -> ()
    %cst_55 = arith.constant 0.316227764 : f32
    %114 = vector.broadcast %cst_55 : f32 to vector<8x16x16xf32>
    %115 = arith.mulf %113, %114 : vector<8x16x16xf32>
    %cst_56 = arith.constant -1.000000e+30 : f32
    %116 = vector.shape_cast %18 : vector<1x16x16xi1> to vector<1x16x16xi1>
    %117 = vector.broadcast %116 : vector<1x16x16xi1> to vector<8x16x16xi1>
    %118 = vector.broadcast %cst_56 : f32 to vector<8x16x16xf32>
    %119 = arith.select %117, %115, %118 : vector<8x16x16xi1>, vector<8x16x16xf32>
    %cst_57 = arith.constant dense<0xFF800000> : vector<8x16xf32>
    %120 = vector.multi_reduction <maximumf>, %119, %cst_57 [2] : vector<8x16x16xf32> to vector<8x16xf32>
    %121 = vector.shape_cast %120 : vector<8x16xf32> to vector<8x16x1xf32>
    %122 = vector.broadcast %121 : vector<8x16x1xf32> to vector<8x16x16xf32>
    %123 = arith.subf %119, %122 : vector<8x16x16xf32>
    %124 = math.exp %123 : vector<8x16x16xf32>
    %cst_58 = arith.constant dense<0.000000e+00> : vector<8x16xf32>
    %125 = vector.multi_reduction <add>, %124, %cst_58 [2] : vector<8x16x16xf32> to vector<8x16xf32>
    %126 = vector.shape_cast %125 : vector<8x16xf32> to vector<8x16x1xf32>
    %127 = tpu.reciprocal %126 {approx = true} : vector<8x16x1xf32> -> vector<8x16x1xf32>
    %128 = vector.broadcast %127 : vector<8x16x1xf32> to vector<8x16x16xf32>
    %129 = arith.mulf %124, %128 : vector<8x16x16xf32>
    %130 = vector.shape_cast %111 : vector<128x32xf32> to vector<8x16x32xf32>
    "tpu.trace_start"() <{level = 10 : i32, message = "bts,bsc->btc"}> : () -> ()
    %cst_59 = arith.constant dense<0.000000e+00> : vector<8x16x32xf32>
    %131 = tpu.matmul %129, %130, %cst_59 {dimension_numbers = #tpu.dot_dimension_numbers<[2], [1], [1], [2], [0, 0, 0, 1, 1, 2], [0], [0]>} : vector<8x16x16xf32>, vector<8x16x32xf32>, vector<8x16x32xf32> -> vector<8x16x32xf32>
    "tpu.trace_stop"() : () -> ()
    %132 = vector.shape_cast %131 : vector<8x16x32xf32> to vector<128x32xf32>
    %133 = arith.addf %105, %132 : vector<128x32xf32>
    %c0_60 = arith.constant 0 : index
    %c0_61 = arith.constant 0 : index
    %c0_62 = arith.constant 0 : index
    %134 = vector.load %arg13[%c0_60, %c0_61, %c0_62] : memref<3x1x32xf32, #tpu.memory_space<vmem>>, vector<1x1x32xf32>
    %135 = vector.shape_cast %134 : vector<1x1x32xf32> to vector<1x32xf32>
    %c0_63 = arith.constant 0 : index
    %c0_64 = arith.constant 0 : index
    %c0_65 = arith.constant 0 : index
    %136 = vector.load %arg14[%c0_63, %c0_64, %c0_65] : memref<3x1x32xf32, #tpu.memory_space<vmem>>, vector<1x1x32xf32>
    %137 = vector.shape_cast %136 : vector<1x1x32xf32> to vector<1x32xf32>
    %cst_66 = arith.constant dense<0.000000e+00> : vector<128xf32>
    %138 = vector.multi_reduction <add>, %133, %cst_66 [1] : vector<128x32xf32> to vector<128xf32>
    %139 = vector.shape_cast %138 : vector<128xf32> to vector<128x1xf32>
    %cst_67 = arith.constant 3.200000e+01 : f32
    %140 = vector.broadcast %cst_67 : f32 to vector<128x1xf32>
    %141 = arith.divf %139, %140 : vector<128x1xf32>
    %142 = vector.broadcast %141 : vector<128x1xf32> to vector<128x32xf32>
    %143 = arith.subf %133, %142 : vector<128x32xf32>
    %144 = arith.mulf %143, %143 : vector<128x32xf32>
    %cst_68 = arith.constant dense<0.000000e+00> : vector<128xf32>
    %145 = vector.multi_reduction <add>, %144, %cst_68 [1] : vector<128x32xf32> to vector<128xf32>
    %146 = vector.shape_cast %145 : vector<128xf32> to vector<128x1xf32>
    %cst_69 = arith.constant 3.200000e+01 : f32
    %147 = vector.broadcast %cst_69 : f32 to vector<128x1xf32>
    %148 = arith.divf %146, %147 : vector<128x1xf32>
    %149 = vector.broadcast %141 : vector<128x1xf32> to vector<128x32xf32>
    %150 = arith.subf %133, %149 : vector<128x32xf32>
    %cst_70 = arith.constant 9.99999974E-6 : f32
    %151 = vector.broadcast %cst_70 : f32 to vector<128x1xf32>
    %152 = arith.addf %148, %151 : vector<128x1xf32>
    %153 = math.rsqrt %152 : vector<128x1xf32>
    %154 = vector.broadcast %153 : vector<128x1xf32> to vector<128x32xf32>
    %155 = arith.mulf %150, %154 : vector<128x32xf32>
    %156 = vector.broadcast %135 : vector<1x32xf32> to vector<128x32xf32>
    %157 = arith.mulf %155, %156 : vector<128x32xf32>
    %158 = vector.broadcast %137 : vector<1x32xf32> to vector<128x32xf32>
    %159 = arith.addf %157, %158 : vector<128x32xf32>
    %c0_71 = arith.constant 0 : index
    %c0_72 = arith.constant 0 : index
    %c0_73 = arith.constant 0 : index
    %160 = vector.load %arg7[%c0_71, %c0_72, %c0_73] : memref<3x32x128xf32, #tpu.memory_space<vmem>>, vector<1x32x128xf32>
    %161 = vector.shape_cast %160 : vector<1x32x128xf32> to vector<32x128xf32>
    %cst_74 = arith.constant dense<0.000000e+00> : vector<128x128xf32>
    %162 = tpu.matmul %159, %161, %cst_74 {dimension_numbers = #tpu.dot_dimension_numbers<[1], [0], [0], [1], [0, 0, 1, 1], [], []>} : vector<128x32xf32>, vector<32x128xf32>, vector<128x128xf32> -> vector<128x128xf32>
    %c0_75 = arith.constant 0 : index
    %c0_76 = arith.constant 0 : index
    %c0_77 = arith.constant 0 : index
    %163 = vector.load %arg8[%c0_75, %c0_76, %c0_77] : memref<3x1x128xf32, #tpu.memory_space<vmem>>, vector<1x1x128xf32>
    %164 = vector.shape_cast %163 : vector<1x1x128xf32> to vector<1x128xf32>
    %165 = vector.broadcast %164 : vector<1x128xf32> to vector<128x128xf32>
    %166 = arith.addf %162, %165 : vector<128x128xf32>
    %cst_78 = arith.constant 0.000000e+00 : f32
    %167 = vector.broadcast %cst_78 : f32 to vector<128x128xf32>
    %168 = arith.maximumf %166, %167 : vector<128x128xf32>
    %c0_79 = arith.constant 0 : index
    %c0_80 = arith.constant 0 : index
    %c0_81 = arith.constant 0 : index
    %169 = vector.load %arg9[%c0_79, %c0_80, %c0_81] : memref<3x128x32xf32, #tpu.memory_space<vmem>>, vector<1x128x32xf32>
    %170 = vector.shape_cast %169 : vector<1x128x32xf32> to vector<128x32xf32>
    %cst_82 = arith.constant dense<0.000000e+00> : vector<128x32xf32>
    %171 = tpu.matmul %168, %170, %cst_82 {dimension_numbers = #tpu.dot_dimension_numbers<[1], [0], [0], [1], [0, 0, 1, 1], [], []>} : vector<128x128xf32>, vector<128x32xf32>, vector<128x32xf32> -> vector<128x32xf32>
    %172 = arith.addf %133, %171 : vector<128x32xf32>
    %c0_83 = arith.constant 0 : index
    %c0_84 = arith.constant 0 : index
    %c0_85 = arith.constant 0 : index
    %173 = vector.load %arg10[%c0_83, %c0_84, %c0_85] : memref<3x1x32xf32, #tpu.memory_space<vmem>>, vector<1x1x32xf32>
    %174 = vector.shape_cast %173 : vector<1x1x32xf32> to vector<1x32xf32>
    %175 = vector.broadcast %174 : vector<1x32xf32> to vector<128x32xf32>
    %176 = arith.addf %172, %175 : vector<128x32xf32>
    %c1_86 = arith.constant 1 : index
    %c0_87 = arith.constant 0 : index
    %c0_88 = arith.constant 0 : index
    %177 = vector.load %arg11[%c1_86, %c0_87, %c0_88] : memref<3x1x32xf32, #tpu.memory_space<vmem>>, vector<1x1x32xf32>
    %178 = vector.shape_cast %177 : vector<1x1x32xf32> to vector<1x32xf32>
    %c1_89 = arith.constant 1 : index
    %c0_90 = arith.constant 0 : index
    %c0_91 = arith.constant 0 : index
    %179 = vector.load %arg12[%c1_89, %c0_90, %c0_91] : memref<3x1x32xf32, #tpu.memory_space<vmem>>, vector<1x1x32xf32>
    %180 = vector.shape_cast %179 : vector<1x1x32xf32> to vector<1x32xf32>
    %cst_92 = arith.constant dense<0.000000e+00> : vector<128xf32>
    %181 = vector.multi_reduction <add>, %176, %cst_92 [1] : vector<128x32xf32> to vector<128xf32>
    %182 = vector.shape_cast %181 : vector<128xf32> to vector<128x1xf32>
    %cst_93 = arith.constant 3.200000e+01 : f32
    %183 = vector.broadcast %cst_93 : f32 to vector<128x1xf32>
    %184 = arith.divf %182, %183 : vector<128x1xf32>
    %185 = vector.broadcast %184 : vector<128x1xf32> to vector<128x32xf32>
    %186 = arith.subf %176, %185 : vector<128x32xf32>
    %187 = arith.mulf %186, %186 : vector<128x32xf32>
    %cst_94 = arith.constant dense<0.000000e+00> : vector<128xf32>
    %188 = vector.multi_reduction <add>, %187, %cst_94 [1] : vector<128x32xf32> to vector<128xf32>
    %189 = vector.shape_cast %188 : vector<128xf32> to vector<128x1xf32>
    %cst_95 = arith.constant 3.200000e+01 : f32
    %190 = vector.broadcast %cst_95 : f32 to vector<128x1xf32>
    %191 = arith.divf %189, %190 : vector<128x1xf32>
    %192 = vector.broadcast %184 : vector<128x1xf32> to vector<128x32xf32>
    %193 = arith.subf %176, %192 : vector<128x32xf32>
    %cst_96 = arith.constant 9.99999974E-6 : f32
    %194 = vector.broadcast %cst_96 : f32 to vector<128x1xf32>
    %195 = arith.addf %191, %194 : vector<128x1xf32>
    %196 = math.rsqrt %195 : vector<128x1xf32>
    %197 = vector.broadcast %196 : vector<128x1xf32> to vector<128x32xf32>
    %198 = arith.mulf %193, %197 : vector<128x32xf32>
    %199 = vector.broadcast %178 : vector<1x32xf32> to vector<128x32xf32>
    %200 = arith.mulf %198, %199 : vector<128x32xf32>
    %201 = vector.broadcast %180 : vector<1x32xf32> to vector<128x32xf32>
    %202 = arith.addf %200, %201 : vector<128x32xf32>
    %203 = vector.shape_cast %202 : vector<128x32xf32> to vector<8x16x32xf32>
    %c1_97 = arith.constant 1 : index
    %c0_98 = arith.constant 0 : index
    %c0_99 = arith.constant 0 : index
    %204 = vector.load %arg6[%c1_97, %c0_98, %c0_99] : memref<3x1x32xf32, #tpu.memory_space<vmem>>, vector<1x1x32xf32>
    %205 = vector.shape_cast %204 : vector<1x1x32xf32> to vector<1x32xf32>
    %206 = vector.broadcast %205 : vector<1x32xf32> to vector<128x32xf32>
    %207 = arith.addf %176, %206 : vector<128x32xf32>
    %c3 = arith.constant 3 : index
    %c0_100 = arith.constant 0 : index
    %c0_101 = arith.constant 0 : index
    %208 = vector.load %arg4[%c3, %c0_100, %c0_101] : memref<9x32x32xf32, #tpu.memory_space<vmem>>, vector<1x32x32xf32>
    %209 = vector.shape_cast %208 : vector<1x32x32xf32> to vector<32x32xf32>
    %cst_102 = arith.constant dense<0.000000e+00> : vector<128x32xf32>
    %210 = tpu.matmul %202, %209, %cst_102 {dimension_numbers = #tpu.dot_dimension_numbers<[1], [0], [0], [1], [0, 0, 1, 1], [], []>} : vector<128x32xf32>, vector<32x32xf32>, vector<128x32xf32> -> vector<128x32xf32>
    %c3_103 = arith.constant 3 : index
    %c0_104 = arith.constant 0 : index
    %c0_105 = arith.constant 0 : index
    %211 = vector.load %arg5[%c3_103, %c0_104, %c0_105] : memref<9x32x32xf32, #tpu.memory_space<vmem>>, vector<1x32x32xf32>
    %212 = vector.shape_cast %211 : vector<1x32x32xf32> to vector<32x32xf32>
    %cst_106 = arith.constant dense<0.000000e+00> : vector<128x32xf32>
    %213 = tpu.matmul %202, %212, %cst_106 {dimension_numbers = #tpu.dot_dimension_numbers<[1], [0], [0], [1], [0, 0, 1, 1], [], []>} : vector<128x32xf32>, vector<32x32xf32>, vector<128x32xf32> -> vector<128x32xf32>
    %214 = vector.shape_cast %210 : vector<128x32xf32> to vector<8x16x32xf32>
    "tpu.trace_start"() <{level = 10 : i32, message = "btc,bsc->bts"}> : () -> ()
    %cst_107 = arith.constant dense<0.000000e+00> : vector<8x16x16xf32>
    %215 = tpu.matmul %214, %203, %cst_107 {dimension_numbers = #tpu.dot_dimension_numbers<[2], [2], [1], [1], [0, 0, 0, 1, 1, 1], [0], [0]>} : vector<8x16x32xf32>, vector<8x16x32xf32>, vector<8x16x16xf32> -> vector<8x16x16xf32>
    "tpu.trace_stop"() : () -> ()
    %cst_108 = arith.constant 0.316227764 : f32
    %216 = vector.broadcast %cst_108 : f32 to vector<8x16x16xf32>
    %217 = arith.mulf %215, %216 : vector<8x16x16xf32>
    %cst_109 = arith.constant -1.000000e+30 : f32
    %218 = vector.shape_cast %18 : vector<1x16x16xi1> to vector<1x16x16xi1>
    %219 = vector.broadcast %218 : vector<1x16x16xi1> to vector<8x16x16xi1>
    %220 = vector.broadcast %cst_109 : f32 to vector<8x16x16xf32>
    %221 = arith.select %219, %217, %220 : vector<8x16x16xi1>, vector<8x16x16xf32>
    %cst_110 = arith.constant dense<0xFF800000> : vector<8x16xf32>
    %222 = vector.multi_reduction <maximumf>, %221, %cst_110 [2] : vector<8x16x16xf32> to vector<8x16xf32>
    %223 = vector.shape_cast %222 : vector<8x16xf32> to vector<8x16x1xf32>
    %224 = vector.broadcast %223 : vector<8x16x1xf32> to vector<8x16x16xf32>
    %225 = arith.subf %221, %224 : vector<8x16x16xf32>
    %226 = math.exp %225 : vector<8x16x16xf32>
    %cst_111 = arith.constant dense<0.000000e+00> : vector<8x16xf32>
    %227 = vector.multi_reduction <add>, %226, %cst_111 [2] : vector<8x16x16xf32> to vector<8x16xf32>
    %228 = vector.shape_cast %227 : vector<8x16xf32> to vector<8x16x1xf32>
    %229 = tpu.reciprocal %228 {approx = true} : vector<8x16x1xf32> -> vector<8x16x1xf32>
    %230 = vector.broadcast %229 : vector<8x16x1xf32> to vector<8x16x16xf32>
    %231 = arith.mulf %226, %230 : vector<8x16x16xf32>
    %232 = vector.shape_cast %213 : vector<128x32xf32> to vector<8x16x32xf32>
    "tpu.trace_start"() <{level = 10 : i32, message = "bts,bsc->btc"}> : () -> ()
    %cst_112 = arith.constant dense<0.000000e+00> : vector<8x16x32xf32>
    %233 = tpu.matmul %231, %232, %cst_112 {dimension_numbers = #tpu.dot_dimension_numbers<[2], [1], [1], [2], [0, 0, 0, 1, 1, 2], [0], [0]>} : vector<8x16x16xf32>, vector<8x16x32xf32>, vector<8x16x32xf32> -> vector<8x16x32xf32>
    "tpu.trace_stop"() : () -> ()
    %234 = vector.shape_cast %233 : vector<8x16x32xf32> to vector<128x32xf32>
    %235 = arith.addf %207, %234 : vector<128x32xf32>
    %c4 = arith.constant 4 : index
    %c0_113 = arith.constant 0 : index
    %c0_114 = arith.constant 0 : index
    %236 = vector.load %arg4[%c4, %c0_113, %c0_114] : memref<9x32x32xf32, #tpu.memory_space<vmem>>, vector<1x32x32xf32>
    %237 = vector.shape_cast %236 : vector<1x32x32xf32> to vector<32x32xf32>
    %cst_115 = arith.constant dense<0.000000e+00> : vector<128x32xf32>
    %238 = tpu.matmul %202, %237, %cst_115 {dimension_numbers = #tpu.dot_dimension_numbers<[1], [0], [0], [1], [0, 0, 1, 1], [], []>} : vector<128x32xf32>, vector<32x32xf32>, vector<128x32xf32> -> vector<128x32xf32>
    %c4_116 = arith.constant 4 : index
    %c0_117 = arith.constant 0 : index
    %c0_118 = arith.constant 0 : index
    %239 = vector.load %arg5[%c4_116, %c0_117, %c0_118] : memref<9x32x32xf32, #tpu.memory_space<vmem>>, vector<1x32x32xf32>
    %240 = vector.shape_cast %239 : vector<1x32x32xf32> to vector<32x32xf32>
    %cst_119 = arith.constant dense<0.000000e+00> : vector<128x32xf32>
    %241 = tpu.matmul %202, %240, %cst_119 {dimension_numbers = #tpu.dot_dimension_numbers<[1], [0], [0], [1], [0, 0, 1, 1], [], []>} : vector<128x32xf32>, vector<32x32xf32>, vector<128x32xf32> -> vector<128x32xf32>
    %242 = vector.shape_cast %238 : vector<128x32xf32> to vector<8x16x32xf32>
    "tpu.trace_start"() <{level = 10 : i32, message = "btc,bsc->bts"}> : () -> ()
    %cst_120 = arith.constant dense<0.000000e+00> : vector<8x16x16xf32>
    %243 = tpu.matmul %242, %203, %cst_120 {dimension_numbers = #tpu.dot_dimension_numbers<[2], [2], [1], [1], [0, 0, 0, 1, 1, 1], [0], [0]>} : vector<8x16x32xf32>, vector<8x16x32xf32>, vector<8x16x16xf32> -> vector<8x16x16xf32>
    "tpu.trace_stop"() : () -> ()
    %cst_121 = arith.constant 0.316227764 : f32
    %244 = vector.broadcast %cst_121 : f32 to vector<8x16x16xf32>
    %245 = arith.mulf %243, %244 : vector<8x16x16xf32>
    %cst_122 = arith.constant -1.000000e+30 : f32
    %246 = vector.shape_cast %18 : vector<1x16x16xi1> to vector<1x16x16xi1>
    %247 = vector.broadcast %246 : vector<1x16x16xi1> to vector<8x16x16xi1>
    %248 = vector.broadcast %cst_122 : f32 to vector<8x16x16xf32>
    %249 = arith.select %247, %245, %248 : vector<8x16x16xi1>, vector<8x16x16xf32>
    %cst_123 = arith.constant dense<0xFF800000> : vector<8x16xf32>
    %250 = vector.multi_reduction <maximumf>, %249, %cst_123 [2] : vector<8x16x16xf32> to vector<8x16xf32>
    %251 = vector.shape_cast %250 : vector<8x16xf32> to vector<8x16x1xf32>
    %252 = vector.broadcast %251 : vector<8x16x1xf32> to vector<8x16x16xf32>
    %253 = arith.subf %249, %252 : vector<8x16x16xf32>
    %254 = math.exp %253 : vector<8x16x16xf32>
    %cst_124 = arith.constant dense<0.000000e+00> : vector<8x16xf32>
    %255 = vector.multi_reduction <add>, %254, %cst_124 [2] : vector<8x16x16xf32> to vector<8x16xf32>
    %256 = vector.shape_cast %255 : vector<8x16xf32> to vector<8x16x1xf32>
    %257 = tpu.reciprocal %256 {approx = true} : vector<8x16x1xf32> -> vector<8x16x1xf32>
    %258 = vector.broadcast %257 : vector<8x16x1xf32> to vector<8x16x16xf32>
    %259 = arith.mulf %254, %258 : vector<8x16x16xf32>
    %260 = vector.shape_cast %241 : vector<128x32xf32> to vector<8x16x32xf32>
    "tpu.trace_start"() <{level = 10 : i32, message = "bts,bsc->btc"}> : () -> ()
    %cst_125 = arith.constant dense<0.000000e+00> : vector<8x16x32xf32>
    %261 = tpu.matmul %259, %260, %cst_125 {dimension_numbers = #tpu.dot_dimension_numbers<[2], [1], [1], [2], [0, 0, 0, 1, 1, 2], [0], [0]>} : vector<8x16x16xf32>, vector<8x16x32xf32>, vector<8x16x32xf32> -> vector<8x16x32xf32>
    "tpu.trace_stop"() : () -> ()
    %262 = vector.shape_cast %261 : vector<8x16x32xf32> to vector<128x32xf32>
    %263 = arith.addf %235, %262 : vector<128x32xf32>
    %c5 = arith.constant 5 : index
    %c0_126 = arith.constant 0 : index
    %c0_127 = arith.constant 0 : index
    %264 = vector.load %arg4[%c5, %c0_126, %c0_127] : memref<9x32x32xf32, #tpu.memory_space<vmem>>, vector<1x32x32xf32>
    %265 = vector.shape_cast %264 : vector<1x32x32xf32> to vector<32x32xf32>
    %cst_128 = arith.constant dense<0.000000e+00> : vector<128x32xf32>
    %266 = tpu.matmul %202, %265, %cst_128 {dimension_numbers = #tpu.dot_dimension_numbers<[1], [0], [0], [1], [0, 0, 1, 1], [], []>} : vector<128x32xf32>, vector<32x32xf32>, vector<128x32xf32> -> vector<128x32xf32>
    %c5_129 = arith.constant 5 : index
    %c0_130 = arith.constant 0 : index
    %c0_131 = arith.constant 0 : index
    %267 = vector.load %arg5[%c5_129, %c0_130, %c0_131] : memref<9x32x32xf32, #tpu.memory_space<vmem>>, vector<1x32x32xf32>
    %268 = vector.shape_cast %267 : vector<1x32x32xf32> to vector<32x32xf32>
    %cst_132 = arith.constant dense<0.000000e+00> : vector<128x32xf32>
    %269 = tpu.matmul %202, %268, %cst_132 {dimension_numbers = #tpu.dot_dimension_numbers<[1], [0], [0], [1], [0, 0, 1, 1], [], []>} : vector<128x32xf32>, vector<32x32xf32>, vector<128x32xf32> -> vector<128x32xf32>
    %270 = vector.shape_cast %266 : vector<128x32xf32> to vector<8x16x32xf32>
    "tpu.trace_start"() <{level = 10 : i32, message = "btc,bsc->bts"}> : () -> ()
    %cst_133 = arith.constant dense<0.000000e+00> : vector<8x16x16xf32>
    %271 = tpu.matmul %270, %203, %cst_133 {dimension_numbers = #tpu.dot_dimension_numbers<[2], [2], [1], [1], [0, 0, 0, 1, 1, 1], [0], [0]>} : vector<8x16x32xf32>, vector<8x16x32xf32>, vector<8x16x16xf32> -> vector<8x16x16xf32>
    "tpu.trace_stop"() : () -> ()
    %cst_134 = arith.constant 0.316227764 : f32
    %272 = vector.broadcast %cst_134 : f32 to vector<8x16x16xf32>
    %273 = arith.mulf %271, %272 : vector<8x16x16xf32>
    %cst_135 = arith.constant -1.000000e+30 : f32
    %274 = vector.shape_cast %18 : vector<1x16x16xi1> to vector<1x16x16xi1>
    %275 = vector.broadcast %274 : vector<1x16x16xi1> to vector<8x16x16xi1>
    %276 = vector.broadcast %cst_135 : f32 to vector<8x16x16xf32>
    %277 = arith.select %275, %273, %276 : vector<8x16x16xi1>, vector<8x16x16xf32>
    %cst_136 = arith.constant dense<0xFF800000> : vector<8x16xf32>
    %278 = vector.multi_reduction <maximumf>, %277, %cst_136 [2] : vector<8x16x16xf32> to vector<8x16xf32>
    %279 = vector.shape_cast %278 : vector<8x16xf32> to vector<8x16x1xf32>
    %280 = vector.broadcast %279 : vector<8x16x1xf32> to vector<8x16x16xf32>
    %281 = arith.subf %277, %280 : vector<8x16x16xf32>
    %282 = math.exp %281 : vector<8x16x16xf32>
    %cst_137 = arith.constant dense<0.000000e+00> : vector<8x16xf32>
    %283 = vector.multi_reduction <add>, %282, %cst_137 [2] : vector<8x16x16xf32> to vector<8x16xf32>
    %284 = vector.shape_cast %283 : vector<8x16xf32> to vector<8x16x1xf32>
    %285 = tpu.reciprocal %284 {approx = true} : vector<8x16x1xf32> -> vector<8x16x1xf32>
    %286 = vector.broadcast %285 : vector<8x16x1xf32> to vector<8x16x16xf32>
    %287 = arith.mulf %282, %286 : vector<8x16x16xf32>
    %288 = vector.shape_cast %269 : vector<128x32xf32> to vector<8x16x32xf32>
    "tpu.trace_start"() <{level = 10 : i32, message = "bts,bsc->btc"}> : () -> ()
    %cst_138 = arith.constant dense<0.000000e+00> : vector<8x16x32xf32>
    %289 = tpu.matmul %287, %288, %cst_138 {dimension_numbers = #tpu.dot_dimension_numbers<[2], [1], [1], [2], [0, 0, 0, 1, 1, 2], [0], [0]>} : vector<8x16x16xf32>, vector<8x16x32xf32>, vector<8x16x32xf32> -> vector<8x16x32xf32>
    "tpu.trace_stop"() : () -> ()
    %290 = vector.shape_cast %289 : vector<8x16x32xf32> to vector<128x32xf32>
    %291 = arith.addf %263, %290 : vector<128x32xf32>
    %c1_139 = arith.constant 1 : index
    %c0_140 = arith.constant 0 : index
    %c0_141 = arith.constant 0 : index
    %292 = vector.load %arg13[%c1_139, %c0_140, %c0_141] : memref<3x1x32xf32, #tpu.memory_space<vmem>>, vector<1x1x32xf32>
    %293 = vector.shape_cast %292 : vector<1x1x32xf32> to vector<1x32xf32>
    %c1_142 = arith.constant 1 : index
    %c0_143 = arith.constant 0 : index
    %c0_144 = arith.constant 0 : index
    %294 = vector.load %arg14[%c1_142, %c0_143, %c0_144] : memref<3x1x32xf32, #tpu.memory_space<vmem>>, vector<1x1x32xf32>
    %295 = vector.shape_cast %294 : vector<1x1x32xf32> to vector<1x32xf32>
    %cst_145 = arith.constant dense<0.000000e+00> : vector<128xf32>
    %296 = vector.multi_reduction <add>, %291, %cst_145 [1] : vector<128x32xf32> to vector<128xf32>
    %297 = vector.shape_cast %296 : vector<128xf32> to vector<128x1xf32>
    %cst_146 = arith.constant 3.200000e+01 : f32
    %298 = vector.broadcast %cst_146 : f32 to vector<128x1xf32>
    %299 = arith.divf %297, %298 : vector<128x1xf32>
    %300 = vector.broadcast %299 : vector<128x1xf32> to vector<128x32xf32>
    %301 = arith.subf %291, %300 : vector<128x32xf32>
    %302 = arith.mulf %301, %301 : vector<128x32xf32>
    %cst_147 = arith.constant dense<0.000000e+00> : vector<128xf32>
    %303 = vector.multi_reduction <add>, %302, %cst_147 [1] : vector<128x32xf32> to vector<128xf32>
    %304 = vector.shape_cast %303 : vector<128xf32> to vector<128x1xf32>
    %cst_148 = arith.constant 3.200000e+01 : f32
    %305 = vector.broadcast %cst_148 : f32 to vector<128x1xf32>
    %306 = arith.divf %304, %305 : vector<128x1xf32>
    %307 = vector.broadcast %299 : vector<128x1xf32> to vector<128x32xf32>
    %308 = arith.subf %291, %307 : vector<128x32xf32>
    %cst_149 = arith.constant 9.99999974E-6 : f32
    %309 = vector.broadcast %cst_149 : f32 to vector<128x1xf32>
    %310 = arith.addf %306, %309 : vector<128x1xf32>
    %311 = math.rsqrt %310 : vector<128x1xf32>
    %312 = vector.broadcast %311 : vector<128x1xf32> to vector<128x32xf32>
    %313 = arith.mulf %308, %312 : vector<128x32xf32>
    %314 = vector.broadcast %293 : vector<1x32xf32> to vector<128x32xf32>
    %315 = arith.mulf %313, %314 : vector<128x32xf32>
    %316 = vector.broadcast %295 : vector<1x32xf32> to vector<128x32xf32>
    %317 = arith.addf %315, %316 : vector<128x32xf32>
    %c1_150 = arith.constant 1 : index
    %c0_151 = arith.constant 0 : index
    %c0_152 = arith.constant 0 : index
    %318 = vector.load %arg7[%c1_150, %c0_151, %c0_152] : memref<3x32x128xf32, #tpu.memory_space<vmem>>, vector<1x32x128xf32>
    %319 = vector.shape_cast %318 : vector<1x32x128xf32> to vector<32x128xf32>
    %cst_153 = arith.constant dense<0.000000e+00> : vector<128x128xf32>
    %320 = tpu.matmul %317, %319, %cst_153 {dimension_numbers = #tpu.dot_dimension_numbers<[1], [0], [0], [1], [0, 0, 1, 1], [], []>} : vector<128x32xf32>, vector<32x128xf32>, vector<128x128xf32> -> vector<128x128xf32>
    %c1_154 = arith.constant 1 : index
    %c0_155 = arith.constant 0 : index
    %c0_156 = arith.constant 0 : index
    %321 = vector.load %arg8[%c1_154, %c0_155, %c0_156] : memref<3x1x128xf32, #tpu.memory_space<vmem>>, vector<1x1x128xf32>
    %322 = vector.shape_cast %321 : vector<1x1x128xf32> to vector<1x128xf32>
    %323 = vector.broadcast %322 : vector<1x128xf32> to vector<128x128xf32>
    %324 = arith.addf %320, %323 : vector<128x128xf32>
    %cst_157 = arith.constant 0.000000e+00 : f32
    %325 = vector.broadcast %cst_157 : f32 to vector<128x128xf32>
    %326 = arith.maximumf %324, %325 : vector<128x128xf32>
    %c1_158 = arith.constant 1 : index
    %c0_159 = arith.constant 0 : index
    %c0_160 = arith.constant 0 : index
    %327 = vector.load %arg9[%c1_158, %c0_159, %c0_160] : memref<3x128x32xf32, #tpu.memory_space<vmem>>, vector<1x128x32xf32>
    %328 = vector.shape_cast %327 : vector<1x128x32xf32> to vector<128x32xf32>
    %cst_161 = arith.constant dense<0.000000e+00> : vector<128x32xf32>
    %329 = tpu.matmul %326, %328, %cst_161 {dimension_numbers = #tpu.dot_dimension_numbers<[1], [0], [0], [1], [0, 0, 1, 1], [], []>} : vector<128x128xf32>, vector<128x32xf32>, vector<128x32xf32> -> vector<128x32xf32>
    %330 = arith.addf %291, %329 : vector<128x32xf32>
    %c1_162 = arith.constant 1 : index
    %c0_163 = arith.constant 0 : index
    %c0_164 = arith.constant 0 : index
    %331 = vector.load %arg10[%c1_162, %c0_163, %c0_164] : memref<3x1x32xf32, #tpu.memory_space<vmem>>, vector<1x1x32xf32>
    %332 = vector.shape_cast %331 : vector<1x1x32xf32> to vector<1x32xf32>
    %333 = vector.broadcast %332 : vector<1x32xf32> to vector<128x32xf32>
    %334 = arith.addf %330, %333 : vector<128x32xf32>
    %c2_165 = arith.constant 2 : index
    %c0_166 = arith.constant 0 : index
    %c0_167 = arith.constant 0 : index
    %335 = vector.load %arg11[%c2_165, %c0_166, %c0_167] : memref<3x1x32xf32, #tpu.memory_space<vmem>>, vector<1x1x32xf32>
    %336 = vector.shape_cast %335 : vector<1x1x32xf32> to vector<1x32xf32>
    %c2_168 = arith.constant 2 : index
    %c0_169 = arith.constant 0 : index
    %c0_170 = arith.constant 0 : index
    %337 = vector.load %arg12[%c2_168, %c0_169, %c0_170] : memref<3x1x32xf32, #tpu.memory_space<vmem>>, vector<1x1x32xf32>
    %338 = vector.shape_cast %337 : vector<1x1x32xf32> to vector<1x32xf32>
    %cst_171 = arith.constant dense<0.000000e+00> : vector<128xf32>
    %339 = vector.multi_reduction <add>, %334, %cst_171 [1] : vector<128x32xf32> to vector<128xf32>
    %340 = vector.shape_cast %339 : vector<128xf32> to vector<128x1xf32>
    %cst_172 = arith.constant 3.200000e+01 : f32
    %341 = vector.broadcast %cst_172 : f32 to vector<128x1xf32>
    %342 = arith.divf %340, %341 : vector<128x1xf32>
    %343 = vector.broadcast %342 : vector<128x1xf32> to vector<128x32xf32>
    %344 = arith.subf %334, %343 : vector<128x32xf32>
    %345 = arith.mulf %344, %344 : vector<128x32xf32>
    %cst_173 = arith.constant dense<0.000000e+00> : vector<128xf32>
    %346 = vector.multi_reduction <add>, %345, %cst_173 [1] : vector<128x32xf32> to vector<128xf32>
    %347 = vector.shape_cast %346 : vector<128xf32> to vector<128x1xf32>
    %cst_174 = arith.constant 3.200000e+01 : f32
    %348 = vector.broadcast %cst_174 : f32 to vector<128x1xf32>
    %349 = arith.divf %347, %348 : vector<128x1xf32>
    %350 = vector.broadcast %342 : vector<128x1xf32> to vector<128x32xf32>
    %351 = arith.subf %334, %350 : vector<128x32xf32>
    %cst_175 = arith.constant 9.99999974E-6 : f32
    %352 = vector.broadcast %cst_175 : f32 to vector<128x1xf32>
    %353 = arith.addf %349, %352 : vector<128x1xf32>
    %354 = math.rsqrt %353 : vector<128x1xf32>
    %355 = vector.broadcast %354 : vector<128x1xf32> to vector<128x32xf32>
    %356 = arith.mulf %351, %355 : vector<128x32xf32>
    %357 = vector.broadcast %336 : vector<1x32xf32> to vector<128x32xf32>
    %358 = arith.mulf %356, %357 : vector<128x32xf32>
    %359 = vector.broadcast %338 : vector<1x32xf32> to vector<128x32xf32>
    %360 = arith.addf %358, %359 : vector<128x32xf32>
    %361 = vector.shape_cast %360 : vector<128x32xf32> to vector<8x16x32xf32>
    %c2_176 = arith.constant 2 : index
    %c0_177 = arith.constant 0 : index
    %c0_178 = arith.constant 0 : index
    %362 = vector.load %arg6[%c2_176, %c0_177, %c0_178] : memref<3x1x32xf32, #tpu.memory_space<vmem>>, vector<1x1x32xf32>
    %363 = vector.shape_cast %362 : vector<1x1x32xf32> to vector<1x32xf32>
    %364 = vector.broadcast %363 : vector<1x32xf32> to vector<128x32xf32>
    %365 = arith.addf %334, %364 : vector<128x32xf32>
    %c6 = arith.constant 6 : index
    %c0_179 = arith.constant 0 : index
    %c0_180 = arith.constant 0 : index
    %366 = vector.load %arg4[%c6, %c0_179, %c0_180] : memref<9x32x32xf32, #tpu.memory_space<vmem>>, vector<1x32x32xf32>
    %367 = vector.shape_cast %366 : vector<1x32x32xf32> to vector<32x32xf32>
    %cst_181 = arith.constant dense<0.000000e+00> : vector<128x32xf32>
    %368 = tpu.matmul %360, %367, %cst_181 {dimension_numbers = #tpu.dot_dimension_numbers<[1], [0], [0], [1], [0, 0, 1, 1], [], []>} : vector<128x32xf32>, vector<32x32xf32>, vector<128x32xf32> -> vector<128x32xf32>
    %c6_182 = arith.constant 6 : index
    %c0_183 = arith.constant 0 : index
    %c0_184 = arith.constant 0 : index
    %369 = vector.load %arg5[%c6_182, %c0_183, %c0_184] : memref<9x32x32xf32, #tpu.memory_space<vmem>>, vector<1x32x32xf32>
    %370 = vector.shape_cast %369 : vector<1x32x32xf32> to vector<32x32xf32>
    %cst_185 = arith.constant dense<0.000000e+00> : vector<128x32xf32>
    %371 = tpu.matmul %360, %370, %cst_185 {dimension_numbers = #tpu.dot_dimension_numbers<[1], [0], [0], [1], [0, 0, 1, 1], [], []>} : vector<128x32xf32>, vector<32x32xf32>, vector<128x32xf32> -> vector<128x32xf32>
    %372 = vector.shape_cast %368 : vector<128x32xf32> to vector<8x16x32xf32>
    "tpu.trace_start"() <{level = 10 : i32, message = "btc,bsc->bts"}> : () -> ()
    %cst_186 = arith.constant dense<0.000000e+00> : vector<8x16x16xf32>
    %373 = tpu.matmul %372, %361, %cst_186 {dimension_numbers = #tpu.dot_dimension_numbers<[2], [2], [1], [1], [0, 0, 0, 1, 1, 1], [0], [0]>} : vector<8x16x32xf32>, vector<8x16x32xf32>, vector<8x16x16xf32> -> vector<8x16x16xf32>
    "tpu.trace_stop"() : () -> ()
    %cst_187 = arith.constant 0.316227764 : f32
    %374 = vector.broadcast %cst_187 : f32 to vector<8x16x16xf32>
    %375 = arith.mulf %373, %374 : vector<8x16x16xf32>
    %cst_188 = arith.constant -1.000000e+30 : f32
    %376 = vector.shape_cast %18 : vector<1x16x16xi1> to vector<1x16x16xi1>
    %377 = vector.broadcast %376 : vector<1x16x16xi1> to vector<8x16x16xi1>
    %378 = vector.broadcast %cst_188 : f32 to vector<8x16x16xf32>
    %379 = arith.select %377, %375, %378 : vector<8x16x16xi1>, vector<8x16x16xf32>
    %cst_189 = arith.constant dense<0xFF800000> : vector<8x16xf32>
    %380 = vector.multi_reduction <maximumf>, %379, %cst_189 [2] : vector<8x16x16xf32> to vector<8x16xf32>
    %381 = vector.shape_cast %380 : vector<8x16xf32> to vector<8x16x1xf32>
    %382 = vector.broadcast %381 : vector<8x16x1xf32> to vector<8x16x16xf32>
    %383 = arith.subf %379, %382 : vector<8x16x16xf32>
    %384 = math.exp %383 : vector<8x16x16xf32>
    %cst_190 = arith.constant dense<0.000000e+00> : vector<8x16xf32>
    %385 = vector.multi_reduction <add>, %384, %cst_190 [2] : vector<8x16x16xf32> to vector<8x16xf32>
    %386 = vector.shape_cast %385 : vector<8x16xf32> to vector<8x16x1xf32>
    %387 = tpu.reciprocal %386 {approx = true} : vector<8x16x1xf32> -> vector<8x16x1xf32>
    %388 = vector.broadcast %387 : vector<8x16x1xf32> to vector<8x16x16xf32>
    %389 = arith.mulf %384, %388 : vector<8x16x16xf32>
    %390 = vector.shape_cast %371 : vector<128x32xf32> to vector<8x16x32xf32>
    "tpu.trace_start"() <{level = 10 : i32, message = "bts,bsc->btc"}> : () -> ()
    %cst_191 = arith.constant dense<0.000000e+00> : vector<8x16x32xf32>
    %391 = tpu.matmul %389, %390, %cst_191 {dimension_numbers = #tpu.dot_dimension_numbers<[2], [1], [1], [2], [0, 0, 0, 1, 1, 2], [0], [0]>} : vector<8x16x16xf32>, vector<8x16x32xf32>, vector<8x16x32xf32> -> vector<8x16x32xf32>
    "tpu.trace_stop"() : () -> ()
    %392 = vector.shape_cast %391 : vector<8x16x32xf32> to vector<128x32xf32>
    %393 = arith.addf %365, %392 : vector<128x32xf32>
    %c7 = arith.constant 7 : index
    %c0_192 = arith.constant 0 : index
    %c0_193 = arith.constant 0 : index
    %394 = vector.load %arg4[%c7, %c0_192, %c0_193] : memref<9x32x32xf32, #tpu.memory_space<vmem>>, vector<1x32x32xf32>
    %395 = vector.shape_cast %394 : vector<1x32x32xf32> to vector<32x32xf32>
    %cst_194 = arith.constant dense<0.000000e+00> : vector<128x32xf32>
    %396 = tpu.matmul %360, %395, %cst_194 {dimension_numbers = #tpu.dot_dimension_numbers<[1], [0], [0], [1], [0, 0, 1, 1], [], []>} : vector<128x32xf32>, vector<32x32xf32>, vector<128x32xf32> -> vector<128x32xf32>
    %c7_195 = arith.constant 7 : index
    %c0_196 = arith.constant 0 : index
    %c0_197 = arith.constant 0 : index
    %397 = vector.load %arg5[%c7_195, %c0_196, %c0_197] : memref<9x32x32xf32, #tpu.memory_space<vmem>>, vector<1x32x32xf32>
    %398 = vector.shape_cast %397 : vector<1x32x32xf32> to vector<32x32xf32>
    %cst_198 = arith.constant dense<0.000000e+00> : vector<128x32xf32>
    %399 = tpu.matmul %360, %398, %cst_198 {dimension_numbers = #tpu.dot_dimension_numbers<[1], [0], [0], [1], [0, 0, 1, 1], [], []>} : vector<128x32xf32>, vector<32x32xf32>, vector<128x32xf32> -> vector<128x32xf32>
    %400 = vector.shape_cast %396 : vector<128x32xf32> to vector<8x16x32xf32>
    "tpu.trace_start"() <{level = 10 : i32, message = "btc,bsc->bts"}> : () -> ()
    %cst_199 = arith.constant dense<0.000000e+00> : vector<8x16x16xf32>
    %401 = tpu.matmul %400, %361, %cst_199 {dimension_numbers = #tpu.dot_dimension_numbers<[2], [2], [1], [1], [0, 0, 0, 1, 1, 1], [0], [0]>} : vector<8x16x32xf32>, vector<8x16x32xf32>, vector<8x16x16xf32> -> vector<8x16x16xf32>
    "tpu.trace_stop"() : () -> ()
    %cst_200 = arith.constant 0.316227764 : f32
    %402 = vector.broadcast %cst_200 : f32 to vector<8x16x16xf32>
    %403 = arith.mulf %401, %402 : vector<8x16x16xf32>
    %cst_201 = arith.constant -1.000000e+30 : f32
    %404 = vector.shape_cast %18 : vector<1x16x16xi1> to vector<1x16x16xi1>
    %405 = vector.broadcast %404 : vector<1x16x16xi1> to vector<8x16x16xi1>
    %406 = vector.broadcast %cst_201 : f32 to vector<8x16x16xf32>
    %407 = arith.select %405, %403, %406 : vector<8x16x16xi1>, vector<8x16x16xf32>
    %cst_202 = arith.constant dense<0xFF800000> : vector<8x16xf32>
    %408 = vector.multi_reduction <maximumf>, %407, %cst_202 [2] : vector<8x16x16xf32> to vector<8x16xf32>
    %409 = vector.shape_cast %408 : vector<8x16xf32> to vector<8x16x1xf32>
    %410 = vector.broadcast %409 : vector<8x16x1xf32> to vector<8x16x16xf32>
    %411 = arith.subf %407, %410 : vector<8x16x16xf32>
    %412 = math.exp %411 : vector<8x16x16xf32>
    %cst_203 = arith.constant dense<0.000000e+00> : vector<8x16xf32>
    %413 = vector.multi_reduction <add>, %412, %cst_203 [2] : vector<8x16x16xf32> to vector<8x16xf32>
    %414 = vector.shape_cast %413 : vector<8x16xf32> to vector<8x16x1xf32>
    %415 = tpu.reciprocal %414 {approx = true} : vector<8x16x1xf32> -> vector<8x16x1xf32>
    %416 = vector.broadcast %415 : vector<8x16x1xf32> to vector<8x16x16xf32>
    %417 = arith.mulf %412, %416 : vector<8x16x16xf32>
    %418 = vector.shape_cast %399 : vector<128x32xf32> to vector<8x16x32xf32>
    "tpu.trace_start"() <{level = 10 : i32, message = "bts,bsc->btc"}> : () -> ()
    %cst_204 = arith.constant dense<0.000000e+00> : vector<8x16x32xf32>
    %419 = tpu.matmul %417, %418, %cst_204 {dimension_numbers = #tpu.dot_dimension_numbers<[2], [1], [1], [2], [0, 0, 0, 1, 1, 2], [0], [0]>} : vector<8x16x16xf32>, vector<8x16x32xf32>, vector<8x16x32xf32> -> vector<8x16x32xf32>
    "tpu.trace_stop"() : () -> ()
    %420 = vector.shape_cast %419 : vector<8x16x32xf32> to vector<128x32xf32>
    %421 = arith.addf %393, %420 : vector<128x32xf32>
    %c8 = arith.constant 8 : index
    %c0_205 = arith.constant 0 : index
    %c0_206 = arith.constant 0 : index
    %422 = vector.load %arg4[%c8, %c0_205, %c0_206] : memref<9x32x32xf32, #tpu.memory_space<vmem>>, vector<1x32x32xf32>
    %423 = vector.shape_cast %422 : vector<1x32x32xf32> to vector<32x32xf32>
    %cst_207 = arith.constant dense<0.000000e+00> : vector<128x32xf32>
    %424 = tpu.matmul %360, %423, %cst_207 {dimension_numbers = #tpu.dot_dimension_numbers<[1], [0], [0], [1], [0, 0, 1, 1], [], []>} : vector<128x32xf32>, vector<32x32xf32>, vector<128x32xf32> -> vector<128x32xf32>
    %c8_208 = arith.constant 8 : index
    %c0_209 = arith.constant 0 : index
    %c0_210 = arith.constant 0 : index
    %425 = vector.load %arg5[%c8_208, %c0_209, %c0_210] : memref<9x32x32xf32, #tpu.memory_space<vmem>>, vector<1x32x32xf32>
    %426 = vector.shape_cast %425 : vector<1x32x32xf32> to vector<32x32xf32>
    %cst_211 = arith.constant dense<0.000000e+00> : vector<128x32xf32>
    %427 = tpu.matmul %360, %426, %cst_211 {dimension_numbers = #tpu.dot_dimension_numbers<[1], [0], [0], [1], [0, 0, 1, 1], [], []>} : vector<128x32xf32>, vector<32x32xf32>, vector<128x32xf32> -> vector<128x32xf32>
    %428 = vector.shape_cast %424 : vector<128x32xf32> to vector<8x16x32xf32>
    "tpu.trace_start"() <{level = 10 : i32, message = "btc,bsc->bts"}> : () -> ()
    %cst_212 = arith.constant dense<0.000000e+00> : vector<8x16x16xf32>
    %429 = tpu.matmul %428, %361, %cst_212 {dimension_numbers = #tpu.dot_dimension_numbers<[2], [2], [1], [1], [0, 0, 0, 1, 1, 1], [0], [0]>} : vector<8x16x32xf32>, vector<8x16x32xf32>, vector<8x16x16xf32> -> vector<8x16x16xf32>
    "tpu.trace_stop"() : () -> ()
    %cst_213 = arith.constant 0.316227764 : f32
    %430 = vector.broadcast %cst_213 : f32 to vector<8x16x16xf32>
    %431 = arith.mulf %429, %430 : vector<8x16x16xf32>
    %cst_214 = arith.constant -1.000000e+30 : f32
    %432 = vector.shape_cast %18 : vector<1x16x16xi1> to vector<1x16x16xi1>
    %433 = vector.broadcast %432 : vector<1x16x16xi1> to vector<8x16x16xi1>
    %434 = vector.broadcast %cst_214 : f32 to vector<8x16x16xf32>
    %435 = arith.select %433, %431, %434 : vector<8x16x16xi1>, vector<8x16x16xf32>
    %cst_215 = arith.constant dense<0xFF800000> : vector<8x16xf32>
    %436 = vector.multi_reduction <maximumf>, %435, %cst_215 [2] : vector<8x16x16xf32> to vector<8x16xf32>
    %437 = vector.shape_cast %436 : vector<8x16xf32> to vector<8x16x1xf32>
    %438 = vector.broadcast %437 : vector<8x16x1xf32> to vector<8x16x16xf32>
    %439 = arith.subf %435, %438 : vector<8x16x16xf32>
    %440 = math.exp %439 : vector<8x16x16xf32>
    %cst_216 = arith.constant dense<0.000000e+00> : vector<8x16xf32>
    %441 = vector.multi_reduction <add>, %440, %cst_216 [2] : vector<8x16x16xf32> to vector<8x16xf32>
    %442 = vector.shape_cast %441 : vector<8x16xf32> to vector<8x16x1xf32>
    %443 = tpu.reciprocal %442 {approx = true} : vector<8x16x1xf32> -> vector<8x16x1xf32>
    %444 = vector.broadcast %443 : vector<8x16x1xf32> to vector<8x16x16xf32>
    %445 = arith.mulf %440, %444 : vector<8x16x16xf32>
    %446 = vector.shape_cast %427 : vector<128x32xf32> to vector<8x16x32xf32>
    "tpu.trace_start"() <{level = 10 : i32, message = "bts,bsc->btc"}> : () -> ()
    %cst_217 = arith.constant dense<0.000000e+00> : vector<8x16x32xf32>
    %447 = tpu.matmul %445, %446, %cst_217 {dimension_numbers = #tpu.dot_dimension_numbers<[2], [1], [1], [2], [0, 0, 0, 1, 1, 2], [0], [0]>} : vector<8x16x16xf32>, vector<8x16x32xf32>, vector<8x16x32xf32> -> vector<8x16x32xf32>
    "tpu.trace_stop"() : () -> ()
    %448 = vector.shape_cast %447 : vector<8x16x32xf32> to vector<128x32xf32>
    %449 = arith.addf %421, %448 : vector<128x32xf32>
    %c2_218 = arith.constant 2 : index
    %c0_219 = arith.constant 0 : index
    %c0_220 = arith.constant 0 : index
    %450 = vector.load %arg13[%c2_218, %c0_219, %c0_220] : memref<3x1x32xf32, #tpu.memory_space<vmem>>, vector<1x1x32xf32>
    %451 = vector.shape_cast %450 : vector<1x1x32xf32> to vector<1x32xf32>
    %c2_221 = arith.constant 2 : index
    %c0_222 = arith.constant 0 : index
    %c0_223 = arith.constant 0 : index
    %452 = vector.load %arg14[%c2_221, %c0_222, %c0_223] : memref<3x1x32xf32, #tpu.memory_space<vmem>>, vector<1x1x32xf32>
    %453 = vector.shape_cast %452 : vector<1x1x32xf32> to vector<1x32xf32>
    %cst_224 = arith.constant dense<0.000000e+00> : vector<128xf32>
    %454 = vector.multi_reduction <add>, %449, %cst_224 [1] : vector<128x32xf32> to vector<128xf32>
    %455 = vector.shape_cast %454 : vector<128xf32> to vector<128x1xf32>
    %cst_225 = arith.constant 3.200000e+01 : f32
    %456 = vector.broadcast %cst_225 : f32 to vector<128x1xf32>
    %457 = arith.divf %455, %456 : vector<128x1xf32>
    %458 = vector.broadcast %457 : vector<128x1xf32> to vector<128x32xf32>
    %459 = arith.subf %449, %458 : vector<128x32xf32>
    %460 = arith.mulf %459, %459 : vector<128x32xf32>
    %cst_226 = arith.constant dense<0.000000e+00> : vector<128xf32>
    %461 = vector.multi_reduction <add>, %460, %cst_226 [1] : vector<128x32xf32> to vector<128xf32>
    %462 = vector.shape_cast %461 : vector<128xf32> to vector<128x1xf32>
    %cst_227 = arith.constant 3.200000e+01 : f32
    %463 = vector.broadcast %cst_227 : f32 to vector<128x1xf32>
    %464 = arith.divf %462, %463 : vector<128x1xf32>
    %465 = vector.broadcast %457 : vector<128x1xf32> to vector<128x32xf32>
    %466 = arith.subf %449, %465 : vector<128x32xf32>
    %cst_228 = arith.constant 9.99999974E-6 : f32
    %467 = vector.broadcast %cst_228 : f32 to vector<128x1xf32>
    %468 = arith.addf %464, %467 : vector<128x1xf32>
    %469 = math.rsqrt %468 : vector<128x1xf32>
    %470 = vector.broadcast %469 : vector<128x1xf32> to vector<128x32xf32>
    %471 = arith.mulf %466, %470 : vector<128x32xf32>
    %472 = vector.broadcast %451 : vector<1x32xf32> to vector<128x32xf32>
    %473 = arith.mulf %471, %472 : vector<128x32xf32>
    %474 = vector.broadcast %453 : vector<1x32xf32> to vector<128x32xf32>
    %475 = arith.addf %473, %474 : vector<128x32xf32>
    %c2_229 = arith.constant 2 : index
    %c0_230 = arith.constant 0 : index
    %c0_231 = arith.constant 0 : index
    %476 = vector.load %arg7[%c2_229, %c0_230, %c0_231] : memref<3x32x128xf32, #tpu.memory_space<vmem>>, vector<1x32x128xf32>
    %477 = vector.shape_cast %476 : vector<1x32x128xf32> to vector<32x128xf32>
    %cst_232 = arith.constant dense<0.000000e+00> : vector<128x128xf32>
    %478 = tpu.matmul %475, %477, %cst_232 {dimension_numbers = #tpu.dot_dimension_numbers<[1], [0], [0], [1], [0, 0, 1, 1], [], []>} : vector<128x32xf32>, vector<32x128xf32>, vector<128x128xf32> -> vector<128x128xf32>
    %c2_233 = arith.constant 2 : index
    %c0_234 = arith.constant 0 : index
    %c0_235 = arith.constant 0 : index
    %479 = vector.load %arg8[%c2_233, %c0_234, %c0_235] : memref<3x1x128xf32, #tpu.memory_space<vmem>>, vector<1x1x128xf32>
    %480 = vector.shape_cast %479 : vector<1x1x128xf32> to vector<1x128xf32>
    %481 = vector.broadcast %480 : vector<1x128xf32> to vector<128x128xf32>
    %482 = arith.addf %478, %481 : vector<128x128xf32>
    %cst_236 = arith.constant 0.000000e+00 : f32
    %483 = vector.broadcast %cst_236 : f32 to vector<128x128xf32>
    %484 = arith.maximumf %482, %483 : vector<128x128xf32>
    %c2_237 = arith.constant 2 : index
    %c0_238 = arith.constant 0 : index
    %c0_239 = arith.constant 0 : index
    %485 = vector.load %arg9[%c2_237, %c0_238, %c0_239] : memref<3x128x32xf32, #tpu.memory_space<vmem>>, vector<1x128x32xf32>
    %486 = vector.shape_cast %485 : vector<1x128x32xf32> to vector<128x32xf32>
    %cst_240 = arith.constant dense<0.000000e+00> : vector<128x32xf32>
    %487 = tpu.matmul %484, %486, %cst_240 {dimension_numbers = #tpu.dot_dimension_numbers<[1], [0], [0], [1], [0, 0, 1, 1], [], []>} : vector<128x128xf32>, vector<128x32xf32>, vector<128x32xf32> -> vector<128x32xf32>
    %488 = arith.addf %449, %487 : vector<128x32xf32>
    %c2_241 = arith.constant 2 : index
    %c0_242 = arith.constant 0 : index
    %c0_243 = arith.constant 0 : index
    %489 = vector.load %arg10[%c2_241, %c0_242, %c0_243] : memref<3x1x32xf32, #tpu.memory_space<vmem>>, vector<1x1x32xf32>
    %490 = vector.shape_cast %489 : vector<1x1x32xf32> to vector<1x32xf32>
    %491 = vector.broadcast %490 : vector<1x32xf32> to vector<128x32xf32>
    %492 = arith.addf %488, %491 : vector<128x32xf32>
    %c0_244 = arith.constant 0 : index
    %c0_245 = arith.constant 0 : index
    %493 = vector.load %arg15[%c0_244, %c0_245] : memref<1x32xf32, #tpu.memory_space<vmem>>, vector<1x32xf32>
    %c0_246 = arith.constant 0 : index
    %c0_247 = arith.constant 0 : index
    %494 = vector.load %arg16[%c0_246, %c0_247] : memref<1x32xf32, #tpu.memory_space<vmem>>, vector<1x32xf32>
    %cst_248 = arith.constant dense<0.000000e+00> : vector<128xf32>
    %495 = vector.multi_reduction <add>, %492, %cst_248 [1] : vector<128x32xf32> to vector<128xf32>
    %496 = vector.shape_cast %495 : vector<128xf32> to vector<128x1xf32>
    %cst_249 = arith.constant 3.200000e+01 : f32
    %497 = vector.broadcast %cst_249 : f32 to vector<128x1xf32>
    %498 = arith.divf %496, %497 : vector<128x1xf32>
    %499 = vector.broadcast %498 : vector<128x1xf32> to vector<128x32xf32>
    %500 = arith.subf %492, %499 : vector<128x32xf32>
    %501 = arith.mulf %500, %500 : vector<128x32xf32>
    %cst_250 = arith.constant dense<0.000000e+00> : vector<128xf32>
    %502 = vector.multi_reduction <add>, %501, %cst_250 [1] : vector<128x32xf32> to vector<128xf32>
    %503 = vector.shape_cast %502 : vector<128xf32> to vector<128x1xf32>
    %cst_251 = arith.constant 3.200000e+01 : f32
    %504 = vector.broadcast %cst_251 : f32 to vector<128x1xf32>
    %505 = arith.divf %503, %504 : vector<128x1xf32>
    %506 = vector.broadcast %498 : vector<128x1xf32> to vector<128x32xf32>
    %507 = arith.subf %492, %506 : vector<128x32xf32>
    %cst_252 = arith.constant 9.99999974E-6 : f32
    %508 = vector.broadcast %cst_252 : f32 to vector<128x1xf32>
    %509 = arith.addf %505, %508 : vector<128x1xf32>
    %510 = math.rsqrt %509 : vector<128x1xf32>
    %511 = vector.broadcast %510 : vector<128x1xf32> to vector<128x32xf32>
    %512 = arith.mulf %507, %511 : vector<128x32xf32>
    %513 = vector.broadcast %493 : vector<1x32xf32> to vector<128x32xf32>
    %514 = arith.mulf %512, %513 : vector<128x32xf32>
    %515 = vector.broadcast %494 : vector<1x32xf32> to vector<128x32xf32>
    %516 = arith.addf %514, %515 : vector<128x32xf32>
    %c0_253 = arith.constant 0 : index
    %c0_254 = arith.constant 0 : index
    %517 = vector.load %arg17[%c0_253, %c0_254] : memref<32x128xf32, #tpu.memory_space<vmem>>, vector<32x128xf32>
    %cst_255 = arith.constant dense<0.000000e+00> : vector<128x128xf32>
    %518 = tpu.matmul %516, %517, %cst_255 {dimension_numbers = #tpu.dot_dimension_numbers<[1], [0], [0], [1], [0, 0, 1, 1], [], []>} : vector<128x32xf32>, vector<32x128xf32>, vector<128x128xf32> -> vector<128x128xf32>
    %c0_256 = arith.constant 0 : index
    %c0_257 = arith.constant 0 : index
    %519 = vector.load %arg18[%c0_256, %c0_257] : memref<1x128xf32, #tpu.memory_space<vmem>>, vector<1x128xf32>
    %520 = vector.broadcast %519 : vector<1x128xf32> to vector<128x128xf32>
    %521 = arith.addf %518, %520 : vector<128x128xf32>
    %522 = vector.shape_cast %521 : vector<128x128xf32> to vector<8x16x128xf32>
    %c0_258 = arith.constant 0 : index
    %c0_259 = arith.constant 0 : index
    %c0_260 = arith.constant 0 : index
    %523 = vector.load %arg19[%c0_258, %c0_259, %c0_260] : memref<8x16x128xf32, #tpu.memory_space<vmem>>, vector<8x16x128xf32>
    tpu.vector_store %arg19[%c0_258, %c0_259, %c0_260], %522 {strides = array<i32>} : memref<8x16x128xf32, #tpu.memory_space<vmem>>, vector<8x16x128xf32>,
    return
  }
  func.func @transform_0(%arg0: i32) -> (i32, i32, i32) {
    %c0_i32 = arith.constant 0 : i32
    %c0_i32_0 = arith.constant 0 : i32
    %c0_i32_1 = arith.constant 0 : i32
    return %arg0, %c0_i32, %c0_i32_0 : i32, i32, i32
  }
  func.func @transform_1(%arg0: i32) -> (i32, i32) {
    %c0_i32 = arith.constant 0 : i32
    %c0_i32_0 = arith.constant 0 : i32
    %c0_i32_1 = arith.constant 0 : i32
    return %c0_i32, %c0_i32_0 : i32, i32
  }
  func.func @transform_2(%arg0: i32) -> (i32, i32) {
    %c0_i32 = arith.constant 0 : i32
    %c0_i32_0 = arith.constant 0 : i32
    %c0_i32_1 = arith.constant 0 : i32
    return %c0_i32, %c0_i32_0 : i32, i32
  }
  func.func @transform_3(%arg0: i32) -> (i32, i32, i32) {
    %c0_i32 = arith.constant 0 : i32
    %c0_i32_0 = arith.constant 0 : i32
    %c0_i32_1 = arith.constant 0 : i32
    %c0_i32_2 = arith.constant 0 : i32
    return %c0_i32, %c0_i32_0, %c0_i32_1 : i32, i32, i32
  }
  func.func @transform_4(%arg0: i32) -> (i32, i32, i32) {
    %c0_i32 = arith.constant 0 : i32
    %c0_i32_0 = arith.constant 0 : i32
    %c0_i32_1 = arith.constant 0 : i32
    %c0_i32_2 = arith.constant 0 : i32
    return %c0_i32, %c0_i32_0, %c0_i32_1 : i32, i32, i32
  }
  func.func @transform_5(%arg0: i32) -> (i32, i32, i32) {
    %c0_i32 = arith.constant 0 : i32
    %c0_i32_0 = arith.constant 0 : i32
    %c0_i32_1 = arith.constant 0 : i32
    %c0_i32_2 = arith.constant 0 : i32
    return %c0_i32, %c0_i32_0, %c0_i32_1 : i32, i32, i32
  }
  func.func @transform_6(%arg0: i32) -> (i32, i32, i32) {
    %c0_i32 = arith.constant 0 : i32
    %c0_i32_0 = arith.constant 0 : i32
    %c0_i32_1 = arith.constant 0 : i32
    %c0_i32_2 = arith.constant 0 : i32
    return %c0_i32, %c0_i32_0, %c0_i32_1 : i32, i32, i32
  }
  func.func @transform_7(%arg0: i32) -> (i32, i32, i32) {
    %c0_i32 = arith.constant 0 : i32
    %c0_i32_0 = arith.constant 0 : i32
    %c0_i32_1 = arith.constant 0 : i32
    %c0_i32_2 = arith.constant 0 : i32
    return %c0_i32, %c0_i32_0, %c0_i32_1 : i32, i32, i32
  }
  func.func @transform_8(%arg0: i32) -> (i32, i32, i32) {
    %c0_i32 = arith.constant 0 : i32
    %c0_i32_0 = arith.constant 0 : i32
    %c0_i32_1 = arith.constant 0 : i32
    %c0_i32_2 = arith.constant 0 : i32
    return %c0_i32, %c0_i32_0, %c0_i32_1 : i32, i32, i32
  }
  func.func @transform_9(%arg0: i32) -> (i32, i32, i32) {
    %c0_i32 = arith.constant 0 : i32
    %c0_i32_0 = arith.constant 0 : i32
    %c0_i32_1 = arith.constant 0 : i32
    %c0_i32_2 = arith.constant 0 : i32
    return %c0_i32, %c0_i32_0, %c0_i32_1 : i32, i32, i32
  }
  func.func @transform_10(%arg0: i32) -> (i32, i32, i32) {
    %c0_i32 = arith.constant 0 : i32
    %c0_i32_0 = arith.constant 0 : i32
    %c0_i32_1 = arith.constant 0 : i32
    %c0_i32_2 = arith.constant 0 : i32
    return %c0_i32, %c0_i32_0, %c0_i32_1 : i32, i32, i32
  }
  func.func @transform_11(%arg0: i32) -> (i32, i32, i32) {
    %c0_i32 = arith.constant 0 : i32
    %c0_i32_0 = arith.constant 0 : i32
    %c0_i32_1 = arith.constant 0 : i32
    %c0_i32_2 = arith.constant 0 : i32
    return %c0_i32, %c0_i32_0, %c0_i32_1 : i32, i32, i32
  }
  func.func @transform_12(%arg0: i32) -> (i32, i32, i32) {
    %c0_i32 = arith.constant 0 : i32
    %c0_i32_0 = arith.constant 0 : i32
    %c0_i32_1 = arith.constant 0 : i32
    %c0_i32_2 = arith.constant 0 : i32
    return %c0_i32, %c0_i32_0, %c0_i32_1 : i32, i32, i32
  }
  func.func @transform_13(%arg0: i32) -> (i32, i32, i32) {
    %c0_i32 = arith.constant 0 : i32
    %c0_i32_0 = arith.constant 0 : i32
    %c0_i32_1 = arith.constant 0 : i32
    %c0_i32_2 = arith.constant 0 : i32
    return %c0_i32, %c0_i32_0, %c0_i32_1 : i32, i32, i32
  }
  func.func @transform_14(%arg0: i32) -> (i32, i32) {
    %c0_i32 = arith.constant 0 : i32
    %c0_i32_0 = arith.constant 0 : i32
    %c0_i32_1 = arith.constant 0 : i32
    return %c0_i32, %c0_i32_0 : i32, i32
  }
  func.func @transform_15(%arg0: i32) -> (i32, i32) {
    %c0_i32 = arith.constant 0 : i32
    %c0_i32_0 = arith.constant 0 : i32
    %c0_i32_1 = arith.constant 0 : i32
    return %c0_i32, %c0_i32_0 : i32, i32
  }
  func.func @transform_16(%arg0: i32) -> (i32, i32) {
    %c0_i32 = arith.constant 0 : i32
    %c0_i32_0 = arith.constant 0 : i32
    %c0_i32_1 = arith.constant 0 : i32
    return %c0_i32, %c0_i32_0 : i32, i32
  }
  func.func @transform_17(%arg0: i32) -> (i32, i32) {
    %c0_i32 = arith.constant 0 : i32
    %c0_i32_0 = arith.constant 0 : i32
    %c0_i32_1 = arith.constant 0 : i32
    return %c0_i32, %c0_i32_0 : i32, i32
  }
  func.func @transform_18(%arg0: i32) -> (i32, i32, i32) {
    %c0_i32 = arith.constant 0 : i32
    %c0_i32_0 = arith.constant 0 : i32
    %c0_i32_1 = arith.constant 0 : i32
    return %arg0, %c0_i32, %c0_i32_0 : i32, i32, i32
  }
}

</mosaic_0001>

<llo_original>
// kernel: tpu_custom_call.1
$region0: #{tpu_custom_call.1}
  #allocation0 [shape = 'u32[]', space=smem, size = 0x4, offset = 0x4, fixed_abs, tag = 'smem constant byte address 0x4 - core index']
  #allocation1 [shape = 'u32[72,128]{1,0:T(1,128)}', space=vmem, size = 0x9000, scoped, tag = 'internal scratch']
  %s0 = inlined_call_operand.vmem [shape: s32[8,16,1], index: 0, kind: input, shape index: {}]
  %s1 = inlined_call_operand.vmem [shape: f32[128,32], index: 1, kind: input, shape index: {}]
  %s2 = inlined_call_operand.vmem [shape: f32[16,32], index: 2, kind: input, shape index: {}]
  %s3 = inlined_call_operand.vmem [shape: f32[9,32,32], index: 3, kind: input, shape index: {}]
  %s4 = inlined_call_operand.hbm [shape: f32[9,32,32], index: 4, kind: input, shape index: {}]
  %s5 = inlined_call_operand.vmem [shape: f32[3,1,32], index: 5, kind: input, shape index: {}]
  %s6 = inlined_call_operand.vmem [shape: f32[3,32,128], index: 6, kind: input, shape index: {}]
  %s7 = inlined_call_operand.vmem [shape: f32[3,1,128], index: 7, kind: input, shape index: {}]
  %s8 = inlined_call_operand.vmem [shape: f32[3,128,32], index: 8, kind: input, shape index: {}]
  %s9 = inlined_call_operand.vmem [shape: f32[3,1,32], index: 9, kind: input, shape index: {}]
  %s10 = inlined_call_operand.vmem [shape: f32[3,1,32], index: 10, kind: input, shape index: {}]
  %s11 = inlined_call_operand.vmem [shape: f32[3,1,32], index: 11, kind: input, shape index: {}]
  %s12 = inlined_call_operand.vmem [shape: f32[3,1,32], index: 12, kind: input, shape index: {}]
  %s13 = inlined_call_operand.vmem [shape: f32[3,1,32], index: 13, kind: input, shape index: {}]
  %s14 = inlined_call_operand.vmem [shape: f32[1,32], index: 14, kind: input, shape index: {}]
  %s15 = inlined_call_operand.vmem [shape: f32[1,32], index: 15, kind: input, shape index: {}]
  %s16 = inlined_call_operand.vmem [shape: f32[32,128], index: 16, kind: input, shape index: {}]
  %s17 = inlined_call_operand.vmem [shape: f32[1,128], index: 17, kind: input, shape index: {}]
  %s18 = inlined_call_operand.hbm [shape: f32[8,16,128], index: 18, kind: output, shape index: {}]
  %s19 = sld [smem:[#allocation0]]
  $region86: #{tpu_custom_call.1} parent=0
    _
  %s21 = ssub.s32 1, %s19
  %s22 = scalar_select 0, %s21, %s19
  $region1: #{tpu_custom_call.1} parent=0
    #allocation2 [shape = 'u8[147456]{0}', space=vmem, size = 0x24000, scoped, tag = 'input window, operand 4, single buffered']
    #allocation3 [shape = 's32[1]{0}', space=sflag, size = 0x4, scoped, tag = 'scoped memory for tpu_custom_call.1']
    #allocation4 [shape = 's32[1]{0}', space=sflag, size = 0x4, scoped, tag = 'scoped memory for tpu_custom_call.1']
    #allocation5 [shape = 'u8[65536]{0}', space=vmem, size = 0x10000, scoped, tag = 'output window, operand 0, single buffered']
    %23 = vsyncpa [#allocation3], 0
    %24 = vsyncpa [#allocation4], 0
    // Predicated region
    $region2: #{tpu_custom_call.1} parent=1 // pred_check
      _
    $region3: #{tpu_custom_call.1} parent=1 // pred_check_branch
      %26 = sbr.rel (0) target = $region5
    $region4: #{tpu_custom_call.1} parent=1 // pred_region
      _
    $region5: #{tpu_custom_call.1} parent=1 // pred_fallthru
      _
    // Predicated region
    $region6: #{tpu_custom_call.1} parent=1 // pred_check
      _
    $region7: #{tpu_custom_call.1} parent=1 // pred_check_branch
      %28 = sbr.rel (0) target = $region9
    $region8: #{tpu_custom_call.1} parent=1 // pred_region
      _
    $region9: #{tpu_custom_call.1} parent=1 // pred_fallthru
      _
    // Predicated region
    $region10: #{tpu_custom_call.1} parent=1 // pred_check
      _
    $region11: #{tpu_custom_call.1} parent=1 // pred_check_branch
      %30 = sbr.rel (0) target = $region13
    $region12: #{tpu_custom_call.1} parent=1 // pred_region
      _
    $region13: #{tpu_custom_call.1} parent=1 // pred_fallthru
      _
    // Predicated region
    $region14: #{tpu_custom_call.1} parent=1 // pred_check
      _
    $region15: #{tpu_custom_call.1} parent=1 // pred_check_branch
      %32 = sbr.rel (0) target = $region17
    $region16: #{tpu_custom_call.1} parent=1 // pred_region
      _
    $region17: #{tpu_custom_call.1} parent=1 // pred_fallthru
      _
    // Predicated region
    $region18: #{tpu_custom_call.1} parent=1 // pred_check
      _
    $region19: #{tpu_custom_call.1} parent=1 // pred_check_branch
      %34 = sbr.rel (0) target = $region21
    $region20: #{tpu_custom_call.1} parent=1 // pred_region
      %36 = vsyncadd [#allocation3], 0
      %s37 = sshll.u32 %s4, 4
      %s38 = int_to_ptr.hbm [resolvable:$true] %s37
      %s39 = sshll.u32 [#allocation2], 4
      %s40 = int_to_ptr.vmem [resolvable:$true] %s39
      %45 = dma.hbm_to_vmem [thread:$0]  %s38, 4608, %s40, [#allocation3], 128, 128, 8
    $region21: #{tpu_custom_call.1} parent=1 // pred_fallthru
      _
    // Predicated region
    $region22: #{tpu_custom_call.1} parent=1 // pred_check
      _
    $region23: #{tpu_custom_call.1} parent=1 // pred_check_branch
      %47 = sbr.rel (0) target = $region25
    $region24: #{tpu_custom_call.1} parent=1 // pred_region
      _
    $region25: #{tpu_custom_call.1} parent=1 // pred_fallthru
      _
    // Predicated region
    $region26: #{tpu_custom_call.1} parent=1 // pred_check
      _
    $region27: #{tpu_custom_call.1} parent=1 // pred_check_branch
      %49 = sbr.rel (0) target = $region29
    $region28: #{tpu_custom_call.1} parent=1 // pred_region
      _
    $region29: #{tpu_custom_call.1} parent=1 // pred_fallthru
      _
    // Predicated region
    $region30: #{tpu_custom_call.1} parent=1 // pred_check
      _
    $region31: #{tpu_custom_call.1} parent=1 // pred_check_branch
      %51 = sbr.rel (0) target = $region33
    $region32: #{tpu_custom_call.1} parent=1 // pred_region
      _
    $region33: #{tpu_custom_call.1} parent=1 // pred_fallthru
      _
    // Predicated region
    $region34: #{tpu_custom_call.1} parent=1 // pred_check
      _
    $region35: #{tpu_custom_call.1} parent=1 // pred_check_branch
      %53 = sbr.rel (0) target = $region37
    $region36: #{tpu_custom_call.1} parent=1 // pred_region
      _
    $region37: #{tpu_custom_call.1} parent=1 // pred_fallthru
      _
    // Predicated region
    $region38: #{tpu_custom_call.1} parent=1 // pred_check
      _
    $region39: #{tpu_custom_call.1} parent=1 // pred_check_branch
      %55 = sbr.rel (0) target = $region41
    $region40: #{tpu_custom_call.1} parent=1 // pred_region
      _
    $region41: #{tpu_custom_call.1} parent=1 // pred_fallthru
      _
    // Predicated region
    $region42: #{tpu_custom_call.1} parent=1 // pred_check
      _
    $region43: #{tpu_custom_call.1} parent=1 // pred_check_branch
      %57 = sbr.rel (0) target = $region45
    $region44: #{tpu_custom_call.1} parent=1 // pred_region
      _
    $region45: #{tpu_custom_call.1} parent=1 // pred_fallthru
      _
    // Predicated region
    $region46: #{tpu_custom_call.1} parent=1 // pred_check
      _
    $region47: #{tpu_custom_call.1} parent=1 // pred_check_branch
      %59 = sbr.rel (0) target = $region49
    $region48: #{tpu_custom_call.1} parent=1 // pred_region
      _
    $region49: #{tpu_custom_call.1} parent=1 // pred_fallthru
      _
    // Predicated region
    $region50: #{tpu_custom_call.1} parent=1 // pred_check
      _
    $region51: #{tpu_custom_call.1} parent=1 // pred_check_branch
      %61 = sbr.rel (0) target = $region53
    $region52: #{tpu_custom_call.1} parent=1 // pred_region
      _
    $region53: #{tpu_custom_call.1} parent=1 // pred_fallthru
      _
    // Predicated region
    $region54: #{tpu_custom_call.1} parent=1 // pred_check
      _
    $region55: #{tpu_custom_call.1} parent=1 // pred_check_branch
      %63 = sbr.rel (0) target = $region57
    $region56: #{tpu_custom_call.1} parent=1 // pred_region
      _
    $region57: #{tpu_custom_call.1} parent=1 // pred_fallthru
      _
    // Predicated region
    $region58: #{tpu_custom_call.1} parent=1 // pred_check
      _
    $region59: #{tpu_custom_call.1} parent=1 // pred_check_branch
      %65 = sbr.rel (0) target = $region61
    $region60: #{tpu_custom_call.1} parent=1 // pred_region
      _
    $region61: #{tpu_custom_call.1} parent=1 // pred_fallthru
      _
    // Predicated region
    $region62: #{tpu_custom_call.1} parent=1 // pred_check
      _
    $region63: #{tpu_custom_call.1} parent=1 // pred_check_branch
      %67 = sbr.rel (0) target = $region65
    $region64: #{tpu_custom_call.1} parent=1 // pred_region
      _
    $region65: #{tpu_custom_call.1} parent=1 // pred_fallthru
      _
    // Predicated region
    $region66: #{tpu_custom_call.1} parent=1 // pred_check
      _
    $region67: #{tpu_custom_call.1} parent=1 // pred_check_branch
      %69 = sbr.rel (0) target = $region69
    $region68: #{tpu_custom_call.1} parent=1 // pred_region
      _
    $region69: #{tpu_custom_call.1} parent=1 // pred_fallthru
      _
    // Predicated region
    $region70: #{tpu_custom_call.1} parent=1 // pred_check
      _
    $region71: #{tpu_custom_call.1} parent=1 // pred_check_branch
      %71 = sbr.rel (0) target = $region73
    $region72: #{tpu_custom_call.1} parent=1 // pred_region
      _
    $region73: #{tpu_custom_call.1} parent=1 // pred_fallthru
      _
    // Predicated region
    $region74: #{tpu_custom_call.1} parent=1 // pred_check
      _
    $region75: #{tpu_custom_call.1} parent=1 // pred_check_branch
      %73 = sbr.rel (0) target = $region77
    $region76: #{tpu_custom_call.1} parent=1 // pred_region
      %75 = dma.done [#allocation3], 4608
    $region77: #{tpu_custom_call.1} parent=1 // pred_fallthru
      _
    %v76 = vld [vmem:[%s0] sm:$0xff]
    %v77 = vld [vmem:[%s0 + $0x8] sm:$0xff]
    %v78 = vld [vmem:[%s0 + $0x10] sm:$0xff]
    %v79 = vld [vmem:[%s0 + $0x18] sm:$0xff]
    %v80 = vld [vmem:[%s0 + $0x20] sm:$0xff]
    %v81 = vld [vmem:[%s0 + $0x28] sm:$0xff]
    %v82 = vld [vmem:[%s0 + $0x30] sm:$0xff]
    %v83 = vld [vmem:[%s0 + $0x38] sm:$0xff]
    %v84 = vld [vmem:[%s0 + $0x40] sm:$0xff]
    %v85 = vld [vmem:[%s0 + $0x48] sm:$0xff]
    %v86 = vld [vmem:[%s0 + $0x50] sm:$0xff]
    %v87 = vld [vmem:[%s0 + $0x58] sm:$0xff]
    %v88 = vld [vmem:[%s0 + $0x60] sm:$0xff]
    %v89 = vld [vmem:[%s0 + $0x68] sm:$0xff]
    %v90 = vld [vmem:[%s0 + $0x70] sm:$0xff]
    %v91 = vld [vmem:[%s0 + $0x78] sm:$0xff]
    %v92 = vlaneseq
    %v93 = vand.u32 %v92, 127
    %94 = vset.pattern.permute.xlu0 0
    %95 = vperm.xlu0 %94, %v76
    %v96 = vpop.permute.xlu0 %95
    %97 = vset.pattern.permute.xlu0 0
    %98 = vperm.xlu0 %97, %v77
    %v99 = vpop.permute.xlu0 %98
    %100 = vset.pattern.permute.xlu0 0
    %101 = vperm.xlu0 %100, %v78
    %v102 = vpop.permute.xlu0 %101
    %103 = vset.pattern.permute.xlu0 0
    %104 = vperm.xlu0 %103, %v79
    %v105 = vpop.permute.xlu0 %104
    %106 = vset.pattern.permute.xlu0 0
    %107 = vperm.xlu0 %106, %v80
    %v108 = vpop.permute.xlu0 %107
    %109 = vset.pattern.permute.xlu0 0
    %110 = vperm.xlu0 %109, %v81
    %v111 = vpop.permute.xlu0 %110
    %112 = vset.pattern.permute.xlu0 0
    %113 = vperm.xlu0 %112, %v82
    %v114 = vpop.permute.xlu0 %113
    %115 = vset.pattern.permute.xlu0 0
    %116 = vperm.xlu0 %115, %v83
    %v117 = vpop.permute.xlu0 %116
    %118 = vset.pattern.permute.xlu0 0
    %119 = vperm.xlu0 %118, %v84
    %v120 = vpop.permute.xlu0 %119
    %121 = vset.pattern.permute.xlu0 0
    %122 = vperm.xlu0 %121, %v85
    %v123 = vpop.permute.xlu0 %122
    %124 = vset.pattern.permute.xlu0 0
    %125 = vperm.xlu0 %124, %v86
    %v126 = vpop.permute.xlu0 %125
    %127 = vset.pattern.permute.xlu0 0
    %128 = vperm.xlu0 %127, %v87
    %v129 = vpop.permute.xlu0 %128
    %130 = vset.pattern.permute.xlu0 0
    %131 = vperm.xlu0 %130, %v88
    %v132 = vpop.permute.xlu0 %131
    %133 = vset.pattern.permute.xlu0 0
    %134 = vperm.xlu0 %133, %v89
    %v135 = vpop.permute.xlu0 %134
    %136 = vset.pattern.permute.xlu0 0
    %137 = vperm.xlu0 %136, %v90
    %v138 = vpop.permute.xlu0 %137
    %139 = vset.pattern.permute.xlu0 0
    %140 = vperm.xlu0 %139, %v91
    %v141 = vpop.permute.xlu0 %140
    %vm142 = vcmp.eq.s32.totalorder %v93, %v96
    %vm143 = vcmp.eq.s32.totalorder %v93, %v99
    %vm144 = vcmp.eq.s32.totalorder %v93, %v102
    %vm145 = vcmp.eq.s32.totalorder %v93, %v105
    %vm146 = vcmp.eq.s32.totalorder %v93, %v108
    %vm147 = vcmp.eq.s32.totalorder %v93, %v111
    %vm148 = vcmp.eq.s32.totalorder %v93, %v114
    %vm149 = vcmp.eq.s32.totalorder %v93, %v117
    %vm150 = vcmp.eq.s32.totalorder %v93, %v120
    %vm151 = vcmp.eq.s32.totalorder %v93, %v123
    %vm152 = vcmp.eq.s32.totalorder %v93, %v126
    %vm153 = vcmp.eq.s32.totalorder %v93, %v129
    %vm154 = vcmp.eq.s32.totalorder %v93, %v132
    %vm155 = vcmp.eq.s32.totalorder %v93, %v135
    %vm156 = vcmp.eq.s32.totalorder %v93, %v138
    %vm157 = vcmp.eq.s32.totalorder %v93, %v141
    %v158 = vsel %vm142, 1, 0
    %v159 = vsel %vm143, 1, 0
    %v160 = vsel %vm144, 1, 0
    %v161 = vsel %vm145, 1, 0
    %v162 = vsel %vm146, 1, 0
    %v163 = vsel %vm147, 1, 0
    %v164 = vsel %vm148, 1, 0
    %v165 = vsel %vm149, 1, 0
    %v166 = vsel %vm150, 1, 0
    %v167 = vsel %vm151, 1, 0
    %v168 = vsel %vm152, 1, 0
    %v169 = vsel %vm153, 1, 0
    %v170 = vsel %vm154, 1, 0
    %v171 = vsel %vm155, 1, 0
    %v172 = vsel %vm156, 1, 0
    %v173 = vsel %vm157, 1, 0
    %v174 = vcvt.s32.f32 %v158
    %v175 = vcvt.s32.f32 %v159
    %v176 = vcvt.s32.f32 %v160
    %v177 = vcvt.s32.f32 %v161
    %v178 = vcvt.s32.f32 %v162
    %v179 = vcvt.s32.f32 %v163
    %v180 = vcvt.s32.f32 %v164
    %v181 = vcvt.s32.f32 %v165
    %v182 = vcvt.s32.f32 %v166
    %v183 = vcvt.s32.f32 %v167
    %v184 = vcvt.s32.f32 %v168
    %v185 = vcvt.s32.f32 %v169
    %v186 = vcvt.s32.f32 %v170
    %v187 = vcvt.s32.f32 %v171
    %v188 = vcvt.s32.f32 %v172
    %v189 = vcvt.s32.f32 %v173
    %v190 = vld [vmem:[%s1] sm:$0xff]
    %v191 = vld [vmem:[%s1 + $0x8] sm:$0xff]
    %v192 = vld [vmem:[%s1 + $0x10] sm:$0xff]
    %v193 = vld [vmem:[%s1 + $0x18] sm:$0xff]
    %v194 = vld [vmem:[%s1 + $0x20] sm:$0xff]
    %v195 = vld [vmem:[%s1 + $0x28] sm:$0xff]
    %v196 = vld [vmem:[%s1 + $0x30] sm:$0xff]
    %v197 = vld [vmem:[%s1 + $0x38] sm:$0xff]
    %v198 = vld [vmem:[%s1 + $0x40] sm:$0xff]
    %v199 = vld [vmem:[%s1 + $0x48] sm:$0xff]
    %v200 = vld [vmem:[%s1 + $0x50] sm:$0xff]
    %v201 = vld [vmem:[%s1 + $0x58] sm:$0xff]
    %v202 = vld [vmem:[%s1 + $0x60] sm:$0xff]
    %v203 = vld [vmem:[%s1 + $0x68] sm:$0xff]
    %v204 = vld [vmem:[%s1 + $0x70] sm:$0xff]
    %v205 = vld [vmem:[%s1 + $0x78] sm:$0xff]
    %206 = vmatpush.msra.mxu0 %v205
    %207 = vmatpush.msra.mxu0 %v204
    %208 = vmatpush.msra.mxu0 %v203
    %209 = vmatpush.msra.mxu0 %v202
    %210 = vmatpush.msra.mxu0 %v201
    %211 = vmatpush.msra.mxu0 %v200
    %212 = vmatpush.msra.mxu0 %v199
    %213 = vmatpush.msra.mxu0 %v198
    %214 = vmatpush.msra.mxu0 %v197
    %215 = vmatpush.msra.mxu0 %v196
    %216 = vmatpush.msra.mxu0 %v195
    %217 = vmatpush.msra.mxu0 %v194
    %218 = vmatpush.msra.mxu0 %v193
    %219 = vmatpush.msra.mxu0 %v192
    %220 = vmatpush.msra.mxu0 %v191
    %221 = vmatpush.msra.mxu0 %v190
    %222 = vmatmul.f32.gmra.mxu0 %v174
    %v223 = vpop.f32.mrf.mxu0
    %v224 = vadd.f32 0.0, %v223
    %225 = vmatmul.f32.gmra.mxu0 %v175
    %v226 = vpop.f32.mrf.mxu0
    %v227 = vadd.f32 0.0, %v226
    %228 = vmatmul.f32.gmra.mxu0 %v176
    %v229 = vpop.f32.mrf.mxu0
    %v230 = vadd.f32 0.0, %v229
    %231 = vmatmul.f32.gmra.mxu0 %v177
    %v232 = vpop.f32.mrf.mxu0
    %v233 = vadd.f32 0.0, %v232
    %234 = vmatmul.f32.gmra.mxu0 %v178
    %v235 = vpop.f32.mrf.mxu0
    %v236 = vadd.f32 0.0, %v235
    %237 = vmatmul.f32.gmra.mxu0 %v179
    %v238 = vpop.f32.mrf.mxu0
    %v239 = vadd.f32 0.0, %v238
    %240 = vmatmul.f32.gmra.mxu0 %v180
    %v241 = vpop.f32.mrf.mxu0
    %v242 = vadd.f32 0.0, %v241
    %243 = vmatmul.f32.gmra.mxu0 %v181
    %v244 = vpop.f32.mrf.mxu0
    %v245 = vadd.f32 0.0, %v244
    %246 = vmatmul.f32.gmra.mxu0 %v182
    %v247 = vpop.f32.mrf.mxu0
    %v248 = vadd.f32 0.0, %v247
    %249 = vmatmul.f32.gmra.mxu0 %v183
    %v250 = vpop.f32.mrf.mxu0
    %v251 = vadd.f32 0.0, %v250
    %252 = vmatmul.f32.gmra.mxu0 %v184
    %v253 = vpop.f32.mrf.mxu0
    %v254 = vadd.f32 0.0, %v253
    %255 = vmatmul.f32.gmra.mxu0 %v185
    %v256 = vpop.f32.mrf.mxu0
    %v257 = vadd.f32 0.0, %v256
    %258 = vmatmul.f32.gmra.mxu0 %v186
    %v259 = vpop.f32.mrf.mxu0
    %v260 = vadd.f32 0.0, %v259
    %261 = vmatmul.f32.gmra.mxu0 %v187
    %v262 = vpop.f32.mrf.mxu0
    %v263 = vadd.f32 0.0, %v262
    %264 = vmatmul.f32.gmra.mxu0 %v188
    %v265 = vpop.f32.mrf.mxu0
    %v266 = vadd.f32 0.0, %v265
    %267 = vmatmul.f32.gmra.mxu0 %v189
    %v268 = vpop.f32.mrf.mxu0
    %v269 = vadd.f32 0.0, %v268
    %270 = vdwg.mxu0
    %v271 = vld [vmem:[%s2] sm:$0xff]
    %v272 = vld [vmem:[%s2 + $0x8] sm:$0xff]
    %v273 = vadd.f32 %v224, %v271
    %v274 = vadd.f32 %v227, %v272
    %v275 = vadd.f32 %v230, %v271
    %v276 = vadd.f32 %v233, %v272
    %v277 = vadd.f32 %v236, %v271
    %v278 = vadd.f32 %v239, %v272
    %v279 = vadd.f32 %v242, %v271
    %v280 = vadd.f32 %v245, %v272
    %v281 = vadd.f32 %v248, %v271
    %v282 = vadd.f32 %v251, %v272
    %v283 = vadd.f32 %v254, %v271
    %v284 = vadd.f32 %v257, %v272
    %v285 = vadd.f32 %v260, %v271
    %v286 = vadd.f32 %v263, %v272
    %v287 = vadd.f32 %v266, %v271
    %v288 = vadd.f32 %v269, %v272
    %v289 = vlaneseq
    %v290 = vshrl.u32 %v289, 7
    %v291 = vadd.s32 %v290, 8
    %vm292 = vcmp.ge.s32.totalorder %v290, %v93
    %vm293 = vcmp.ge.s32.totalorder %v291, %v93
    %v294 = vld [vmem:[%s10] sm:$0x1]
    %v295 = vld [vmem:[%s11] sm:$0x1]
    %vm296 = vcmask 261120
    %v297 = vsel %vm296, %v273, 0.0
    %298 = vadd.xlane.f32.xlu0 %v297
    %v299 = vpop.xlane.xlu0 %298
    %v300 = vsel %vm296, %v274, 0.0
    %301 = vadd.xlane.f32.xlu0 %v300
    %v302 = vpop.xlane.xlu0 %301
    %v303 = vsel %vm296, %v275, 0.0
    %304 = vadd.xlane.f32.xlu0 %v303
    %v305 = vpop.xlane.xlu0 %304
    %v306 = vsel %vm296, %v276, 0.0
    %307 = vadd.xlane.f32.xlu0 %v306
    %v308 = vpop.xlane.xlu0 %307
    %v309 = vsel %vm296, %v277, 0.0
    %310 = vadd.xlane.f32.xlu0 %v309
    %v311 = vpop.xlane.xlu0 %310
    %v312 = vsel %vm296, %v278, 0.0
    %313 = vadd.xlane.f32.xlu0 %v312
    %v314 = vpop.xlane.xlu0 %313
    %v315 = vsel %vm296, %v279, 0.0
    %316 = vadd.xlane.f32.xlu0 %v315
    %v317 = vpop.xlane.xlu0 %316
    %v318 = vsel %vm296, %v280, 0.0
    %319 = vadd.xlane.f32.xlu0 %v318
    %v320 = vpop.xlane.xlu0 %319
    %v321 = vsel %vm296, %v281, 0.0
    %322 = vadd.xlane.f32.xlu0 %v321
    %v323 = vpop.xlane.xlu0 %322
    %v324 = vsel %vm296, %v282, 0.0
    %325 = vadd.xlane.f32.xlu0 %v324
    %v326 = vpop.xlane.xlu0 %325
    %v327 = vsel %vm296, %v283, 0.0
    %328 = vadd.xlane.f32.xlu0 %v327
    %v329 = vpop.xlane.xlu0 %328
    %v330 = vsel %vm296, %v284, 0.0
    %331 = vadd.xlane.f32.xlu0 %v330
    %v332 = vpop.xlane.xlu0 %331
    %v333 = vsel %vm296, %v285, 0.0
    %334 = vadd.xlane.f32.xlu0 %v333
    %v335 = vpop.xlane.xlu0 %334
    %v336 = vsel %vm296, %v286, 0.0
    %337 = vadd.xlane.f32.xlu0 %v336
    %v338 = vpop.xlane.xlu0 %337
    %v339 = vsel %vm296, %v287, 0.0
    %340 = vadd.xlane.f32.xlu0 %v339
    %v341 = vpop.xlane.xlu0 %340
    %v342 = vsel %vm296, %v288, 0.0
    %343 = vadd.xlane.f32.xlu0 %v342
    %v344 = vpop.xlane.xlu0 %343
    %v345 = vrcp.pop 32.0
    %v346 = vmul.f32 32.0, %v345
    %v347 = vsub.f32 1.0, %v346
    %v348 = vmul.f32 %v345, %v347
    %v349 = vadd.f32 %v345, %v348
    %vm350 = vweird.f32 %v345
    %v351 = vsel %vm350, %v345, %v349
    %v352 = vmul.f32 %v299, %v351
    %v353 = vmul.f32 %v302, %v351
    %v354 = vmul.f32 %v305, %v351
    %v355 = vmul.f32 %v308, %v351
    %v356 = vmul.f32 %v311, %v351
    %v357 = vmul.f32 %v314, %v351
    %v358 = vmul.f32 %v317, %v351
    %v359 = vmul.f32 %v320, %v351
    %v360 = vmul.f32 %v323, %v351
    %v361 = vmul.f32 %v326, %v351
    %v362 = vmul.f32 %v329, %v351
    %v363 = vmul.f32 %v332, %v351
    %v364 = vmul.f32 %v335, %v351
    %v365 = vmul.f32 %v338, %v351
    %v366 = vmul.f32 %v341, %v351
    %v367 = vmul.f32 %v344, %v351
    %v368 = vsub.f32 %v273, %v352
    %v369 = vsub.f32 %v274, %v353
    %v370 = vsub.f32 %v275, %v354
    %v371 = vsub.f32 %v276, %v355
    %v372 = vsub.f32 %v277, %v356
    %v373 = vsub.f32 %v278, %v357
    %v374 = vsub.f32 %v279, %v358
    %v375 = vsub.f32 %v280, %v359
    %v376 = vsub.f32 %v281, %v360
    %v377 = vsub.f32 %v282, %v361
    %v378 = vsub.f32 %v283, %v362
    %v379 = vsub.f32 %v284, %v363
    %v380 = vsub.f32 %v285, %v364
    %v381 = vsub.f32 %v286, %v365
    %v382 = vsub.f32 %v287, %v366
    %v383 = vsub.f32 %v288, %v367
    %v384 = vmul.f32 %v368, %v368
    %v385 = vmul.f32 %v369, %v369
    %v386 = vmul.f32 %v370, %v370
    %v387 = vmul.f32 %v371, %v371
    %v388 = vmul.f32 %v372, %v372
    %v389 = vmul.f32 %v373, %v373
    %v390 = vmul.f32 %v374, %v374
    %v391 = vmul.f32 %v375, %v375
    %v392 = vmul.f32 %v376, %v376
    %v393 = vmul.f32 %v377, %v377
    %v394 = vmul.f32 %v378, %v378
    %v395 = vmul.f32 %v379, %v379
    %v396 = vmul.f32 %v380, %v380
    %v397 = vmul.f32 %v381, %v381
    %v398 = vmul.f32 %v382, %v382
    %v399 = vmul.f32 %v383, %v383
    %v400 = vsel %vm296, %v384, 0.0
    %401 = vadd.xlane.f32.xlu0 %v400
    %v402 = vpop.xlane.xlu0 %401
    %v403 = vsel %vm296, %v385, 0.0
    %404 = vadd.xlane.f32.xlu0 %v403
    %v405 = vpop.xlane.xlu0 %404
    %v406 = vsel %vm296, %v386, 0.0
    %407 = vadd.xlane.f32.xlu0 %v406
    %v408 = vpop.xlane.xlu0 %407
    %v409 = vsel %vm296, %v387, 0.0
    %410 = vadd.xlane.f32.xlu0 %v409
    %v411 = vpop.xlane.xlu0 %410
    %v412 = vsel %vm296, %v388, 0.0
    %413 = vadd.xlane.f32.xlu0 %v412
    %v414 = vpop.xlane.xlu0 %413
    %v415 = vsel %vm296, %v389, 0.0
    %416 = vadd.xlane.f32.xlu0 %v415
    %v417 = vpop.xlane.xlu0 %416
    %v418 = vsel %vm296, %v390, 0.0
    %419 = vadd.xlane.f32.xlu0 %v418
    %v420 = vpop.xlane.xlu0 %419
    %v421 = vsel %vm296, %v391, 0.0
    %422 = vadd.xlane.f32.xlu0 %v421
    %v423 = vpop.xlane.xlu0 %422
    %v424 = vsel %vm296, %v392, 0.0
    %425 = vadd.xlane.f32.xlu0 %v424
    %v426 = vpop.xlane.xlu0 %425
    %v427 = vsel %vm296, %v393, 0.0
    %428 = vadd.xlane.f32.xlu0 %v427
    %v429 = vpop.xlane.xlu0 %428
    %v430 = vsel %vm296, %v394, 0.0
    %431 = vadd.xlane.f32.xlu0 %v430
    %v432 = vpop.xlane.xlu0 %431
    %v433 = vsel %vm296, %v395, 0.0
    %434 = vadd.xlane.f32.xlu0 %v433
    %v435 = vpop.xlane.xlu0 %434
    %v436 = vsel %vm296, %v396, 0.0
    %437 = vadd.xlane.f32.xlu0 %v436
    %v438 = vpop.xlane.xlu0 %437
    %v439 = vsel %vm296, %v397, 0.0
    %440 = vadd.xlane.f32.xlu0 %v439
    %v441 = vpop.xlane.xlu0 %440
    %v442 = vsel %vm296, %v398, 0.0
    %443 = vadd.xlane.f32.xlu0 %v442
    %v444 = vpop.xlane.xlu0 %443
    %v445 = vsel %vm296, %v399, 0.0
    %446 = vadd.xlane.f32.xlu0 %v445
    %v447 = vpop.xlane.xlu0 %446
    %v448 = vmul.f32 %v402, %v351
    %v449 = vmul.f32 %v405, %v351
    %v450 = vmul.f32 %v408, %v351
    %v451 = vmul.f32 %v411, %v351
    %v452 = vmul.f32 %v414, %v351
    %v453 = vmul.f32 %v417, %v351
    %v454 = vmul.f32 %v420, %v351
    %v455 = vmul.f32 %v423, %v351
    %v456 = vmul.f32 %v426, %v351
    %v457 = vmul.f32 %v429, %v351
    %v458 = vmul.f32 %v432, %v351
    %v459 = vmul.f32 %v435, %v351
    %v460 = vmul.f32 %v438, %v351
    %v461 = vmul.f32 %v441, %v351
    %v462 = vmul.f32 %v444, %v351
    %v463 = vmul.f32 %v447, %v351
    %v464 = vadd.f32 %v448, 1e-05
    %v465 = vadd.f32 %v449, 1e-05
    %v466 = vadd.f32 %v450, 1e-05
    %v467 = vadd.f32 %v451, 1e-05
    %v468 = vadd.f32 %v452, 1e-05
    %v469 = vadd.f32 %v453, 1e-05
    %v470 = vadd.f32 %v454, 1e-05
    %v471 = vadd.f32 %v455, 1e-05
    %v472 = vadd.f32 %v456, 1e-05
    %v473 = vadd.f32 %v457, 1e-05
    %v474 = vadd.f32 %v458, 1e-05
    %v475 = vadd.f32 %v459, 1e-05
    %v476 = vadd.f32 %v460, 1e-05
    %v477 = vadd.f32 %v461, 1e-05
    %v478 = vadd.f32 %v462, 1e-05
    %v479 = vadd.f32 %v463, 1e-05
    %v480 = vrsqrt.pop %v464
    %v481 = vmul.f32 %v480, %v464
    %v482 = vmul.f32 %v481, %v480
    %v483 = vmul.f32 0.5, %v482
    %v484 = vsub.f32 1.5, %v483
    %v485 = vmul.f32 %v480, %v484
    %vm486 = vweird.f32 %v464
    %vm487 = vweird.f32 %v480
    %vm488 = vmor %vm486, %vm487
    %v489 = vsel %vm488, %v480, %v485
    %v490 = vrsqrt.pop %v465
    %v491 = vmul.f32 %v490, %v465
    %v492 = vmul.f32 %v491, %v490
    %v493 = vmul.f32 0.5, %v492
    %v494 = vsub.f32 1.5, %v493
    %v495 = vmul.f32 %v490, %v494
    %vm496 = vweird.f32 %v465
    %vm497 = vweird.f32 %v490
    %vm498 = vmor %vm496, %vm497
    %v499 = vsel %vm498, %v490, %v495
    %v500 = vrsqrt.pop %v466
    %v501 = vmul.f32 %v500, %v466
    %v502 = vmul.f32 %v501, %v500
    %v503 = vmul.f32 0.5, %v502
    %v504 = vsub.f32 1.5, %v503
    %v505 = vmul.f32 %v500, %v504
    %vm506 = vweird.f32 %v466
    %vm507 = vweird.f32 %v500
    %vm508 = vmor %vm506, %vm507
    %v509 = vsel %vm508, %v500, %v505
    %v510 = vrsqrt.pop %v467
    %v511 = vmul.f32 %v510, %v467
    %v512 = vmul.f32 %v511, %v510
    %v513 = vmul.f32 0.5, %v512
    %v514 = vsub.f32 1.5, %v513
    %v515 = vmul.f32 %v510, %v514
    %vm516 = vweird.f32 %v467
    %vm517 = vweird.f32 %v510
    %vm518 = vmor %vm516, %vm517
    %v519 = vsel %vm518, %v510, %v515
    %v520 = vrsqrt.pop %v468
    %v521 = vmul.f32 %v520, %v468
    %v522 = vmul.f32 %v521, %v520
    %v523 = vmul.f32 0.5, %v522
    %v524 = vsub.f32 1.5, %v523
    %v525 = vmul.f32 %v520, %v524
    %vm526 = vweird.f32 %v468
    %vm527 = vweird.f32 %v520
    %vm528 = vmor %vm526, %vm527
    %v529 = vsel %vm528, %v520, %v525
    %v530 = vrsqrt.pop %v469
    %v531 = vmul.f32 %v530, %v469
    %v532 = vmul.f32 %v531, %v530
    %v533 = vmul.f32 0.5, %v532
    %v534 = vsub.f32 1.5, %v533
    %v535 = vmul.f32 %v530, %v534
    %vm536 = vweird.f32 %v469
    %vm537 = vweird.f32 %v530
    %vm538 = vmor %vm536, %vm537
    %v539 = vsel %vm538, %v530, %v535
    %v540 = vrsqrt.pop %v470
    %v541 = vmul.f32 %v540, %v470
    %v542 = vmul.f32 %v541, %v540
    %v543 = vmul.f32 0.5, %v542
    %v544 = vsub.f32 1.5, %v543
    %v545 = vmul.f32 %v540, %v544
    %vm546 = vweird.f32 %v470
    %vm547 = vweird.f32 %v540
    %vm548 = vmor %vm546, %vm547
    %v549 = vsel %vm548, %v540, %v545
    %v550 = vrsqrt.pop %v471
    %v551 = vmul.f32 %v550, %v471
    %v552 = vmul.f32 %v551, %v550
    %v553 = vmul.f32 0.5, %v552
    %v554 = vsub.f32 1.5, %v553
    %v555 = vmul.f32 %v550, %v554
    %vm556 = vweird.f32 %v471
    %vm557 = vweird.f32 %v550
    %vm558 = vmor %vm556, %vm557
    %v559 = vsel %vm558, %v550, %v555
    %v560 = vrsqrt.pop %v472
    %v561 = vmul.f32 %v560, %v472
    %v562 = vmul.f32 %v561, %v560
    %v563 = vmul.f32 0.5, %v562
    %v564 = vsub.f32 1.5, %v563
    %v565 = vmul.f32 %v560, %v564
    %vm566 = vweird.f32 %v472
    %vm567 = vweird.f32 %v560
    %vm568 = vmor %vm566, %vm567
    %v569 = vsel %vm568, %v560, %v565
    %v570 = vrsqrt.pop %v473
    %v571 = vmul.f32 %v570, %v473
    %v572 = vmul.f32 %v571, %v570
    %v573 = vmul.f32 0.5, %v572
    %v574 = vsub.f32 1.5, %v573
    %v575 = vmul.f32 %v570, %v574
    %vm576 = vweird.f32 %v473
    %vm577 = vweird.f32 %v570
    %vm578 = vmor %vm576, %vm577
    %v579 = vsel %vm578, %v570, %v575
    %v580 = vrsqrt.pop %v474
    %v581 = vmul.f32 %v580, %v474
    %v582 = vmul.f32 %v581, %v580
    %v583 = vmul.f32 0.5, %v582
    %v584 = vsub.f32 1.5, %v583
    %v585 = vmul.f32 %v580, %v584
    %vm586 = vweird.f32 %v474
    %vm587 = vweird.f32 %v580
    %vm588 = vmor %vm586, %vm587
    %v589 = vsel %vm588, %v580, %v585
    %v590 = vrsqrt.pop %v475
    %v591 = vmul.f32 %v590, %v475
    %v592 = vmul.f32 %v591, %v590
    %v593 = vmul.f32 0.5, %v592
    %v594 = vsub.f32 1.5, %v593
    %v595 = vmul.f32 %v590, %v594
    %vm596 = vweird.f32 %v475
    %vm597 = vweird.f32 %v590
    %vm598 = vmor %vm596, %vm597
    %v599 = vsel %vm598, %v590, %v595
    %v600 = vrsqrt.pop %v476
    %v601 = vmul.f32 %v600, %v476
    %v602 = vmul.f32 %v601, %v600
    %v603 = vmul.f32 0.5, %v602
    %v604 = vsub.f32 1.5, %v603
    %v605 = vmul.f32 %v600, %v604
    %vm606 = vweird.f32 %v476
    %vm607 = vweird.f32 %v600
    %vm608 = vmor %vm606, %vm607
    %v609 = vsel %vm608, %v600, %v605
    %v610 = vrsqrt.pop %v477
    %v611 = vmul.f32 %v610, %v477
    %v612 = vmul.f32 %v611, %v610
    %v613 = vmul.f32 0.5, %v612
    %v614 = vsub.f32 1.5, %v613
    %v615 = vmul.f32 %v610, %v614
    %vm616 = vweird.f32 %v477
    %vm617 = vweird.f32 %v610
    %vm618 = vmor %vm616, %vm617
    %v619 = vsel %vm618, %v610, %v615
    %v620 = vrsqrt.pop %v478
    %v621 = vmul.f32 %v620, %v478
    %v622 = vmul.f32 %v621, %v620
    %v623 = vmul.f32 0.5, %v622
    %v624 = vsub.f32 1.5, %v623
    %v625 = vmul.f32 %v620, %v624
    %vm626 = vweird.f32 %v478
    %vm627 = vweird.f32 %v620
    %vm628 = vmor %vm626, %vm627
    %v629 = vsel %vm628, %v620, %v625
    %v630 = vrsqrt.pop %v479
    %v631 = vmul.f32 %v630, %v479
    %v632 = vmul.f32 %v631, %v630
    %v633 = vmul.f32 0.5, %v632
    %v634 = vsub.f32 1.5, %v633
    %v635 = vmul.f32 %v630, %v634
    %vm636 = vweird.f32 %v479
    %vm637 = vweird.f32 %v630
    %vm638 = vmor %vm636, %vm637
    %v639 = vsel %vm638, %v630, %v635
    %v640 = vmul.f32 %v368, %v489
    %v641 = vmul.f32 %v369, %v499
    %v642 = vmul.f32 %v370, %v509
    %v643 = vmul.f32 %v371, %v519
    %v644 = vmul.f32 %v372, %v529
    %v645 = vmul.f32 %v373, %v539
    %v646 = vmul.f32 %v374, %v549
    %v647 = vmul.f32 %v375, %v559
    %v648 = vmul.f32 %v376, %v569
    %v649 = vmul.f32 %v377, %v579
    %v650 = vmul.f32 %v378, %v589
    %v651 = vmul.f32 %v379, %v599
    %v652 = vmul.f32 %v380, %v609
    %v653 = vmul.f32 %v381, %v619
    %v654 = vmul.f32 %v382, %v629
    %v655 = vmul.f32 %v383, %v639
    %v657 = vperm.slane %v294, 0
    %v659 = vmul.f32 %v640, %v657
    %v660 = vmul.f32 %v641, %v657
    %v661 = vmul.f32 %v642, %v657
    %v662 = vmul.f32 %v643, %v657
    %v663 = vmul.f32 %v644, %v657
    %v664 = vmul.f32 %v645, %v657
    %v665 = vmul.f32 %v646, %v657
    %v666 = vmul.f32 %v647, %v657
    %v667 = vmul.f32 %v648, %v657
    %v668 = vmul.f32 %v649, %v657
    %v669 = vmul.f32 %v650, %v657
    %v670 = vmul.f32 %v651, %v657
    %v671 = vmul.f32 %v652, %v657
    %v672 = vmul.f32 %v653, %v657
    %v673 = vmul.f32 %v654, %v657
    %v674 = vmul.f32 %v655, %v657
    %v676 = vperm.slane %v295, 0
    %v678 = vadd.f32 %v659, %v676
    %v679 = vadd.f32 %v660, %v676
    %v680 = vadd.f32 %v661, %v676
    %v681 = vadd.f32 %v662, %v676
    %v682 = vadd.f32 %v663, %v676
    %v683 = vadd.f32 %v664, %v676
    %v684 = vadd.f32 %v665, %v676
    %v685 = vadd.f32 %v666, %v676
    %v686 = vadd.f32 %v667, %v676
    %v687 = vadd.f32 %v668, %v676
    %v688 = vadd.f32 %v669, %v676
    %v689 = vadd.f32 %v670, %v676
    %v690 = vadd.f32 %v671, %v676
    %v691 = vadd.f32 %v672, %v676
    %v692 = vadd.f32 %v673, %v676
    %v693 = vadd.f32 %v674, %v676
    %v694 = vld [vmem:[%s5] sm:$0x1]
    %v696 = vperm.slane %v694, 0
    %v698 = vadd.f32 %v273, %v696
    %v699 = vadd.f32 %v274, %v696
    %v700 = vadd.f32 %v275, %v696
    %v701 = vadd.f32 %v276, %v696
    %v702 = vadd.f32 %v277, %v696
    %v703 = vadd.f32 %v278, %v696
    %v704 = vadd.f32 %v279, %v696
    %v705 = vadd.f32 %v280, %v696
    %v706 = vadd.f32 %v281, %v696
    %v707 = vadd.f32 %v282, %v696
    %v708 = vadd.f32 %v283, %v696
    %v709 = vadd.f32 %v284, %v696
    %v710 = vadd.f32 %v285, %v696
    %v711 = vadd.f32 %v286, %v696
    %v712 = vadd.f32 %v287, %v696
    %v713 = vadd.f32 %v288, %v696
    %v714 = vld [vmem:[%s3] sm:$0xff]
    %v715 = vld [vmem:[%s3 + $0x8] sm:$0xff]
    %v716 = vld [vmem:[%s3 + $0x10] sm:$0xff]
    %v717 = vld [vmem:[%s3 + $0x18] sm:$0xff]
    %v719 = vsel %vm296, %v678, 0
    %v722 = vsel %vm296, %v679, 0
    %v725 = vsel %vm296, %v680, 0
    %v728 = vsel %vm296, %v681, 0
    %v731 = vsel %vm296, %v682, 0
    %v734 = vsel %vm296, %v683, 0
    %v737 = vsel %vm296, %v684, 0
    %v740 = vsel %vm296, %v685, 0
    %v743 = vsel %vm296, %v686, 0
    %v746 = vsel %vm296, %v687, 0
    %v749 = vsel %vm296, %v688, 0
    %v752 = vsel %vm296, %v689, 0
    %v755 = vsel %vm296, %v690, 0
    %v758 = vsel %vm296, %v691, 0
    %v761 = vsel %vm296, %v692, 0
    %v764 = vsel %vm296, %v693, 0
    %766 = vmatpush.msra.mxu0 0.0
    %767 = vmatpush.msra.mxu0 0.0
    %768 = vmatpush.msra.mxu0 0.0
    %769 = vmatpush.msra.mxu0 0.0
    %770 = vmatpush.msra.mxu0 0.0
    %771 = vmatpush.msra.mxu0 0.0
    %772 = vmatpush.msra.mxu0 0.0
    %773 = vmatpush.msra.mxu0 0.0
    %774 = vmatpush.msra.mxu0 0.0
    %775 = vmatpush.msra.mxu0 0.0
    %776 = vmatpush.msra.mxu0 0.0
    %777 = vmatpush.msra.mxu0 0.0
    %778 = vmatpush.msra.mxu0 %v717
    %779 = vmatpush.msra.mxu0 %v716
    %780 = vmatpush.msra.mxu0 %v715
    %781 = vmatpush.msra.mxu0 %v714
    %782 = vmatmul.f32.gmra.mxu0 %v719
    %v783 = vpop.f32.mrf.mxu0
    %v784 = vadd.f32 0.0, %v783
    %785 = vmatmul.f32.gmra.mxu0 %v722
    %v786 = vpop.f32.mrf.mxu0
    %v787 = vadd.f32 0.0, %v786
    %788 = vmatmul.f32.gmra.mxu0 %v725
    %v789 = vpop.f32.mrf.mxu0
    %v790 = vadd.f32 0.0, %v789
    %791 = vmatmul.f32.gmra.mxu0 %v728
    %v792 = vpop.f32.mrf.mxu0
    %v793 = vadd.f32 0.0, %v792
    %794 = vmatmul.f32.gmra.mxu0 %v731
    %v795 = vpop.f32.mrf.mxu0
    %v796 = vadd.f32 0.0, %v795
    %797 = vmatmul.f32.gmra.mxu0 %v734
    %v798 = vpop.f32.mrf.mxu0
    %v799 = vadd.f32 0.0, %v798
    %800 = vmatmul.f32.gmra.mxu0 %v737
    %v801 = vpop.f32.mrf.mxu0
    %v802 = vadd.f32 0.0, %v801
    %803 = vmatmul.f32.gmra.mxu0 %v740
    %v804 = vpop.f32.mrf.mxu0
    %v805 = vadd.f32 0.0, %v804
    %806 = vmatmul.f32.gmra.mxu0 %v743
    %v807 = vpop.f32.mrf.mxu0
    %v808 = vadd.f32 0.0, %v807
    %809 = vmatmul.f32.gmra.mxu0 %v746
    %v810 = vpop.f32.mrf.mxu0
    %v811 = vadd.f32 0.0, %v810
    %812 = vmatmul.f32.gmra.mxu0 %v749
    %v813 = vpop.f32.mrf.mxu0
    %v814 = vadd.f32 0.0, %v813
    %815 = vmatmul.f32.gmra.mxu0 %v752
    %v816 = vpop.f32.mrf.mxu0
    %v817 = vadd.f32 0.0, %v816
    %818 = vmatmul.f32.gmra.mxu0 %v755
    %v819 = vpop.f32.mrf.mxu0
    %v820 = vadd.f32 0.0, %v819
    %821 = vmatmul.f32.gmra.mxu0 %v758
    %v822 = vpop.f32.mrf.mxu0
    %v823 = vadd.f32 0.0, %v822
    %824 = vmatmul.f32.gmra.mxu0 %v761
    %v825 = vpop.f32.mrf.mxu0
    %v826 = vadd.f32 0.0, %v825
    %827 = vmatmul.f32.gmra.mxu0 %v764
    %v828 = vpop.f32.mrf.mxu0
    %v829 = vadd.f32 0.0, %v828
    %830 = vdwg.mxu0
    %v831 = vld [vmem:[#allocation2] sm:$0xff]
    %v832 = vld [vmem:[#allocation2 + $0x8] sm:$0xff]
    %v833 = vld [vmem:[#allocation2 + $0x10] sm:$0xff]
    %v834 = vld [vmem:[#allocation2 + $0x18] sm:$0xff]
    %835 = vmatpush.msra.mxu0 0.0
    %836 = vmatpush.msra.mxu0 0.0
    %837 = vmatpush.msra.mxu0 0.0
    %838 = vmatpush.msra.mxu0 0.0
    %839 = vmatpush.msra.mxu0 0.0
    %840 = vmatpush.msra.mxu0 0.0
    %841 = vmatpush.msra.mxu0 0.0
    %842 = vmatpush.msra.mxu0 0.0
    %843 = vmatpush.msra.mxu0 0.0
    %844 = vmatpush.msra.mxu0 0.0
    %845 = vmatpush.msra.mxu0 0.0
    %846 = vmatpush.msra.mxu0 0.0
    %847 = vmatpush.msra.mxu0 %v834
    %848 = vmatpush.msra.mxu0 %v833
    %849 = vmatpush.msra.mxu0 %v832
    %850 = vmatpush.msra.mxu0 %v831
    %851 = vmatmul.f32.gmra.mxu0 %v719
    %v852 = vpop.f32.mrf.mxu0
    %v853 = vadd.f32 0.0, %v852
    %854 = vmatmul.f32.gmra.mxu0 %v722
    %v855 = vpop.f32.mrf.mxu0
    %v856 = vadd.f32 0.0, %v855
    %857 = vmatmul.f32.gmra.mxu0 %v725
    %v858 = vpop.f32.mrf.mxu0
    %v859 = vadd.f32 0.0, %v858
    %860 = vmatmul.f32.gmra.mxu0 %v728
    %v861 = vpop.f32.mrf.mxu0
    %v862 = vadd.f32 0.0, %v861
    %863 = vmatmul.f32.gmra.mxu0 %v731
    %v864 = vpop.f32.mrf.mxu0
    %v865 = vadd.f32 0.0, %v864
    %866 = vmatmul.f32.gmra.mxu0 %v734
    %v867 = vpop.f32.mrf.mxu0
    %v868 = vadd.f32 0.0, %v867
    %869 = vmatmul.f32.gmra.mxu0 %v737
    %v870 = vpop.f32.mrf.mxu0
    %v871 = vadd.f32 0.0, %v870
    %872 = vmatmul.f32.gmra.mxu0 %v740
    %v873 = vpop.f32.mrf.mxu0
    %v874 = vadd.f32 0.0, %v873
    %875 = vmatmul.f32.gmra.mxu0 %v743
    %v876 = vpop.f32.mrf.mxu0
    %v877 = vadd.f32 0.0, %v876
    %878 = vmatmul.f32.gmra.mxu0 %v746
    %v879 = vpop.f32.mrf.mxu0
    %v880 = vadd.f32 0.0, %v879
    %881 = vmatmul.f32.gmra.mxu0 %v749
    %v882 = vpop.f32.mrf.mxu0
    %v883 = vadd.f32 0.0, %v882
    %884 = vmatmul.f32.gmra.mxu0 %v752
    %v885 = vpop.f32.mrf.mxu0
    %v886 = vadd.f32 0.0, %v885
    %887 = vmatmul.f32.gmra.mxu0 %v755
    %v888 = vpop.f32.mrf.mxu0
    %v889 = vadd.f32 0.0, %v888
    %890 = vmatmul.f32.gmra.mxu0 %v758
    %v891 = vpop.f32.mrf.mxu0
    %v892 = vadd.f32 0.0, %v891
    %893 = vmatmul.f32.gmra.mxu0 %v761
    %v894 = vpop.f32.mrf.mxu0
    %v895 = vadd.f32 0.0, %v894
    %896 = vmatmul.f32.gmra.mxu0 %v764
    %v897 = vpop.f32.mrf.mxu0
    %v898 = vadd.f32 0.0, %v897
    %899 = vdwg.mxu0
    %v901 = vsel %vm296, %v784, 0
    %v904 = vsel %vm296, %v787, 0
    %906 = vmatpush.xpose.msra.mxu0 0.0
    %907 = vmatpush.xpose.msra.mxu0 0.0
    %908 = vmatpush.xpose.msra.mxu0 0.0
    %909 = vmatpush.xpose.msra.mxu0 0.0
    %910 = vmatpush.xpose.msra.mxu0 0.0
    %911 = vmatpush.xpose.msra.mxu0 0.0
    %912 = vmatpush.xpose.msra.mxu0 0.0
    %913 = vmatpush.xpose.msra.mxu0 0.0
    %914 = vmatpush.xpose.msra.mxu0 0.0
    %915 = vmatpush.xpose.msra.mxu0 0.0
    %916 = vmatpush.xpose.msra.mxu0 0.0
    %917 = vmatpush.xpose.msra.mxu0 0.0
    %918 = vmatpush.xpose.msra.mxu0 0.0
    %919 = vmatpush.xpose.msra.mxu0 0.0
    %920 = vmatpush.xpose.msra.mxu0 %v722
    %921 = vmatpush.xpose.msra.mxu0 %v719
    %922 = vmatmul.f32.gmra.mxu0 %v901
    %v923 = vpop.f32.mrf.mxu0
    %v924 = vadd.f32 0.0, %v923
    %925 = vmatmul.f32.gmra.mxu0 %v904
    %v926 = vpop.f32.mrf.mxu0
    %v927 = vadd.f32 0.0, %v926
    %928 = vdwg.mxu0
    %v930 = vsel %vm296, %v790, 0
    %v933 = vsel %vm296, %v793, 0
    %935 = vmatpush.xpose.msra.mxu0 0.0
    %936 = vmatpush.xpose.msra.mxu0 0.0
    %937 = vmatpush.xpose.msra.mxu0 0.0
    %938 = vmatpush.xpose.msra.mxu0 0.0
    %939 = vmatpush.xpose.msra.mxu0 0.0
    %940 = vmatpush.xpose.msra.mxu0 0.0
    %941 = vmatpush.xpose.msra.mxu0 0.0
    %942 = vmatpush.xpose.msra.mxu0 0.0
    %943 = vmatpush.xpose.msra.mxu0 0.0
    %944 = vmatpush.xpose.msra.mxu0 0.0
    %945 = vmatpush.xpose.msra.mxu0 0.0
    %946 = vmatpush.xpose.msra.mxu0 0.0
    %947 = vmatpush.xpose.msra.mxu0 0.0
    %948 = vmatpush.xpose.msra.mxu0 0.0
    %949 = vmatpush.xpose.msra.mxu0 %v728
    %950 = vmatpush.xpose.msra.mxu0 %v725
    %951 = vmatmul.f32.gmra.mxu0 %v930
    %v952 = vpop.f32.mrf.mxu0
    %v953 = vadd.f32 0.0, %v952
    %954 = vmatmul.f32.gmra.mxu0 %v933
    %v955 = vpop.f32.mrf.mxu0
    %v956 = vadd.f32 0.0, %v955
    %957 = vdwg.mxu0
    %v959 = vsel %vm296, %v796, 0
    %v962 = vsel %vm296, %v799, 0
    %964 = vmatpush.xpose.msra.mxu0 0.0
    %965 = vmatpush.xpose.msra.mxu0 0.0
    %966 = vmatpush.xpose.msra.mxu0 0.0
    %967 = vmatpush.xpose.msra.mxu0 0.0
    %968 = vmatpush.xpose.msra.mxu0 0.0
    %969 = vmatpush.xpose.msra.mxu0 0.0
    %970 = vmatpush.xpose.msra.mxu0 0.0
    %971 = vmatpush.xpose.msra.mxu0 0.0
    %972 = vmatpush.xpose.msra.mxu0 0.0
    %973 = vmatpush.xpose.msra.mxu0 0.0
    %974 = vmatpush.xpose.msra.mxu0 0.0
    %975 = vmatpush.xpose.msra.mxu0 0.0
    %976 = vmatpush.xpose.msra.mxu0 0.0
    %977 = vmatpush.xpose.msra.mxu0 0.0
    %978 = vmatpush.xpose.msra.mxu0 %v734
    %979 = vmatpush.xpose.msra.mxu0 %v731
    %980 = vmatmul.f32.gmra.mxu0 %v959
    %v981 = vpop.f32.mrf.mxu0
    %v982 = vadd.f32 0.0, %v981
    %983 = vmatmul.f32.gmra.mxu0 %v962
    %v984 = vpop.f32.mrf.mxu0
    %v985 = vadd.f32 0.0, %v984
    %986 = vdwg.mxu0
    %v988 = vsel %vm296, %v802, 0
    %v991 = vsel %vm296, %v805, 0
    %993 = vmatpush.xpose.msra.mxu0 0.0
    %994 = vmatpush.xpose.msra.mxu0 0.0
    %995 = vmatpush.xpose.msra.mxu0 0.0
    %996 = vmatpush.xpose.msra.mxu0 0.0
    %997 = vmatpush.xpose.msra.mxu0 0.0
    %998 = vmatpush.xpose.msra.mxu0 0.0
    %999 = vmatpush.xpose.msra.mxu0 0.0
    %1000 = vmatpush.xpose.msra.mxu0 0.0
    %1001 = vmatpush.xpose.msra.mxu0 0.0
    %1002 = vmatpush.xpose.msra.mxu0 0.0
    %1003 = vmatpush.xpose.msra.mxu0 0.0
    %1004 = vmatpush.xpose.msra.mxu0 0.0
    %1005 = vmatpush.xpose.msra.mxu0 0.0
    %1006 = vmatpush.xpose.msra.mxu0 0.0
    %1007 = vmatpush.xpose.msra.mxu0 %v740
    %1008 = vmatpush.xpose.msra.mxu0 %v737
    %1009 = vmatmul.f32.gmra.mxu0 %v988
    %v1010 = vpop.f32.mrf.mxu0
    %v1011 = vadd.f32 0.0, %v1010
    %1012 = vmatmul.f32.gmra.mxu0 %v991
    %v1013 = vpop.f32.mrf.mxu0
    %v1014 = vadd.f32 0.0, %v1013
    %1015 = vdwg.mxu0
    %v1017 = vsel %vm296, %v808, 0
    %v1020 = vsel %vm296, %v811, 0
    %1022 = vmatpush.xpose.msra.mxu0 0.0
    %1023 = vmatpush.xpose.msra.mxu0 0.0
    %1024 = vmatpush.xpose.msra.mxu0 0.0
    %1025 = vmatpush.xpose.msra.mxu0 0.0
    %1026 = vmatpush.xpose.msra.mxu0 0.0
    %1027 = vmatpush.xpose.msra.mxu0 0.0
    %1028 = vmatpush.xpose.msra.mxu0 0.0
    %1029 = vmatpush.xpose.msra.mxu0 0.0
    %1030 = vmatpush.xpose.msra.mxu0 0.0
    %1031 = vmatpush.xpose.msra.mxu0 0.0
    %1032 = vmatpush.xpose.msra.mxu0 0.0
    %1033 = vmatpush.xpose.msra.mxu0 0.0
    %1034 = vmatpush.xpose.msra.mxu0 0.0
    %1035 = vmatpush.xpose.msra.mxu0 0.0
    %1036 = vmatpush.xpose.msra.mxu0 %v746
    %1037 = vmatpush.xpose.msra.mxu0 %v743
    %1038 = vmatmul.f32.gmra.mxu0 %v1017
    %v1039 = vpop.f32.mrf.mxu0
    %v1040 = vadd.f32 0.0, %v1039
    %1041 = vmatmul.f32.gmra.mxu0 %v1020
    %v1042 = vpop.f32.mrf.mxu0
    %v1043 = vadd.f32 0.0, %v1042
    %1044 = vdwg.mxu0
    %v1046 = vsel %vm296, %v814, 0
    %v1049 = vsel %vm296, %v817, 0
    %1051 = vmatpush.xpose.msra.mxu0 0.0
    %1052 = vmatpush.xpose.msra.mxu0 0.0
    %1053 = vmatpush.xpose.msra.mxu0 0.0
    %1054 = vmatpush.xpose.msra.mxu0 0.0
    %1055 = vmatpush.xpose.msra.mxu0 0.0
    %1056 = vmatpush.xpose.msra.mxu0 0.0
    %1057 = vmatpush.xpose.msra.mxu0 0.0
    %1058 = vmatpush.xpose.msra.mxu0 0.0
    %1059 = vmatpush.xpose.msra.mxu0 0.0
    %1060 = vmatpush.xpose.msra.mxu0 0.0
    %1061 = vmatpush.xpose.msra.mxu0 0.0
    %1062 = vmatpush.xpose.msra.mxu0 0.0
    %1063 = vmatpush.xpose.msra.mxu0 0.0
    %1064 = vmatpush.xpose.msra.mxu0 0.0
    %1065 = vmatpush.xpose.msra.mxu0 %v752
    %1066 = vmatpush.xpose.msra.mxu0 %v749
    %1067 = vmatmul.f32.gmra.mxu0 %v1046
    %v1068 = vpop.f32.mrf.mxu0
    %v1069 = vadd.f32 0.0, %v1068
    %1070 = vmatmul.f32.gmra.mxu0 %v1049
    %v1071 = vpop.f32.mrf.mxu0
    %v1072 = vadd.f32 0.0, %v1071
    %1073 = vdwg.mxu0
    %v1075 = vsel %vm296, %v820, 0
    %v1078 = vsel %vm296, %v823, 0
    %1080 = vmatpush.xpose.msra.mxu0 0.0
    %1081 = vmatpush.xpose.msra.mxu0 0.0
    %1082 = vmatpush.xpose.msra.mxu0 0.0
    %1083 = vmatpush.xpose.msra.mxu0 0.0
    %1084 = vmatpush.xpose.msra.mxu0 0.0
    %1085 = vmatpush.xpose.msra.mxu0 0.0
    %1086 = vmatpush.xpose.msra.mxu0 0.0
    %1087 = vmatpush.xpose.msra.mxu0 0.0
    %1088 = vmatpush.xpose.msra.mxu0 0.0
    %1089 = vmatpush.xpose.msra.mxu0 0.0
    %1090 = vmatpush.xpose.msra.mxu0 0.0
    %1091 = vmatpush.xpose.msra.mxu0 0.0
    %1092 = vmatpush.xpose.msra.mxu0 0.0
    %1093 = vmatpush.xpose.msra.mxu0 0.0
    %1094 = vmatpush.xpose.msra.mxu0 %v758
    %1095 = vmatpush.xpose.msra.mxu0 %v755
    %1096 = vmatmul.f32.gmra.mxu0 %v1075
    %v1097 = vpop.f32.mrf.mxu0
    %v1098 = vadd.f32 0.0, %v1097
    %1099 = vmatmul.f32.gmra.mxu0 %v1078
    %v1100 = vpop.f32.mrf.mxu0
    %v1101 = vadd.f32 0.0, %v1100
    %1102 = vdwg.mxu0
    %v1104 = vsel %vm296, %v826, 0
    %v1107 = vsel %vm296, %v829, 0
    %1109 = vmatpush.xpose.msra.mxu0 0.0
    %1110 = vmatpush.xpose.msra.mxu0 0.0
    %1111 = vmatpush.xpose.msra.mxu0 0.0
    %1112 = vmatpush.xpose.msra.mxu0 0.0
    %1113 = vmatpush.xpose.msra.mxu0 0.0
    %1114 = vmatpush.xpose.msra.mxu0 0.0
    %1115 = vmatpush.xpose.msra.mxu0 0.0
    %1116 = vmatpush.xpose.msra.mxu0 0.0
    %1117 = vmatpush.xpose.msra.mxu0 0.0
    %1118 = vmatpush.xpose.msra.mxu0 0.0
    %1119 = vmatpush.xpose.msra.mxu0 0.0
    %1120 = vmatpush.xpose.msra.mxu0 0.0
    %1121 = vmatpush.xpose.msra.mxu0 0.0
    %1122 = vmatpush.xpose.msra.mxu0 0.0
    %1123 = vmatpush.xpose.msra.mxu0 %v764
    %1124 = vmatpush.xpose.msra.mxu0 %v761
    %1125 = vmatmul.f32.gmra.mxu0 %v1104
    %v1126 = vpop.f32.mrf.mxu0
    %v1127 = vadd.f32 0.0, %v1126
    %1128 = vmatmul.f32.gmra.mxu0 %v1107
    %v1129 = vpop.f32.mrf.mxu0
    %v1130 = vadd.f32 0.0, %v1129
    %1131 = vdwg.mxu0
    %v1132 = vmul.f32 %v924, 0.31622776
    %v1133 = vmul.f32 %v927, 0.31622776
    %v1134 = vmul.f32 %v953, 0.31622776
    %v1135 = vmul.f32 %v956, 0.31622776
    %v1136 = vmul.f32 %v982, 0.31622776
    %v1137 = vmul.f32 %v985, 0.31622776
    %v1138 = vmul.f32 %v1011, 0.31622776
    %v1139 = vmul.f32 %v1014, 0.31622776
    %v1140 = vmul.f32 %v1040, 0.31622776
    %v1141 = vmul.f32 %v1043, 0.31622776
    %v1142 = vmul.f32 %v1069, 0.31622776
    %v1143 = vmul.f32 %v1072, 0.31622776
    %v1144 = vmul.f32 %v1098, 0.31622776
    %v1145 = vmul.f32 %v1101, 0.31622776
    %v1146 = vmul.f32 %v1127, 0.31622776
    %v1147 = vmul.f32 %v1130, 0.31622776
    %v1148 = vsel %vm292, 1, 0
    %v1149 = vsel %vm293, 1, 0
    %vm1150 = vcmp.eq.s32.totalorder %v1148, 1
    %vm1151 = vcmp.eq.s32.totalorder %v1149, 1
    %v1152 = vsel %vm1150, %v1132, -1e+30
    %v1153 = vsel %vm1151, %v1133, -1e+30
    %v1154 = vsel %vm1150, %v1134, -1e+30
    %v1155 = vsel %vm1151, %v1135, -1e+30
    %v1156 = vsel %vm1150, %v1136, -1e+30
    %v1157 = vsel %vm1151, %v1137, -1e+30
    %v1158 = vsel %vm1150, %v1138, -1e+30
    %v1159 = vsel %vm1151, %v1139, -1e+30
    %v1160 = vsel %vm1150, %v1140, -1e+30
    %v1161 = vsel %vm1151, %v1141, -1e+30
    %v1162 = vsel %vm1150, %v1142, -1e+30
    %v1163 = vsel %vm1151, %v1143, -1e+30
    %v1164 = vsel %vm1150, %v1144, -1e+30
    %v1165 = vsel %vm1151, %v1145, -1e+30
    %v1166 = vsel %vm1150, %v1146, -1e+30
    %v1167 = vsel %vm1151, %v1147, -1e+30
    %vm1168 = vcmask 130048
    %v1169 = vsel %vm1168, %v1152, -inf
    %1170 = vmax.xlane.f32.xlu0 %v1169
    %v1171 = vpop.xlane.xlu0 %1170
    %v1172 = vsel %vm1168, %v1153, -inf
    %1173 = vmax.xlane.f32.xlu0 %v1172
    %v1174 = vpop.xlane.xlu0 %1173
    %v1175 = vsel %vm1168, %v1154, -inf
    %1176 = vmax.xlane.f32.xlu0 %v1175
    %v1177 = vpop.xlane.xlu0 %1176
    %v1178 = vsel %vm1168, %v1155, -inf
    %1179 = vmax.xlane.f32.xlu0 %v1178
    %v1180 = vpop.xlane.xlu0 %1179
    %v1181 = vsel %vm1168, %v1156, -inf
    %1182 = vmax.xlane.f32.xlu0 %v1181
    %v1183 = vpop.xlane.xlu0 %1182
    %v1184 = vsel %vm1168, %v1157, -inf
    %1185 = vmax.xlane.f32.xlu0 %v1184
    %v1186 = vpop.xlane.xlu0 %1185
    %v1187 = vsel %vm1168, %v1158, -inf
    %1188 = vmax.xlane.f32.xlu0 %v1187
    %v1189 = vpop.xlane.xlu0 %1188
    %v1190 = vsel %vm1168, %v1159, -inf
    %1191 = vmax.xlane.f32.xlu0 %v1190
    %v1192 = vpop.xlane.xlu0 %1191
    %v1193 = vsel %vm1168, %v1160, -inf
    %1194 = vmax.xlane.f32.xlu0 %v1193
    %v1195 = vpop.xlane.xlu0 %1194
    %v1196 = vsel %vm1168, %v1161, -inf
    %1197 = vmax.xlane.f32.xlu0 %v1196
    %v1198 = vpop.xlane.xlu0 %1197
    %v1199 = vsel %vm1168, %v1162, -inf
    %1200 = vmax.xlane.f32.xlu0 %v1199
    %v1201 = vpop.xlane.xlu0 %1200
    %v1202 = vsel %vm1168, %v1163, -inf
    %1203 = vmax.xlane.f32.xlu0 %v1202
    %v1204 = vpop.xlane.xlu0 %1203
    %v1205 = vsel %vm1168, %v1164, -inf
    %1206 = vmax.xlane.f32.xlu0 %v1205
    %v1207 = vpop.xlane.xlu0 %1206
    %v1208 = vsel %vm1168, %v1165, -inf
    %1209 = vmax.xlane.f32.xlu0 %v1208
    %v1210 = vpop.xlane.xlu0 %1209
    %v1211 = vsel %vm1168, %v1166, -inf
    %1212 = vmax.xlane.f32.xlu0 %v1211
    %v1213 = vpop.xlane.xlu0 %1212
    %v1214 = vsel %vm1168, %v1167, -inf
    %1215 = vmax.xlane.f32.xlu0 %v1214
    %v1216 = vpop.xlane.xlu0 %1215
    %v1217 = vsub.f32 %v1152, %v1171
    %v1218 = vsub.f32 %v1153, %v1174
    %v1219 = vsub.f32 %v1154, %v1177
    %v1220 = vsub.f32 %v1155, %v1180
    %v1221 = vsub.f32 %v1156, %v1183
    %v1222 = vsub.f32 %v1157, %v1186
    %v1223 = vsub.f32 %v1158, %v1189
    %v1224 = vsub.f32 %v1159, %v1192
    %v1225 = vsub.f32 %v1160, %v1195
    %v1226 = vsub.f32 %v1161, %v1198
    %v1227 = vsub.f32 %v1162, %v1201
    %v1228 = vsub.f32 %v1163, %v1204
    %v1229 = vsub.f32 %v1164, %v1207
    %v1230 = vsub.f32 %v1165, %v1210
    %v1231 = vsub.f32 %v1166, %v1213
    %v1232 = vsub.f32 %v1167, %v1216
    %v1233 = vmul.f32 %v1217, 1.442695
    %v1234 = vpow.pop %v1233
    %v1235 = vmul.f32 %v1218, 1.442695
    %v1236 = vpow.pop %v1235
    %v1237 = vmul.f32 %v1219, 1.442695
    %v1238 = vpow.pop %v1237
    %v1239 = vmul.f32 %v1220, 1.442695
    %v1240 = vpow.pop %v1239
    %v1241 = vmul.f32 %v1221, 1.442695
    %v1242 = vpow.pop %v1241
    %v1243 = vmul.f32 %v1222, 1.442695
    %v1244 = vpow.pop %v1243
    %v1245 = vmul.f32 %v1223, 1.442695
    %v1246 = vpow.pop %v1245
    %v1247 = vmul.f32 %v1224, 1.442695
    %v1248 = vpow.pop %v1247
    %v1249 = vmul.f32 %v1225, 1.442695
    %v1250 = vpow.pop %v1249
    %v1251 = vmul.f32 %v1226, 1.442695
    %v1252 = vpow.pop %v1251
    %v1253 = vmul.f32 %v1227, 1.442695
    %v1254 = vpow.pop %v1253
    %v1255 = vmul.f32 %v1228, 1.442695
    %v1256 = vpow.pop %v1255
    %v1257 = vmul.f32 %v1229, 1.442695
    %v1258 = vpow.pop %v1257
    %v1259 = vmul.f32 %v1230, 1.442695
    %v1260 = vpow.pop %v1259
    %v1261 = vmul.f32 %v1231, 1.442695
    %v1262 = vpow.pop %v1261
    %v1263 = vmul.f32 %v1232, 1.442695
    %v1264 = vpow.pop %v1263
    %v1265 = vsel %vm1168, %v1234, 0.0
    %1266 = vadd.xlane.f32.xlu0 %v1265
    %v1267 = vpop.xlane.xlu0 %1266
    %v1268 = vsel %vm1168, %v1236, 0.0
    %1269 = vadd.xlane.f32.xlu0 %v1268
    %v1270 = vpop.xlane.xlu0 %1269
    %v1271 = vsel %vm1168, %v1238, 0.0
    %1272 = vadd.xlane.f32.xlu0 %v1271
    %v1273 = vpop.xlane.xlu0 %1272
    %v1274 = vsel %vm1168, %v1240, 0.0
    %1275 = vadd.xlane.f32.xlu0 %v1274
    %v1276 = vpop.xlane.xlu0 %1275
    %v1277 = vsel %vm1168, %v1242, 0.0
    %1278 = vadd.xlane.f32.xlu0 %v1277
    %v1279 = vpop.xlane.xlu0 %1278
    %v1280 = vsel %vm1168, %v1244, 0.0
    %1281 = vadd.xlane.f32.xlu0 %v1280
    %v1282 = vpop.xlane.xlu0 %1281
    %v1283 = vsel %vm1168, %v1246, 0.0
    %1284 = vadd.xlane.f32.xlu0 %v1283
    %v1285 = vpop.xlane.xlu0 %1284
    %v1286 = vsel %vm1168, %v1248, 0.0
    %1287 = vadd.xlane.f32.xlu0 %v1286
    %v1288 = vpop.xlane.xlu0 %1287
    %v1289 = vsel %vm1168, %v1250, 0.0
    %1290 = vadd.xlane.f32.xlu0 %v1289
    %v1291 = vpop.xlane.xlu0 %1290
    %v1292 = vsel %vm1168, %v1252, 0.0
    %1293 = vadd.xlane.f32.xlu0 %v1292
    %v1294 = vpop.xlane.xlu0 %1293
    %v1295 = vsel %vm1168, %v1254, 0.0
    %1296 = vadd.xlane.f32.xlu0 %v1295
    %v1297 = vpop.xlane.xlu0 %1296
    %v1298 = vsel %vm1168, %v1256, 0.0
    %1299 = vadd.xlane.f32.xlu0 %v1298
    %v1300 = vpop.xlane.xlu0 %1299
    %v1301 = vsel %vm1168, %v1258, 0.0
    %1302 = vadd.xlane.f32.xlu0 %v1301
    %v1303 = vpop.xlane.xlu0 %1302
    %v1304 = vsel %vm1168, %v1260, 0.0
    %1305 = vadd.xlane.f32.xlu0 %v1304
    %v1306 = vpop.xlane.xlu0 %1305
    %v1307 = vsel %vm1168, %v1262, 0.0
    %1308 = vadd.xlane.f32.xlu0 %v1307
    %v1309 = vpop.xlane.xlu0 %1308
    %v1310 = vsel %vm1168, %v1264, 0.0
    %1311 = vadd.xlane.f32.xlu0 %v1310
    %v1312 = vpop.xlane.xlu0 %1311
    %v1313 = vrcp.pop %v1267
    %v1314 = vrcp.pop %v1270
    %v1315 = vrcp.pop %v1273
    %v1316 = vrcp.pop %v1276
    %v1317 = vrcp.pop %v1279
    %v1318 = vrcp.pop %v1282
    %v1319 = vrcp.pop %v1285
    %v1320 = vrcp.pop %v1288
    %v1321 = vrcp.pop %v1291
    %v1322 = vrcp.pop %v1294
    %v1323 = vrcp.pop %v1297
    %v1324 = vrcp.pop %v1300
    %v1325 = vrcp.pop %v1303
    %v1326 = vrcp.pop %v1306
    %v1327 = vrcp.pop %v1309
    %v1328 = vrcp.pop %v1312
    %v1329 = vmul.f32 %v1234, %v1313
    %v1330 = vmul.f32 %v1236, %v1314
    %v1331 = vmul.f32 %v1238, %v1315
    %v1332 = vmul.f32 %v1240, %v1316
    %v1333 = vmul.f32 %v1242, %v1317
    %v1334 = vmul.f32 %v1244, %v1318
    %v1335 = vmul.f32 %v1246, %v1319
    %v1336 = vmul.f32 %v1248, %v1320
    %v1337 = vmul.f32 %v1250, %v1321
    %v1338 = vmul.f32 %v1252, %v1322
    %v1339 = vmul.f32 %v1254, %v1323
    %v1340 = vmul.f32 %v1256, %v1324
    %v1341 = vmul.f32 %v1258, %v1325
    %v1342 = vmul.f32 %v1260, %v1326
    %v1343 = vmul.f32 %v1262, %v1327
    %v1344 = vmul.f32 %v1264, %v1328
    %v1346 = vsel %vm1168, %v1329, 0
    %v1349 = vsel %vm1168, %v1330, 0
    %1351 = vmatpush.msra.mxu0 0.0
    %1352 = vmatpush.msra.mxu0 0.0
    %1353 = vmatpush.msra.mxu0 0.0
    %1354 = vmatpush.msra.mxu0 0.0
    %1355 = vmatpush.msra.mxu0 0.0
    %1356 = vmatpush.msra.mxu0 0.0
    %1357 = vmatpush.msra.mxu0 0.0
    %1358 = vmatpush.msra.mxu0 0.0
    %1359 = vmatpush.msra.mxu0 0.0
    %1360 = vmatpush.msra.mxu0 0.0
    %1361 = vmatpush.msra.mxu0 0.0
    %1362 = vmatpush.msra.mxu0 0.0
    %1363 = vmatpush.msra.mxu0 0.0
    %1364 = vmatpush.msra.mxu0 0.0
    %1365 = vmatpush.msra.mxu0 %v856
    %1366 = vmatpush.msra.mxu0 %v853
    %1367 = vmatmul.f32.gmra.mxu0 %v1346
    %v1368 = vpop.f32.mrf.mxu0
    %v1369 = vadd.f32 0.0, %v1368
    %1370 = vmatmul.f32.gmra.mxu0 %v1349
    %v1371 = vpop.f32.mrf.mxu0
    %v1372 = vadd.f32 0.0, %v1371
    %1373 = vdwg.mxu0
    %v1375 = vsel %vm1168, %v1331, 0
    %v1378 = vsel %vm1168, %v1332, 0
    %1380 = vmatpush.msra.mxu0 0.0
    %1381 = vmatpush.msra.mxu0 0.0
    %1382 = vmatpush.msra.mxu0 0.0
    %1383 = vmatpush.msra.mxu0 0.0
    %1384 = vmatpush.msra.mxu0 0.0
    %1385 = vmatpush.msra.mxu0 0.0
    %1386 = vmatpush.msra.mxu0 0.0
    %1387 = vmatpush.msra.mxu0 0.0
    %1388 = vmatpush.msra.mxu0 0.0
    %1389 = vmatpush.msra.mxu0 0.0
    %1390 = vmatpush.msra.mxu0 0.0
    %1391 = vmatpush.msra.mxu0 0.0
    %1392 = vmatpush.msra.mxu0 0.0
    %1393 = vmatpush.msra.mxu0 0.0
    %1394 = vmatpush.msra.mxu0 %v862
    %1395 = vmatpush.msra.mxu0 %v859
    %1396 = vmatmul.f32.gmra.mxu0 %v1375
    %v1397 = vpop.f32.mrf.mxu0
    %v1398 = vadd.f32 0.0, %v1397
    %1399 = vmatmul.f32.gmra.mxu0 %v1378
    %v1400 = vpop.f32.mrf.mxu0
    %v1401 = vadd.f32 0.0, %v1400
    %1402 = vdwg.mxu0
    %v1404 = vsel %vm1168, %v1333, 0
    %v1407 = vsel %vm1168, %v1334, 0
    %1409 = vmatpush.msra.mxu0 0.0
    %1410 = vmatpush.msra.mxu0 0.0
    %1411 = vmatpush.msra.mxu0 0.0
    %1412 = vmatpush.msra.mxu0 0.0
    %1413 = vmatpush.msra.mxu0 0.0
    %1414 = vmatpush.msra.mxu0 0.0
    %1415 = vmatpush.msra.mxu0 0.0
    %1416 = vmatpush.msra.mxu0 0.0
    %1417 = vmatpush.msra.mxu0 0.0
    %1418 = vmatpush.msra.mxu0 0.0
    %1419 = vmatpush.msra.mxu0 0.0
    %1420 = vmatpush.msra.mxu0 0.0
    %1421 = vmatpush.msra.mxu0 0.0
    %1422 = vmatpush.msra.mxu0 0.0
    %1423 = vmatpush.msra.mxu0 %v868
    %1424 = vmatpush.msra.mxu0 %v865
    %1425 = vmatmul.f32.gmra.mxu0 %v1404
    %v1426 = vpop.f32.mrf.mxu0
    %v1427 = vadd.f32 0.0, %v1426
    %1428 = vmatmul.f32.gmra.mxu0 %v1407
    %v1429 = vpop.f32.mrf.mxu0
    %v1430 = vadd.f32 0.0, %v1429
    %1431 = vdwg.mxu0
    %v1433 = vsel %vm1168, %v1335, 0
    %v1436 = vsel %vm1168, %v1336, 0
    %1438 = vmatpush.msra.mxu0 0.0
    %1439 = vmatpush.msra.mxu0 0.0
    %1440 = vmatpush.msra.mxu0 0.0
    %1441 = vmatpush.msra.mxu0 0.0
    %1442 = vmatpush.msra.mxu0 0.0
    %1443 = vmatpush.msra.mxu0 0.0
    %1444 = vmatpush.msra.mxu0 0.0
    %1445 = vmatpush.msra.mxu0 0.0
    %1446 = vmatpush.msra.mxu0 0.0
    %1447 = vmatpush.msra.mxu0 0.0
    %1448 = vmatpush.msra.mxu0 0.0
    %1449 = vmatpush.msra.mxu0 0.0
    %1450 = vmatpush.msra.mxu0 0.0
    %1451 = vmatpush.msra.mxu0 0.0
    %1452 = vmatpush.msra.mxu0 %v874
    %1453 = vmatpush.msra.mxu0 %v871
    %1454 = vmatmul.f32.gmra.mxu0 %v1433
    %v1455 = vpop.f32.mrf.mxu0
    %v1456 = vadd.f32 0.0, %v1455
    %1457 = vmatmul.f32.gmra.mxu0 %v1436
    %v1458 = vpop.f32.mrf.mxu0
    %v1459 = vadd.f32 0.0, %v1458
    %1460 = vdwg.mxu0
    %v1462 = vsel %vm1168, %v1337, 0
    %v1465 = vsel %vm1168, %v1338, 0
    %1467 = vmatpush.msra.mxu0 0.0
    %1468 = vmatpush.msra.mxu0 0.0
    %1469 = vmatpush.msra.mxu0 0.0
    %1470 = vmatpush.msra.mxu0 0.0
    %1471 = vmatpush.msra.mxu0 0.0
    %1472 = vmatpush.msra.mxu0 0.0
    %1473 = vmatpush.msra.mxu0 0.0
    %1474 = vmatpush.msra.mxu0 0.0
    %1475 = vmatpush.msra.mxu0 0.0
    %1476 = vmatpush.msra.mxu0 0.0
    %1477 = vmatpush.msra.mxu0 0.0
    %1478 = vmatpush.msra.mxu0 0.0
    %1479 = vmatpush.msra.mxu0 0.0
    %1480 = vmatpush.msra.mxu0 0.0
    %1481 = vmatpush.msra.mxu0 %v880
    %1482 = vmatpush.msra.mxu0 %v877
    %1483 = vmatmul.f32.gmra.mxu0 %v1462
    %v1484 = vpop.f32.mrf.mxu0
    %v1485 = vadd.f32 0.0, %v1484
    %1486 = vmatmul.f32.gmra.mxu0 %v1465
    %v1487 = vpop.f32.mrf.mxu0
    %v1488 = vadd.f32 0.0, %v1487
    %1489 = vdwg.mxu0
    %v1491 = vsel %vm1168, %v1339, 0
    %v1494 = vsel %vm1168, %v1340, 0
    %1496 = vmatpush.msra.mxu0 0.0
    %1497 = vmatpush.msra.mxu0 0.0
    %1498 = vmatpush.msra.mxu0 0.0
    %1499 = vmatpush.msra.mxu0 0.0
    %1500 = vmatpush.msra.mxu0 0.0
    %1501 = vmatpush.msra.mxu0 0.0
    %1502 = vmatpush.msra.mxu0 0.0
    %1503 = vmatpush.msra.mxu0 0.0
    %1504 = vmatpush.msra.mxu0 0.0
    %1505 = vmatpush.msra.mxu0 0.0
    %1506 = vmatpush.msra.mxu0 0.0
    %1507 = vmatpush.msra.mxu0 0.0
    %1508 = vmatpush.msra.mxu0 0.0
    %1509 = vmatpush.msra.mxu0 0.0
    %1510 = vmatpush.msra.mxu0 %v886
    %1511 = vmatpush.msra.mxu0 %v883
    %1512 = vmatmul.f32.gmra.mxu0 %v1491
    %v1513 = vpop.f32.mrf.mxu0
    %v1514 = vadd.f32 0.0, %v1513
    %1515 = vmatmul.f32.gmra.mxu0 %v1494
    %v1516 = vpop.f32.mrf.mxu0
    %v1517 = vadd.f32 0.0, %v1516
    %1518 = vdwg.mxu0
    %v1520 = vsel %vm1168, %v1341, 0
    %v1523 = vsel %vm1168, %v1342, 0
    %1525 = vmatpush.msra.mxu0 0.0
    %1526 = vmatpush.msra.mxu0 0.0
    %1527 = vmatpush.msra.mxu0 0.0
    %1528 = vmatpush.msra.mxu0 0.0
    %1529 = vmatpush.msra.mxu0 0.0
    %1530 = vmatpush.msra.mxu0 0.0
    %1531 = vmatpush.msra.mxu0 0.0
    %1532 = vmatpush.msra.mxu0 0.0
    %1533 = vmatpush.msra.mxu0 0.0
    %1534 = vmatpush.msra.mxu0 0.0
    %1535 = vmatpush.msra.mxu0 0.0
    %1536 = vmatpush.msra.mxu0 0.0
    %1537 = vmatpush.msra.mxu0 0.0
    %1538 = vmatpush.msra.mxu0 0.0
    %1539 = vmatpush.msra.mxu0 %v892
    %1540 = vmatpush.msra.mxu0 %v889
    %1541 = vmatmul.f32.gmra.mxu0 %v1520
    %v1542 = vpop.f32.mrf.mxu0
    %v1543 = vadd.f32 0.0, %v1542
    %1544 = vmatmul.f32.gmra.mxu0 %v1523
    %v1545 = vpop.f32.mrf.mxu0
    %v1546 = vadd.f32 0.0, %v1545
    %1547 = vdwg.mxu0
    %v1549 = vsel %vm1168, %v1343, 0
    %v1552 = vsel %vm1168, %v1344, 0
    %1554 = vmatpush.msra.mxu0 0.0
    %1555 = vmatpush.msra.mxu0 0.0
    %1556 = vmatpush.msra.mxu0 0.0
    %1557 = vmatpush.msra.mxu0 0.0
    %1558 = vmatpush.msra.mxu0 0.0
    %1559 = vmatpush.msra.mxu0 0.0
    %1560 = vmatpush.msra.mxu0 0.0
    %1561 = vmatpush.msra.mxu0 0.0
    %1562 = vmatpush.msra.mxu0 0.0
    %1563 = vmatpush.msra.mxu0 0.0
    %1564 = vmatpush.msra.mxu0 0.0
    %1565 = vmatpush.msra.mxu0 0.0
    %1566 = vmatpush.msra.mxu0 0.0
    %1567 = vmatpush.msra.mxu0 0.0
    %1568 = vmatpush.msra.mxu0 %v898
    %1569 = vmatpush.msra.mxu0 %v895
    %1570 = vmatmul.f32.gmra.mxu0 %v1549
    %v1571 = vpop.f32.mrf.mxu0
    %v1572 = vadd.f32 0.0, %v1571
    %1573 = vmatmul.f32.gmra.mxu0 %v1552
    %v1574 = vpop.f32.mrf.mxu0
    %v1575 = vadd.f32 0.0, %v1574
    %1576 = vdwg.mxu0
    %v1577 = vadd.f32 %v698, %v1369
    %v1578 = vadd.f32 %v699, %v1372
    %v1579 = vadd.f32 %v700, %v1398
    %v1580 = vadd.f32 %v701, %v1401
    %v1581 = vadd.f32 %v702, %v1427
    %v1582 = vadd.f32 %v703, %v1430
    %v1583 = vadd.f32 %v704, %v1456
    %v1584 = vadd.f32 %v705, %v1459
    %v1585 = vadd.f32 %v706, %v1485
    %v1586 = vadd.f32 %v707, %v1488
    %v1587 = vadd.f32 %v708, %v1514
    %v1588 = vadd.f32 %v709, %v1517
    %v1589 = vadd.f32 %v710, %v1543
    %v1590 = vadd.f32 %v711, %v1546
    %v1591 = vadd.f32 %v712, %v1572
    %v1592 = vadd.f32 %v713, %v1575
    %s1593 = scalar_lea.vmem %s3, 32
    %v1594 = vld [vmem:[%s1593] sm:$0xff]
    %v1595 = vld [vmem:[%s1593 + $0x8] sm:$0xff]
    %v1596 = vld [vmem:[%s1593 + $0x10] sm:$0xff]
    %v1597 = vld [vmem:[%s1593 + $0x18] sm:$0xff]
    %1598 = vmatpush.msra.mxu0 0.0
    %1599 = vmatpush.msra.mxu0 0.0
    %1600 = vmatpush.msra.mxu0 0.0
    %1601 = vmatpush.msra.mxu0 0.0
    %1602 = vmatpush.msra.mxu0 0.0
    %1603 = vmatpush.msra.mxu0 0.0
    %1604 = vmatpush.msra.mxu0 0.0
    %1605 = vmatpush.msra.mxu0 0.0
    %1606 = vmatpush.msra.mxu0 0.0
    %1607 = vmatpush.msra.mxu0 0.0
    %1608 = vmatpush.msra.mxu0 0.0
    %1609 = vmatpush.msra.mxu0 0.0
    %1610 = vmatpush.msra.mxu0 %v1597
    %1611 = vmatpush.msra.mxu0 %v1596
    %1612 = vmatpush.msra.mxu0 %v1595
    %1613 = vmatpush.msra.mxu0 %v1594
    %1614 = vmatmul.f32.gmra.mxu0 %v719
    %v1615 = vpop.f32.mrf.mxu0
    %v1616 = vadd.f32 0.0, %v1615
    %1617 = vmatmul.f32.gmra.mxu0 %v722
    %v1618 = vpop.f32.mrf.mxu0
    %v1619 = vadd.f32 0.0, %v1618
    %1620 = vmatmul.f32.gmra.mxu0 %v725
    %v1621 = vpop.f32.mrf.mxu0
    %v1622 = vadd.f32 0.0, %v1621
    %1623 = vmatmul.f32.gmra.mxu0 %v728
    %v1624 = vpop.f32.mrf.mxu0
    %v1625 = vadd.f32 0.0, %v1624
    %1626 = vmatmul.f32.gmra.mxu0 %v731
    %v1627 = vpop.f32.mrf.mxu0
    %v1628 = vadd.f32 0.0, %v1627
    %1629 = vmatmul.f32.gmra.mxu0 %v734
    %v1630 = vpop.f32.mrf.mxu0
    %v1631 = vadd.f32 0.0, %v1630
    %1632 = vmatmul.f32.gmra.mxu0 %v737
    %v1633 = vpop.f32.mrf.mxu0
    %v1634 = vadd.f32 0.0, %v1633
    %1635 = vmatmul.f32.gmra.mxu0 %v740
    %v1636 = vpop.f32.mrf.mxu0
    %v1637 = vadd.f32 0.0, %v1636
    %1638 = vmatmul.f32.gmra.mxu0 %v743
    %v1639 = vpop.f32.mrf.mxu0
    %v1640 = vadd.f32 0.0, %v1639
    %1641 = vmatmul.f32.gmra.mxu0 %v746
    %v1642 = vpop.f32.mrf.mxu0
    %v1643 = vadd.f32 0.0, %v1642
    %1644 = vmatmul.f32.gmra.mxu0 %v749
    %v1645 = vpop.f32.mrf.mxu0
    %v1646 = vadd.f32 0.0, %v1645
    %1647 = vmatmul.f32.gmra.mxu0 %v752
    %v1648 = vpop.f32.mrf.mxu0
    %v1649 = vadd.f32 0.0, %v1648
    %1650 = vmatmul.f32.gmra.mxu0 %v755
    %v1651 = vpop.f32.mrf.mxu0
    %v1652 = vadd.f32 0.0, %v1651
    %1653 = vmatmul.f32.gmra.mxu0 %v758
    %v1654 = vpop.f32.mrf.mxu0
    %v1655 = vadd.f32 0.0, %v1654
    %1656 = vmatmul.f32.gmra.mxu0 %v761
    %v1657 = vpop.f32.mrf.mxu0
    %v1658 = vadd.f32 0.0, %v1657
    %1659 = vmatmul.f32.gmra.mxu0 %v764
    %v1660 = vpop.f32.mrf.mxu0
    %v1661 = vadd.f32 0.0, %v1660
    %1662 = vdwg.mxu0
    %s1663 = scalar_lea.vmem [#allocation2], 32
    %v1664 = vld [vmem:[%s1663] sm:$0xff]
    %v1665 = vld [vmem:[%s1663 + $0x8] sm:$0xff]
    %v1666 = vld [vmem:[%s1663 + $0x10] sm:$0xff]
    %v1667 = vld [vmem:[%s1663 + $0x18] sm:$0xff]
    %1668 = vmatpush.msra.mxu0 0.0
    %1669 = vmatpush.msra.mxu0 0.0
    %1670 = vmatpush.msra.mxu0 0.0
    %1671 = vmatpush.msra.mxu0 0.0
    %1672 = vmatpush.msra.mxu0 0.0
    %1673 = vmatpush.msra.mxu0 0.0
    %1674 = vmatpush.msra.mxu0 0.0
    %1675 = vmatpush.msra.mxu0 0.0
    %1676 = vmatpush.msra.mxu0 0.0
    %1677 = vmatpush.msra.mxu0 0.0
    %1678 = vmatpush.msra.mxu0 0.0
    %1679 = vmatpush.msra.mxu0 0.0
    %1680 = vmatpush.msra.mxu0 %v1667
    %1681 = vmatpush.msra.mxu0 %v1666
    %1682 = vmatpush.msra.mxu0 %v1665
    %1683 = vmatpush.msra.mxu0 %v1664
    %1684 = vmatmul.f32.gmra.mxu0 %v719
    %v1685 = vpop.f32.mrf.mxu0
    %v1686 = vadd.f32 0.0, %v1685
    %1687 = vmatmul.f32.gmra.mxu0 %v722
    %v1688 = vpop.f32.mrf.mxu0
    %v1689 = vadd.f32 0.0, %v1688
    %1690 = vmatmul.f32.gmra.mxu0 %v725
    %v1691 = vpop.f32.mrf.mxu0
    %v1692 = vadd.f32 0.0, %v1691
    %1693 = vmatmul.f32.gmra.mxu0 %v728
    %v1694 = vpop.f32.mrf.mxu0
    %v1695 = vadd.f32 0.0, %v1694
    %1696 = vmatmul.f32.gmra.mxu0 %v731
    %v1697 = vpop.f32.mrf.mxu0
    %v1698 = vadd.f32 0.0, %v1697
    %1699 = vmatmul.f32.gmra.mxu0 %v734
    %v1700 = vpop.f32.mrf.mxu0
    %v1701 = vadd.f32 0.0, %v1700
    %1702 = vmatmul.f32.gmra.mxu0 %v737
    %v1703 = vpop.f32.mrf.mxu0
    %v1704 = vadd.f32 0.0, %v1703
    %1705 = vmatmul.f32.gmra.mxu0 %v740
    %v1706 = vpop.f32.mrf.mxu0
    %v1707 = vadd.f32 0.0, %v1706
    %1708 = vmatmul.f32.gmra.mxu0 %v743
    %v1709 = vpop.f32.mrf.mxu0
    %v1710 = vadd.f32 0.0, %v1709
    %1711 = vmatmul.f32.gmra.mxu0 %v746
    %v1712 = vpop.f32.mrf.mxu0
    %v1713 = vadd.f32 0.0, %v1712
    %1714 = vmatmul.f32.gmra.mxu0 %v749
    %v1715 = vpop.f32.mrf.mxu0
    %v1716 = vadd.f32 0.0, %v1715
    %1717 = vmatmul.f32.gmra.mxu0 %v752
    %v1718 = vpop.f32.mrf.mxu0
    %v1719 = vadd.f32 0.0, %v1718
    %1720 = vmatmul.f32.gmra.mxu0 %v755
    %v1721 = vpop.f32.mrf.mxu0
    %v1722 = vadd.f32 0.0, %v1721
    %1723 = vmatmul.f32.gmra.mxu0 %v758
    %v1724 = vpop.f32.mrf.mxu0
    %v1725 = vadd.f32 0.0, %v1724
    %1726 = vmatmul.f32.gmra.mxu0 %v761
    %v1727 = vpop.f32.mrf.mxu0
    %v1728 = vadd.f32 0.0, %v1727
    %1729 = vmatmul.f32.gmra.mxu0 %v764
    %v1730 = vpop.f32.mrf.mxu0
    %v1731 = vadd.f32 0.0, %v1730
    %1732 = vdwg.mxu0
    %v1734 = vsel %vm296, %v1616, 0
    %v1737 = vsel %vm296, %v1619, 0
    %1739 = vmatpush.xpose.msra.mxu0 0.0
    %1740 = vmatpush.xpose.msra.mxu0 0.0
    %1741 = vmatpush.xpose.msra.mxu0 0.0
    %1742 = vmatpush.xpose.msra.mxu0 0.0
    %1743 = vmatpush.xpose.msra.mxu0 0.0
    %1744 = vmatpush.xpose.msra.mxu0 0.0
    %1745 = vmatpush.xpose.msra.mxu0 0.0
    %1746 = vmatpush.xpose.msra.mxu0 0.0
    %1747 = vmatpush.xpose.msra.mxu0 0.0
    %1748 = vmatpush.xpose.msra.mxu0 0.0
    %1749 = vmatpush.xpose.msra.mxu0 0.0
    %1750 = vmatpush.xpose.msra.mxu0 0.0
    %1751 = vmatpush.xpose.msra.mxu0 0.0
    %1752 = vmatpush.xpose.msra.mxu0 0.0
    %1753 = vmatpush.xpose.msra.mxu0 %v722
    %1754 = vmatpush.xpose.msra.mxu0 %v719
    %1755 = vmatmul.f32.gmra.mxu0 %v1734
    %v1756 = vpop.f32.mrf.mxu0
    %v1757 = vadd.f32 0.0, %v1756
    %1758 = vmatmul.f32.gmra.mxu0 %v1737
    %v1759 = vpop.f32.mrf.mxu0
    %v1760 = vadd.f32 0.0, %v1759
    %1761 = vdwg.mxu0
    %v1763 = vsel %vm296, %v1622, 0
    %v1766 = vsel %vm296, %v1625, 0
    %1768 = vmatpush.xpose.msra.mxu0 0.0
    %1769 = vmatpush.xpose.msra.mxu0 0.0
    %1770 = vmatpush.xpose.msra.mxu0 0.0
    %1771 = vmatpush.xpose.msra.mxu0 0.0
    %1772 = vmatpush.xpose.msra.mxu0 0.0
    %1773 = vmatpush.xpose.msra.mxu0 0.0
    %1774 = vmatpush.xpose.msra.mxu0 0.0
    %1775 = vmatpush.xpose.msra.mxu0 0.0
    %1776 = vmatpush.xpose.msra.mxu0 0.0
    %1777 = vmatpush.xpose.msra.mxu0 0.0
    %1778 = vmatpush.xpose.msra.mxu0 0.0
    %1779 = vmatpush.xpose.msra.mxu0 0.0
    %1780 = vmatpush.xpose.msra.mxu0 0.0
    %1781 = vmatpush.xpose.msra.mxu0 0.0
    %1782 = vmatpush.xpose.msra.mxu0 %v728
    %1783 = vmatpush.xpose.msra.mxu0 %v725
    %1784 = vmatmul.f32.gmra.mxu0 %v1763
    %v1785 = vpop.f32.mrf.mxu0
    %v1786 = vadd.f32 0.0, %v1785
    %1787 = vmatmul.f32.gmra.mxu0 %v1766
    %v1788 = vpop.f32.mrf.mxu0
    %v1789 = vadd.f32 0.0, %v1788
    %1790 = vdwg.mxu0
    %v1792 = vsel %vm296, %v1628, 0
    %v1795 = vsel %vm296, %v1631, 0
    %1797 = vmatpush.xpose.msra.mxu0 0.0
    %1798 = vmatpush.xpose.msra.mxu0 0.0
    %1799 = vmatpush.xpose.msra.mxu0 0.0
    %1800 = vmatpush.xpose.msra.mxu0 0.0
    %1801 = vmatpush.xpose.msra.mxu0 0.0
    %1802 = vmatpush.xpose.msra.mxu0 0.0
    %1803 = vmatpush.xpose.msra.mxu0 0.0
    %1804 = vmatpush.xpose.msra.mxu0 0.0
    %1805 = vmatpush.xpose.msra.mxu0 0.0
    %1806 = vmatpush.xpose.msra.mxu0 0.0
    %1807 = vmatpush.xpose.msra.mxu0 0.0
    %1808 = vmatpush.xpose.msra.mxu0 0.0
    %1809 = vmatpush.xpose.msra.mxu0 0.0
    %1810 = vmatpush.xpose.msra.mxu0 0.0
    %1811 = vmatpush.xpose.msra.mxu0 %v734
    %1812 = vmatpush.xpose.msra.mxu0 %v731
    %1813 = vmatmul.f32.gmra.mxu0 %v1792
    %v1814 = vpop.f32.mrf.mxu0
    %v1815 = vadd.f32 0.0, %v1814
    %1816 = vmatmul.f32.gmra.mxu0 %v1795
    %v1817 = vpop.f32.mrf.mxu0
    %v1818 = vadd.f32 0.0, %v1817
    %1819 = vdwg.mxu0
    %v1821 = vsel %vm296, %v1634, 0
    %v1824 = vsel %vm296, %v1637, 0
    %1826 = vmatpush.xpose.msra.mxu0 0.0
    %1827 = vmatpush.xpose.msra.mxu0 0.0
    %1828 = vmatpush.xpose.msra.mxu0 0.0
    %1829 = vmatpush.xpose.msra.mxu0 0.0
    %1830 = vmatpush.xpose.msra.mxu0 0.0
    %1831 = vmatpush.xpose.msra.mxu0 0.0
    %1832 = vmatpush.xpose.msra.mxu0 0.0
    %1833 = vmatpush.xpose.msra.mxu0 0.0
    %1834 = vmatpush.xpose.msra.mxu0 0.0
    %1835 = vmatpush.xpose.msra.mxu0 0.0
    %1836 = vmatpush.xpose.msra.mxu0 0.0
    %1837 = vmatpush.xpose.msra.mxu0 0.0
    %1838 = vmatpush.xpose.msra.mxu0 0.0
    %1839 = vmatpush.xpose.msra.mxu0 0.0
    %1840 = vmatpush.xpose.msra.mxu0 %v740
    %1841 = vmatpush.xpose.msra.mxu0 %v737
    %1842 = vmatmul.f32.gmra.mxu0 %v1821
    %v1843 = vpop.f32.mrf.mxu0
    %v1844 = vadd.f32 0.0, %v1843
    %1845 = vmatmul.f32.gmra.mxu0 %v1824
    %v1846 = vpop.f32.mrf.mxu0
    %v1847 = vadd.f32 0.0, %v1846
    %1848 = vdwg.mxu0
    %v1850 = vsel %vm296, %v1640, 0
    %v1853 = vsel %vm296, %v1643, 0
    %1855 = vmatpush.xpose.msra.mxu0 0.0
    %1856 = vmatpush.xpose.msra.mxu0 0.0
    %1857 = vmatpush.xpose.msra.mxu0 0.0
    %1858 = vmatpush.xpose.msra.mxu0 0.0
    %1859 = vmatpush.xpose.msra.mxu0 0.0
    %1860 = vmatpush.xpose.msra.mxu0 0.0
    %1861 = vmatpush.xpose.msra.mxu0 0.0
    %1862 = vmatpush.xpose.msra.mxu0 0.0
    %1863 = vmatpush.xpose.msra.mxu0 0.0
    %1864 = vmatpush.xpose.msra.mxu0 0.0
    %1865 = vmatpush.xpose.msra.mxu0 0.0
    %1866 = vmatpush.xpose.msra.mxu0 0.0
    %1867 = vmatpush.xpose.msra.mxu0 0.0
    %1868 = vmatpush.xpose.msra.mxu0 0.0
    %1869 = vmatpush.xpose.msra.mxu0 %v746
    %1870 = vmatpush.xpose.msra.mxu0 %v743
    %1871 = vmatmul.f32.gmra.mxu0 %v1850
    %v1872 = vpop.f32.mrf.mxu0
    %v1873 = vadd.f32 0.0, %v1872
    %1874 = vmatmul.f32.gmra.mxu0 %v1853
    %v1875 = vpop.f32.mrf.mxu0
    %v1876 = vadd.f32 0.0, %v1875
    %1877 = vdwg.mxu0
    %v1879 = vsel %vm296, %v1646, 0
    %v1882 = vsel %vm296, %v1649, 0
    %1884 = vmatpush.xpose.msra.mxu0 0.0
    %1885 = vmatpush.xpose.msra.mxu0 0.0
    %1886 = vmatpush.xpose.msra.mxu0 0.0
    %1887 = vmatpush.xpose.msra.mxu0 0.0
    %1888 = vmatpush.xpose.msra.mxu0 0.0
    %1889 = vmatpush.xpose.msra.mxu0 0.0
    %1890 = vmatpush.xpose.msra.mxu0 0.0
    %1891 = vmatpush.xpose.msra.mxu0 0.0
    %1892 = vmatpush.xpose.msra.mxu0 0.0
    %1893 = vmatpush.xpose.msra.mxu0 0.0
    %1894 = vmatpush.xpose.msra.mxu0 0.0
    %1895 = vmatpush.xpose.msra.mxu0 0.0
    %1896 = vmatpush.xpose.msra.mxu0 0.0
    %1897 = vmatpush.xpose.msra.mxu0 0.0
    %1898 = vmatpush.xpose.msra.mxu0 %v752
    %1899 = vmatpush.xpose.msra.mxu0 %v749
    %1900 = vmatmul.f32.gmra.mxu0 %v1879
    %v1901 = vpop.f32.mrf.mxu0
    %v1902 = vadd.f32 0.0, %v1901
    %1903 = vmatmul.f32.gmra.mxu0 %v1882
    %v1904 = vpop.f32.mrf.mxu0
    %v1905 = vadd.f32 0.0, %v1904
    %1906 = vdwg.mxu0
    %v1908 = vsel %vm296, %v1652, 0
    %v1911 = vsel %vm296, %v1655, 0
    %1913 = vmatpush.xpose.msra.mxu0 0.0
    %1914 = vmatpush.xpose.msra.mxu0 0.0
    %1915 = vmatpush.xpose.msra.mxu0 0.0
    %1916 = vmatpush.xpose.msra.mxu0 0.0
    %1917 = vmatpush.xpose.msra.mxu0 0.0
    %1918 = vmatpush.xpose.msra.mxu0 0.0
    %1919 = vmatpush.xpose.msra.mxu0 0.0
    %1920 = vmatpush.xpose.msra.mxu0 0.0
    %1921 = vmatpush.xpose.msra.mxu0 0.0
    %1922 = vmatpush.xpose.msra.mxu0 0.0
    %1923 = vmatpush.xpose.msra.mxu0 0.0
    %1924 = vmatpush.xpose.msra.mxu0 0.0
    %1925 = vmatpush.xpose.msra.mxu0 0.0
    %1926 = vmatpush.xpose.msra.mxu0 0.0
    %1927 = vmatpush.xpose.msra.mxu0 %v758
    %1928 = vmatpush.xpose.msra.mxu0 %v755
    %1929 = vmatmul.f32.gmra.mxu0 %v1908
    %v1930 = vpop.f32.mrf.mxu0
    %v1931 = vadd.f32 0.0, %v1930
    %1932 = vmatmul.f32.gmra.mxu0 %v1911
    %v1933 = vpop.f32.mrf.mxu0
    %v1934 = vadd.f32 0.0, %v1933
    %1935 = vdwg.mxu0
    %v1937 = vsel %vm296, %v1658, 0
    %v1940 = vsel %vm296, %v1661, 0
    %1942 = vmatpush.xpose.msra.mxu0 0.0
    %1943 = vmatpush.xpose.msra.mxu0 0.0
    %1944 = vmatpush.xpose.msra.mxu0 0.0
    %1945 = vmatpush.xpose.msra.mxu0 0.0
    %1946 = vmatpush.xpose.msra.mxu0 0.0
    %1947 = vmatpush.xpose.msra.mxu0 0.0
    %1948 = vmatpush.xpose.msra.mxu0 0.0
    %1949 = vmatpush.xpose.msra.mxu0 0.0
    %1950 = vmatpush.xpose.msra.mxu0 0.0
    %1951 = vmatpush.xpose.msra.mxu0 0.0
    %1952 = vmatpush.xpose.msra.mxu0 0.0
    %1953 = vmatpush.xpose.msra.mxu0 0.0
    %1954 = vmatpush.xpose.msra.mxu0 0.0
    %1955 = vmatpush.xpose.msra.mxu0 0.0
    %1956 = vmatpush.xpose.msra.mxu0 %v764
    %1957 = vmatpush.xpose.msra.mxu0 %v761
    %1958 = vmatmul.f32.gmra.mxu0 %v1937
    %v1959 = vpop.f32.mrf.mxu0
    %v1960 = vadd.f32 0.0, %v1959
    %1961 = vmatmul.f32.gmra.mxu0 %v1940
    %v1962 = vpop.f32.mrf.mxu0
    %v1963 = vadd.f32 0.0, %v1962
    %1964 = vdwg.mxu0
    %v1965 = vmul.f32 %v1757, 0.31622776
    %v1966 = vmul.f32 %v1760, 0.31622776
    %v1967 = vmul.f32 %v1786, 0.31622776
    %v1968 = vmul.f32 %v1789, 0.31622776
    %v1969 = vmul.f32 %v1815, 0.31622776
    %v1970 = vmul.f32 %v1818, 0.31622776
    %v1971 = vmul.f32 %v1844, 0.31622776
    %v1972 = vmul.f32 %v1847, 0.31622776
    %v1973 = vmul.f32 %v1873, 0.31622776
    %v1974 = vmul.f32 %v1876, 0.31622776
    %v1975 = vmul.f32 %v1902, 0.31622776
    %v1976 = vmul.f32 %v1905, 0.31622776
    %v1977 = vmul.f32 %v1931, 0.31622776
    %v1978 = vmul.f32 %v1934, 0.31622776
    %v1979 = vmul.f32 %v1960, 0.31622776
    %v1980 = vmul.f32 %v1963, 0.31622776
    %v1981 = vsel %vm1150, %v1965, -1e+30
    %v1982 = vsel %vm1151, %v1966, -1e+30
    %v1983 = vsel %vm1150, %v1967, -1e+30
    %v1984 = vsel %vm1151, %v1968, -1e+30
    %v1985 = vsel %vm1150, %v1969, -1e+30
    %v1986 = vsel %vm1151, %v1970, -1e+30
    %v1987 = vsel %vm1150, %v1971, -1e+30
    %v1988 = vsel %vm1151, %v1972, -1e+30
    %v1989 = vsel %vm1150, %v1973, -1e+30
    %v1990 = vsel %vm1151, %v1974, -1e+30
    %v1991 = vsel %vm1150, %v1975, -1e+30
    %v1992 = vsel %vm1151, %v1976, -1e+30
    %v1993 = vsel %vm1150, %v1977, -1e+30
    %v1994 = vsel %vm1151, %v1978, -1e+30
    %v1995 = vsel %vm1150, %v1979, -1e+30
    %v1996 = vsel %vm1151, %v1980, -1e+30
    %v1997 = vsel %vm1168, %v1981, -inf
    %1998 = vmax.xlane.f32.xlu0 %v1997
    %v1999 = vpop.xlane.xlu0 %1998
    %v2000 = vsel %vm1168, %v1982, -inf
    %2001 = vmax.xlane.f32.xlu0 %v2000
    %v2002 = vpop.xlane.xlu0 %2001
    %v2003 = vsel %vm1168, %v1983, -inf
    %2004 = vmax.xlane.f32.xlu0 %v2003
    %v2005 = vpop.xlane.xlu0 %2004
    %v2006 = vsel %vm1168, %v1984, -inf
    %2007 = vmax.xlane.f32.xlu0 %v2006
    %v2008 = vpop.xlane.xlu0 %2007
    %v2009 = vsel %vm1168, %v1985, -inf
    %2010 = vmax.xlane.f32.xlu0 %v2009
    %v2011 = vpop.xlane.xlu0 %2010
    %v2012 = vsel %vm1168, %v1986, -inf
    %2013 = vmax.xlane.f32.xlu0 %v2012
    %v2014 = vpop.xlane.xlu0 %2013
    %v2015 = vsel %vm1168, %v1987, -inf
    %2016 = vmax.xlane.f32.xlu0 %v2015
    %v2017 = vpop.xlane.xlu0 %2016
    %v2018 = vsel %vm1168, %v1988, -inf
    %2019 = vmax.xlane.f32.xlu0 %v2018
    %v2020 = vpop.xlane.xlu0 %2019
    %v2021 = vsel %vm1168, %v1989, -inf
    %2022 = vmax.xlane.f32.xlu0 %v2021
    %v2023 = vpop.xlane.xlu0 %2022
    %v2024 = vsel %vm1168, %v1990, -inf
    %2025 = vmax.xlane.f32.xlu0 %v2024
    %v2026 = vpop.xlane.xlu0 %2025
    %v2027 = vsel %vm1168, %v1991, -inf
    %2028 = vmax.xlane.f32.xlu0 %v2027
    %v2029 = vpop.xlane.xlu0 %2028
    %v2030 = vsel %vm1168, %v1992, -inf
    %2031 = vmax.xlane.f32.xlu0 %v2030
    %v2032 = vpop.xlane.xlu0 %2031
    %v2033 = vsel %vm1168, %v1993, -inf
    %2034 = vmax.xlane.f32.xlu0 %v2033
    %v2035 = vpop.xlane.xlu0 %2034
    %v2036 = vsel %vm1168, %v1994, -inf
    %2037 = vmax.xlane.f32.xlu0 %v2036
    %v2038 = vpop.xlane.xlu0 %2037
    %v2039 = vsel %vm1168, %v1995, -inf
    %2040 = vmax.xlane.f32.xlu0 %v2039
    %v2041 = vpop.xlane.xlu0 %2040
    %v2042 = vsel %vm1168, %v1996, -inf
    %2043 = vmax.xlane.f32.xlu0 %v2042
    %v2044 = vpop.xlane.xlu0 %2043
    %v2045 = vsub.f32 %v1981, %v1999
    %v2046 = vsub.f32 %v1982, %v2002
    %v2047 = vsub.f32 %v1983, %v2005
    %v2048 = vsub.f32 %v1984, %v2008
    %v2049 = vsub.f32 %v1985, %v2011
    %v2050 = vsub.f32 %v1986, %v2014
    %v2051 = vsub.f32 %v1987, %v2017
    %v2052 = vsub.f32 %v1988, %v2020
    %v2053 = vsub.f32 %v1989, %v2023
    %v2054 = vsub.f32 %v1990, %v2026
    %v2055 = vsub.f32 %v1991, %v2029
    %v2056 = vsub.f32 %v1992, %v2032
    %v2057 = vsub.f32 %v1993, %v2035
    %v2058 = vsub.f32 %v1994, %v2038
    %v2059 = vsub.f32 %v1995, %v2041
    %v2060 = vsub.f32 %v1996, %v2044
    %v2061 = vmul.f32 %v2045, 1.442695
    %v2062 = vpow.pop %v2061
    %v2063 = vmul.f32 %v2046, 1.442695
    %v2064 = vpow.pop %v2063
    %v2065 = vmul.f32 %v2047, 1.442695
    %v2066 = vpow.pop %v2065
    %v2067 = vmul.f32 %v2048, 1.442695
    %v2068 = vpow.pop %v2067
    %v2069 = vmul.f32 %v2049, 1.442695
    %v2070 = vpow.pop %v2069
    %v2071 = vmul.f32 %v2050, 1.442695
    %v2072 = vpow.pop %v2071
    %v2073 = vmul.f32 %v2051, 1.442695
    %v2074 = vpow.pop %v2073
    %v2075 = vmul.f32 %v2052, 1.442695
    %v2076 = vpow.pop %v2075
    %v2077 = vmul.f32 %v2053, 1.442695
    %v2078 = vpow.pop %v2077
    %v2079 = vmul.f32 %v2054, 1.442695
    %v2080 = vpow.pop %v2079
    %v2081 = vmul.f32 %v2055, 1.442695
    %v2082 = vpow.pop %v2081
    %v2083 = vmul.f32 %v2056, 1.442695
    %v2084 = vpow.pop %v2083
    %v2085 = vmul.f32 %v2057, 1.442695
    %v2086 = vpow.pop %v2085
    %v2087 = vmul.f32 %v2058, 1.442695
    %v2088 = vpow.pop %v2087
    %v2089 = vmul.f32 %v2059, 1.442695
    %v2090 = vpow.pop %v2089
    %v2091 = vmul.f32 %v2060, 1.442695
    %v2092 = vpow.pop %v2091
    %v2093 = vsel %vm1168, %v2062, 0.0
    %2094 = vadd.xlane.f32.xlu0 %v2093
    %v2095 = vpop.xlane.xlu0 %2094
    %v2096 = vsel %vm1168, %v2064, 0.0
    %2097 = vadd.xlane.f32.xlu0 %v2096
    %v2098 = vpop.xlane.xlu0 %2097
    %v2099 = vsel %vm1168, %v2066, 0.0
    %2100 = vadd.xlane.f32.xlu0 %v2099
    %v2101 = vpop.xlane.xlu0 %2100
    %v2102 = vsel %vm1168, %v2068, 0.0
    %2103 = vadd.xlane.f32.xlu0 %v2102
    %v2104 = vpop.xlane.xlu0 %2103
    %v2105 = vsel %vm1168, %v2070, 0.0
    %2106 = vadd.xlane.f32.xlu0 %v2105
    %v2107 = vpop.xlane.xlu0 %2106
    %v2108 = vsel %vm1168, %v2072, 0.0
    %2109 = vadd.xlane.f32.xlu0 %v2108
    %v2110 = vpop.xlane.xlu0 %2109
    %v2111 = vsel %vm1168, %v2074, 0.0
    %2112 = vadd.xlane.f32.xlu0 %v2111
    %v2113 = vpop.xlane.xlu0 %2112
    %v2114 = vsel %vm1168, %v2076, 0.0
    %2115 = vadd.xlane.f32.xlu0 %v2114
    %v2116 = vpop.xlane.xlu0 %2115
    %v2117 = vsel %vm1168, %v2078, 0.0
    %2118 = vadd.xlane.f32.xlu0 %v2117
    %v2119 = vpop.xlane.xlu0 %2118
    %v2120 = vsel %vm1168, %v2080, 0.0
    %2121 = vadd.xlane.f32.xlu0 %v2120
    %v2122 = vpop.xlane.xlu0 %2121
    %v2123 = vsel %vm1168, %v2082, 0.0
    %2124 = vadd.xlane.f32.xlu0 %v2123
    %v2125 = vpop.xlane.xlu0 %2124
    %v2126 = vsel %vm1168, %v2084, 0.0
    %2127 = vadd.xlane.f32.xlu0 %v2126
    %v2128 = vpop.xlane.xlu0 %2127
    %v2129 = vsel %vm1168, %v2086, 0.0
    %2130 = vadd.xlane.f32.xlu0 %v2129
    %v2131 = vpop.xlane.xlu0 %2130
    %v2132 = vsel %vm1168, %v2088, 0.0
    %2133 = vadd.xlane.f32.xlu0 %v2132
    %v2134 = vpop.xlane.xlu0 %2133
    %v2135 = vsel %vm1168, %v2090, 0.0
    %2136 = vadd.xlane.f32.xlu0 %v2135
    %v2137 = vpop.xlane.xlu0 %2136
    %v2138 = vsel %vm1168, %v2092, 0.0
    %2139 = vadd.xlane.f32.xlu0 %v2138
    %v2140 = vpop.xlane.xlu0 %2139
    %v2141 = vrcp.pop %v2095
    %v2142 = vrcp.pop %v2098
    %v2143 = vrcp.pop %v2101
    %v2144 = vrcp.pop %v2104
    %v2145 = vrcp.pop %v2107
    %v2146 = vrcp.pop %v2110
    %v2147 = vrcp.pop %v2113
    %v2148 = vrcp.pop %v2116
    %v2149 = vrcp.pop %v2119
    %v2150 = vrcp.pop %v2122
    %v2151 = vrcp.pop %v2125
    %v2152 = vrcp.pop %v2128
    %v2153 = vrcp.pop %v2131
    %v2154 = vrcp.pop %v2134
    %v2155 = vrcp.pop %v2137
    %v2156 = vrcp.pop %v2140
    %v2157 = vmul.f32 %v2062, %v2141
    %v2158 = vmul.f32 %v2064, %v2142
    %v2159 = vmul.f32 %v2066, %v2143
    %v2160 = vmul.f32 %v2068, %v2144
    %v2161 = vmul.f32 %v2070, %v2145
    %v2162 = vmul.f32 %v2072, %v2146
    %v2163 = vmul.f32 %v2074, %v2147
    %v2164 = vmul.f32 %v2076, %v2148
    %v2165 = vmul.f32 %v2078, %v2149
    %v2166 = vmul.f32 %v2080, %v2150
    %v2167 = vmul.f32 %v2082, %v2151
    %v2168 = vmul.f32 %v2084, %v2152
    %v2169 = vmul.f32 %v2086, %v2153
    %v2170 = vmul.f32 %v2088, %v2154
    %v2171 = vmul.f32 %v2090, %v2155
    %v2172 = vmul.f32 %v2092, %v2156
    %v2174 = vsel %vm1168, %v2157, 0
    %v2177 = vsel %vm1168, %v2158, 0
    %2179 = vmatpush.msra.mxu0 0.0
    %2180 = vmatpush.msra.mxu0 0.0
    %2181 = vmatpush.msra.mxu0 0.0
    %2182 = vmatpush.msra.mxu0 0.0
    %2183 = vmatpush.msra.mxu0 0.0
    %2184 = vmatpush.msra.mxu0 0.0
    %2185 = vmatpush.msra.mxu0 0.0
    %2186 = vmatpush.msra.mxu0 0.0
    %2187 = vmatpush.msra.mxu0 0.0
    %2188 = vmatpush.msra.mxu0 0.0
    %2189 = vmatpush.msra.mxu0 0.0
    %2190 = vmatpush.msra.mxu0 0.0
    %2191 = vmatpush.msra.mxu0 0.0
    %2192 = vmatpush.msra.mxu0 0.0
    %2193 = vmatpush.msra.mxu0 %v1689
    %2194 = vmatpush.msra.mxu0 %v1686
    %2195 = vmatmul.f32.gmra.mxu0 %v2174
    %v2196 = vpop.f32.mrf.mxu0
    %v2197 = vadd.f32 0.0, %v2196
    %2198 = vmatmul.f32.gmra.mxu0 %v2177
    %v2199 = vpop.f32.mrf.mxu0
    %v2200 = vadd.f32 0.0, %v2199
    %2201 = vdwg.mxu0
    %v2203 = vsel %vm1168, %v2159, 0
    %v2206 = vsel %vm1168, %v2160, 0
    %2208 = vmatpush.msra.mxu0 0.0
    %2209 = vmatpush.msra.mxu0 0.0
    %2210 = vmatpush.msra.mxu0 0.0
    %2211 = vmatpush.msra.mxu0 0.0
    %2212 = vmatpush.msra.mxu0 0.0
    %2213 = vmatpush.msra.mxu0 0.0
    %2214 = vmatpush.msra.mxu0 0.0
    %2215 = vmatpush.msra.mxu0 0.0
    %2216 = vmatpush.msra.mxu0 0.0
    %2217 = vmatpush.msra.mxu0 0.0
    %2218 = vmatpush.msra.mxu0 0.0
    %2219 = vmatpush.msra.mxu0 0.0
    %2220 = vmatpush.msra.mxu0 0.0
    %2221 = vmatpush.msra.mxu0 0.0
    %2222 = vmatpush.msra.mxu0 %v1695
    %2223 = vmatpush.msra.mxu0 %v1692
    %2224 = vmatmul.f32.gmra.mxu0 %v2203
    %v2225 = vpop.f32.mrf.mxu0
    %v2226 = vadd.f32 0.0, %v2225
    %2227 = vmatmul.f32.gmra.mxu0 %v2206
    %v2228 = vpop.f32.mrf.mxu0
    %v2229 = vadd.f32 0.0, %v2228
    %2230 = vdwg.mxu0
    %v2232 = vsel %vm1168, %v2161, 0
    %v2235 = vsel %vm1168, %v2162, 0
    %2237 = vmatpush.msra.mxu0 0.0
    %2238 = vmatpush.msra.mxu0 0.0
    %2239 = vmatpush.msra.mxu0 0.0
    %2240 = vmatpush.msra.mxu0 0.0
    %2241 = vmatpush.msra.mxu0 0.0
    %2242 = vmatpush.msra.mxu0 0.0
    %2243 = vmatpush.msra.mxu0 0.0
    %2244 = vmatpush.msra.mxu0 0.0
    %2245 = vmatpush.msra.mxu0 0.0
    %2246 = vmatpush.msra.mxu0 0.0
    %2247 = vmatpush.msra.mxu0 0.0
    %2248 = vmatpush.msra.mxu0 0.0
    %2249 = vmatpush.msra.mxu0 0.0
    %2250 = vmatpush.msra.mxu0 0.0
    %2251 = vmatpush.msra.mxu0 %v1701
    %2252 = vmatpush.msra.mxu0 %v1698
    %2253 = vmatmul.f32.gmra.mxu0 %v2232
    %v2254 = vpop.f32.mrf.mxu0
    %v2255 = vadd.f32 0.0, %v2254
    %2256 = vmatmul.f32.gmra.mxu0 %v2235
    %v2257 = vpop.f32.mrf.mxu0
    %v2258 = vadd.f32 0.0, %v2257
    %2259 = vdwg.mxu0
    %v2261 = vsel %vm1168, %v2163, 0
    %v2264 = vsel %vm1168, %v2164, 0
    %2266 = vmatpush.msra.mxu0 0.0
    %2267 = vmatpush.msra.mxu0 0.0
    %2268 = vmatpush.msra.mxu0 0.0
    %2269 = vmatpush.msra.mxu0 0.0
    %2270 = vmatpush.msra.mxu0 0.0
    %2271 = vmatpush.msra.mxu0 0.0
    %2272 = vmatpush.msra.mxu0 0.0
    %2273 = vmatpush.msra.mxu0 0.0
    %2274 = vmatpush.msra.mxu0 0.0
    %2275 = vmatpush.msra.mxu0 0.0
    %2276 = vmatpush.msra.mxu0 0.0
    %2277 = vmatpush.msra.mxu0 0.0
    %2278 = vmatpush.msra.mxu0 0.0
    %2279 = vmatpush.msra.mxu0 0.0
    %2280 = vmatpush.msra.mxu0 %v1707
    %2281 = vmatpush.msra.mxu0 %v1704
    %2282 = vmatmul.f32.gmra.mxu0 %v2261
    %v2283 = vpop.f32.mrf.mxu0
    %v2284 = vadd.f32 0.0, %v2283
    %2285 = vmatmul.f32.gmra.mxu0 %v2264
    %v2286 = vpop.f32.mrf.mxu0
    %v2287 = vadd.f32 0.0, %v2286
    %2288 = vdwg.mxu0
    %v2290 = vsel %vm1168, %v2165, 0
    %v2293 = vsel %vm1168, %v2166, 0
    %2295 = vmatpush.msra.mxu0 0.0
    %2296 = vmatpush.msra.mxu0 0.0
    %2297 = vmatpush.msra.mxu0 0.0
    %2298 = vmatpush.msra.mxu0 0.0
    %2299 = vmatpush.msra.mxu0 0.0
    %2300 = vmatpush.msra.mxu0 0.0
    %2301 = vmatpush.msra.mxu0 0.0
    %2302 = vmatpush.msra.mxu0 0.0
    %2303 = vmatpush.msra.mxu0 0.0
    %2304 = vmatpush.msra.mxu0 0.0
    %2305 = vmatpush.msra.mxu0 0.0
    %2306 = vmatpush.msra.mxu0 0.0
    %2307 = vmatpush.msra.mxu0 0.0
    %2308 = vmatpush.msra.mxu0 0.0
    %2309 = vmatpush.msra.mxu0 %v1713
    %2310 = vmatpush.msra.mxu0 %v1710
    %2311 = vmatmul.f32.gmra.mxu0 %v2290
    %v2312 = vpop.f32.mrf.mxu0
    %v2313 = vadd.f32 0.0, %v2312
    %2314 = vmatmul.f32.gmra.mxu0 %v2293
    %v2315 = vpop.f32.mrf.mxu0
    %v2316 = vadd.f32 0.0, %v2315
    %2317 = vdwg.mxu0
    %v2319 = vsel %vm1168, %v2167, 0
    %v2322 = vsel %vm1168, %v2168, 0
    %2324 = vmatpush.msra.mxu0 0.0
    %2325 = vmatpush.msra.mxu0 0.0
    %2326 = vmatpush.msra.mxu0 0.0
    %2327 = vmatpush.msra.mxu0 0.0
    %2328 = vmatpush.msra.mxu0 0.0
    %2329 = vmatpush.msra.mxu0 0.0
    %2330 = vmatpush.msra.mxu0 0.0
    %2331 = vmatpush.msra.mxu0 0.0
    %2332 = vmatpush.msra.mxu0 0.0
    %2333 = vmatpush.msra.mxu0 0.0
    %2334 = vmatpush.msra.mxu0 0.0
    %2335 = vmatpush.msra.mxu0 0.0
    %2336 = vmatpush.msra.mxu0 0.0
    %2337 = vmatpush.msra.mxu0 0.0
    %2338 = vmatpush.msra.mxu0 %v1719
    %2339 = vmatpush.msra.mxu0 %v1716
    %2340 = vmatmul.f32.gmra.mxu0 %v2319
    %v2341 = vpop.f32.mrf.mxu0
    %v2342 = vadd.f32 0.0, %v2341
    %2343 = vmatmul.f32.gmra.mxu0 %v2322
    %v2344 = vpop.f32.mrf.mxu0
    %v2345 = vadd.f32 0.0, %v2344
    %2346 = vdwg.mxu0
    %v2348 = vsel %vm1168, %v2169, 0
    %v2351 = vsel %vm1168, %v2170, 0
    %2353 = vmatpush.msra.mxu0 0.0
    %2354 = vmatpush.msra.mxu0 0.0
    %2355 = vmatpush.msra.mxu0 0.0
    %2356 = vmatpush.msra.mxu0 0.0
    %2357 = vmatpush.msra.mxu0 0.0
    %2358 = vmatpush.msra.mxu0 0.0
    %2359 = vmatpush.msra.mxu0 0.0
    %2360 = vmatpush.msra.mxu0 0.0
    %2361 = vmatpush.msra.mxu0 0.0
    %2362 = vmatpush.msra.mxu0 0.0
    %2363 = vmatpush.msra.mxu0 0.0
    %2364 = vmatpush.msra.mxu0 0.0
    %2365 = vmatpush.msra.mxu0 0.0
    %2366 = vmatpush.msra.mxu0 0.0
    %2367 = vmatpush.msra.mxu0 %v1725
    %2368 = vmatpush.msra.mxu0 %v1722
    %2369 = vmatmul.f32.gmra.mxu0 %v2348
    %v2370 = vpop.f32.mrf.mxu0
    %v2371 = vadd.f32 0.0, %v2370
    %2372 = vmatmul.f32.gmra.mxu0 %v2351
    %v2373 = vpop.f32.mrf.mxu0
    %v2374 = vadd.f32 0.0, %v2373
    %2375 = vdwg.mxu0
    %v2377 = vsel %vm1168, %v2171, 0
    %v2380 = vsel %vm1168, %v2172, 0
    %2382 = vmatpush.msra.mxu0 0.0
    %2383 = vmatpush.msra.mxu0 0.0
    %2384 = vmatpush.msra.mxu0 0.0
    %2385 = vmatpush.msra.mxu0 0.0
    %2386 = vmatpush.msra.mxu0 0.0
    %2387 = vmatpush.msra.mxu0 0.0
    %2388 = vmatpush.msra.mxu0 0.0
    %2389 = vmatpush.msra.mxu0 0.0
    %2390 = vmatpush.msra.mxu0 0.0
    %2391 = vmatpush.msra.mxu0 0.0
    %2392 = vmatpush.msra.mxu0 0.0
    %2393 = vmatpush.msra.mxu0 0.0
    %2394 = vmatpush.msra.mxu0 0.0
    %2395 = vmatpush.msra.mxu0 0.0
    %2396 = vmatpush.msra.mxu0 %v1731
    %2397 = vmatpush.msra.mxu0 %v1728
    %2398 = vmatmul.f32.gmra.mxu0 %v2377
    %v2399 = vpop.f32.mrf.mxu0
    %v2400 = vadd.f32 0.0, %v2399
    %2401 = vmatmul.f32.gmra.mxu0 %v2380
    %v2402 = vpop.f32.mrf.mxu0
    %v2403 = vadd.f32 0.0, %v2402
    %2404 = vdwg.mxu0
    %v2405 = vadd.f32 %v1577, %v2197
    %v2406 = vadd.f32 %v1578, %v2200
    %v2407 = vadd.f32 %v1579, %v2226
    %v2408 = vadd.f32 %v1580, %v2229
    %v2409 = vadd.f32 %v1581, %v2255
    %v2410 = vadd.f32 %v1582, %v2258
    %v2411 = vadd.f32 %v1583, %v2284
    %v2412 = vadd.f32 %v1584, %v2287
    %v2413 = vadd.f32 %v1585, %v2313
    %v2414 = vadd.f32 %v1586, %v2316
    %v2415 = vadd.f32 %v1587, %v2342
    %v2416 = vadd.f32 %v1588, %v2345
    %v2417 = vadd.f32 %v1589, %v2371
    %v2418 = vadd.f32 %v1590, %v2374
    %v2419 = vadd.f32 %v1591, %v2400
    %v2420 = vadd.f32 %v1592, %v2403
    %s2421 = scalar_lea.vmem %s3, 64
    %v2422 = vld [vmem:[%s2421] sm:$0xff]
    %v2423 = vld [vmem:[%s2421 + $0x8] sm:$0xff]
    %v2424 = vld [vmem:[%s2421 + $0x10] sm:$0xff]
    %v2425 = vld [vmem:[%s2421 + $0x18] sm:$0xff]
    %2426 = vmatpush.msra.mxu0 0.0
    %2427 = vmatpush.msra.mxu0 0.0
    %2428 = vmatpush.msra.mxu0 0.0
    %2429 = vmatpush.msra.mxu0 0.0
    %2430 = vmatpush.msra.mxu0 0.0
    %2431 = vmatpush.msra.mxu0 0.0
    %2432 = vmatpush.msra.mxu0 0.0
    %2433 = vmatpush.msra.mxu0 0.0
    %2434 = vmatpush.msra.mxu0 0.0
    %2435 = vmatpush.msra.mxu0 0.0
    %2436 = vmatpush.msra.mxu0 0.0
    %2437 = vmatpush.msra.mxu0 0.0
    %2438 = vmatpush.msra.mxu0 %v2425
    %2439 = vmatpush.msra.mxu0 %v2424
    %2440 = vmatpush.msra.mxu0 %v2423
    %2441 = vmatpush.msra.mxu0 %v2422
    %2442 = vmatmul.f32.gmra.mxu0 %v719
    %v2443 = vpop.f32.mrf.mxu0
    %v2444 = vadd.f32 0.0, %v2443
    %2445 = vmatmul.f32.gmra.mxu0 %v722
    %v2446 = vpop.f32.mrf.mxu0
    %v2447 = vadd.f32 0.0, %v2446
    %2448 = vmatmul.f32.gmra.mxu0 %v725
    %v2449 = vpop.f32.mrf.mxu0
    %v2450 = vadd.f32 0.0, %v2449
    %2451 = vmatmul.f32.gmra.mxu0 %v728
    %v2452 = vpop.f32.mrf.mxu0
    %v2453 = vadd.f32 0.0, %v2452
    %2454 = vmatmul.f32.gmra.mxu0 %v731
    %v2455 = vpop.f32.mrf.mxu0
    %v2456 = vadd.f32 0.0, %v2455
    %2457 = vmatmul.f32.gmra.mxu0 %v734
    %v2458 = vpop.f32.mrf.mxu0
    %v2459 = vadd.f32 0.0, %v2458
    %2460 = vmatmul.f32.gmra.mxu0 %v737
    %v2461 = vpop.f32.mrf.mxu0
    %v2462 = vadd.f32 0.0, %v2461
    %2463 = vmatmul.f32.gmra.mxu0 %v740
    %v2464 = vpop.f32.mrf.mxu0
    %v2465 = vadd.f32 0.0, %v2464
    %2466 = vmatmul.f32.gmra.mxu0 %v743
    %v2467 = vpop.f32.mrf.mxu0
    %v2468 = vadd.f32 0.0, %v2467
    %2469 = vmatmul.f32.gmra.mxu0 %v746
    %v2470 = vpop.f32.mrf.mxu0
    %v2471 = vadd.f32 0.0, %v2470
    %2472 = vmatmul.f32.gmra.mxu0 %v749
    %v2473 = vpop.f32.mrf.mxu0
    %v2474 = vadd.f32 0.0, %v2473
    %2475 = vmatmul.f32.gmra.mxu0 %v752
    %v2476 = vpop.f32.mrf.mxu0
    %v2477 = vadd.f32 0.0, %v2476
    %2478 = vmatmul.f32.gmra.mxu0 %v755
    %v2479 = vpop.f32.mrf.mxu0
    %v2480 = vadd.f32 0.0, %v2479
    %2481 = vmatmul.f32.gmra.mxu0 %v758
    %v2482 = vpop.f32.mrf.mxu0
    %v2483 = vadd.f32 0.0, %v2482
    %2484 = vmatmul.f32.gmra.mxu0 %v761
    %v2485 = vpop.f32.mrf.mxu0
    %v2486 = vadd.f32 0.0, %v2485
    %2487 = vmatmul.f32.gmra.mxu0 %v764
    %v2488 = vpop.f32.mrf.mxu0
    %v2489 = vadd.f32 0.0, %v2488
    %2490 = vdwg.mxu0
    %s2491 = scalar_lea.vmem [#allocation2], 64
    %v2492 = vld [vmem:[%s2491] sm:$0xff]
    %v2493 = vld [vmem:[%s2491 + $0x8] sm:$0xff]
    %v2494 = vld [vmem:[%s2491 + $0x10] sm:$0xff]
    %v2495 = vld [vmem:[%s2491 + $0x18] sm:$0xff]
    %2496 = vmatpush.msra.mxu0 0.0
    %2497 = vmatpush.msra.mxu0 0.0
    %2498 = vmatpush.msra.mxu0 0.0
    %2499 = vmatpush.msra.mxu0 0.0
    %2500 = vmatpush.msra.mxu0 0.0
    %2501 = vmatpush.msra.mxu0 0.0
    %2502 = vmatpush.msra.mxu0 0.0
    %2503 = vmatpush.msra.mxu0 0.0
    %2504 = vmatpush.msra.mxu0 0.0
    %2505 = vmatpush.msra.mxu0 0.0
    %2506 = vmatpush.msra.mxu0 0.0
    %2507 = vmatpush.msra.mxu0 0.0
    %2508 = vmatpush.msra.mxu0 %v2495
    %2509 = vmatpush.msra.mxu0 %v2494
    %2510 = vmatpush.msra.mxu0 %v2493
    %2511 = vmatpush.msra.mxu0 %v2492
    %2512 = vmatmul.f32.gmra.mxu0 %v719
    %v2513 = vpop.f32.mrf.mxu0
    %v2514 = vadd.f32 0.0, %v2513
    %2515 = vmatmul.f32.gmra.mxu0 %v722
    %v2516 = vpop.f32.mrf.mxu0
    %v2517 = vadd.f32 0.0, %v2516
    %2518 = vmatmul.f32.gmra.mxu0 %v725
    %v2519 = vpop.f32.mrf.mxu0
    %v2520 = vadd.f32 0.0, %v2519
    %2521 = vmatmul.f32.gmra.mxu0 %v728
    %v2522 = vpop.f32.mrf.mxu0
    %v2523 = vadd.f32 0.0, %v2522
    %2524 = vmatmul.f32.gmra.mxu0 %v731
    %v2525 = vpop.f32.mrf.mxu0
    %v2526 = vadd.f32 0.0, %v2525
    %2527 = vmatmul.f32.gmra.mxu0 %v734
    %v2528 = vpop.f32.mrf.mxu0
    %v2529 = vadd.f32 0.0, %v2528
    %2530 = vmatmul.f32.gmra.mxu0 %v737
    %v2531 = vpop.f32.mrf.mxu0
    %v2532 = vadd.f32 0.0, %v2531
    %2533 = vmatmul.f32.gmra.mxu0 %v740
    %v2534 = vpop.f32.mrf.mxu0
    %v2535 = vadd.f32 0.0, %v2534
    %2536 = vmatmul.f32.gmra.mxu0 %v743
    %v2537 = vpop.f32.mrf.mxu0
    %v2538 = vadd.f32 0.0, %v2537
    %2539 = vmatmul.f32.gmra.mxu0 %v746
    %v2540 = vpop.f32.mrf.mxu0
    %v2541 = vadd.f32 0.0, %v2540
    %2542 = vmatmul.f32.gmra.mxu0 %v749
    %v2543 = vpop.f32.mrf.mxu0
    %v2544 = vadd.f32 0.0, %v2543
    %2545 = vmatmul.f32.gmra.mxu0 %v752
    %v2546 = vpop.f32.mrf.mxu0
    %v2547 = vadd.f32 0.0, %v2546
    %2548 = vmatmul.f32.gmra.mxu0 %v755
    %v2549 = vpop.f32.mrf.mxu0
    %v2550 = vadd.f32 0.0, %v2549
    %2551 = vmatmul.f32.gmra.mxu0 %v758
    %v2552 = vpop.f32.mrf.mxu0
    %v2553 = vadd.f32 0.0, %v2552
    %2554 = vmatmul.f32.gmra.mxu0 %v761
    %v2555 = vpop.f32.mrf.mxu0
    %v2556 = vadd.f32 0.0, %v2555
    %2557 = vmatmul.f32.gmra.mxu0 %v764
    %v2558 = vpop.f32.mrf.mxu0
    %v2559 = vadd.f32 0.0, %v2558
    %2560 = vdwg.mxu0
    %v2562 = vsel %vm296, %v2444, 0
    %v2565 = vsel %vm296, %v2447, 0
    %2567 = vmatpush.xpose.msra.mxu0 0.0
    %2568 = vmatpush.xpose.msra.mxu0 0.0
    %2569 = vmatpush.xpose.msra.mxu0 0.0
    %2570 = vmatpush.xpose.msra.mxu0 0.0
    %2571 = vmatpush.xpose.msra.mxu0 0.0
    %2572 = vmatpush.xpose.msra.mxu0 0.0
    %2573 = vmatpush.xpose.msra.mxu0 0.0
    %2574 = vmatpush.xpose.msra.mxu0 0.0
    %2575 = vmatpush.xpose.msra.mxu0 0.0
    %2576 = vmatpush.xpose.msra.mxu0 0.0
    %2577 = vmatpush.xpose.msra.mxu0 0.0
    %2578 = vmatpush.xpose.msra.mxu0 0.0
    %2579 = vmatpush.xpose.msra.mxu0 0.0
    %2580 = vmatpush.xpose.msra.mxu0 0.0
    %2581 = vmatpush.xpose.msra.mxu0 %v722
    %2582 = vmatpush.xpose.msra.mxu0 %v719
    %2583 = vmatmul.f32.gmra.mxu0 %v2562
    %v2584 = vpop.f32.mrf.mxu0
    %v2585 = vadd.f32 0.0, %v2584
    %2586 = vmatmul.f32.gmra.mxu0 %v2565
    %v2587 = vpop.f32.mrf.mxu0
    %v2588 = vadd.f32 0.0, %v2587
    %2589 = vdwg.mxu0
    %v2591 = vsel %vm296, %v2450, 0
    %v2594 = vsel %vm296, %v2453, 0
    %2596 = vmatpush.xpose.msra.mxu0 0.0
    %2597 = vmatpush.xpose.msra.mxu0 0.0
    %2598 = vmatpush.xpose.msra.mxu0 0.0
    %2599 = vmatpush.xpose.msra.mxu0 0.0
    %2600 = vmatpush.xpose.msra.mxu0 0.0
    %2601 = vmatpush.xpose.msra.mxu0 0.0
    %2602 = vmatpush.xpose.msra.mxu0 0.0
    %2603 = vmatpush.xpose.msra.mxu0 0.0
    %2604 = vmatpush.xpose.msra.mxu0 0.0
    %2605 = vmatpush.xpose.msra.mxu0 0.0
    %2606 = vmatpush.xpose.msra.mxu0 0.0
    %2607 = vmatpush.xpose.msra.mxu0 0.0
    %2608 = vmatpush.xpose.msra.mxu0 0.0
    %2609 = vmatpush.xpose.msra.mxu0 0.0
    %2610 = vmatpush.xpose.msra.mxu0 %v728
    %2611 = vmatpush.xpose.msra.mxu0 %v725
    %2612 = vmatmul.f32.gmra.mxu0 %v2591
    %v2613 = vpop.f32.mrf.mxu0
    %v2614 = vadd.f32 0.0, %v2613
    %2615 = vmatmul.f32.gmra.mxu0 %v2594
    %v2616 = vpop.f32.mrf.mxu0
    %v2617 = vadd.f32 0.0, %v2616
    %2618 = vdwg.mxu0
    %v2620 = vsel %vm296, %v2456, 0
    %v2623 = vsel %vm296, %v2459, 0
    %2625 = vmatpush.xpose.msra.mxu0 0.0
    %2626 = vmatpush.xpose.msra.mxu0 0.0
    %2627 = vmatpush.xpose.msra.mxu0 0.0
    %2628 = vmatpush.xpose.msra.mxu0 0.0
    %2629 = vmatpush.xpose.msra.mxu0 0.0
    %2630 = vmatpush.xpose.msra.mxu0 0.0
    %2631 = vmatpush.xpose.msra.mxu0 0.0
    %2632 = vmatpush.xpose.msra.mxu0 0.0
    %2633 = vmatpush.xpose.msra.mxu0 0.0
    %2634 = vmatpush.xpose.msra.mxu0 0.0
    %2635 = vmatpush.xpose.msra.mxu0 0.0
    %2636 = vmatpush.xpose.msra.mxu0 0.0
    %2637 = vmatpush.xpose.msra.mxu0 0.0
    %2638 = vmatpush.xpose.msra.mxu0 0.0
    %2639 = vmatpush.xpose.msra.mxu0 %v734
    %2640 = vmatpush.xpose.msra.mxu0 %v731
    %2641 = vmatmul.f32.gmra.mxu0 %v2620
    %v2642 = vpop.f32.mrf.mxu0
    %v2643 = vadd.f32 0.0, %v2642
    %2644 = vmatmul.f32.gmra.mxu0 %v2623
    %v2645 = vpop.f32.mrf.mxu0
    %v2646 = vadd.f32 0.0, %v2645
    %2647 = vdwg.mxu0
    %v2649 = vsel %vm296, %v2462, 0
    %v2652 = vsel %vm296, %v2465, 0
    %2654 = vmatpush.xpose.msra.mxu0 0.0
    %2655 = vmatpush.xpose.msra.mxu0 0.0
    %2656 = vmatpush.xpose.msra.mxu0 0.0
    %2657 = vmatpush.xpose.msra.mxu0 0.0
    %2658 = vmatpush.xpose.msra.mxu0 0.0
    %2659 = vmatpush.xpose.msra.mxu0 0.0
    %2660 = vmatpush.xpose.msra.mxu0 0.0
    %2661 = vmatpush.xpose.msra.mxu0 0.0
    %2662 = vmatpush.xpose.msra.mxu0 0.0
    %2663 = vmatpush.xpose.msra.mxu0 0.0
    %2664 = vmatpush.xpose.msra.mxu0 0.0
    %2665 = vmatpush.xpose.msra.mxu0 0.0
    %2666 = vmatpush.xpose.msra.mxu0 0.0
    %2667 = vmatpush.xpose.msra.mxu0 0.0
    %2668 = vmatpush.xpose.msra.mxu0 %v740
    %2669 = vmatpush.xpose.msra.mxu0 %v737
    %2670 = vmatmul.f32.gmra.mxu0 %v2649
    %v2671 = vpop.f32.mrf.mxu0
    %v2672 = vadd.f32 0.0, %v2671
    %2673 = vmatmul.f32.gmra.mxu0 %v2652
    %v2674 = vpop.f32.mrf.mxu0
    %v2675 = vadd.f32 0.0, %v2674
    %2676 = vdwg.mxu0
    %v2678 = vsel %vm296, %v2468, 0
    %v2681 = vsel %vm296, %v2471, 0
    %2683 = vmatpush.xpose.msra.mxu0 0.0
    %2684 = vmatpush.xpose.msra.mxu0 0.0
    %2685 = vmatpush.xpose.msra.mxu0 0.0
    %2686 = vmatpush.xpose.msra.mxu0 0.0
    %2687 = vmatpush.xpose.msra.mxu0 0.0
    %2688 = vmatpush.xpose.msra.mxu0 0.0
    %2689 = vmatpush.xpose.msra.mxu0 0.0
    %2690 = vmatpush.xpose.msra.mxu0 0.0
    %2691 = vmatpush.xpose.msra.mxu0 0.0
    %2692 = vmatpush.xpose.msra.mxu0 0.0
    %2693 = vmatpush.xpose.msra.mxu0 0.0
    %2694 = vmatpush.xpose.msra.mxu0 0.0
    %2695 = vmatpush.xpose.msra.mxu0 0.0
    %2696 = vmatpush.xpose.msra.mxu0 0.0
    %2697 = vmatpush.xpose.msra.mxu0 %v746
    %2698 = vmatpush.xpose.msra.mxu0 %v743
    %2699 = vmatmul.f32.gmra.mxu0 %v2678
    %v2700 = vpop.f32.mrf.mxu0
    %v2701 = vadd.f32 0.0, %v2700
    %2702 = vmatmul.f32.gmra.mxu0 %v2681
    %v2703 = vpop.f32.mrf.mxu0
    %v2704 = vadd.f32 0.0, %v2703
    %2705 = vdwg.mxu0
    %v2707 = vsel %vm296, %v2474, 0
    %v2710 = vsel %vm296, %v2477, 0
    %2712 = vmatpush.xpose.msra.mxu0 0.0
    %2713 = vmatpush.xpose.msra.mxu0 0.0
    %2714 = vmatpush.xpose.msra.mxu0 0.0
    %2715 = vmatpush.xpose.msra.mxu0 0.0
    %2716 = vmatpush.xpose.msra.mxu0 0.0
    %2717 = vmatpush.xpose.msra.mxu0 0.0
    %2718 = vmatpush.xpose.msra.mxu0 0.0
    %2719 = vmatpush.xpose.msra.mxu0 0.0
    %2720 = vmatpush.xpose.msra.mxu0 0.0
    %2721 = vmatpush.xpose.msra.mxu0 0.0
    %2722 = vmatpush.xpose.msra.mxu0 0.0
    %2723 = vmatpush.xpose.msra.mxu0 0.0
    %2724 = vmatpush.xpose.msra.mxu0 0.0
    %2725 = vmatpush.xpose.msra.mxu0 0.0
    %2726 = vmatpush.xpose.msra.mxu0 %v752
    %2727 = vmatpush.xpose.msra.mxu0 %v749
    %2728 = vmatmul.f32.gmra.mxu0 %v2707
    %v2729 = vpop.f32.mrf.mxu0
    %v2730 = vadd.f32 0.0, %v2729
    %2731 = vmatmul.f32.gmra.mxu0 %v2710
    %v2732 = vpop.f32.mrf.mxu0
    %v2733 = vadd.f32 0.0, %v2732
    %2734 = vdwg.mxu0
    %v2736 = vsel %vm296, %v2480, 0
    %v2739 = vsel %vm296, %v2483, 0
    %2741 = vmatpush.xpose.msra.mxu0 0.0
    %2742 = vmatpush.xpose.msra.mxu0 0.0
    %2743 = vmatpush.xpose.msra.mxu0 0.0
    %2744 = vmatpush.xpose.msra.mxu0 0.0
    %2745 = vmatpush.xpose.msra.mxu0 0.0
    %2746 = vmatpush.xpose.msra.mxu0 0.0
    %2747 = vmatpush.xpose.msra.mxu0 0.0
    %2748 = vmatpush.xpose.msra.mxu0 0.0
    %2749 = vmatpush.xpose.msra.mxu0 0.0
    %2750 = vmatpush.xpose.msra.mxu0 0.0
    %2751 = vmatpush.xpose.msra.mxu0 0.0
    %2752 = vmatpush.xpose.msra.mxu0 0.0
    %2753 = vmatpush.xpose.msra.mxu0 0.0
    %2754 = vmatpush.xpose.msra.mxu0 0.0
    %2755 = vmatpush.xpose.msra.mxu0 %v758
    %2756 = vmatpush.xpose.msra.mxu0 %v755
    %2757 = vmatmul.f32.gmra.mxu0 %v2736
    %v2758 = vpop.f32.mrf.mxu0
    %v2759 = vadd.f32 0.0, %v2758
    %2760 = vmatmul.f32.gmra.mxu0 %v2739
    %v2761 = vpop.f32.mrf.mxu0
    %v2762 = vadd.f32 0.0, %v2761
    %2763 = vdwg.mxu0
    %v2765 = vsel %vm296, %v2486, 0
    %v2768 = vsel %vm296, %v2489, 0
    %2770 = vmatpush.xpose.msra.mxu0 0.0
    %2771 = vmatpush.xpose.msra.mxu0 0.0
    %2772 = vmatpush.xpose.msra.mxu0 0.0
    %2773 = vmatpush.xpose.msra.mxu0 0.0
    %2774 = vmatpush.xpose.msra.mxu0 0.0
    %2775 = vmatpush.xpose.msra.mxu0 0.0
    %2776 = vmatpush.xpose.msra.mxu0 0.0
    %2777 = vmatpush.xpose.msra.mxu0 0.0
    %2778 = vmatpush.xpose.msra.mxu0 0.0
    %2779 = vmatpush.xpose.msra.mxu0 0.0
    %2780 = vmatpush.xpose.msra.mxu0 0.0
    %2781 = vmatpush.xpose.msra.mxu0 0.0
    %2782 = vmatpush.xpose.msra.mxu0 0.0
    %2783 = vmatpush.xpose.msra.mxu0 0.0
    %2784 = vmatpush.xpose.msra.mxu0 %v764
    %2785 = vmatpush.xpose.msra.mxu0 %v761
    %2786 = vmatmul.f32.gmra.mxu0 %v2765
    %v2787 = vpop.f32.mrf.mxu0
    %v2788 = vadd.f32 0.0, %v2787
    %2789 = vmatmul.f32.gmra.mxu0 %v2768
    %v2790 = vpop.f32.mrf.mxu0
    %v2791 = vadd.f32 0.0, %v2790
    %2792 = vdwg.mxu0
    %v2793 = vmul.f32 %v2585, 0.31622776
    %v2794 = vmul.f32 %v2588, 0.31622776
    %v2795 = vmul.f32 %v2614, 0.31622776
    %v2796 = vmul.f32 %v2617, 0.31622776
    %v2797 = vmul.f32 %v2643, 0.31622776
    %v2798 = vmul.f32 %v2646, 0.31622776
    %v2799 = vmul.f32 %v2672, 0.31622776
    %v2800 = vmul.f32 %v2675, 0.31622776
    %v2801 = vmul.f32 %v2701, 0.31622776
    %v2802 = vmul.f32 %v2704, 0.31622776
    %v2803 = vmul.f32 %v2730, 0.31622776
    %v2804 = vmul.f32 %v2733, 0.31622776
    %v2805 = vmul.f32 %v2759, 0.31622776
    %v2806 = vmul.f32 %v2762, 0.31622776
    %v2807 = vmul.f32 %v2788, 0.31622776
    %v2808 = vmul.f32 %v2791, 0.31622776
    %v2809 = vsel %vm1150, %v2793, -1e+30
    %v2810 = vsel %vm1151, %v2794, -1e+30
    %v2811 = vsel %vm1150, %v2795, -1e+30
    %v2812 = vsel %vm1151, %v2796, -1e+30
    %v2813 = vsel %vm1150, %v2797, -1e+30
    %v2814 = vsel %vm1151, %v2798, -1e+30
    %v2815 = vsel %vm1150, %v2799, -1e+30
    %v2816 = vsel %vm1151, %v2800, -1e+30
    %v2817 = vsel %vm1150, %v2801, -1e+30
    %v2818 = vsel %vm1151, %v2802, -1e+30
    %v2819 = vsel %vm1150, %v2803, -1e+30
    %v2820 = vsel %vm1151, %v2804, -1e+30
    %v2821 = vsel %vm1150, %v2805, -1e+30
    %v2822 = vsel %vm1151, %v2806, -1e+30
    %v2823 = vsel %vm1150, %v2807, -1e+30
    %v2824 = vsel %vm1151, %v2808, -1e+30
    %v2825 = vsel %vm1168, %v2809, -inf
    %2826 = vmax.xlane.f32.xlu0 %v2825
    %v2827 = vpop.xlane.xlu0 %2826
    %v2828 = vsel %vm1168, %v2810, -inf
    %2829 = vmax.xlane.f32.xlu0 %v2828
    %v2830 = vpop.xlane.xlu0 %2829
    %v2831 = vsel %vm1168, %v2811, -inf
    %2832 = vmax.xlane.f32.xlu0 %v2831
    %v2833 = vpop.xlane.xlu0 %2832
    %v2834 = vsel %vm1168, %v2812, -inf
    %2835 = vmax.xlane.f32.xlu0 %v2834
    %v2836 = vpop.xlane.xlu0 %2835
    %v2837 = vsel %vm1168, %v2813, -inf
    %2838 = vmax.xlane.f32.xlu0 %v2837
    %v2839 = vpop.xlane.xlu0 %2838
    %v2840 = vsel %vm1168, %v2814, -inf
    %2841 = vmax.xlane.f32.xlu0 %v2840
    %v2842 = vpop.xlane.xlu0 %2841
    %v2843 = vsel %vm1168, %v2815, -inf
    %2844 = vmax.xlane.f32.xlu0 %v2843
    %v2845 = vpop.xlane.xlu0 %2844
    %v2846 = vsel %vm1168, %v2816, -inf
    %2847 = vmax.xlane.f32.xlu0 %v2846
    %v2848 = vpop.xlane.xlu0 %2847
    %v2849 = vsel %vm1168, %v2817, -inf
    %2850 = vmax.xlane.f32.xlu0 %v2849
    %v2851 = vpop.xlane.xlu0 %2850
    %v2852 = vsel %vm1168, %v2818, -inf
    %2853 = vmax.xlane.f32.xlu0 %v2852
    %v2854 = vpop.xlane.xlu0 %2853
    %v2855 = vsel %vm1168, %v2819, -inf
    %2856 = vmax.xlane.f32.xlu0 %v2855
    %v2857 = vpop.xlane.xlu0 %2856
    %v2858 = vsel %vm1168, %v2820, -inf
    %2859 = vmax.xlane.f32.xlu0 %v2858
    %v2860 = vpop.xlane.xlu0 %2859
    %v2861 = vsel %vm1168, %v2821, -inf
    %2862 = vmax.xlane.f32.xlu0 %v2861
    %v2863 = vpop.xlane.xlu0 %2862
    %v2864 = vsel %vm1168, %v2822, -inf
    %2865 = vmax.xlane.f32.xlu0 %v2864
    %v2866 = vpop.xlane.xlu0 %2865
    %v2867 = vsel %vm1168, %v2823, -inf
    %2868 = vmax.xlane.f32.xlu0 %v2867
    %v2869 = vpop.xlane.xlu0 %2868
    %v2870 = vsel %vm1168, %v2824, -inf
    %2871 = vmax.xlane.f32.xlu0 %v2870
    %v2872 = vpop.xlane.xlu0 %2871
    %v2873 = vsub.f32 %v2809, %v2827
    %v2874 = vsub.f32 %v2810, %v2830
    %v2875 = vsub.f32 %v2811, %v2833
    %v2876 = vsub.f32 %v2812, %v2836
    %v2877 = vsub.f32 %v2813, %v2839
    %v2878 = vsub.f32 %v2814, %v2842
    %v2879 = vsub.f32 %v2815, %v2845
    %v2880 = vsub.f32 %v2816, %v2848
    %v2881 = vsub.f32 %v2817, %v2851
    %v2882 = vsub.f32 %v2818, %v2854
    %v2883 = vsub.f32 %v2819, %v2857
    %v2884 = vsub.f32 %v2820, %v2860
    %v2885 = vsub.f32 %v2821, %v2863
    %v2886 = vsub.f32 %v2822, %v2866
    %v2887 = vsub.f32 %v2823, %v2869
    %v2888 = vsub.f32 %v2824, %v2872
    %v2889 = vmul.f32 %v2873, 1.442695
    %v2890 = vpow.pop %v2889
    %v2891 = vmul.f32 %v2874, 1.442695
    %v2892 = vpow.pop %v2891
    %v2893 = vmul.f32 %v2875, 1.442695
    %v2894 = vpow.pop %v2893
    %v2895 = vmul.f32 %v2876, 1.442695
    %v2896 = vpow.pop %v2895
    %v2897 = vmul.f32 %v2877, 1.442695
    %v2898 = vpow.pop %v2897
    %v2899 = vmul.f32 %v2878, 1.442695
    %v2900 = vpow.pop %v2899
    %v2901 = vmul.f32 %v2879, 1.442695
    %v2902 = vpow.pop %v2901
    %v2903 = vmul.f32 %v2880, 1.442695
    %v2904 = vpow.pop %v2903
    %v2905 = vmul.f32 %v2881, 1.442695
    %v2906 = vpow.pop %v2905
    %v2907 = vmul.f32 %v2882, 1.442695
    %v2908 = vpow.pop %v2907
    %v2909 = vmul.f32 %v2883, 1.442695
    %v2910 = vpow.pop %v2909
    %v2911 = vmul.f32 %v2884, 1.442695
    %v2912 = vpow.pop %v2911
    %v2913 = vmul.f32 %v2885, 1.442695
    %v2914 = vpow.pop %v2913
    %v2915 = vmul.f32 %v2886, 1.442695
    %v2916 = vpow.pop %v2915
    %v2917 = vmul.f32 %v2887, 1.442695
    %v2918 = vpow.pop %v2917
    %v2919 = vmul.f32 %v2888, 1.442695
    %v2920 = vpow.pop %v2919
    %v2921 = vsel %vm1168, %v2890, 0.0
    %2922 = vadd.xlane.f32.xlu0 %v2921
    %v2923 = vpop.xlane.xlu0 %2922
    %v2924 = vsel %vm1168, %v2892, 0.0
    %2925 = vadd.xlane.f32.xlu0 %v2924
    %v2926 = vpop.xlane.xlu0 %2925
    %v2927 = vsel %vm1168, %v2894, 0.0
    %2928 = vadd.xlane.f32.xlu0 %v2927
    %v2929 = vpop.xlane.xlu0 %2928
    %v2930 = vsel %vm1168, %v2896, 0.0
    %2931 = vadd.xlane.f32.xlu0 %v2930
    %v2932 = vpop.xlane.xlu0 %2931
    %v2933 = vsel %vm1168, %v2898, 0.0
    %2934 = vadd.xlane.f32.xlu0 %v2933
    %v2935 = vpop.xlane.xlu0 %2934
    %v2936 = vsel %vm1168, %v2900, 0.0
    %2937 = vadd.xlane.f32.xlu0 %v2936
    %v2938 = vpop.xlane.xlu0 %2937
    %v2939 = vsel %vm1168, %v2902, 0.0
    %2940 = vadd.xlane.f32.xlu0 %v2939
    %v2941 = vpop.xlane.xlu0 %2940
    %v2942 = vsel %vm1168, %v2904, 0.0
    %2943 = vadd.xlane.f32.xlu0 %v2942
    %v2944 = vpop.xlane.xlu0 %2943
    %v2945 = vsel %vm1168, %v2906, 0.0
    %2946 = vadd.xlane.f32.xlu0 %v2945
    %v2947 = vpop.xlane.xlu0 %2946
    %v2948 = vsel %vm1168, %v2908, 0.0
    %2949 = vadd.xlane.f32.xlu0 %v2948
    %v2950 = vpop.xlane.xlu0 %2949
    %v2951 = vsel %vm1168, %v2910, 0.0
    %2952 = vadd.xlane.f32.xlu0 %v2951
    %v2953 = vpop.xlane.xlu0 %2952
    %v2954 = vsel %vm1168, %v2912, 0.0
    %2955 = vadd.xlane.f32.xlu0 %v2954
    %v2956 = vpop.xlane.xlu0 %2955
    %v2957 = vsel %vm1168, %v2914, 0.0
    %2958 = vadd.xlane.f32.xlu0 %v2957
    %v2959 = vpop.xlane.xlu0 %2958
    %v2960 = vsel %vm1168, %v2916, 0.0
    %2961 = vadd.xlane.f32.xlu0 %v2960
    %v2962 = vpop.xlane.xlu0 %2961
    %v2963 = vsel %vm1168, %v2918, 0.0
    %2964 = vadd.xlane.f32.xlu0 %v2963
    %v2965 = vpop.xlane.xlu0 %2964
    %v2966 = vsel %vm1168, %v2920, 0.0
    %2967 = vadd.xlane.f32.xlu0 %v2966
    %v2968 = vpop.xlane.xlu0 %2967
    %v2969 = vrcp.pop %v2923
    %v2970 = vrcp.pop %v2926
    %v2971 = vrcp.pop %v2929
    %v2972 = vrcp.pop %v2932
    %v2973 = vrcp.pop %v2935
    %v2974 = vrcp.pop %v2938
    %v2975 = vrcp.pop %v2941
    %v2976 = vrcp.pop %v2944
    %v2977 = vrcp.pop %v2947
    %v2978 = vrcp.pop %v2950
    %v2979 = vrcp.pop %v2953
    %v2980 = vrcp.pop %v2956
    %v2981 = vrcp.pop %v2959
    %v2982 = vrcp.pop %v2962
    %v2983 = vrcp.pop %v2965
    %v2984 = vrcp.pop %v2968
    %v2985 = vmul.f32 %v2890, %v2969
    %v2986 = vmul.f32 %v2892, %v2970
    %v2987 = vmul.f32 %v2894, %v2971
    %v2988 = vmul.f32 %v2896, %v2972
    %v2989 = vmul.f32 %v2898, %v2973
    %v2990 = vmul.f32 %v2900, %v2974
    %v2991 = vmul.f32 %v2902, %v2975
    %v2992 = vmul.f32 %v2904, %v2976
    %v2993 = vmul.f32 %v2906, %v2977
    %v2994 = vmul.f32 %v2908, %v2978
    %v2995 = vmul.f32 %v2910, %v2979
    %v2996 = vmul.f32 %v2912, %v2980
    %v2997 = vmul.f32 %v2914, %v2981
    %v2998 = vmul.f32 %v2916, %v2982
    %v2999 = vmul.f32 %v2918, %v2983
    %v3000 = vmul.f32 %v2920, %v2984
    %v3002 = vsel %vm1168, %v2985, 0
    %v3005 = vsel %vm1168, %v2986, 0
    %3007 = vmatpush.msra.mxu0 0.0
    %3008 = vmatpush.msra.mxu0 0.0
    %3009 = vmatpush.msra.mxu0 0.0
    %3010 = vmatpush.msra.mxu0 0.0
    %3011 = vmatpush.msra.mxu0 0.0
    %3012 = vmatpush.msra.mxu0 0.0
    %3013 = vmatpush.msra.mxu0 0.0
    %3014 = vmatpush.msra.mxu0 0.0
    %3015 = vmatpush.msra.mxu0 0.0
    %3016 = vmatpush.msra.mxu0 0.0
    %3017 = vmatpush.msra.mxu0 0.0
    %3018 = vmatpush.msra.mxu0 0.0
    %3019 = vmatpush.msra.mxu0 0.0
    %3020 = vmatpush.msra.mxu0 0.0
    %3021 = vmatpush.msra.mxu0 %v2517
    %3022 = vmatpush.msra.mxu0 %v2514
    %3023 = vmatmul.f32.gmra.mxu0 %v3002
    %v3024 = vpop.f32.mrf.mxu0
    %v3025 = vadd.f32 0.0, %v3024
    %3026 = vmatmul.f32.gmra.mxu0 %v3005
    %v3027 = vpop.f32.mrf.mxu0
    %v3028 = vadd.f32 0.0, %v3027
    %3029 = vdwg.mxu0
    %v3031 = vsel %vm1168, %v2987, 0
    %v3034 = vsel %vm1168, %v2988, 0
    %3036 = vmatpush.msra.mxu0 0.0
    %3037 = vmatpush.msra.mxu0 0.0
    %3038 = vmatpush.msra.mxu0 0.0
    %3039 = vmatpush.msra.mxu0 0.0
    %3040 = vmatpush.msra.mxu0 0.0
    %3041 = vmatpush.msra.mxu0 0.0
    %3042 = vmatpush.msra.mxu0 0.0
    %3043 = vmatpush.msra.mxu0 0.0
    %3044 = vmatpush.msra.mxu0 0.0
    %3045 = vmatpush.msra.mxu0 0.0
    %3046 = vmatpush.msra.mxu0 0.0
    %3047 = vmatpush.msra.mxu0 0.0
    %3048 = vmatpush.msra.mxu0 0.0
    %3049 = vmatpush.msra.mxu0 0.0
    %3050 = vmatpush.msra.mxu0 %v2523
    %3051 = vmatpush.msra.mxu0 %v2520
    %3052 = vmatmul.f32.gmra.mxu0 %v3031
    %v3053 = vpop.f32.mrf.mxu0
    %v3054 = vadd.f32 0.0, %v3053
    %3055 = vmatmul.f32.gmra.mxu0 %v3034
    %v3056 = vpop.f32.mrf.mxu0
    %v3057 = vadd.f32 0.0, %v3056
    %3058 = vdwg.mxu0
    %v3060 = vsel %vm1168, %v2989, 0
    %v3063 = vsel %vm1168, %v2990, 0
    %3065 = vmatpush.msra.mxu0 0.0
    %3066 = vmatpush.msra.mxu0 0.0
    %3067 = vmatpush.msra.mxu0 0.0
    %3068 = vmatpush.msra.mxu0 0.0
    %3069 = vmatpush.msra.mxu0 0.0
    %3070 = vmatpush.msra.mxu0 0.0
    %3071 = vmatpush.msra.mxu0 0.0
    %3072 = vmatpush.msra.mxu0 0.0
    %3073 = vmatpush.msra.mxu0 0.0
    %3074 = vmatpush.msra.mxu0 0.0
    %3075 = vmatpush.msra.mxu0 0.0
    %3076 = vmatpush.msra.mxu0 0.0
    %3077 = vmatpush.msra.mxu0 0.0
    %3078 = vmatpush.msra.mxu0 0.0
    %3079 = vmatpush.msra.mxu0 %v2529
    %3080 = vmatpush.msra.mxu0 %v2526
    %3081 = vmatmul.f32.gmra.mxu0 %v3060
    %v3082 = vpop.f32.mrf.mxu0
    %v3083 = vadd.f32 0.0, %v3082
    %3084 = vmatmul.f32.gmra.mxu0 %v3063
    %v3085 = vpop.f32.mrf.mxu0
    %v3086 = vadd.f32 0.0, %v3085
    %3087 = vdwg.mxu0
    %v3089 = vsel %vm1168, %v2991, 0
    %v3092 = vsel %vm1168, %v2992, 0
    %3094 = vmatpush.msra.mxu0 0.0
    %3095 = vmatpush.msra.mxu0 0.0
    %3096 = vmatpush.msra.mxu0 0.0
    %3097 = vmatpush.msra.mxu0 0.0
    %3098 = vmatpush.msra.mxu0 0.0
    %3099 = vmatpush.msra.mxu0 0.0
    %3100 = vmatpush.msra.mxu0 0.0
    %3101 = vmatpush.msra.mxu0 0.0
    %3102 = vmatpush.msra.mxu0 0.0
    %3103 = vmatpush.msra.mxu0 0.0
    %3104 = vmatpush.msra.mxu0 0.0
    %3105 = vmatpush.msra.mxu0 0.0
    %3106 = vmatpush.msra.mxu0 0.0
    %3107 = vmatpush.msra.mxu0 0.0
    %3108 = vmatpush.msra.mxu0 %v2535
    %3109 = vmatpush.msra.mxu0 %v2532
    %3110 = vmatmul.f32.gmra.mxu0 %v3089
    %v3111 = vpop.f32.mrf.mxu0
    %v3112 = vadd.f32 0.0, %v3111
    %3113 = vmatmul.f32.gmra.mxu0 %v3092
    %v3114 = vpop.f32.mrf.mxu0
    %v3115 = vadd.f32 0.0, %v3114
    %3116 = vdwg.mxu0
    %v3118 = vsel %vm1168, %v2993, 0
    %v3121 = vsel %vm1168, %v2994, 0
    %3123 = vmatpush.msra.mxu0 0.0
    %3124 = vmatpush.msra.mxu0 0.0
    %3125 = vmatpush.msra.mxu0 0.0
    %3126 = vmatpush.msra.mxu0 0.0
    %3127 = vmatpush.msra.mxu0 0.0
    %3128 = vmatpush.msra.mxu0 0.0
    %3129 = vmatpush.msra.mxu0 0.0
    %3130 = vmatpush.msra.mxu0 0.0
    %3131 = vmatpush.msra.mxu0 0.0
    %3132 = vmatpush.msra.mxu0 0.0
    %3133 = vmatpush.msra.mxu0 0.0
    %3134 = vmatpush.msra.mxu0 0.0
    %3135 = vmatpush.msra.mxu0 0.0
    %3136 = vmatpush.msra.mxu0 0.0
    %3137 = vmatpush.msra.mxu0 %v2541
    %3138 = vmatpush.msra.mxu0 %v2538
    %3139 = vmatmul.f32.gmra.mxu0 %v3118
    %v3140 = vpop.f32.mrf.mxu0
    %v3141 = vadd.f32 0.0, %v3140
    %3142 = vmatmul.f32.gmra.mxu0 %v3121
    %v3143 = vpop.f32.mrf.mxu0
    %v3144 = vadd.f32 0.0, %v3143
    %3145 = vdwg.mxu0
    %v3147 = vsel %vm1168, %v2995, 0
    %v3150 = vsel %vm1168, %v2996, 0
    %3152 = vmatpush.msra.mxu0 0.0
    %3153 = vmatpush.msra.mxu0 0.0
    %3154 = vmatpush.msra.mxu0 0.0
    %3155 = vmatpush.msra.mxu0 0.0
    %3156 = vmatpush.msra.mxu0 0.0
    %3157 = vmatpush.msra.mxu0 0.0
    %3158 = vmatpush.msra.mxu0 0.0
    %3159 = vmatpush.msra.mxu0 0.0
    %3160 = vmatpush.msra.mxu0 0.0
    %3161 = vmatpush.msra.mxu0 0.0
    %3162 = vmatpush.msra.mxu0 0.0
    %3163 = vmatpush.msra.mxu0 0.0
    %3164 = vmatpush.msra.mxu0 0.0
    %3165 = vmatpush.msra.mxu0 0.0
    %3166 = vmatpush.msra.mxu0 %v2547
    %3167 = vmatpush.msra.mxu0 %v2544
    %3168 = vmatmul.f32.gmra.mxu0 %v3147
    %v3169 = vpop.f32.mrf.mxu0
    %v3170 = vadd.f32 0.0, %v3169
    %3171 = vmatmul.f32.gmra.mxu0 %v3150
    %v3172 = vpop.f32.mrf.mxu0
    %v3173 = vadd.f32 0.0, %v3172
    %3174 = vdwg.mxu0
    %v3176 = vsel %vm1168, %v2997, 0
    %v3179 = vsel %vm1168, %v2998, 0
    %3181 = vmatpush.msra.mxu0 0.0
    %3182 = vmatpush.msra.mxu0 0.0
    %3183 = vmatpush.msra.mxu0 0.0
    %3184 = vmatpush.msra.mxu0 0.0
    %3185 = vmatpush.msra.mxu0 0.0
    %3186 = vmatpush.msra.mxu0 0.0
    %3187 = vmatpush.msra.mxu0 0.0
    %3188 = vmatpush.msra.mxu0 0.0
    %3189 = vmatpush.msra.mxu0 0.0
    %3190 = vmatpush.msra.mxu0 0.0
    %3191 = vmatpush.msra.mxu0 0.0
    %3192 = vmatpush.msra.mxu0 0.0
    %3193 = vmatpush.msra.mxu0 0.0
    %3194 = vmatpush.msra.mxu0 0.0
    %3195 = vmatpush.msra.mxu0 %v2553
    %3196 = vmatpush.msra.mxu0 %v2550
    %3197 = vmatmul.f32.gmra.mxu0 %v3176
    %v3198 = vpop.f32.mrf.mxu0
    %v3199 = vadd.f32 0.0, %v3198
    %3200 = vmatmul.f32.gmra.mxu0 %v3179
    %v3201 = vpop.f32.mrf.mxu0
    %v3202 = vadd.f32 0.0, %v3201
    %3203 = vdwg.mxu0
    %v3205 = vsel %vm1168, %v2999, 0
    %v3208 = vsel %vm1168, %v3000, 0
    %3210 = vmatpush.msra.mxu0 0.0
    %3211 = vmatpush.msra.mxu0 0.0
    %3212 = vmatpush.msra.mxu0 0.0
    %3213 = vmatpush.msra.mxu0 0.0
    %3214 = vmatpush.msra.mxu0 0.0
    %3215 = vmatpush.msra.mxu0 0.0
    %3216 = vmatpush.msra.mxu0 0.0
    %3217 = vmatpush.msra.mxu0 0.0
    %3218 = vmatpush.msra.mxu0 0.0
    %3219 = vmatpush.msra.mxu0 0.0
    %3220 = vmatpush.msra.mxu0 0.0
    %3221 = vmatpush.msra.mxu0 0.0
    %3222 = vmatpush.msra.mxu0 0.0
    %3223 = vmatpush.msra.mxu0 0.0
    %3224 = vmatpush.msra.mxu0 %v2559
    %3225 = vmatpush.msra.mxu0 %v2556
    %3226 = vmatmul.f32.gmra.mxu0 %v3205
    %v3227 = vpop.f32.mrf.mxu0
    %v3228 = vadd.f32 0.0, %v3227
    %3229 = vmatmul.f32.gmra.mxu0 %v3208
    %v3230 = vpop.f32.mrf.mxu0
    %v3231 = vadd.f32 0.0, %v3230
    %3232 = vdwg.mxu0
    %v3233 = vadd.f32 %v2405, %v3025
    %v3234 = vadd.f32 %v2406, %v3028
    %v3235 = vadd.f32 %v2407, %v3054
    %v3236 = vadd.f32 %v2408, %v3057
    %v3237 = vadd.f32 %v2409, %v3083
    %v3238 = vadd.f32 %v2410, %v3086
    %v3239 = vadd.f32 %v2411, %v3112
    %v3240 = vadd.f32 %v2412, %v3115
    %v3241 = vadd.f32 %v2413, %v3141
    %v3242 = vadd.f32 %v2414, %v3144
    %v3243 = vadd.f32 %v2415, %v3170
    %v3244 = vadd.f32 %v2416, %v3173
    %v3245 = vadd.f32 %v2417, %v3199
    %v3246 = vadd.f32 %v2418, %v3202
    %v3247 = vadd.f32 %v2419, %v3228
    %v3248 = vadd.f32 %v2420, %v3231
    %v3249 = vld [vmem:[%s12] sm:$0x1]
    %v3250 = vld [vmem:[%s13] sm:$0x1]
    %v3251 = vsel %vm296, %v3233, 0.0
    %3252 = vadd.xlane.f32.xlu0 %v3251
    %v3253 = vpop.xlane.xlu0 %3252
    %v3254 = vsel %vm296, %v3234, 0.0
    %3255 = vadd.xlane.f32.xlu0 %v3254
    %v3256 = vpop.xlane.xlu0 %3255
    %v3257 = vsel %vm296, %v3235, 0.0
    %3258 = vadd.xlane.f32.xlu0 %v3257
    %v3259 = vpop.xlane.xlu0 %3258
    %v3260 = vsel %vm296, %v3236, 0.0
    %3261 = vadd.xlane.f32.xlu0 %v3260
    %v3262 = vpop.xlane.xlu0 %3261
    %v3263 = vsel %vm296, %v3237, 0.0
    %3264 = vadd.xlane.f32.xlu0 %v3263
    %v3265 = vpop.xlane.xlu0 %3264
    %v3266 = vsel %vm296, %v3238, 0.0
    %3267 = vadd.xlane.f32.xlu0 %v3266
    %v3268 = vpop.xlane.xlu0 %3267
    %v3269 = vsel %vm296, %v3239, 0.0
    %3270 = vadd.xlane.f32.xlu0 %v3269
    %v3271 = vpop.xlane.xlu0 %3270
    %v3272 = vsel %vm296, %v3240, 0.0
    %3273 = vadd.xlane.f32.xlu0 %v3272
    %v3274 = vpop.xlane.xlu0 %3273
    %v3275 = vsel %vm296, %v3241, 0.0
    %3276 = vadd.xlane.f32.xlu0 %v3275
    %v3277 = vpop.xlane.xlu0 %3276
    %v3278 = vsel %vm296, %v3242, 0.0
    %3279 = vadd.xlane.f32.xlu0 %v3278
    %v3280 = vpop.xlane.xlu0 %3279
    %v3281 = vsel %vm296, %v3243, 0.0
    %3282 = vadd.xlane.f32.xlu0 %v3281
    %v3283 = vpop.xlane.xlu0 %3282
    %v3284 = vsel %vm296, %v3244, 0.0
    %3285 = vadd.xlane.f32.xlu0 %v3284
    %v3286 = vpop.xlane.xlu0 %3285
    %v3287 = vsel %vm296, %v3245, 0.0
    %3288 = vadd.xlane.f32.xlu0 %v3287
    %v3289 = vpop.xlane.xlu0 %3288
    %v3290 = vsel %vm296, %v3246, 0.0
    %3291 = vadd.xlane.f32.xlu0 %v3290
    %v3292 = vpop.xlane.xlu0 %3291
    %v3293 = vsel %vm296, %v3247, 0.0
    %3294 = vadd.xlane.f32.xlu0 %v3293
    %v3295 = vpop.xlane.xlu0 %3294
    %v3296 = vsel %vm296, %v3248, 0.0
    %3297 = vadd.xlane.f32.xlu0 %v3296
    %v3298 = vpop.xlane.xlu0 %3297
    %v3299 = vmul.f32 %v3253, %v351
    %v3300 = vmul.f32 %v3256, %v351
    %v3301 = vmul.f32 %v3259, %v351
    %v3302 = vmul.f32 %v3262, %v351
    %v3303 = vmul.f32 %v3265, %v351
    %v3304 = vmul.f32 %v3268, %v351
    %v3305 = vmul.f32 %v3271, %v351
    %v3306 = vmul.f32 %v3274, %v351
    %v3307 = vmul.f32 %v3277, %v351
    %v3308 = vmul.f32 %v3280, %v351
    %v3309 = vmul.f32 %v3283, %v351
    %v3310 = vmul.f32 %v3286, %v351
    %v3311 = vmul.f32 %v3289, %v351
    %v3312 = vmul.f32 %v3292, %v351
    %v3313 = vmul.f32 %v3295, %v351
    %v3314 = vmul.f32 %v3298, %v351
    %v3315 = vsub.f32 %v3233, %v3299
    %v3316 = vsub.f32 %v3234, %v3300
    %v3317 = vsub.f32 %v3235, %v3301
    %v3318 = vsub.f32 %v3236, %v3302
    %v3319 = vsub.f32 %v3237, %v3303
    %v3320 = vsub.f32 %v3238, %v3304
    %v3321 = vsub.f32 %v3239, %v3305
    %v3322 = vsub.f32 %v3240, %v3306
    %v3323 = vsub.f32 %v3241, %v3307
    %v3324 = vsub.f32 %v3242, %v3308
    %v3325 = vsub.f32 %v3243, %v3309
    %v3326 = vsub.f32 %v3244, %v3310
    %v3327 = vsub.f32 %v3245, %v3311
    %v3328 = vsub.f32 %v3246, %v3312
    %v3329 = vsub.f32 %v3247, %v3313
    %v3330 = vsub.f32 %v3248, %v3314
    %v3331 = vmul.f32 %v3315, %v3315
    %v3332 = vmul.f32 %v3316, %v3316
    %v3333 = vmul.f32 %v3317, %v3317
    %v3334 = vmul.f32 %v3318, %v3318
    %v3335 = vmul.f32 %v3319, %v3319
    %v3336 = vmul.f32 %v3320, %v3320
    %v3337 = vmul.f32 %v3321, %v3321
    %v3338 = vmul.f32 %v3322, %v3322
    %v3339 = vmul.f32 %v3323, %v3323
    %v3340 = vmul.f32 %v3324, %v3324
    %v3341 = vmul.f32 %v3325, %v3325
    %v3342 = vmul.f32 %v3326, %v3326
    %v3343 = vmul.f32 %v3327, %v3327
    %v3344 = vmul.f32 %v3328, %v3328
    %v3345 = vmul.f32 %v3329, %v3329
    %v3346 = vmul.f32 %v3330, %v3330
    %v3347 = vsel %vm296, %v3331, 0.0
    %3348 = vadd.xlane.f32.xlu0 %v3347
    %v3349 = vpop.xlane.xlu0 %3348
    %v3350 = vsel %vm296, %v3332, 0.0
    %3351 = vadd.xlane.f32.xlu0 %v3350
    %v3352 = vpop.xlane.xlu0 %3351
    %v3353 = vsel %vm296, %v3333, 0.0
    %3354 = vadd.xlane.f32.xlu0 %v3353
    %v3355 = vpop.xlane.xlu0 %3354
    %v3356 = vsel %vm296, %v3334, 0.0
    %3357 = vadd.xlane.f32.xlu0 %v3356
    %v3358 = vpop.xlane.xlu0 %3357
    %v3359 = vsel %vm296, %v3335, 0.0
    %3360 = vadd.xlane.f32.xlu0 %v3359
    %v3361 = vpop.xlane.xlu0 %3360
    %v3362 = vsel %vm296, %v3336, 0.0
    %3363 = vadd.xlane.f32.xlu0 %v3362
    %v3364 = vpop.xlane.xlu0 %3363
    %v3365 = vsel %vm296, %v3337, 0.0
    %3366 = vadd.xlane.f32.xlu0 %v3365
    %v3367 = vpop.xlane.xlu0 %3366
    %v3368 = vsel %vm296, %v3338, 0.0
    %3369 = vadd.xlane.f32.xlu0 %v3368
    %v3370 = vpop.xlane.xlu0 %3369
    %v3371 = vsel %vm296, %v3339, 0.0
    %3372 = vadd.xlane.f32.xlu0 %v3371
    %v3373 = vpop.xlane.xlu0 %3372
    %v3374 = vsel %vm296, %v3340, 0.0
    %3375 = vadd.xlane.f32.xlu0 %v3374
    %v3376 = vpop.xlane.xlu0 %3375
    %v3377 = vsel %vm296, %v3341, 0.0
    %3378 = vadd.xlane.f32.xlu0 %v3377
    %v3379 = vpop.xlane.xlu0 %3378
    %v3380 = vsel %vm296, %v3342, 0.0
    %3381 = vadd.xlane.f32.xlu0 %v3380
    %v3382 = vpop.xlane.xlu0 %3381
    %v3383 = vsel %vm296, %v3343, 0.0
    %3384 = vadd.xlane.f32.xlu0 %v3383
    %v3385 = vpop.xlane.xlu0 %3384
    %v3386 = vsel %vm296, %v3344, 0.0
    %3387 = vadd.xlane.f32.xlu0 %v3386
    %v3388 = vpop.xlane.xlu0 %3387
    %v3389 = vsel %vm296, %v3345, 0.0
    %3390 = vadd.xlane.f32.xlu0 %v3389
    %v3391 = vpop.xlane.xlu0 %3390
    %v3392 = vsel %vm296, %v3346, 0.0
    %3393 = vadd.xlane.f32.xlu0 %v3392
    %v3394 = vpop.xlane.xlu0 %3393
    %v3395 = vmul.f32 %v3349, %v351
    %v3396 = vmul.f32 %v3352, %v351
    %v3397 = vmul.f32 %v3355, %v351
    %v3398 = vmul.f32 %v3358, %v351
    %v3399 = vmul.f32 %v3361, %v351
    %v3400 = vmul.f32 %v3364, %v351
    %v3401 = vmul.f32 %v3367, %v351
    %v3402 = vmul.f32 %v3370, %v351
    %v3403 = vmul.f32 %v3373, %v351
    %v3404 = vmul.f32 %v3376, %v351
    %v3405 = vmul.f32 %v3379, %v351
    %v3406 = vmul.f32 %v3382, %v351
    %v3407 = vmul.f32 %v3385, %v351
    %v3408 = vmul.f32 %v3388, %v351
    %v3409 = vmul.f32 %v3391, %v351
    %v3410 = vmul.f32 %v3394, %v351
    %v3411 = vadd.f32 %v3395, 1e-05
    %v3412 = vadd.f32 %v3396, 1e-05
    %v3413 = vadd.f32 %v3397, 1e-05
    %v3414 = vadd.f32 %v3398, 1e-05
    %v3415 = vadd.f32 %v3399, 1e-05
    %v3416 = vadd.f32 %v3400, 1e-05
    %v3417 = vadd.f32 %v3401, 1e-05
    %v3418 = vadd.f32 %v3402, 1e-05
    %v3419 = vadd.f32 %v3403, 1e-05
    %v3420 = vadd.f32 %v3404, 1e-05
    %v3421 = vadd.f32 %v3405, 1e-05
    %v3422 = vadd.f32 %v3406, 1e-05
    %v3423 = vadd.f32 %v3407, 1e-05
    %v3424 = vadd.f32 %v3408, 1e-05
    %v3425 = vadd.f32 %v3409, 1e-05
    %v3426 = vadd.f32 %v3410, 1e-05
    %v3427 = vrsqrt.pop %v3411
    %v3428 = vmul.f32 %v3427, %v3411
    %v3429 = vmul.f32 %v3428, %v3427
    %v3430 = vmul.f32 0.5, %v3429
    %v3431 = vsub.f32 1.5, %v3430
    %v3432 = vmul.f32 %v3427, %v3431
    %vm3433 = vweird.f32 %v3411
    %vm3434 = vweird.f32 %v3427
    %vm3435 = vmor %vm3433, %vm3434
    %v3436 = vsel %vm3435, %v3427, %v3432
    %v3437 = vrsqrt.pop %v3412
    %v3438 = vmul.f32 %v3437, %v3412
    %v3439 = vmul.f32 %v3438, %v3437
    %v3440 = vmul.f32 0.5, %v3439
    %v3441 = vsub.f32 1.5, %v3440
    %v3442 = vmul.f32 %v3437, %v3441
    %vm3443 = vweird.f32 %v3412
    %vm3444 = vweird.f32 %v3437
    %vm3445 = vmor %vm3443, %vm3444
    %v3446 = vsel %vm3445, %v3437, %v3442
    %v3447 = vrsqrt.pop %v3413
    %v3448 = vmul.f32 %v3447, %v3413
    %v3449 = vmul.f32 %v3448, %v3447
    %v3450 = vmul.f32 0.5, %v3449
    %v3451 = vsub.f32 1.5, %v3450
    %v3452 = vmul.f32 %v3447, %v3451
    %vm3453 = vweird.f32 %v3413
    %vm3454 = vweird.f32 %v3447
    %vm3455 = vmor %vm3453, %vm3454
    %v3456 = vsel %vm3455, %v3447, %v3452
    %v3457 = vrsqrt.pop %v3414
    %v3458 = vmul.f32 %v3457, %v3414
    %v3459 = vmul.f32 %v3458, %v3457
    %v3460 = vmul.f32 0.5, %v3459
    %v3461 = vsub.f32 1.5, %v3460
    %v3462 = vmul.f32 %v3457, %v3461
    %vm3463 = vweird.f32 %v3414
    %vm3464 = vweird.f32 %v3457
    %vm3465 = vmor %vm3463, %vm3464
    %v3466 = vsel %vm3465, %v3457, %v3462
    %v3467 = vrsqrt.pop %v3415
    %v3468 = vmul.f32 %v3467, %v3415
    %v3469 = vmul.f32 %v3468, %v3467
    %v3470 = vmul.f32 0.5, %v3469
    %v3471 = vsub.f32 1.5, %v3470
    %v3472 = vmul.f32 %v3467, %v3471
    %vm3473 = vweird.f32 %v3415
    %vm3474 = vweird.f32 %v3467
    %vm3475 = vmor %vm3473, %vm3474
    %v3476 = vsel %vm3475, %v3467, %v3472
    %v3477 = vrsqrt.pop %v3416
    %v3478 = vmul.f32 %v3477, %v3416
    %v3479 = vmul.f32 %v3478, %v3477
    %v3480 = vmul.f32 0.5, %v3479
    %v3481 = vsub.f32 1.5, %v3480
    %v3482 = vmul.f32 %v3477, %v3481
    %vm3483 = vweird.f32 %v3416
    %vm3484 = vweird.f32 %v3477
    %vm3485 = vmor %vm3483, %vm3484
    %v3486 = vsel %vm3485, %v3477, %v3482
    %v3487 = vrsqrt.pop %v3417
    %v3488 = vmul.f32 %v3487, %v3417
    %v3489 = vmul.f32 %v3488, %v3487
    %v3490 = vmul.f32 0.5, %v3489
    %v3491 = vsub.f32 1.5, %v3490
    %v3492 = vmul.f32 %v3487, %v3491
    %vm3493 = vweird.f32 %v3417
    %vm3494 = vweird.f32 %v3487
    %vm3495 = vmor %vm3493, %vm3494
    %v3496 = vsel %vm3495, %v3487, %v3492
    %v3497 = vrsqrt.pop %v3418
    %v3498 = vmul.f32 %v3497, %v3418
    %v3499 = vmul.f32 %v3498, %v3497
    %v3500 = vmul.f32 0.5, %v3499
    %v3501 = vsub.f32 1.5, %v3500
    %v3502 = vmul.f32 %v3497, %v3501
    %vm3503 = vweird.f32 %v3418
    %vm3504 = vweird.f32 %v3497
    %vm3505 = vmor %vm3503, %vm3504
    %v3506 = vsel %vm3505, %v3497, %v3502
    %v3507 = vrsqrt.pop %v3419
    %v3508 = vmul.f32 %v3507, %v3419
    %v3509 = vmul.f32 %v3508, %v3507
    %v3510 = vmul.f32 0.5, %v3509
    %v3511 = vsub.f32 1.5, %v3510
    %v3512 = vmul.f32 %v3507, %v3511
    %vm3513 = vweird.f32 %v3419
    %vm3514 = vweird.f32 %v3507
    %vm3515 = vmor %vm3513, %vm3514
    %v3516 = vsel %vm3515, %v3507, %v3512
    %v3517 = vrsqrt.pop %v3420
    %v3518 = vmul.f32 %v3517, %v3420
    %v3519 = vmul.f32 %v3518, %v3517
    %v3520 = vmul.f32 0.5, %v3519
    %v3521 = vsub.f32 1.5, %v3520
    %v3522 = vmul.f32 %v3517, %v3521
    %vm3523 = vweird.f32 %v3420
    %vm3524 = vweird.f32 %v3517
    %vm3525 = vmor %vm3523, %vm3524
    %v3526 = vsel %vm3525, %v3517, %v3522
    %v3527 = vrsqrt.pop %v3421
    %v3528 = vmul.f32 %v3527, %v3421
    %v3529 = vmul.f32 %v3528, %v3527
    %v3530 = vmul.f32 0.5, %v3529
    %v3531 = vsub.f32 1.5, %v3530
    %v3532 = vmul.f32 %v3527, %v3531
    %vm3533 = vweird.f32 %v3421
    %vm3534 = vweird.f32 %v3527
    %vm3535 = vmor %vm3533, %vm3534
    %v3536 = vsel %vm3535, %v3527, %v3532
    %v3537 = vrsqrt.pop %v3422
    %v3538 = vmul.f32 %v3537, %v3422
    %v3539 = vmul.f32 %v3538, %v3537
    %v3540 = vmul.f32 0.5, %v3539
    %v3541 = vsub.f32 1.5, %v3540
    %v3542 = vmul.f32 %v3537, %v3541
    %vm3543 = vweird.f32 %v3422
    %vm3544 = vweird.f32 %v3537
    %vm3545 = vmor %vm3543, %vm3544
    %v3546 = vsel %vm3545, %v3537, %v3542
    %v3547 = vrsqrt.pop %v3423
    %v3548 = vmul.f32 %v3547, %v3423
    %v3549 = vmul.f32 %v3548, %v3547
    %v3550 = vmul.f32 0.5, %v3549
    %v3551 = vsub.f32 1.5, %v3550
    %v3552 = vmul.f32 %v3547, %v3551
    %vm3553 = vweird.f32 %v3423
    %vm3554 = vweird.f32 %v3547
    %vm3555 = vmor %vm3553, %vm3554
    %v3556 = vsel %vm3555, %v3547, %v3552
    %v3557 = vrsqrt.pop %v3424
    %v3558 = vmul.f32 %v3557, %v3424
    %v3559 = vmul.f32 %v3558, %v3557
    %v3560 = vmul.f32 0.5, %v3559
    %v3561 = vsub.f32 1.5, %v3560
    %v3562 = vmul.f32 %v3557, %v3561
    %vm3563 = vweird.f32 %v3424
    %vm3564 = vweird.f32 %v3557
    %vm3565 = vmor %vm3563, %vm3564
    %v3566 = vsel %vm3565, %v3557, %v3562
    %v3567 = vrsqrt.pop %v3425
    %v3568 = vmul.f32 %v3567, %v3425
    %v3569 = vmul.f32 %v3568, %v3567
    %v3570 = vmul.f32 0.5, %v3569
    %v3571 = vsub.f32 1.5, %v3570
    %v3572 = vmul.f32 %v3567, %v3571
    %vm3573 = vweird.f32 %v3425
    %vm3574 = vweird.f32 %v3567
    %vm3575 = vmor %vm3573, %vm3574
    %v3576 = vsel %vm3575, %v3567, %v3572
    %v3577 = vrsqrt.pop %v3426
    %v3578 = vmul.f32 %v3577, %v3426
    %v3579 = vmul.f32 %v3578, %v3577
    %v3580 = vmul.f32 0.5, %v3579
    %v3581 = vsub.f32 1.5, %v3580
    %v3582 = vmul.f32 %v3577, %v3581
    %vm3583 = vweird.f32 %v3426
    %vm3584 = vweird.f32 %v3577
    %vm3585 = vmor %vm3583, %vm3584
    %v3586 = vsel %vm3585, %v3577, %v3582
    %v3587 = vmul.f32 %v3315, %v3436
    %v3588 = vmul.f32 %v3316, %v3446
    %v3589 = vmul.f32 %v3317, %v3456
    %v3590 = vmul.f32 %v3318, %v3466
    %v3591 = vmul.f32 %v3319, %v3476
    %v3592 = vmul.f32 %v3320, %v3486
    %v3593 = vmul.f32 %v3321, %v3496
    %v3594 = vmul.f32 %v3322, %v3506
    %v3595 = vmul.f32 %v3323, %v3516
    %v3596 = vmul.f32 %v3324, %v3526
    %v3597 = vmul.f32 %v3325, %v3536
    %v3598 = vmul.f32 %v3326, %v3546
    %v3599 = vmul.f32 %v3327, %v3556
    %v3600 = vmul.f32 %v3328, %v3566
    %v3601 = vmul.f32 %v3329, %v3576
    %v3602 = vmul.f32 %v3330, %v3586
    %v3604 = vperm.slane %v3249, 0
    %v3606 = vmul.f32 %v3587, %v3604
    %v3607 = vmul.f32 %v3588, %v3604
    %v3608 = vmul.f32 %v3589, %v3604
    %v3609 = vmul.f32 %v3590, %v3604
    %v3610 = vmul.f32 %v3591, %v3604
    %v3611 = vmul.f32 %v3592, %v3604
    %v3612 = vmul.f32 %v3593, %v3604
    %v3613 = vmul.f32 %v3594, %v3604
    %v3614 = vmul.f32 %v3595, %v3604
    %v3615 = vmul.f32 %v3596, %v3604
    %v3616 = vmul.f32 %v3597, %v3604
    %v3617 = vmul.f32 %v3598, %v3604
    %v3618 = vmul.f32 %v3599, %v3604
    %v3619 = vmul.f32 %v3600, %v3604
    %v3620 = vmul.f32 %v3601, %v3604
    %v3621 = vmul.f32 %v3602, %v3604
    %v3623 = vperm.slane %v3250, 0
    %v3625 = vadd.f32 %v3606, %v3623
    %v3626 = vadd.f32 %v3607, %v3623
    %v3627 = vadd.f32 %v3608, %v3623
    %v3628 = vadd.f32 %v3609, %v3623
    %v3629 = vadd.f32 %v3610, %v3623
    %v3630 = vadd.f32 %v3611, %v3623
    %v3631 = vadd.f32 %v3612, %v3623
    %v3632 = vadd.f32 %v3613, %v3623
    %v3633 = vadd.f32 %v3614, %v3623
    %v3634 = vadd.f32 %v3615, %v3623
    %v3635 = vadd.f32 %v3616, %v3623
    %v3636 = vadd.f32 %v3617, %v3623
    %v3637 = vadd.f32 %v3618, %v3623
    %v3638 = vadd.f32 %v3619, %v3623
    %v3639 = vadd.f32 %v3620, %v3623
    %v3640 = vadd.f32 %v3621, %v3623
    %v3641 = vld [vmem:[%s6] sm:$0xff]
    %v3642 = vld [vmem:[%s6 + $0x8] sm:$0xff]
    %v3643 = vld [vmem:[%s6 + $0x10] sm:$0xff]
    %v3644 = vld [vmem:[%s6 + $0x18] sm:$0xff]
    %v3645 = vld [vmem:[%s7] sm:$0x1]
    %v3647 = vperm.slane %v3645, 0
    %v3650 = vsel %vm296, %v3625, 0
    %v3653 = vsel %vm296, %v3626, 0
    %v3656 = vsel %vm296, %v3627, 0
    %v3659 = vsel %vm296, %v3628, 0
    %v3662 = vsel %vm296, %v3629, 0
    %v3665 = vsel %vm296, %v3630, 0
    %v3668 = vsel %vm296, %v3631, 0
    %v3671 = vsel %vm296, %v3632, 0
    %v3674 = vsel %vm296, %v3633, 0
    %v3677 = vsel %vm296, %v3634, 0
    %v3680 = vsel %vm296, %v3635, 0
    %v3683 = vsel %vm296, %v3636, 0
    %v3686 = vsel %vm296, %v3637, 0
    %v3689 = vsel %vm296, %v3638, 0
    %v3692 = vsel %vm296, %v3639, 0
    %v3695 = vsel %vm296, %v3640, 0
    %3697 = vmatpush.msra.mxu0 0.0
    %3698 = vmatpush.msra.mxu0 0.0
    %3699 = vmatpush.msra.mxu0 0.0
    %3700 = vmatpush.msra.mxu0 0.0
    %3701 = vmatpush.msra.mxu0 0.0
    %3702 = vmatpush.msra.mxu0 0.0
    %3703 = vmatpush.msra.mxu0 0.0
    %3704 = vmatpush.msra.mxu0 0.0
    %3705 = vmatpush.msra.mxu0 0.0
    %3706 = vmatpush.msra.mxu0 0.0
    %3707 = vmatpush.msra.mxu0 0.0
    %3708 = vmatpush.msra.mxu0 0.0
    %3709 = vmatpush.msra.mxu0 %v3644
    %3710 = vmatpush.msra.mxu0 %v3643
    %3711 = vmatpush.msra.mxu0 %v3642
    %3712 = vmatpush.msra.mxu0 %v3641
    %3713 = vmatmul.f32.gmra.mxu0 %v3650
    %v3714 = vpop.f32.mrf.mxu0
    %v3715 = vadd.f32 %v3647, %v3714
    %3716 = vmatmul.f32.gmra.mxu0 %v3653
    %v3717 = vpop.f32.mrf.mxu0
    %v3718 = vadd.f32 %v3647, %v3717
    %3719 = vmatmul.f32.gmra.mxu0 %v3656
    %v3720 = vpop.f32.mrf.mxu0
    %v3721 = vadd.f32 %v3647, %v3720
    %3722 = vmatmul.f32.gmra.mxu0 %v3659
    %v3723 = vpop.f32.mrf.mxu0
    %v3724 = vadd.f32 %v3647, %v3723
    %3725 = vmatmul.f32.gmra.mxu0 %v3662
    %v3726 = vpop.f32.mrf.mxu0
    %v3727 = vadd.f32 %v3647, %v3726
    %3728 = vmatmul.f32.gmra.mxu0 %v3665
    %v3729 = vpop.f32.mrf.mxu0
    %v3730 = vadd.f32 %v3647, %v3729
    %3731 = vmatmul.f32.gmra.mxu0 %v3668
    %v3732 = vpop.f32.mrf.mxu0
    %v3733 = vadd.f32 %v3647, %v3732
    %3734 = vmatmul.f32.gmra.mxu0 %v3671
    %v3735 = vpop.f32.mrf.mxu0
    %v3736 = vadd.f32 %v3647, %v3735
    %3737 = vmatmul.f32.gmra.mxu0 %v3674
    %v3738 = vpop.f32.mrf.mxu0
    %v3739 = vadd.f32 %v3647, %v3738
    %3740 = vmatmul.f32.gmra.mxu0 %v3677
    %v3741 = vpop.f32.mrf.mxu0
    %v3742 = vadd.f32 %v3647, %v3741
    %3743 = vmatmul.f32.gmra.mxu0 %v3680
    %v3744 = vpop.f32.mrf.mxu0
    %v3745 = vadd.f32 %v3647, %v3744
    %3746 = vmatmul.f32.gmra.mxu0 %v3683
    %v3747 = vpop.f32.mrf.mxu0
    %v3748 = vadd.f32 %v3647, %v3747
    %3749 = vmatmul.f32.gmra.mxu0 %v3686
    %v3750 = vpop.f32.mrf.mxu0
    %v3751 = vadd.f32 %v3647, %v3750
    %3752 = vmatmul.f32.gmra.mxu0 %v3689
    %v3753 = vpop.f32.mrf.mxu0
    %v3754 = vadd.f32 %v3647, %v3753
    %3755 = vmatmul.f32.gmra.mxu0 %v3692
    %v3756 = vpop.f32.mrf.mxu0
    %v3757 = vadd.f32 %v3647, %v3756
    %3758 = vmatmul.f32.gmra.mxu0 %v3695
    %v3759 = vpop.f32.mrf.mxu0
    %v3760 = vadd.f32 %v3647, %v3759
    %3761 = vdwg.mxu0
    %v3762 = vmax.f32 %v3715, 0.0
    %v3763 = vmax.f32 %v3718, 0.0
    %v3764 = vmax.f32 %v3721, 0.0
    %v3765 = vmax.f32 %v3724, 0.0
    %v3766 = vmax.f32 %v3727, 0.0
    %v3767 = vmax.f32 %v3730, 0.0
    %v3768 = vmax.f32 %v3733, 0.0
    %v3769 = vmax.f32 %v3736, 0.0
    %v3770 = vmax.f32 %v3739, 0.0
    %v3771 = vmax.f32 %v3742, 0.0
    %v3772 = vmax.f32 %v3745, 0.0
    %v3773 = vmax.f32 %v3748, 0.0
    %v3774 = vmax.f32 %v3751, 0.0
    %v3775 = vmax.f32 %v3754, 0.0
    %v3776 = vmax.f32 %v3757, 0.0
    %v3777 = vmax.f32 %v3760, 0.0
    %v3778 = vld [vmem:[%s8] sm:$0xff]
    %v3779 = vld [vmem:[%s8 + $0x8] sm:$0xff]
    %v3780 = vld [vmem:[%s8 + $0x10] sm:$0xff]
    %v3781 = vld [vmem:[%s8 + $0x18] sm:$0xff]
    %v3782 = vld [vmem:[%s8 + $0x20] sm:$0xff]
    %v3783 = vld [vmem:[%s8 + $0x28] sm:$0xff]
    %v3784 = vld [vmem:[%s8 + $0x30] sm:$0xff]
    %v3785 = vld [vmem:[%s8 + $0x38] sm:$0xff]
    %v3786 = vld [vmem:[%s8 + $0x40] sm:$0xff]
    %v3787 = vld [vmem:[%s8 + $0x48] sm:$0xff]
    %v3788 = vld [vmem:[%s8 + $0x50] sm:$0xff]
    %v3789 = vld [vmem:[%s8 + $0x58] sm:$0xff]
    %v3790 = vld [vmem:[%s8 + $0x60] sm:$0xff]
    %v3791 = vld [vmem:[%s8 + $0x68] sm:$0xff]
    %v3792 = vld [vmem:[%s8 + $0x70] sm:$0xff]
    %v3793 = vld [vmem:[%s8 + $0x78] sm:$0xff]
    %3794 = vmatpush.msra.mxu0 %v3793
    %3795 = vmatpush.msra.mxu0 %v3792
    %3796 = vmatpush.msra.mxu0 %v3791
    %3797 = vmatpush.msra.mxu0 %v3790
    %3798 = vmatpush.msra.mxu0 %v3789
    %3799 = vmatpush.msra.mxu0 %v3788
    %3800 = vmatpush.msra.mxu0 %v3787
    %3801 = vmatpush.msra.mxu0 %v3786
    %3802 = vmatpush.msra.mxu0 %v3785
    %3803 = vmatpush.msra.mxu0 %v3784
    %3804 = vmatpush.msra.mxu0 %v3783
    %3805 = vmatpush.msra.mxu0 %v3782
    %3806 = vmatpush.msra.mxu0 %v3781
    %3807 = vmatpush.msra.mxu0 %v3780
    %3808 = vmatpush.msra.mxu0 %v3779
    %3809 = vmatpush.msra.mxu0 %v3778
    %3810 = vmatmul.f32.gmra.mxu0 %v3762
    %v3811 = vpop.f32.mrf.mxu0
    %v3812 = vadd.f32 0.0, %v3811
    %3813 = vmatmul.f32.gmra.mxu0 %v3763
    %v3814 = vpop.f32.mrf.mxu0
    %v3815 = vadd.f32 0.0, %v3814
    %3816 = vmatmul.f32.gmra.mxu0 %v3764
    %v3817 = vpop.f32.mrf.mxu0
    %v3818 = vadd.f32 0.0, %v3817
    %3819 = vmatmul.f32.gmra.mxu0 %v3765
    %v3820 = vpop.f32.mrf.mxu0
    %v3821 = vadd.f32 0.0, %v3820
    %3822 = vmatmul.f32.gmra.mxu0 %v3766
    %v3823 = vpop.f32.mrf.mxu0
    %v3824 = vadd.f32 0.0, %v3823
    %3825 = vmatmul.f32.gmra.mxu0 %v3767
    %v3826 = vpop.f32.mrf.mxu0
    %v3827 = vadd.f32 0.0, %v3826
    %3828 = vmatmul.f32.gmra.mxu0 %v3768
    %v3829 = vpop.f32.mrf.mxu0
    %v3830 = vadd.f32 0.0, %v3829
    %3831 = vmatmul.f32.gmra.mxu0 %v3769
    %v3832 = vpop.f32.mrf.mxu0
    %v3833 = vadd.f32 0.0, %v3832
    %3834 = vmatmul.f32.gmra.mxu0 %v3770
    %v3835 = vpop.f32.mrf.mxu0
    %v3836 = vadd.f32 0.0, %v3835
    %3837 = vmatmul.f32.gmra.mxu0 %v3771
    %v3838 = vpop.f32.mrf.mxu0
    %v3839 = vadd.f32 0.0, %v3838
    %3840 = vmatmul.f32.gmra.mxu0 %v3772
    %v3841 = vpop.f32.mrf.mxu0
    %v3842 = vadd.f32 0.0, %v3841
    %3843 = vmatmul.f32.gmra.mxu0 %v3773
    %v3844 = vpop.f32.mrf.mxu0
    %v3845 = vadd.f32 0.0, %v3844
    %3846 = vmatmul.f32.gmra.mxu0 %v3774
    %v3847 = vpop.f32.mrf.mxu0
    %v3848 = vadd.f32 0.0, %v3847
    %3849 = vmatmul.f32.gmra.mxu0 %v3775
    %v3850 = vpop.f32.mrf.mxu0
    %v3851 = vadd.f32 0.0, %v3850
    %3852 = vmatmul.f32.gmra.mxu0 %v3776
    %v3853 = vpop.f32.mrf.mxu0
    %v3854 = vadd.f32 0.0, %v3853
    %3855 = vmatmul.f32.gmra.mxu0 %v3777
    %v3856 = vpop.f32.mrf.mxu0
    %v3857 = vadd.f32 0.0, %v3856
    %3858 = vdwg.mxu0
    %v3859 = vadd.f32 %v3233, %v3812
    %v3860 = vadd.f32 %v3234, %v3815
    %v3861 = vadd.f32 %v3235, %v3818
    %v3862 = vadd.f32 %v3236, %v3821
    %v3863 = vadd.f32 %v3237, %v3824
    %v3864 = vadd.f32 %v3238, %v3827
    %v3865 = vadd.f32 %v3239, %v3830
    %v3866 = vadd.f32 %v3240, %v3833
    %v3867 = vadd.f32 %v3241, %v3836
    %v3868 = vadd.f32 %v3242, %v3839
    %v3869 = vadd.f32 %v3243, %v3842
    %v3870 = vadd.f32 %v3244, %v3845
    %v3871 = vadd.f32 %v3245, %v3848
    %v3872 = vadd.f32 %v3246, %v3851
    %v3873 = vadd.f32 %v3247, %v3854
    %v3874 = vadd.f32 %v3248, %v3857
    %v3875 = vld [vmem:[%s9] sm:$0x1]
    %v3877 = vperm.slane %v3875, 0
    %v3879 = vadd.f32 %v3859, %v3877
    %v3880 = vadd.f32 %v3860, %v3877
    %v3881 = vadd.f32 %v3861, %v3877
    %v3882 = vadd.f32 %v3862, %v3877
    %v3883 = vadd.f32 %v3863, %v3877
    %v3884 = vadd.f32 %v3864, %v3877
    %v3885 = vadd.f32 %v3865, %v3877
    %v3886 = vadd.f32 %v3866, %v3877
    %v3887 = vadd.f32 %v3867, %v3877
    %v3888 = vadd.f32 %v3868, %v3877
    %v3889 = vadd.f32 %v3869, %v3877
    %v3890 = vadd.f32 %v3870, %v3877
    %v3891 = vadd.f32 %v3871, %v3877
    %v3892 = vadd.f32 %v3872, %v3877
    %v3893 = vadd.f32 %v3873, %v3877
    %v3894 = vadd.f32 %v3874, %v3877
    %s3895 = scalar_lea.vmem %s10, 1
    %v3896 = vld [vmem:[%s3895] sm:$0x1]
    %s3897 = scalar_lea.vmem %s11, 1
    %v3898 = vld [vmem:[%s3897] sm:$0x1]
    %v3899 = vsel %vm296, %v3879, 0.0
    %3900 = vadd.xlane.f32.xlu0 %v3899
    %v3901 = vpop.xlane.xlu0 %3900
    %v3902 = vsel %vm296, %v3880, 0.0
    %3903 = vadd.xlane.f32.xlu0 %v3902
    %v3904 = vpop.xlane.xlu0 %3903
    %v3905 = vsel %vm296, %v3881, 0.0
    %3906 = vadd.xlane.f32.xlu0 %v3905
    %v3907 = vpop.xlane.xlu0 %3906
    %v3908 = vsel %vm296, %v3882, 0.0
    %3909 = vadd.xlane.f32.xlu0 %v3908
    %v3910 = vpop.xlane.xlu0 %3909
    %v3911 = vsel %vm296, %v3883, 0.0
    %3912 = vadd.xlane.f32.xlu0 %v3911
    %v3913 = vpop.xlane.xlu0 %3912
    %v3914 = vsel %vm296, %v3884, 0.0
    %3915 = vadd.xlane.f32.xlu0 %v3914
    %v3916 = vpop.xlane.xlu0 %3915
    %v3917 = vsel %vm296, %v3885, 0.0
    %3918 = vadd.xlane.f32.xlu0 %v3917
    %v3919 = vpop.xlane.xlu0 %3918
    %v3920 = vsel %vm296, %v3886, 0.0
    %3921 = vadd.xlane.f32.xlu0 %v3920
    %v3922 = vpop.xlane.xlu0 %3921
    %v3923 = vsel %vm296, %v3887, 0.0
    %3924 = vadd.xlane.f32.xlu0 %v3923
    %v3925 = vpop.xlane.xlu0 %3924
    %v3926 = vsel %vm296, %v3888, 0.0
    %3927 = vadd.xlane.f32.xlu0 %v3926
    %v3928 = vpop.xlane.xlu0 %3927
    %v3929 = vsel %vm296, %v3889, 0.0
    %3930 = vadd.xlane.f32.xlu0 %v3929
    %v3931 = vpop.xlane.xlu0 %3930
    %v3932 = vsel %vm296, %v3890, 0.0
    %3933 = vadd.xlane.f32.xlu0 %v3932
    %v3934 = vpop.xlane.xlu0 %3933
    %v3935 = vsel %vm296, %v3891, 0.0
    %3936 = vadd.xlane.f32.xlu0 %v3935
    %v3937 = vpop.xlane.xlu0 %3936
    %v3938 = vsel %vm296, %v3892, 0.0
    %3939 = vadd.xlane.f32.xlu0 %v3938
    %v3940 = vpop.xlane.xlu0 %3939
    %v3941 = vsel %vm296, %v3893, 0.0
    %3942 = vadd.xlane.f32.xlu0 %v3941
    %v3943 = vpop.xlane.xlu0 %3942
    %v3944 = vsel %vm296, %v3894, 0.0
    %3945 = vadd.xlane.f32.xlu0 %v3944
    %v3946 = vpop.xlane.xlu0 %3945
    %v3947 = vmul.f32 %v3901, %v351
    %v3948 = vmul.f32 %v3904, %v351
    %v3949 = vmul.f32 %v3907, %v351
    %v3950 = vmul.f32 %v3910, %v351
    %v3951 = vmul.f32 %v3913, %v351
    %v3952 = vmul.f32 %v3916, %v351
    %v3953 = vmul.f32 %v3919, %v351
    %v3954 = vmul.f32 %v3922, %v351
    %v3955 = vmul.f32 %v3925, %v351
    %v3956 = vmul.f32 %v3928, %v351
    %v3957 = vmul.f32 %v3931, %v351
    %v3958 = vmul.f32 %v3934, %v351
    %v3959 = vmul.f32 %v3937, %v351
    %v3960 = vmul.f32 %v3940, %v351
    %v3961 = vmul.f32 %v3943, %v351
    %v3962 = vmul.f32 %v3946, %v351
    %v3963 = vsub.f32 %v3879, %v3947
    %v3964 = vsub.f32 %v3880, %v3948
    %v3965 = vsub.f32 %v3881, %v3949
    %v3966 = vsub.f32 %v3882, %v3950
    %v3967 = vsub.f32 %v3883, %v3951
    %v3968 = vsub.f32 %v3884, %v3952
    %v3969 = vsub.f32 %v3885, %v3953
    %v3970 = vsub.f32 %v3886, %v3954
    %v3971 = vsub.f32 %v3887, %v3955
    %v3972 = vsub.f32 %v3888, %v3956
    %v3973 = vsub.f32 %v3889, %v3957
    %v3974 = vsub.f32 %v3890, %v3958
    %v3975 = vsub.f32 %v3891, %v3959
    %v3976 = vsub.f32 %v3892, %v3960
    %v3977 = vsub.f32 %v3893, %v3961
    %v3978 = vsub.f32 %v3894, %v3962
    %v3979 = vmul.f32 %v3963, %v3963
    %v3980 = vmul.f32 %v3964, %v3964
    %v3981 = vmul.f32 %v3965, %v3965
    %v3982 = vmul.f32 %v3966, %v3966
    %v3983 = vmul.f32 %v3967, %v3967
    %v3984 = vmul.f32 %v3968, %v3968
    %v3985 = vmul.f32 %v3969, %v3969
    %v3986 = vmul.f32 %v3970, %v3970
    %v3987 = vmul.f32 %v3971, %v3971
    %v3988 = vmul.f32 %v3972, %v3972
    %v3989 = vmul.f32 %v3973, %v3973
    %v3990 = vmul.f32 %v3974, %v3974
    %v3991 = vmul.f32 %v3975, %v3975
    %v3992 = vmul.f32 %v3976, %v3976
    %v3993 = vmul.f32 %v3977, %v3977
    %v3994 = vmul.f32 %v3978, %v3978
    %v3995 = vsel %vm296, %v3979, 0.0
    %3996 = vadd.xlane.f32.xlu0 %v3995
    %v3997 = vpop.xlane.xlu0 %3996
    %v3998 = vsel %vm296, %v3980, 0.0
    %3999 = vadd.xlane.f32.xlu0 %v3998
    %v4000 = vpop.xlane.xlu0 %3999
    %v4001 = vsel %vm296, %v3981, 0.0
    %4002 = vadd.xlane.f32.xlu0 %v4001
    %v4003 = vpop.xlane.xlu0 %4002
    %v4004 = vsel %vm296, %v3982, 0.0
    %4005 = vadd.xlane.f32.xlu0 %v4004
    %v4006 = vpop.xlane.xlu0 %4005
    %v4007 = vsel %vm296, %v3983, 0.0
    %4008 = vadd.xlane.f32.xlu0 %v4007
    %v4009 = vpop.xlane.xlu0 %4008
    %v4010 = vsel %vm296, %v3984, 0.0
    %4011 = vadd.xlane.f32.xlu0 %v4010
    %v4012 = vpop.xlane.xlu0 %4011
    %v4013 = vsel %vm296, %v3985, 0.0
    %4014 = vadd.xlane.f32.xlu0 %v4013
    %v4015 = vpop.xlane.xlu0 %4014
    %v4016 = vsel %vm296, %v3986, 0.0
    %4017 = vadd.xlane.f32.xlu0 %v4016
    %v4018 = vpop.xlane.xlu0 %4017
    %v4019 = vsel %vm296, %v3987, 0.0
    %4020 = vadd.xlane.f32.xlu0 %v4019
    %v4021 = vpop.xlane.xlu0 %4020
    %v4022 = vsel %vm296, %v3988, 0.0
    %4023 = vadd.xlane.f32.xlu0 %v4022
    %v4024 = vpop.xlane.xlu0 %4023
    %v4025 = vsel %vm296, %v3989, 0.0
    %4026 = vadd.xlane.f32.xlu0 %v4025
    %v4027 = vpop.xlane.xlu0 %4026
    %v4028 = vsel %vm296, %v3990, 0.0
    %4029 = vadd.xlane.f32.xlu0 %v4028
    %v4030 = vpop.xlane.xlu0 %4029
    %v4031 = vsel %vm296, %v3991, 0.0
    %4032 = vadd.xlane.f32.xlu0 %v4031
    %v4033 = vpop.xlane.xlu0 %4032
    %v4034 = vsel %vm296, %v3992, 0.0
    %4035 = vadd.xlane.f32.xlu0 %v4034
    %v4036 = vpop.xlane.xlu0 %4035
    %v4037 = vsel %vm296, %v3993, 0.0
    %4038 = vadd.xlane.f32.xlu0 %v4037
    %v4039 = vpop.xlane.xlu0 %4038
    %v4040 = vsel %vm296, %v3994, 0.0
    %4041 = vadd.xlane.f32.xlu0 %v4040
    %v4042 = vpop.xlane.xlu0 %4041
    %v4043 = vmul.f32 %v3997, %v351
    %v4044 = vmul.f32 %v4000, %v351
    %v4045 = vmul.f32 %v4003, %v351
    %v4046 = vmul.f32 %v4006, %v351
    %v4047 = vmul.f32 %v4009, %v351
    %v4048 = vmul.f32 %v4012, %v351
    %v4049 = vmul.f32 %v4015, %v351
    %v4050 = vmul.f32 %v4018, %v351
    %v4051 = vmul.f32 %v4021, %v351
    %v4052 = vmul.f32 %v4024, %v351
    %v4053 = vmul.f32 %v4027, %v351
    %v4054 = vmul.f32 %v4030, %v351
    %v4055 = vmul.f32 %v4033, %v351
    %v4056 = vmul.f32 %v4036, %v351
    %v4057 = vmul.f32 %v4039, %v351
    %v4058 = vmul.f32 %v4042, %v351
    %v4059 = vadd.f32 %v4043, 1e-05
    %v4060 = vadd.f32 %v4044, 1e-05
    %v4061 = vadd.f32 %v4045, 1e-05
    %v4062 = vadd.f32 %v4046, 1e-05
    %v4063 = vadd.f32 %v4047, 1e-05
    %v4064 = vadd.f32 %v4048, 1e-05
    %v4065 = vadd.f32 %v4049, 1e-05
    %v4066 = vadd.f32 %v4050, 1e-05
    %v4067 = vadd.f32 %v4051, 1e-05
    %v4068 = vadd.f32 %v4052, 1e-05
    %v4069 = vadd.f32 %v4053, 1e-05
    %v4070 = vadd.f32 %v4054, 1e-05
    %v4071 = vadd.f32 %v4055, 1e-05
    %v4072 = vadd.f32 %v4056, 1e-05
    %v4073 = vadd.f32 %v4057, 1e-05
    %v4074 = vadd.f32 %v4058, 1e-05
    %v4075 = vrsqrt.pop %v4059
    %v4076 = vmul.f32 %v4075, %v4059
    %v4077 = vmul.f32 %v4076, %v4075
    %v4078 = vmul.f32 0.5, %v4077
    %v4079 = vsub.f32 1.5, %v4078
    %v4080 = vmul.f32 %v4075, %v4079
    %vm4081 = vweird.f32 %v4059
    %vm4082 = vweird.f32 %v4075
    %vm4083 = vmor %vm4081, %vm4082
    %v4084 = vsel %vm4083, %v4075, %v4080
    %v4085 = vrsqrt.pop %v4060
    %v4086 = vmul.f32 %v4085, %v4060
    %v4087 = vmul.f32 %v4086, %v4085
    %v4088 = vmul.f32 0.5, %v4087
    %v4089 = vsub.f32 1.5, %v4088
    %v4090 = vmul.f32 %v4085, %v4089
    %vm4091 = vweird.f32 %v4060
    %vm4092 = vweird.f32 %v4085
    %vm4093 = vmor %vm4091, %vm4092
    %v4094 = vsel %vm4093, %v4085, %v4090
    %v4095 = vrsqrt.pop %v4061
    %v4096 = vmul.f32 %v4095, %v4061
    %v4097 = vmul.f32 %v4096, %v4095
    %v4098 = vmul.f32 0.5, %v4097
    %v4099 = vsub.f32 1.5, %v4098
    %v4100 = vmul.f32 %v4095, %v4099
    %vm4101 = vweird.f32 %v4061
    %vm4102 = vweird.f32 %v4095
    %vm4103 = vmor %vm4101, %vm4102
    %v4104 = vsel %vm4103, %v4095, %v4100
    %v4105 = vrsqrt.pop %v4062
    %v4106 = vmul.f32 %v4105, %v4062
    %v4107 = vmul.f32 %v4106, %v4105
    %v4108 = vmul.f32 0.5, %v4107
    %v4109 = vsub.f32 1.5, %v4108
    %v4110 = vmul.f32 %v4105, %v4109
    %vm4111 = vweird.f32 %v4062
    %vm4112 = vweird.f32 %v4105
    %vm4113 = vmor %vm4111, %vm4112
    %v4114 = vsel %vm4113, %v4105, %v4110
    %v4115 = vrsqrt.pop %v4063
    %v4116 = vmul.f32 %v4115, %v4063
    %v4117 = vmul.f32 %v4116, %v4115
    %v4118 = vmul.f32 0.5, %v4117
    %v4119 = vsub.f32 1.5, %v4118
    %v4120 = vmul.f32 %v4115, %v4119
    %vm4121 = vweird.f32 %v4063
    %vm4122 = vweird.f32 %v4115
    %vm4123 = vmor %vm4121, %vm4122
    %v4124 = vsel %vm4123, %v4115, %v4120
    %v4125 = vrsqrt.pop %v4064
    %v4126 = vmul.f32 %v4125, %v4064
    %v4127 = vmul.f32 %v4126, %v4125
    %v4128 = vmul.f32 0.5, %v4127
    %v4129 = vsub.f32 1.5, %v4128
    %v4130 = vmul.f32 %v4125, %v4129
    %vm4131 = vweird.f32 %v4064
    %vm4132 = vweird.f32 %v4125
    %vm4133 = vmor %vm4131, %vm4132
    %v4134 = vsel %vm4133, %v4125, %v4130
    %v4135 = vrsqrt.pop %v4065
    %v4136 = vmul.f32 %v4135, %v4065
    %v4137 = vmul.f32 %v4136, %v4135
    %v4138 = vmul.f32 0.5, %v4137
    %v4139 = vsub.f32 1.5, %v4138
    %v4140 = vmul.f32 %v4135, %v4139
    %vm4141 = vweird.f32 %v4065
    %vm4142 = vweird.f32 %v4135
    %vm4143 = vmor %vm4141, %vm4142
    %v4144 = vsel %vm4143, %v4135, %v4140
    %v4145 = vrsqrt.pop %v4066
    %v4146 = vmul.f32 %v4145, %v4066
    %v4147 = vmul.f32 %v4146, %v4145
    %v4148 = vmul.f32 0.5, %v4147
    %v4149 = vsub.f32 1.5, %v4148
    %v4150 = vmul.f32 %v4145, %v4149
    %vm4151 = vweird.f32 %v4066
    %vm4152 = vweird.f32 %v4145
    %vm4153 = vmor %vm4151, %vm4152
    %v4154 = vsel %vm4153, %v4145, %v4150
    %v4155 = vrsqrt.pop %v4067
    %v4156 = vmul.f32 %v4155, %v4067
    %v4157 = vmul.f32 %v4156, %v4155
    %v4158 = vmul.f32 0.5, %v4157
    %v4159 = vsub.f32 1.5, %v4158
    %v4160 = vmul.f32 %v4155, %v4159
    %vm4161 = vweird.f32 %v4067
    %vm4162 = vweird.f32 %v4155
    %vm4163 = vmor %vm4161, %vm4162
    %v4164 = vsel %vm4163, %v4155, %v4160
    %v4165 = vrsqrt.pop %v4068
    %v4166 = vmul.f32 %v4165, %v4068
    %v4167 = vmul.f32 %v4166, %v4165
    %v4168 = vmul.f32 0.5, %v4167
    %v4169 = vsub.f32 1.5, %v4168
    %v4170 = vmul.f32 %v4165, %v4169
    %vm4171 = vweird.f32 %v4068
    %vm4172 = vweird.f32 %v4165
    %vm4173 = vmor %vm4171, %vm4172
    %v4174 = vsel %vm4173, %v4165, %v4170
    %v4175 = vrsqrt.pop %v4069
    %v4176 = vmul.f32 %v4175, %v4069
    %v4177 = vmul.f32 %v4176, %v4175
    %v4178 = vmul.f32 0.5, %v4177
    %v4179 = vsub.f32 1.5, %v4178
    %v4180 = vmul.f32 %v4175, %v4179
    %vm4181 = vweird.f32 %v4069
    %vm4182 = vweird.f32 %v4175
    %vm4183 = vmor %vm4181, %vm4182
    %v4184 = vsel %vm4183, %v4175, %v4180
    %v4185 = vrsqrt.pop %v4070
    %v4186 = vmul.f32 %v4185, %v4070
    %v4187 = vmul.f32 %v4186, %v4185
    %v4188 = vmul.f32 0.5, %v4187
    %v4189 = vsub.f32 1.5, %v4188
    %v4190 = vmul.f32 %v4185, %v4189
    %vm4191 = vweird.f32 %v4070
    %vm4192 = vweird.f32 %v4185
    %vm4193 = vmor %vm4191, %vm4192
    %v4194 = vsel %vm4193, %v4185, %v4190
    %v4195 = vrsqrt.pop %v4071
    %v4196 = vmul.f32 %v4195, %v4071
    %v4197 = vmul.f32 %v4196, %v4195
    %v4198 = vmul.f32 0.5, %v4197
    %v4199 = vsub.f32 1.5, %v4198
    %v4200 = vmul.f32 %v4195, %v4199
    %vm4201 = vweird.f32 %v4071
    %vm4202 = vweird.f32 %v4195
    %vm4203 = vmor %vm4201, %vm4202
    %v4204 = vsel %vm4203, %v4195, %v4200
    %v4205 = vrsqrt.pop %v4072
    %v4206 = vmul.f32 %v4205, %v4072
    %v4207 = vmul.f32 %v4206, %v4205
    %v4208 = vmul.f32 0.5, %v4207
    %v4209 = vsub.f32 1.5, %v4208
    %v4210 = vmul.f32 %v4205, %v4209
    %vm4211 = vweird.f32 %v4072
    %vm4212 = vweird.f32 %v4205
    %vm4213 = vmor %vm4211, %vm4212
    %v4214 = vsel %vm4213, %v4205, %v4210
    %v4215 = vrsqrt.pop %v4073
    %v4216 = vmul.f32 %v4215, %v4073
    %v4217 = vmul.f32 %v4216, %v4215
    %v4218 = vmul.f32 0.5, %v4217
    %v4219 = vsub.f32 1.5, %v4218
    %v4220 = vmul.f32 %v4215, %v4219
    %vm4221 = vweird.f32 %v4073
    %vm4222 = vweird.f32 %v4215
    %vm4223 = vmor %vm4221, %vm4222
    %v4224 = vsel %vm4223, %v4215, %v4220
    %v4225 = vrsqrt.pop %v4074
    %v4226 = vmul.f32 %v4225, %v4074
    %v4227 = vmul.f32 %v4226, %v4225
    %v4228 = vmul.f32 0.5, %v4227
    %v4229 = vsub.f32 1.5, %v4228
    %v4230 = vmul.f32 %v4225, %v4229
    %vm4231 = vweird.f32 %v4074
    %vm4232 = vweird.f32 %v4225
    %vm4233 = vmor %vm4231, %vm4232
    %v4234 = vsel %vm4233, %v4225, %v4230
    %v4235 = vmul.f32 %v3963, %v4084
    %v4236 = vmul.f32 %v3964, %v4094
    %v4237 = vmul.f32 %v3965, %v4104
    %v4238 = vmul.f32 %v3966, %v4114
    %v4239 = vmul.f32 %v3967, %v4124
    %v4240 = vmul.f32 %v3968, %v4134
    %v4241 = vmul.f32 %v3969, %v4144
    %v4242 = vmul.f32 %v3970, %v4154
    %v4243 = vmul.f32 %v3971, %v4164
    %v4244 = vmul.f32 %v3972, %v4174
    %v4245 = vmul.f32 %v3973, %v4184
    %v4246 = vmul.f32 %v3974, %v4194
    %v4247 = vmul.f32 %v3975, %v4204
    %v4248 = vmul.f32 %v3976, %v4214
    %v4249 = vmul.f32 %v3977, %v4224
    %v4250 = vmul.f32 %v3978, %v4234
    %v4252 = vperm.slane %v3896, 0
    %v4254 = vmul.f32 %v4235, %v4252
    %v4255 = vmul.f32 %v4236, %v4252
    %v4256 = vmul.f32 %v4237, %v4252
    %v4257 = vmul.f32 %v4238, %v4252
    %v4258 = vmul.f32 %v4239, %v4252
    %v4259 = vmul.f32 %v4240, %v4252
    %v4260 = vmul.f32 %v4241, %v4252
    %v4261 = vmul.f32 %v4242, %v4252
    %v4262 = vmul.f32 %v4243, %v4252
    %v4263 = vmul.f32 %v4244, %v4252
    %v4264 = vmul.f32 %v4245, %v4252
    %v4265 = vmul.f32 %v4246, %v4252
    %v4266 = vmul.f32 %v4247, %v4252
    %v4267 = vmul.f32 %v4248, %v4252
    %v4268 = vmul.f32 %v4249, %v4252
    %v4269 = vmul.f32 %v4250, %v4252
    %v4271 = vperm.slane %v3898, 0
    %v4273 = vadd.f32 %v4254, %v4271
    %v4274 = vadd.f32 %v4255, %v4271
    %v4275 = vadd.f32 %v4256, %v4271
    %v4276 = vadd.f32 %v4257, %v4271
    %v4277 = vadd.f32 %v4258, %v4271
    %v4278 = vadd.f32 %v4259, %v4271
    %v4279 = vadd.f32 %v4260, %v4271
    %v4280 = vadd.f32 %v4261, %v4271
    %v4281 = vadd.f32 %v4262, %v4271
    %v4282 = vadd.f32 %v4263, %v4271
    %v4283 = vadd.f32 %v4264, %v4271
    %v4284 = vadd.f32 %v4265, %v4271
    %v4285 = vadd.f32 %v4266, %v4271
    %v4286 = vadd.f32 %v4267, %v4271
    %v4287 = vadd.f32 %v4268, %v4271
    %v4288 = vadd.f32 %v4269, %v4271
    %s4289 = scalar_lea.vmem %s5, 1
    %v4290 = vld [vmem:[%s4289] sm:$0x1]
    %v4292 = vperm.slane %v4290, 0
    %v4294 = vadd.f32 %v3879, %v4292
    %v4295 = vadd.f32 %v3880, %v4292
    %v4296 = vadd.f32 %v3881, %v4292
    %v4297 = vadd.f32 %v3882, %v4292
    %v4298 = vadd.f32 %v3883, %v4292
    %v4299 = vadd.f32 %v3884, %v4292
    %v4300 = vadd.f32 %v3885, %v4292
    %v4301 = vadd.f32 %v3886, %v4292
    %v4302 = vadd.f32 %v3887, %v4292
    %v4303 = vadd.f32 %v3888, %v4292
    %v4304 = vadd.f32 %v3889, %v4292
    %v4305 = vadd.f32 %v3890, %v4292
    %v4306 = vadd.f32 %v3891, %v4292
    %v4307 = vadd.f32 %v3892, %v4292
    %v4308 = vadd.f32 %v3893, %v4292
    %v4309 = vadd.f32 %v3894, %v4292
    %s4310 = scalar_lea.vmem %s3, 96
    %v4311 = vld [vmem:[%s4310] sm:$0xff]
    %v4312 = vld [vmem:[%s4310 + $0x8] sm:$0xff]
    %v4313 = vld [vmem:[%s4310 + $0x10] sm:$0xff]
    %v4314 = vld [vmem:[%s4310 + $0x18] sm:$0xff]
    %v4316 = vsel %vm296, %v4273, 0
    %v4319 = vsel %vm296, %v4274, 0
    %v4322 = vsel %vm296, %v4275, 0
    %v4325 = vsel %vm296, %v4276, 0
    %v4328 = vsel %vm296, %v4277, 0
    %v4331 = vsel %vm296, %v4278, 0
    %v4334 = vsel %vm296, %v4279, 0
    %v4337 = vsel %vm296, %v4280, 0
    %v4340 = vsel %vm296, %v4281, 0
    %v4343 = vsel %vm296, %v4282, 0
    %v4346 = vsel %vm296, %v4283, 0
    %v4349 = vsel %vm296, %v4284, 0
    %v4352 = vsel %vm296, %v4285, 0
    %v4355 = vsel %vm296, %v4286, 0
    %v4358 = vsel %vm296, %v4287, 0
    %v4361 = vsel %vm296, %v4288, 0
    %4363 = vmatpush.msra.mxu0 0.0
    %4364 = vmatpush.msra.mxu0 0.0
    %4365 = vmatpush.msra.mxu0 0.0
    %4366 = vmatpush.msra.mxu0 0.0
    %4367 = vmatpush.msra.mxu0 0.0
    %4368 = vmatpush.msra.mxu0 0.0
    %4369 = vmatpush.msra.mxu0 0.0
    %4370 = vmatpush.msra.mxu0 0.0
    %4371 = vmatpush.msra.mxu0 0.0
    %4372 = vmatpush.msra.mxu0 0.0
    %4373 = vmatpush.msra.mxu0 0.0
    %4374 = vmatpush.msra.mxu0 0.0
    %4375 = vmatpush.msra.mxu0 %v4314
    %4376 = vmatpush.msra.mxu0 %v4313
    %4377 = vmatpush.msra.mxu0 %v4312
    %4378 = vmatpush.msra.mxu0 %v4311
    %4379 = vmatmul.f32.gmra.mxu0 %v4316
    %v4380 = vpop.f32.mrf.mxu0
    %v4381 = vadd.f32 0.0, %v4380
    %4382 = vmatmul.f32.gmra.mxu0 %v4319
    %v4383 = vpop.f32.mrf.mxu0
    %v4384 = vadd.f32 0.0, %v4383
    %4385 = vmatmul.f32.gmra.mxu0 %v4322
    %v4386 = vpop.f32.mrf.mxu0
    %v4387 = vadd.f32 0.0, %v4386
    %4388 = vmatmul.f32.gmra.mxu0 %v4325
    %v4389 = vpop.f32.mrf.mxu0
    %v4390 = vadd.f32 0.0, %v4389
    %4391 = vmatmul.f32.gmra.mxu0 %v4328
    %v4392 = vpop.f32.mrf.mxu0
    %v4393 = vadd.f32 0.0, %v4392
    %4394 = vmatmul.f32.gmra.mxu0 %v4331
    %v4395 = vpop.f32.mrf.mxu0
    %v4396 = vadd.f32 0.0, %v4395
    %4397 = vmatmul.f32.gmra.mxu0 %v4334
    %v4398 = vpop.f32.mrf.mxu0
    %v4399 = vadd.f32 0.0, %v4398
    %4400 = vmatmul.f32.gmra.mxu0 %v4337
    %v4401 = vpop.f32.mrf.mxu0
    %v4402 = vadd.f32 0.0, %v4401
    %4403 = vmatmul.f32.gmra.mxu0 %v4340
    %v4404 = vpop.f32.mrf.mxu0
    %v4405 = vadd.f32 0.0, %v4404
    %4406 = vmatmul.f32.gmra.mxu0 %v4343
    %v4407 = vpop.f32.mrf.mxu0
    %v4408 = vadd.f32 0.0, %v4407
    %4409 = vmatmul.f32.gmra.mxu0 %v4346
    %v4410 = vpop.f32.mrf.mxu0
    %v4411 = vadd.f32 0.0, %v4410
    %4412 = vmatmul.f32.gmra.mxu0 %v4349
    %v4413 = vpop.f32.mrf.mxu0
    %v4414 = vadd.f32 0.0, %v4413
    %4415 = vmatmul.f32.gmra.mxu0 %v4352
    %v4416 = vpop.f32.mrf.mxu0
    %v4417 = vadd.f32 0.0, %v4416
    %4418 = vmatmul.f32.gmra.mxu0 %v4355
    %v4419 = vpop.f32.mrf.mxu0
    %v4420 = vadd.f32 0.0, %v4419
    %4421 = vmatmul.f32.gmra.mxu0 %v4358
    %v4422 = vpop.f32.mrf.mxu0
    %v4423 = vadd.f32 0.0, %v4422
    %4424 = vmatmul.f32.gmra.mxu0 %v4361
    %v4425 = vpop.f32.mrf.mxu0
    %v4426 = vadd.f32 0.0, %v4425
    %4427 = vdwg.mxu0
    %s4428 = scalar_lea.vmem [#allocation2], 96
    %v4429 = vld [vmem:[%s4428] sm:$0xff]
    %v4430 = vld [vmem:[%s4428 + $0x8] sm:$0xff]
    %v4431 = vld [vmem:[%s4428 + $0x10] sm:$0xff]
    %v4432 = vld [vmem:[%s4428 + $0x18] sm:$0xff]
    %4433 = vmatpush.msra.mxu0 0.0
    %4434 = vmatpush.msra.mxu0 0.0
    %4435 = vmatpush.msra.mxu0 0.0
    %4436 = vmatpush.msra.mxu0 0.0
    %4437 = vmatpush.msra.mxu0 0.0
    %4438 = vmatpush.msra.mxu0 0.0
    %4439 = vmatpush.msra.mxu0 0.0
    %4440 = vmatpush.msra.mxu0 0.0
    %4441 = vmatpush.msra.mxu0 0.0
    %4442 = vmatpush.msra.mxu0 0.0
    %4443 = vmatpush.msra.mxu0 0.0
    %4444 = vmatpush.msra.mxu0 0.0
    %4445 = vmatpush.msra.mxu0 %v4432
    %4446 = vmatpush.msra.mxu0 %v4431
    %4447 = vmatpush.msra.mxu0 %v4430
    %4448 = vmatpush.msra.mxu0 %v4429
    %4449 = vmatmul.f32.gmra.mxu0 %v4316
    %v4450 = vpop.f32.mrf.mxu0
    %v4451 = vadd.f32 0.0, %v4450
    %4452 = vmatmul.f32.gmra.mxu0 %v4319
    %v4453 = vpop.f32.mrf.mxu0
    %v4454 = vadd.f32 0.0, %v4453
    %4455 = vmatmul.f32.gmra.mxu0 %v4322
    %v4456 = vpop.f32.mrf.mxu0
    %v4457 = vadd.f32 0.0, %v4456
    %4458 = vmatmul.f32.gmra.mxu0 %v4325
    %v4459 = vpop.f32.mrf.mxu0
    %v4460 = vadd.f32 0.0, %v4459
    %4461 = vmatmul.f32.gmra.mxu0 %v4328
    %v4462 = vpop.f32.mrf.mxu0
    %v4463 = vadd.f32 0.0, %v4462
    %4464 = vmatmul.f32.gmra.mxu0 %v4331
    %v4465 = vpop.f32.mrf.mxu0
    %v4466 = vadd.f32 0.0, %v4465
    %4467 = vmatmul.f32.gmra.mxu0 %v4334
    %v4468 = vpop.f32.mrf.mxu0
    %v4469 = vadd.f32 0.0, %v4468
    %4470 = vmatmul.f32.gmra.mxu0 %v4337
    %v4471 = vpop.f32.mrf.mxu0
    %v4472 = vadd.f32 0.0, %v4471
    %4473 = vmatmul.f32.gmra.mxu0 %v4340
    %v4474 = vpop.f32.mrf.mxu0
    %v4475 = vadd.f32 0.0, %v4474
    %4476 = vmatmul.f32.gmra.mxu0 %v4343
    %v4477 = vpop.f32.mrf.mxu0
    %v4478 = vadd.f32 0.0, %v4477
    %4479 = vmatmul.f32.gmra.mxu0 %v4346
    %v4480 = vpop.f32.mrf.mxu0
    %v4481 = vadd.f32 0.0, %v4480
    %4482 = vmatmul.f32.gmra.mxu0 %v4349
    %v4483 = vpop.f32.mrf.mxu0
    %v4484 = vadd.f32 0.0, %v4483
    %4485 = vmatmul.f32.gmra.mxu0 %v4352
    %v4486 = vpop.f32.mrf.mxu0
    %v4487 = vadd.f32 0.0, %v4486
    %4488 = vmatmul.f32.gmra.mxu0 %v4355
    %v4489 = vpop.f32.mrf.mxu0
    %v4490 = vadd.f32 0.0, %v4489
    %4491 = vmatmul.f32.gmra.mxu0 %v4358
    %v4492 = vpop.f32.mrf.mxu0
    %v4493 = vadd.f32 0.0, %v4492
    %4494 = vmatmul.f32.gmra.mxu0 %v4361
    %v4495 = vpop.f32.mrf.mxu0
    %v4496 = vadd.f32 0.0, %v4495
    %4497 = vdwg.mxu0
    %v4499 = vsel %vm296, %v4381, 0
    %v4502 = vsel %vm296, %v4384, 0
    %4504 = vmatpush.xpose.msra.mxu0 0.0
    %4505 = vmatpush.xpose.msra.mxu0 0.0
    %4506 = vmatpush.xpose.msra.mxu0 0.0
    %4507 = vmatpush.xpose.msra.mxu0 0.0
    %4508 = vmatpush.xpose.msra.mxu0 0.0
    %4509 = vmatpush.xpose.msra.mxu0 0.0
    %4510 = vmatpush.xpose.msra.mxu0 0.0
    %4511 = vmatpush.xpose.msra.mxu0 0.0
    %4512 = vmatpush.xpose.msra.mxu0 0.0
    %4513 = vmatpush.xpose.msra.mxu0 0.0
    %4514 = vmatpush.xpose.msra.mxu0 0.0
    %4515 = vmatpush.xpose.msra.mxu0 0.0
    %4516 = vmatpush.xpose.msra.mxu0 0.0
    %4517 = vmatpush.xpose.msra.mxu0 0.0
    %4518 = vmatpush.xpose.msra.mxu0 %v4319
    %4519 = vmatpush.xpose.msra.mxu0 %v4316
    %4520 = vmatmul.f32.gmra.mxu0 %v4499
    %v4521 = vpop.f32.mrf.mxu0
    %v4522 = vadd.f32 0.0, %v4521
    %4523 = vmatmul.f32.gmra.mxu0 %v4502
    %v4524 = vpop.f32.mrf.mxu0
    %v4525 = vadd.f32 0.0, %v4524
    %4526 = vdwg.mxu0
    %v4528 = vsel %vm296, %v4387, 0
    %v4531 = vsel %vm296, %v4390, 0
    %4533 = vmatpush.xpose.msra.mxu0 0.0
    %4534 = vmatpush.xpose.msra.mxu0 0.0
    %4535 = vmatpush.xpose.msra.mxu0 0.0
    %4536 = vmatpush.xpose.msra.mxu0 0.0
    %4537 = vmatpush.xpose.msra.mxu0 0.0
    %4538 = vmatpush.xpose.msra.mxu0 0.0
    %4539 = vmatpush.xpose.msra.mxu0 0.0
    %4540 = vmatpush.xpose.msra.mxu0 0.0
    %4541 = vmatpush.xpose.msra.mxu0 0.0
    %4542 = vmatpush.xpose.msra.mxu0 0.0
    %4543 = vmatpush.xpose.msra.mxu0 0.0
    %4544 = vmatpush.xpose.msra.mxu0 0.0
    %4545 = vmatpush.xpose.msra.mxu0 0.0
    %4546 = vmatpush.xpose.msra.mxu0 0.0
    %4547 = vmatpush.xpose.msra.mxu0 %v4325
    %4548 = vmatpush.xpose.msra.mxu0 %v4322
    %4549 = vmatmul.f32.gmra.mxu0 %v4528
    %v4550 = vpop.f32.mrf.mxu0
    %v4551 = vadd.f32 0.0, %v4550
    %4552 = vmatmul.f32.gmra.mxu0 %v4531
    %v4553 = vpop.f32.mrf.mxu0
    %v4554 = vadd.f32 0.0, %v4553
    %4555 = vdwg.mxu0
    %v4557 = vsel %vm296, %v4393, 0
    %v4560 = vsel %vm296, %v4396, 0
    %4562 = vmatpush.xpose.msra.mxu0 0.0
    %4563 = vmatpush.xpose.msra.mxu0 0.0
    %4564 = vmatpush.xpose.msra.mxu0 0.0
    %4565 = vmatpush.xpose.msra.mxu0 0.0
    %4566 = vmatpush.xpose.msra.mxu0 0.0
    %4567 = vmatpush.xpose.msra.mxu0 0.0
    %4568 = vmatpush.xpose.msra.mxu0 0.0
    %4569 = vmatpush.xpose.msra.mxu0 0.0
    %4570 = vmatpush.xpose.msra.mxu0 0.0
    %4571 = vmatpush.xpose.msra.mxu0 0.0
    %4572 = vmatpush.xpose.msra.mxu0 0.0
    %4573 = vmatpush.xpose.msra.mxu0 0.0
    %4574 = vmatpush.xpose.msra.mxu0 0.0
    %4575 = vmatpush.xpose.msra.mxu0 0.0
    %4576 = vmatpush.xpose.msra.mxu0 %v4331
    %4577 = vmatpush.xpose.msra.mxu0 %v4328
    %4578 = vmatmul.f32.gmra.mxu0 %v4557
    %v4579 = vpop.f32.mrf.mxu0
    %v4580 = vadd.f32 0.0, %v4579
    %4581 = vmatmul.f32.gmra.mxu0 %v4560
    %v4582 = vpop.f32.mrf.mxu0
    %v4583 = vadd.f32 0.0, %v4582
    %4584 = vdwg.mxu0
    %v4586 = vsel %vm296, %v4399, 0
    %v4589 = vsel %vm296, %v4402, 0
    %4591 = vmatpush.xpose.msra.mxu0 0.0
    %4592 = vmatpush.xpose.msra.mxu0 0.0
    %4593 = vmatpush.xpose.msra.mxu0 0.0
    %4594 = vmatpush.xpose.msra.mxu0 0.0
    %4595 = vmatpush.xpose.msra.mxu0 0.0
    %4596 = vmatpush.xpose.msra.mxu0 0.0
    %4597 = vmatpush.xpose.msra.mxu0 0.0
    %4598 = vmatpush.xpose.msra.mxu0 0.0
    %4599 = vmatpush.xpose.msra.mxu0 0.0
    %4600 = vmatpush.xpose.msra.mxu0 0.0
    %4601 = vmatpush.xpose.msra.mxu0 0.0
    %4602 = vmatpush.xpose.msra.mxu0 0.0
    %4603 = vmatpush.xpose.msra.mxu0 0.0
    %4604 = vmatpush.xpose.msra.mxu0 0.0
    %4605 = vmatpush.xpose.msra.mxu0 %v4337
    %4606 = vmatpush.xpose.msra.mxu0 %v4334
    %4607 = vmatmul.f32.gmra.mxu0 %v4586
    %v4608 = vpop.f32.mrf.mxu0
    %v4609 = vadd.f32 0.0, %v4608
    %4610 = vmatmul.f32.gmra.mxu0 %v4589
    %v4611 = vpop.f32.mrf.mxu0
    %v4612 = vadd.f32 0.0, %v4611
    %4613 = vdwg.mxu0
    %v4615 = vsel %vm296, %v4405, 0
    %v4618 = vsel %vm296, %v4408, 0
    %4620 = vmatpush.xpose.msra.mxu0 0.0
    %4621 = vmatpush.xpose.msra.mxu0 0.0
    %4622 = vmatpush.xpose.msra.mxu0 0.0
    %4623 = vmatpush.xpose.msra.mxu0 0.0
    %4624 = vmatpush.xpose.msra.mxu0 0.0
    %4625 = vmatpush.xpose.msra.mxu0 0.0
    %4626 = vmatpush.xpose.msra.mxu0 0.0
    %4627 = vmatpush.xpose.msra.mxu0 0.0
    %4628 = vmatpush.xpose.msra.mxu0 0.0
    %4629 = vmatpush.xpose.msra.mxu0 0.0
    %4630 = vmatpush.xpose.msra.mxu0 0.0
    %4631 = vmatpush.xpose.msra.mxu0 0.0
    %4632 = vmatpush.xpose.msra.mxu0 0.0
    %4633 = vmatpush.xpose.msra.mxu0 0.0
    %4634 = vmatpush.xpose.msra.mxu0 %v4343
    %4635 = vmatpush.xpose.msra.mxu0 %v4340
    %4636 = vmatmul.f32.gmra.mxu0 %v4615
    %v4637 = vpop.f32.mrf.mxu0
    %v4638 = vadd.f32 0.0, %v4637
    %4639 = vmatmul.f32.gmra.mxu0 %v4618
    %v4640 = vpop.f32.mrf.mxu0
    %v4641 = vadd.f32 0.0, %v4640
    %4642 = vdwg.mxu0
    %v4644 = vsel %vm296, %v4411, 0
    %v4647 = vsel %vm296, %v4414, 0
    %4649 = vmatpush.xpose.msra.mxu0 0.0
    %4650 = vmatpush.xpose.msra.mxu0 0.0
    %4651 = vmatpush.xpose.msra.mxu0 0.0
    %4652 = vmatpush.xpose.msra.mxu0 0.0
    %4653 = vmatpush.xpose.msra.mxu0 0.0
    %4654 = vmatpush.xpose.msra.mxu0 0.0
    %4655 = vmatpush.xpose.msra.mxu0 0.0
    %4656 = vmatpush.xpose.msra.mxu0 0.0
    %4657 = vmatpush.xpose.msra.mxu0 0.0
    %4658 = vmatpush.xpose.msra.mxu0 0.0
    %4659 = vmatpush.xpose.msra.mxu0 0.0
    %4660 = vmatpush.xpose.msra.mxu0 0.0
    %4661 = vmatpush.xpose.msra.mxu0 0.0
    %4662 = vmatpush.xpose.msra.mxu0 0.0
    %4663 = vmatpush.xpose.msra.mxu0 %v4349
    %4664 = vmatpush.xpose.msra.mxu0 %v4346
    %4665 = vmatmul.f32.gmra.mxu0 %v4644
    %v4666 = vpop.f32.mrf.mxu0
    %v4667 = vadd.f32 0.0, %v4666
    %4668 = vmatmul.f32.gmra.mxu0 %v4647
    %v4669 = vpop.f32.mrf.mxu0
    %v4670 = vadd.f32 0.0, %v4669
    %4671 = vdwg.mxu0
    %v4673 = vsel %vm296, %v4417, 0
    %v4676 = vsel %vm296, %v4420, 0
    %4678 = vmatpush.xpose.msra.mxu0 0.0
    %4679 = vmatpush.xpose.msra.mxu0 0.0
    %4680 = vmatpush.xpose.msra.mxu0 0.0
    %4681 = vmatpush.xpose.msra.mxu0 0.0
    %4682 = vmatpush.xpose.msra.mxu0 0.0
    %4683 = vmatpush.xpose.msra.mxu0 0.0
    %4684 = vmatpush.xpose.msra.mxu0 0.0
    %4685 = vmatpush.xpose.msra.mxu0 0.0
    %4686 = vmatpush.xpose.msra.mxu0 0.0
    %4687 = vmatpush.xpose.msra.mxu0 0.0
    %4688 = vmatpush.xpose.msra.mxu0 0.0
    %4689 = vmatpush.xpose.msra.mxu0 0.0
    %4690 = vmatpush.xpose.msra.mxu0 0.0
    %4691 = vmatpush.xpose.msra.mxu0 0.0
    %4692 = vmatpush.xpose.msra.mxu0 %v4355
    %4693 = vmatpush.xpose.msra.mxu0 %v4352
    %4694 = vmatmul.f32.gmra.mxu0 %v4673
    %v4695 = vpop.f32.mrf.mxu0
    %v4696 = vadd.f32 0.0, %v4695
    %4697 = vmatmul.f32.gmra.mxu0 %v4676
    %v4698 = vpop.f32.mrf.mxu0
    %v4699 = vadd.f32 0.0, %v4698
    %4700 = vdwg.mxu0
    %v4702 = vsel %vm296, %v4423, 0
    %v4705 = vsel %vm296, %v4426, 0
    %4707 = vmatpush.xpose.msra.mxu0 0.0
    %4708 = vmatpush.xpose.msra.mxu0 0.0
    %4709 = vmatpush.xpose.msra.mxu0 0.0
    %4710 = vmatpush.xpose.msra.mxu0 0.0
    %4711 = vmatpush.xpose.msra.mxu0 0.0
    %4712 = vmatpush.xpose.msra.mxu0 0.0
    %4713 = vmatpush.xpose.msra.mxu0 0.0
    %4714 = vmatpush.xpose.msra.mxu0 0.0
    %4715 = vmatpush.xpose.msra.mxu0 0.0
    %4716 = vmatpush.xpose.msra.mxu0 0.0
    %4717 = vmatpush.xpose.msra.mxu0 0.0
    %4718 = vmatpush.xpose.msra.mxu0 0.0
    %4719 = vmatpush.xpose.msra.mxu0 0.0
    %4720 = vmatpush.xpose.msra.mxu0 0.0
    %4721 = vmatpush.xpose.msra.mxu0 %v4361
    %4722 = vmatpush.xpose.msra.mxu0 %v4358
    %4723 = vmatmul.f32.gmra.mxu0 %v4702
    %v4724 = vpop.f32.mrf.mxu0
    %v4725 = vadd.f32 0.0, %v4724
    %4726 = vmatmul.f32.gmra.mxu0 %v4705
    %v4727 = vpop.f32.mrf.mxu0
    %v4728 = vadd.f32 0.0, %v4727
    %4729 = vdwg.mxu0
    %v4730 = vmul.f32 %v4522, 0.31622776
    %v4731 = vmul.f32 %v4525, 0.31622776
    %v4732 = vmul.f32 %v4551, 0.31622776
    %v4733 = vmul.f32 %v4554, 0.31622776
    %v4734 = vmul.f32 %v4580, 0.31622776
    %v4735 = vmul.f32 %v4583, 0.31622776
    %v4736 = vmul.f32 %v4609, 0.31622776
    %v4737 = vmul.f32 %v4612, 0.31622776
    %v4738 = vmul.f32 %v4638, 0.31622776
    %v4739 = vmul.f32 %v4641, 0.31622776
    %v4740 = vmul.f32 %v4667, 0.31622776
    %v4741 = vmul.f32 %v4670, 0.31622776
    %v4742 = vmul.f32 %v4696, 0.31622776
    %v4743 = vmul.f32 %v4699, 0.31622776
    %v4744 = vmul.f32 %v4725, 0.31622776
    %v4745 = vmul.f32 %v4728, 0.31622776
    %v4746 = vsel %vm1150, %v4730, -1e+30
    %v4747 = vsel %vm1151, %v4731, -1e+30
    %v4748 = vsel %vm1150, %v4732, -1e+30
    %v4749 = vsel %vm1151, %v4733, -1e+30
    %v4750 = vsel %vm1150, %v4734, -1e+30
    %v4751 = vsel %vm1151, %v4735, -1e+30
    %v4752 = vsel %vm1150, %v4736, -1e+30
    %v4753 = vsel %vm1151, %v4737, -1e+30
    %v4754 = vsel %vm1150, %v4738, -1e+30
    %v4755 = vsel %vm1151, %v4739, -1e+30
    %v4756 = vsel %vm1150, %v4740, -1e+30
    %v4757 = vsel %vm1151, %v4741, -1e+30
    %v4758 = vsel %vm1150, %v4742, -1e+30
    %v4759 = vsel %vm1151, %v4743, -1e+30
    %v4760 = vsel %vm1150, %v4744, -1e+30
    %v4761 = vsel %vm1151, %v4745, -1e+30
    %v4762 = vsel %vm1168, %v4746, -inf
    %4763 = vmax.xlane.f32.xlu0 %v4762
    %v4764 = vpop.xlane.xlu0 %4763
    %v4765 = vsel %vm1168, %v4747, -inf
    %4766 = vmax.xlane.f32.xlu0 %v4765
    %v4767 = vpop.xlane.xlu0 %4766
    %v4768 = vsel %vm1168, %v4748, -inf
    %4769 = vmax.xlane.f32.xlu0 %v4768
    %v4770 = vpop.xlane.xlu0 %4769
    %v4771 = vsel %vm1168, %v4749, -inf
    %4772 = vmax.xlane.f32.xlu0 %v4771
    %v4773 = vpop.xlane.xlu0 %4772
    %v4774 = vsel %vm1168, %v4750, -inf
    %4775 = vmax.xlane.f32.xlu0 %v4774
    %v4776 = vpop.xlane.xlu0 %4775
    %v4777 = vsel %vm1168, %v4751, -inf
    %4778 = vmax.xlane.f32.xlu0 %v4777
    %v4779 = vpop.xlane.xlu0 %4778
    %v4780 = vsel %vm1168, %v4752, -inf
    %4781 = vmax.xlane.f32.xlu0 %v4780
    %v4782 = vpop.xlane.xlu0 %4781
    %v4783 = vsel %vm1168, %v4753, -inf
    %4784 = vmax.xlane.f32.xlu0 %v4783
    %v4785 = vpop.xlane.xlu0 %4784
    %v4786 = vsel %vm1168, %v4754, -inf
    %4787 = vmax.xlane.f32.xlu0 %v4786
    %v4788 = vpop.xlane.xlu0 %4787
    %v4789 = vsel %vm1168, %v4755, -inf
    %4790 = vmax.xlane.f32.xlu0 %v4789
    %v4791 = vpop.xlane.xlu0 %4790
    %v4792 = vsel %vm1168, %v4756, -inf
    %4793 = vmax.xlane.f32.xlu0 %v4792
    %v4794 = vpop.xlane.xlu0 %4793
    %v4795 = vsel %vm1168, %v4757, -inf
    %4796 = vmax.xlane.f32.xlu0 %v4795
    %v4797 = vpop.xlane.xlu0 %4796
    %v4798 = vsel %vm1168, %v4758, -inf
    %4799 = vmax.xlane.f32.xlu0 %v4798
    %v4800 = vpop.xlane.xlu0 %4799
    %v4801 = vsel %vm1168, %v4759, -inf
    %4802 = vmax.xlane.f32.xlu0 %v4801
    %v4803 = vpop.xlane.xlu0 %4802
    %v4804 = vsel %vm1168, %v4760, -inf
    %4805 = vmax.xlane.f32.xlu0 %v4804
    %v4806 = vpop.xlane.xlu0 %4805
    %v4807 = vsel %vm1168, %v4761, -inf
    %4808 = vmax.xlane.f32.xlu0 %v4807
    %v4809 = vpop.xlane.xlu0 %4808
    %v4810 = vsub.f32 %v4746, %v4764
    %v4811 = vsub.f32 %v4747, %v4767
    %v4812 = vsub.f32 %v4748, %v4770
    %v4813 = vsub.f32 %v4749, %v4773
    %v4814 = vsub.f32 %v4750, %v4776
    %v4815 = vsub.f32 %v4751, %v4779
    %v4816 = vsub.f32 %v4752, %v4782
    %v4817 = vsub.f32 %v4753, %v4785
    %v4818 = vsub.f32 %v4754, %v4788
    %v4819 = vsub.f32 %v4755, %v4791
    %v4820 = vsub.f32 %v4756, %v4794
    %v4821 = vsub.f32 %v4757, %v4797
    %v4822 = vsub.f32 %v4758, %v4800
    %v4823 = vsub.f32 %v4759, %v4803
    %v4824 = vsub.f32 %v4760, %v4806
    %v4825 = vsub.f32 %v4761, %v4809
    %v4826 = vmul.f32 %v4810, 1.442695
    %v4827 = vpow.pop %v4826
    %v4828 = vmul.f32 %v4811, 1.442695
    %v4829 = vpow.pop %v4828
    %v4830 = vmul.f32 %v4812, 1.442695
    %v4831 = vpow.pop %v4830
    %v4832 = vmul.f32 %v4813, 1.442695
    %v4833 = vpow.pop %v4832
    %v4834 = vmul.f32 %v4814, 1.442695
    %v4835 = vpow.pop %v4834
    %v4836 = vmul.f32 %v4815, 1.442695
    %v4837 = vpow.pop %v4836
    %v4838 = vmul.f32 %v4816, 1.442695
    %v4839 = vpow.pop %v4838
    %v4840 = vmul.f32 %v4817, 1.442695
    %v4841 = vpow.pop %v4840
    %v4842 = vmul.f32 %v4818, 1.442695
    %v4843 = vpow.pop %v4842
    %v4844 = vmul.f32 %v4819, 1.442695
    %v4845 = vpow.pop %v4844
    %v4846 = vmul.f32 %v4820, 1.442695
    %v4847 = vpow.pop %v4846
    %v4848 = vmul.f32 %v4821, 1.442695
    %v4849 = vpow.pop %v4848
    %v4850 = vmul.f32 %v4822, 1.442695
    %v4851 = vpow.pop %v4850
    %v4852 = vmul.f32 %v4823, 1.442695
    %v4853 = vpow.pop %v4852
    %v4854 = vmul.f32 %v4824, 1.442695
    %v4855 = vpow.pop %v4854
    %v4856 = vmul.f32 %v4825, 1.442695
    %v4857 = vpow.pop %v4856
    %v4858 = vsel %vm1168, %v4827, 0.0
    %4859 = vadd.xlane.f32.xlu0 %v4858
    %v4860 = vpop.xlane.xlu0 %4859
    %v4861 = vsel %vm1168, %v4829, 0.0
    %4862 = vadd.xlane.f32.xlu0 %v4861
    %v4863 = vpop.xlane.xlu0 %4862
    %v4864 = vsel %vm1168, %v4831, 0.0
    %4865 = vadd.xlane.f32.xlu0 %v4864
    %v4866 = vpop.xlane.xlu0 %4865
    %v4867 = vsel %vm1168, %v4833, 0.0
    %4868 = vadd.xlane.f32.xlu0 %v4867
    %v4869 = vpop.xlane.xlu0 %4868
    %v4870 = vsel %vm1168, %v4835, 0.0
    %4871 = vadd.xlane.f32.xlu0 %v4870
    %v4872 = vpop.xlane.xlu0 %4871
    %v4873 = vsel %vm1168, %v4837, 0.0
    %4874 = vadd.xlane.f32.xlu0 %v4873
    %v4875 = vpop.xlane.xlu0 %4874
    %v4876 = vsel %vm1168, %v4839, 0.0
    %4877 = vadd.xlane.f32.xlu0 %v4876
    %v4878 = vpop.xlane.xlu0 %4877
    %v4879 = vsel %vm1168, %v4841, 0.0
    %4880 = vadd.xlane.f32.xlu0 %v4879
    %v4881 = vpop.xlane.xlu0 %4880
    %v4882 = vsel %vm1168, %v4843, 0.0
    %4883 = vadd.xlane.f32.xlu0 %v4882
    %v4884 = vpop.xlane.xlu0 %4883
    %v4885 = vsel %vm1168, %v4845, 0.0
    %4886 = vadd.xlane.f32.xlu0 %v4885
    %v4887 = vpop.xlane.xlu0 %4886
    %v4888 = vsel %vm1168, %v4847, 0.0
    %4889 = vadd.xlane.f32.xlu0 %v4888
    %v4890 = vpop.xlane.xlu0 %4889
    %v4891 = vsel %vm1168, %v4849, 0.0
    %4892 = vadd.xlane.f32.xlu0 %v4891
    %v4893 = vpop.xlane.xlu0 %4892
    %v4894 = vsel %vm1168, %v4851, 0.0
    %4895 = vadd.xlane.f32.xlu0 %v4894
    %v4896 = vpop.xlane.xlu0 %4895
    %v4897 = vsel %vm1168, %v4853, 0.0
    %4898 = vadd.xlane.f32.xlu0 %v4897
    %v4899 = vpop.xlane.xlu0 %4898
    %v4900 = vsel %vm1168, %v4855, 0.0
    %4901 = vadd.xlane.f32.xlu0 %v4900
    %v4902 = vpop.xlane.xlu0 %4901
    %v4903 = vsel %vm1168, %v4857, 0.0
    %4904 = vadd.xlane.f32.xlu0 %v4903
    %v4905 = vpop.xlane.xlu0 %4904
    %v4906 = vrcp.pop %v4860
    %v4907 = vrcp.pop %v4863
    %v4908 = vrcp.pop %v4866
    %v4909 = vrcp.pop %v4869
    %v4910 = vrcp.pop %v4872
    %v4911 = vrcp.pop %v4875
    %v4912 = vrcp.pop %v4878
    %v4913 = vrcp.pop %v4881
    %v4914 = vrcp.pop %v4884
    %v4915 = vrcp.pop %v4887
    %v4916 = vrcp.pop %v4890
    %v4917 = vrcp.pop %v4893
    %v4918 = vrcp.pop %v4896
    %v4919 = vrcp.pop %v4899
    %v4920 = vrcp.pop %v4902
    %v4921 = vrcp.pop %v4905
    %v4922 = vmul.f32 %v4827, %v4906
    %v4923 = vmul.f32 %v4829, %v4907
    %v4924 = vmul.f32 %v4831, %v4908
    %v4925 = vmul.f32 %v4833, %v4909
    %v4926 = vmul.f32 %v4835, %v4910
    %v4927 = vmul.f32 %v4837, %v4911
    %v4928 = vmul.f32 %v4839, %v4912
    %v4929 = vmul.f32 %v4841, %v4913
    %v4930 = vmul.f32 %v4843, %v4914
    %v4931 = vmul.f32 %v4845, %v4915
    %v4932 = vmul.f32 %v4847, %v4916
    %v4933 = vmul.f32 %v4849, %v4917
    %v4934 = vmul.f32 %v4851, %v4918
    %v4935 = vmul.f32 %v4853, %v4919
    %v4936 = vmul.f32 %v4855, %v4920
    %v4937 = vmul.f32 %v4857, %v4921
    %v4939 = vsel %vm1168, %v4922, 0
    %v4942 = vsel %vm1168, %v4923, 0
    %4944 = vmatpush.msra.mxu0 0.0
    %4945 = vmatpush.msra.mxu0 0.0
    %4946 = vmatpush.msra.mxu0 0.0
    %4947 = vmatpush.msra.mxu0 0.0
    %4948 = vmatpush.msra.mxu0 0.0
    %4949 = vmatpush.msra.mxu0 0.0
    %4950 = vmatpush.msra.mxu0 0.0
    %4951 = vmatpush.msra.mxu0 0.0
    %4952 = vmatpush.msra.mxu0 0.0
    %4953 = vmatpush.msra.mxu0 0.0
    %4954 = vmatpush.msra.mxu0 0.0
    %4955 = vmatpush.msra.mxu0 0.0
    %4956 = vmatpush.msra.mxu0 0.0
    %4957 = vmatpush.msra.mxu0 0.0
    %4958 = vmatpush.msra.mxu0 %v4454
    %4959 = vmatpush.msra.mxu0 %v4451
    %4960 = vmatmul.f32.gmra.mxu0 %v4939
    %v4961 = vpop.f32.mrf.mxu0
    %v4962 = vadd.f32 0.0, %v4961
    %4963 = vmatmul.f32.gmra.mxu0 %v4942
    %v4964 = vpop.f32.mrf.mxu0
    %v4965 = vadd.f32 0.0, %v4964
    %4966 = vdwg.mxu0
    %v4968 = vsel %vm1168, %v4924, 0
    %v4971 = vsel %vm1168, %v4925, 0
    %4973 = vmatpush.msra.mxu0 0.0
    %4974 = vmatpush.msra.mxu0 0.0
    %4975 = vmatpush.msra.mxu0 0.0
    %4976 = vmatpush.msra.mxu0 0.0
    %4977 = vmatpush.msra.mxu0 0.0
    %4978 = vmatpush.msra.mxu0 0.0
    %4979 = vmatpush.msra.mxu0 0.0
    %4980 = vmatpush.msra.mxu0 0.0
    %4981 = vmatpush.msra.mxu0 0.0
    %4982 = vmatpush.msra.mxu0 0.0
    %4983 = vmatpush.msra.mxu0 0.0
    %4984 = vmatpush.msra.mxu0 0.0
    %4985 = vmatpush.msra.mxu0 0.0
    %4986 = vmatpush.msra.mxu0 0.0
    %4987 = vmatpush.msra.mxu0 %v4460
    %4988 = vmatpush.msra.mxu0 %v4457
    %4989 = vmatmul.f32.gmra.mxu0 %v4968
    %v4990 = vpop.f32.mrf.mxu0
    %v4991 = vadd.f32 0.0, %v4990
    %4992 = vmatmul.f32.gmra.mxu0 %v4971
    %v4993 = vpop.f32.mrf.mxu0
    %v4994 = vadd.f32 0.0, %v4993
    %4995 = vdwg.mxu0
    %v4997 = vsel %vm1168, %v4926, 0
    %v5000 = vsel %vm1168, %v4927, 0
    %5002 = vmatpush.msra.mxu0 0.0
    %5003 = vmatpush.msra.mxu0 0.0
    %5004 = vmatpush.msra.mxu0 0.0
    %5005 = vmatpush.msra.mxu0 0.0
    %5006 = vmatpush.msra.mxu0 0.0
    %5007 = vmatpush.msra.mxu0 0.0
    %5008 = vmatpush.msra.mxu0 0.0
    %5009 = vmatpush.msra.mxu0 0.0
    %5010 = vmatpush.msra.mxu0 0.0
    %5011 = vmatpush.msra.mxu0 0.0
    %5012 = vmatpush.msra.mxu0 0.0
    %5013 = vmatpush.msra.mxu0 0.0
    %5014 = vmatpush.msra.mxu0 0.0
    %5015 = vmatpush.msra.mxu0 0.0
    %5016 = vmatpush.msra.mxu0 %v4466
    %5017 = vmatpush.msra.mxu0 %v4463
    %5018 = vmatmul.f32.gmra.mxu0 %v4997
    %v5019 = vpop.f32.mrf.mxu0
    %v5020 = vadd.f32 0.0, %v5019
    %5021 = vmatmul.f32.gmra.mxu0 %v5000
    %v5022 = vpop.f32.mrf.mxu0
    %v5023 = vadd.f32 0.0, %v5022
    %5024 = vdwg.mxu0
    %v5026 = vsel %vm1168, %v4928, 0
    %v5029 = vsel %vm1168, %v4929, 0
    %5031 = vmatpush.msra.mxu0 0.0
    %5032 = vmatpush.msra.mxu0 0.0
    %5033 = vmatpush.msra.mxu0 0.0
    %5034 = vmatpush.msra.mxu0 0.0
    %5035 = vmatpush.msra.mxu0 0.0
    %5036 = vmatpush.msra.mxu0 0.0
    %5037 = vmatpush.msra.mxu0 0.0
    %5038 = vmatpush.msra.mxu0 0.0
    %5039 = vmatpush.msra.mxu0 0.0
    %5040 = vmatpush.msra.mxu0 0.0
    %5041 = vmatpush.msra.mxu0 0.0
    %5042 = vmatpush.msra.mxu0 0.0
    %5043 = vmatpush.msra.mxu0 0.0
    %5044 = vmatpush.msra.mxu0 0.0
    %5045 = vmatpush.msra.mxu0 %v4472
    %5046 = vmatpush.msra.mxu0 %v4469
    %5047 = vmatmul.f32.gmra.mxu0 %v5026
    %v5048 = vpop.f32.mrf.mxu0
    %v5049 = vadd.f32 0.0, %v5048
    %5050 = vmatmul.f32.gmra.mxu0 %v5029
    %v5051 = vpop.f32.mrf.mxu0
    %v5052 = vadd.f32 0.0, %v5051
    %5053 = vdwg.mxu0
    %v5055 = vsel %vm1168, %v4930, 0
    %v5058 = vsel %vm1168, %v4931, 0
    %5060 = vmatpush.msra.mxu0 0.0
    %5061 = vmatpush.msra.mxu0 0.0
    %5062 = vmatpush.msra.mxu0 0.0
    %5063 = vmatpush.msra.mxu0 0.0
    %5064 = vmatpush.msra.mxu0 0.0
    %5065 = vmatpush.msra.mxu0 0.0
    %5066 = vmatpush.msra.mxu0 0.0
    %5067 = vmatpush.msra.mxu0 0.0
    %5068 = vmatpush.msra.mxu0 0.0
    %5069 = vmatpush.msra.mxu0 0.0
    %5070 = vmatpush.msra.mxu0 0.0
    %5071 = vmatpush.msra.mxu0 0.0
    %5072 = vmatpush.msra.mxu0 0.0
    %5073 = vmatpush.msra.mxu0 0.0
    %5074 = vmatpush.msra.mxu0 %v4478
    %5075 = vmatpush.msra.mxu0 %v4475
    %5076 = vmatmul.f32.gmra.mxu0 %v5055
    %v5077 = vpop.f32.mrf.mxu0
    %v5078 = vadd.f32 0.0, %v5077
    %5079 = vmatmul.f32.gmra.mxu0 %v5058
    %v5080 = vpop.f32.mrf.mxu0
    %v5081 = vadd.f32 0.0, %v5080
    %5082 = vdwg.mxu0
    %v5084 = vsel %vm1168, %v4932, 0
    %v5087 = vsel %vm1168, %v4933, 0
    %5089 = vmatpush.msra.mxu0 0.0
    %5090 = vmatpush.msra.mxu0 0.0
    %5091 = vmatpush.msra.mxu0 0.0
    %5092 = vmatpush.msra.mxu0 0.0
    %5093 = vmatpush.msra.mxu0 0.0
    %5094 = vmatpush.msra.mxu0 0.0
    %5095 = vmatpush.msra.mxu0 0.0
    %5096 = vmatpush.msra.mxu0 0.0
    %5097 = vmatpush.msra.mxu0 0.0
    %5098 = vmatpush.msra.mxu0 0.0
    %5099 = vmatpush.msra.mxu0 0.0
    %5100 = vmatpush.msra.mxu0 0.0
    %5101 = vmatpush.msra.mxu0 0.0
    %5102 = vmatpush.msra.mxu0 0.0
    %5103 = vmatpush.msra.mxu0 %v4484
    %5104 = vmatpush.msra.mxu0 %v4481
    %5105 = vmatmul.f32.gmra.mxu0 %v5084
    %v5106 = vpop.f32.mrf.mxu0
    %v5107 = vadd.f32 0.0, %v5106
    %5108 = vmatmul.f32.gmra.mxu0 %v5087
    %v5109 = vpop.f32.mrf.mxu0
    %v5110 = vadd.f32 0.0, %v5109
    %5111 = vdwg.mxu0
    %v5113 = vsel %vm1168, %v4934, 0
    %v5116 = vsel %vm1168, %v4935, 0
    %5118 = vmatpush.msra.mxu0 0.0
    %5119 = vmatpush.msra.mxu0 0.0
    %5120 = vmatpush.msra.mxu0 0.0
    %5121 = vmatpush.msra.mxu0 0.0
    %5122 = vmatpush.msra.mxu0 0.0
    %5123 = vmatpush.msra.mxu0 0.0
    %5124 = vmatpush.msra.mxu0 0.0
    %5125 = vmatpush.msra.mxu0 0.0
    %5126 = vmatpush.msra.mxu0 0.0
    %5127 = vmatpush.msra.mxu0 0.0
    %5128 = vmatpush.msra.mxu0 0.0
    %5129 = vmatpush.msra.mxu0 0.0
    %5130 = vmatpush.msra.mxu0 0.0
    %5131 = vmatpush.msra.mxu0 0.0
    %5132 = vmatpush.msra.mxu0 %v4490
    %5133 = vmatpush.msra.mxu0 %v4487
    %5134 = vmatmul.f32.gmra.mxu0 %v5113
    %v5135 = vpop.f32.mrf.mxu0
    %v5136 = vadd.f32 0.0, %v5135
    %5137 = vmatmul.f32.gmra.mxu0 %v5116
    %v5138 = vpop.f32.mrf.mxu0
    %v5139 = vadd.f32 0.0, %v5138
    %5140 = vdwg.mxu0
    %v5142 = vsel %vm1168, %v4936, 0
    %v5145 = vsel %vm1168, %v4937, 0
    %5147 = vmatpush.msra.mxu0 0.0
    %5148 = vmatpush.msra.mxu0 0.0
    %5149 = vmatpush.msra.mxu0 0.0
    %5150 = vmatpush.msra.mxu0 0.0
    %5151 = vmatpush.msra.mxu0 0.0
    %5152 = vmatpush.msra.mxu0 0.0
    %5153 = vmatpush.msra.mxu0 0.0
    %5154 = vmatpush.msra.mxu0 0.0
    %5155 = vmatpush.msra.mxu0 0.0
    %5156 = vmatpush.msra.mxu0 0.0
    %5157 = vmatpush.msra.mxu0 0.0
    %5158 = vmatpush.msra.mxu0 0.0
    %5159 = vmatpush.msra.mxu0 0.0
    %5160 = vmatpush.msra.mxu0 0.0
    %5161 = vmatpush.msra.mxu0 %v4496
    %5162 = vmatpush.msra.mxu0 %v4493
    %5163 = vmatmul.f32.gmra.mxu0 %v5142
    %v5164 = vpop.f32.mrf.mxu0
    %v5165 = vadd.f32 0.0, %v5164
    %5166 = vmatmul.f32.gmra.mxu0 %v5145
    %v5167 = vpop.f32.mrf.mxu0
    %v5168 = vadd.f32 0.0, %v5167
    %5169 = vdwg.mxu0
    %v5170 = vadd.f32 %v4294, %v4962
    %v5171 = vadd.f32 %v4295, %v4965
    %v5172 = vadd.f32 %v4296, %v4991
    %v5173 = vadd.f32 %v4297, %v4994
    %v5174 = vadd.f32 %v4298, %v5020
    %v5175 = vadd.f32 %v4299, %v5023
    %v5176 = vadd.f32 %v4300, %v5049
    %v5177 = vadd.f32 %v4301, %v5052
    %v5178 = vadd.f32 %v4302, %v5078
    %v5179 = vadd.f32 %v4303, %v5081
    %v5180 = vadd.f32 %v4304, %v5107
    %v5181 = vadd.f32 %v4305, %v5110
    %v5182 = vadd.f32 %v4306, %v5136
    %v5183 = vadd.f32 %v4307, %v5139
    %v5184 = vadd.f32 %v4308, %v5165
    %v5185 = vadd.f32 %v4309, %v5168
    %s5186 = scalar_lea.vmem %s3, 128
    %v5187 = vld [vmem:[%s5186] sm:$0xff]
    %v5188 = vld [vmem:[%s5186 + $0x8] sm:$0xff]
    %v5189 = vld [vmem:[%s5186 + $0x10] sm:$0xff]
    %v5190 = vld [vmem:[%s5186 + $0x18] sm:$0xff]
    %5191 = vmatpush.msra.mxu0 0.0
    %5192 = vmatpush.msra.mxu0 0.0
    %5193 = vmatpush.msra.mxu0 0.0
    %5194 = vmatpush.msra.mxu0 0.0
    %5195 = vmatpush.msra.mxu0 0.0
    %5196 = vmatpush.msra.mxu0 0.0
    %5197 = vmatpush.msra.mxu0 0.0
    %5198 = vmatpush.msra.mxu0 0.0
    %5199 = vmatpush.msra.mxu0 0.0
    %5200 = vmatpush.msra.mxu0 0.0
    %5201 = vmatpush.msra.mxu0 0.0
    %5202 = vmatpush.msra.mxu0 0.0
    %5203 = vmatpush.msra.mxu0 %v5190
    %5204 = vmatpush.msra.mxu0 %v5189
    %5205 = vmatpush.msra.mxu0 %v5188
    %5206 = vmatpush.msra.mxu0 %v5187
    %5207 = vmatmul.f32.gmra.mxu0 %v4316
    %v5208 = vpop.f32.mrf.mxu0
    %v5209 = vadd.f32 0.0, %v5208
    %5210 = vmatmul.f32.gmra.mxu0 %v4319
    %v5211 = vpop.f32.mrf.mxu0
    %v5212 = vadd.f32 0.0, %v5211
    %5213 = vmatmul.f32.gmra.mxu0 %v4322
    %v5214 = vpop.f32.mrf.mxu0
    %v5215 = vadd.f32 0.0, %v5214
    %5216 = vmatmul.f32.gmra.mxu0 %v4325
    %v5217 = vpop.f32.mrf.mxu0
    %v5218 = vadd.f32 0.0, %v5217
    %5219 = vmatmul.f32.gmra.mxu0 %v4328
    %v5220 = vpop.f32.mrf.mxu0
    %v5221 = vadd.f32 0.0, %v5220
    %5222 = vmatmul.f32.gmra.mxu0 %v4331
    %v5223 = vpop.f32.mrf.mxu0
    %v5224 = vadd.f32 0.0, %v5223
    %5225 = vmatmul.f32.gmra.mxu0 %v4334
    %v5226 = vpop.f32.mrf.mxu0
    %v5227 = vadd.f32 0.0, %v5226
    %5228 = vmatmul.f32.gmra.mxu0 %v4337
    %v5229 = vpop.f32.mrf.mxu0
    %v5230 = vadd.f32 0.0, %v5229
    %5231 = vmatmul.f32.gmra.mxu0 %v4340
    %v5232 = vpop.f32.mrf.mxu0
    %v5233 = vadd.f32 0.0, %v5232
    %5234 = vmatmul.f32.gmra.mxu0 %v4343
    %v5235 = vpop.f32.mrf.mxu0
    %v5236 = vadd.f32 0.0, %v5235
    %5237 = vmatmul.f32.gmra.mxu0 %v4346
    %v5238 = vpop.f32.mrf.mxu0
    %v5239 = vadd.f32 0.0, %v5238
    %5240 = vmatmul.f32.gmra.mxu0 %v4349
    %v5241 = vpop.f32.mrf.mxu0
    %v5242 = vadd.f32 0.0, %v5241
    %5243 = vmatmul.f32.gmra.mxu0 %v4352
    %v5244 = vpop.f32.mrf.mxu0
    %v5245 = vadd.f32 0.0, %v5244
    %5246 = vmatmul.f32.gmra.mxu0 %v4355
    %v5247 = vpop.f32.mrf.mxu0
    %v5248 = vadd.f32 0.0, %v5247
    %5249 = vmatmul.f32.gmra.mxu0 %v4358
    %v5250 = vpop.f32.mrf.mxu0
    %v5251 = vadd.f32 0.0, %v5250
    %5252 = vmatmul.f32.gmra.mxu0 %v4361
    %v5253 = vpop.f32.mrf.mxu0
    %v5254 = vadd.f32 0.0, %v5253
    %5255 = vdwg.mxu0
    %s5256 = scalar_lea.vmem [#allocation2], 128
    %v5257 = vld [vmem:[%s5256] sm:$0xff]
    %v5258 = vld [vmem:[%s5256 + $0x8] sm:$0xff]
    %v5259 = vld [vmem:[%s5256 + $0x10] sm:$0xff]
    %v5260 = vld [vmem:[%s5256 + $0x18] sm:$0xff]
    %5261 = vmatpush.msra.mxu0 0.0
    %5262 = vmatpush.msra.mxu0 0.0
    %5263 = vmatpush.msra.mxu0 0.0
    %5264 = vmatpush.msra.mxu0 0.0
    %5265 = vmatpush.msra.mxu0 0.0
    %5266 = vmatpush.msra.mxu0 0.0
    %5267 = vmatpush.msra.mxu0 0.0
    %5268 = vmatpush.msra.mxu0 0.0
    %5269 = vmatpush.msra.mxu0 0.0
    %5270 = vmatpush.msra.mxu0 0.0
    %5271 = vmatpush.msra.mxu0 0.0
    %5272 = vmatpush.msra.mxu0 0.0
    %5273 = vmatpush.msra.mxu0 %v5260
    %5274 = vmatpush.msra.mxu0 %v5259
    %5275 = vmatpush.msra.mxu0 %v5258
    %5276 = vmatpush.msra.mxu0 %v5257
    %5277 = vmatmul.f32.gmra.mxu0 %v4316
    %v5278 = vpop.f32.mrf.mxu0
    %v5279 = vadd.f32 0.0, %v5278
    %5280 = vmatmul.f32.gmra.mxu0 %v4319
    %v5281 = vpop.f32.mrf.mxu0
    %v5282 = vadd.f32 0.0, %v5281
    %5283 = vmatmul.f32.gmra.mxu0 %v4322
    %v5284 = vpop.f32.mrf.mxu0
    %v5285 = vadd.f32 0.0, %v5284
    %5286 = vmatmul.f32.gmra.mxu0 %v4325
    %v5287 = vpop.f32.mrf.mxu0
    %v5288 = vadd.f32 0.0, %v5287
    %5289 = vmatmul.f32.gmra.mxu0 %v4328
    %v5290 = vpop.f32.mrf.mxu0
    %v5291 = vadd.f32 0.0, %v5290
    %5292 = vmatmul.f32.gmra.mxu0 %v4331
    %v5293 = vpop.f32.mrf.mxu0
    %v5294 = vadd.f32 0.0, %v5293
    %5295 = vmatmul.f32.gmra.mxu0 %v4334
    %v5296 = vpop.f32.mrf.mxu0
    %v5297 = vadd.f32 0.0, %v5296
    %5298 = vmatmul.f32.gmra.mxu0 %v4337
    %v5299 = vpop.f32.mrf.mxu0
    %v5300 = vadd.f32 0.0, %v5299
    %5301 = vmatmul.f32.gmra.mxu0 %v4340
    %v5302 = vpop.f32.mrf.mxu0
    %v5303 = vadd.f32 0.0, %v5302
    %5304 = vmatmul.f32.gmra.mxu0 %v4343
    %v5305 = vpop.f32.mrf.mxu0
    %v5306 = vadd.f32 0.0, %v5305
    %5307 = vmatmul.f32.gmra.mxu0 %v4346
    %v5308 = vpop.f32.mrf.mxu0
    %v5309 = vadd.f32 0.0, %v5308
    %5310 = vmatmul.f32.gmra.mxu0 %v4349
    %v5311 = vpop.f32.mrf.mxu0
    %v5312 = vadd.f32 0.0, %v5311
    %5313 = vmatmul.f32.gmra.mxu0 %v4352
    %v5314 = vpop.f32.mrf.mxu0
    %v5315 = vadd.f32 0.0, %v5314
    %5316 = vmatmul.f32.gmra.mxu0 %v4355
    %v5317 = vpop.f32.mrf.mxu0
    %v5318 = vadd.f32 0.0, %v5317
    %5319 = vmatmul.f32.gmra.mxu0 %v4358
    %v5320 = vpop.f32.mrf.mxu0
    %v5321 = vadd.f32 0.0, %v5320
    %5322 = vmatmul.f32.gmra.mxu0 %v4361
    %v5323 = vpop.f32.mrf.mxu0
    %v5324 = vadd.f32 0.0, %v5323
    %5325 = vdwg.mxu0
    %v5327 = vsel %vm296, %v5209, 0
    %v5330 = vsel %vm296, %v5212, 0
    %5332 = vmatpush.xpose.msra.mxu0 0.0
    %5333 = vmatpush.xpose.msra.mxu0 0.0
    %5334 = vmatpush.xpose.msra.mxu0 0.0
    %5335 = vmatpush.xpose.msra.mxu0 0.0
    %5336 = vmatpush.xpose.msra.mxu0 0.0
    %5337 = vmatpush.xpose.msra.mxu0 0.0
    %5338 = vmatpush.xpose.msra.mxu0 0.0
    %5339 = vmatpush.xpose.msra.mxu0 0.0
    %5340 = vmatpush.xpose.msra.mxu0 0.0
    %5341 = vmatpush.xpose.msra.mxu0 0.0
    %5342 = vmatpush.xpose.msra.mxu0 0.0
    %5343 = vmatpush.xpose.msra.mxu0 0.0
    %5344 = vmatpush.xpose.msra.mxu0 0.0
    %5345 = vmatpush.xpose.msra.mxu0 0.0
    %5346 = vmatpush.xpose.msra.mxu0 %v4319
    %5347 = vmatpush.xpose.msra.mxu0 %v4316
    %5348 = vmatmul.f32.gmra.mxu0 %v5327
    %v5349 = vpop.f32.mrf.mxu0
    %v5350 = vadd.f32 0.0, %v5349
    %5351 = vmatmul.f32.gmra.mxu0 %v5330
    %v5352 = vpop.f32.mrf.mxu0
    %v5353 = vadd.f32 0.0, %v5352
    %5354 = vdwg.mxu0
    %v5356 = vsel %vm296, %v5215, 0
    %v5359 = vsel %vm296, %v5218, 0
    %5361 = vmatpush.xpose.msra.mxu0 0.0
    %5362 = vmatpush.xpose.msra.mxu0 0.0
    %5363 = vmatpush.xpose.msra.mxu0 0.0
    %5364 = vmatpush.xpose.msra.mxu0 0.0
    %5365 = vmatpush.xpose.msra.mxu0 0.0
    %5366 = vmatpush.xpose.msra.mxu0 0.0
    %5367 = vmatpush.xpose.msra.mxu0 0.0
    %5368 = vmatpush.xpose.msra.mxu0 0.0
    %5369 = vmatpush.xpose.msra.mxu0 0.0
    %5370 = vmatpush.xpose.msra.mxu0 0.0
    %5371 = vmatpush.xpose.msra.mxu0 0.0
    %5372 = vmatpush.xpose.msra.mxu0 0.0
    %5373 = vmatpush.xpose.msra.mxu0 0.0
    %5374 = vmatpush.xpose.msra.mxu0 0.0
    %5375 = vmatpush.xpose.msra.mxu0 %v4325
    %5376 = vmatpush.xpose.msra.mxu0 %v4322
    %5377 = vmatmul.f32.gmra.mxu0 %v5356
    %v5378 = vpop.f32.mrf.mxu0
    %v5379 = vadd.f32 0.0, %v5378
    %5380 = vmatmul.f32.gmra.mxu0 %v5359
    %v5381 = vpop.f32.mrf.mxu0
    %v5382 = vadd.f32 0.0, %v5381
    %5383 = vdwg.mxu0
    %v5385 = vsel %vm296, %v5221, 0
    %v5388 = vsel %vm296, %v5224, 0
    %5390 = vmatpush.xpose.msra.mxu0 0.0
    %5391 = vmatpush.xpose.msra.mxu0 0.0
    %5392 = vmatpush.xpose.msra.mxu0 0.0
    %5393 = vmatpush.xpose.msra.mxu0 0.0
    %5394 = vmatpush.xpose.msra.mxu0 0.0
    %5395 = vmatpush.xpose.msra.mxu0 0.0
    %5396 = vmatpush.xpose.msra.mxu0 0.0
    %5397 = vmatpush.xpose.msra.mxu0 0.0
    %5398 = vmatpush.xpose.msra.mxu0 0.0
    %5399 = vmatpush.xpose.msra.mxu0 0.0
    %5400 = vmatpush.xpose.msra.mxu0 0.0
    %5401 = vmatpush.xpose.msra.mxu0 0.0
    %5402 = vmatpush.xpose.msra.mxu0 0.0
    %5403 = vmatpush.xpose.msra.mxu0 0.0
    %5404 = vmatpush.xpose.msra.mxu0 %v4331
    %5405 = vmatpush.xpose.msra.mxu0 %v4328
    %5406 = vmatmul.f32.gmra.mxu0 %v5385
    %v5407 = vpop.f32.mrf.mxu0
    %v5408 = vadd.f32 0.0, %v5407
    %5409 = vmatmul.f32.gmra.mxu0 %v5388
    %v5410 = vpop.f32.mrf.mxu0
    %v5411 = vadd.f32 0.0, %v5410
    %5412 = vdwg.mxu0
    %v5414 = vsel %vm296, %v5227, 0
    %v5417 = vsel %vm296, %v5230, 0
    %5419 = vmatpush.xpose.msra.mxu0 0.0
    %5420 = vmatpush.xpose.msra.mxu0 0.0
    %5421 = vmatpush.xpose.msra.mxu0 0.0
    %5422 = vmatpush.xpose.msra.mxu0 0.0
    %5423 = vmatpush.xpose.msra.mxu0 0.0
    %5424 = vmatpush.xpose.msra.mxu0 0.0
    %5425 = vmatpush.xpose.msra.mxu0 0.0
    %5426 = vmatpush.xpose.msra.mxu0 0.0
    %5427 = vmatpush.xpose.msra.mxu0 0.0
    %5428 = vmatpush.xpose.msra.mxu0 0.0
    %5429 = vmatpush.xpose.msra.mxu0 0.0
    %5430 = vmatpush.xpose.msra.mxu0 0.0
    %5431 = vmatpush.xpose.msra.mxu0 0.0
    %5432 = vmatpush.xpose.msra.mxu0 0.0
    %5433 = vmatpush.xpose.msra.mxu0 %v4337
    %5434 = vmatpush.xpose.msra.mxu0 %v4334
    %5435 = vmatmul.f32.gmra.mxu0 %v5414
    %v5436 = vpop.f32.mrf.mxu0
    %v5437 = vadd.f32 0.0, %v5436
    %5438 = vmatmul.f32.gmra.mxu0 %v5417
    %v5439 = vpop.f32.mrf.mxu0
    %v5440 = vadd.f32 0.0, %v5439
    %5441 = vdwg.mxu0
    %v5443 = vsel %vm296, %v5233, 0
    %v5446 = vsel %vm296, %v5236, 0
    %5448 = vmatpush.xpose.msra.mxu0 0.0
    %5449 = vmatpush.xpose.msra.mxu0 0.0
    %5450 = vmatpush.xpose.msra.mxu0 0.0
    %5451 = vmatpush.xpose.msra.mxu0 0.0
    %5452 = vmatpush.xpose.msra.mxu0 0.0
    %5453 = vmatpush.xpose.msra.mxu0 0.0
    %5454 = vmatpush.xpose.msra.mxu0 0.0
    %5455 = vmatpush.xpose.msra.mxu0 0.0
    %5456 = vmatpush.xpose.msra.mxu0 0.0
    %5457 = vmatpush.xpose.msra.mxu0 0.0
    %5458 = vmatpush.xpose.msra.mxu0 0.0
    %5459 = vmatpush.xpose.msra.mxu0 0.0
    %5460 = vmatpush.xpose.msra.mxu0 0.0
    %5461 = vmatpush.xpose.msra.mxu0 0.0
    %5462 = vmatpush.xpose.msra.mxu0 %v4343
    %5463 = vmatpush.xpose.msra.mxu0 %v4340
    %5464 = vmatmul.f32.gmra.mxu0 %v5443
    %v5465 = vpop.f32.mrf.mxu0
    %v5466 = vadd.f32 0.0, %v5465
    %5467 = vmatmul.f32.gmra.mxu0 %v5446
    %v5468 = vpop.f32.mrf.mxu0
    %v5469 = vadd.f32 0.0, %v5468
    %5470 = vdwg.mxu0
    %v5472 = vsel %vm296, %v5239, 0
    %v5475 = vsel %vm296, %v5242, 0
    %5477 = vmatpush.xpose.msra.mxu0 0.0
    %5478 = vmatpush.xpose.msra.mxu0 0.0
    %5479 = vmatpush.xpose.msra.mxu0 0.0
    %5480 = vmatpush.xpose.msra.mxu0 0.0
    %5481 = vmatpush.xpose.msra.mxu0 0.0
    %5482 = vmatpush.xpose.msra.mxu0 0.0
    %5483 = vmatpush.xpose.msra.mxu0 0.0
    %5484 = vmatpush.xpose.msra.mxu0 0.0
    %5485 = vmatpush.xpose.msra.mxu0 0.0
    %5486 = vmatpush.xpose.msra.mxu0 0.0
    %5487 = vmatpush.xpose.msra.mxu0 0.0
    %5488 = vmatpush.xpose.msra.mxu0 0.0
    %5489 = vmatpush.xpose.msra.mxu0 0.0
    %5490 = vmatpush.xpose.msra.mxu0 0.0
    %5491 = vmatpush.xpose.msra.mxu0 %v4349
    %5492 = vmatpush.xpose.msra.mxu0 %v4346
    %5493 = vmatmul.f32.gmra.mxu0 %v5472
    %v5494 = vpop.f32.mrf.mxu0
    %v5495 = vadd.f32 0.0, %v5494
    %5496 = vmatmul.f32.gmra.mxu0 %v5475
    %v5497 = vpop.f32.mrf.mxu0
    %v5498 = vadd.f32 0.0, %v5497
    %5499 = vdwg.mxu0
    %v5501 = vsel %vm296, %v5245, 0
    %v5504 = vsel %vm296, %v5248, 0
    %5506 = vmatpush.xpose.msra.mxu0 0.0
    %5507 = vmatpush.xpose.msra.mxu0 0.0
    %5508 = vmatpush.xpose.msra.mxu0 0.0
    %5509 = vmatpush.xpose.msra.mxu0 0.0
    %5510 = vmatpush.xpose.msra.mxu0 0.0
    %5511 = vmatpush.xpose.msra.mxu0 0.0
    %5512 = vmatpush.xpose.msra.mxu0 0.0
    %5513 = vmatpush.xpose.msra.mxu0 0.0
    %5514 = vmatpush.xpose.msra.mxu0 0.0
    %5515 = vmatpush.xpose.msra.mxu0 0.0
    %5516 = vmatpush.xpose.msra.mxu0 0.0
    %5517 = vmatpush.xpose.msra.mxu0 0.0
    %5518 = vmatpush.xpose.msra.mxu0 0.0
    %5519 = vmatpush.xpose.msra.mxu0 0.0
    %5520 = vmatpush.xpose.msra.mxu0 %v4355
    %5521 = vmatpush.xpose.msra.mxu0 %v4352
    %5522 = vmatmul.f32.gmra.mxu0 %v5501
    %v5523 = vpop.f32.mrf.mxu0
    %v5524 = vadd.f32 0.0, %v5523
    %5525 = vmatmul.f32.gmra.mxu0 %v5504
    %v5526 = vpop.f32.mrf.mxu0
    %v5527 = vadd.f32 0.0, %v5526
    %5528 = vdwg.mxu0
    %v5530 = vsel %vm296, %v5251, 0
    %v5533 = vsel %vm296, %v5254, 0
    %5535 = vmatpush.xpose.msra.mxu0 0.0
    %5536 = vmatpush.xpose.msra.mxu0 0.0
    %5537 = vmatpush.xpose.msra.mxu0 0.0
    %5538 = vmatpush.xpose.msra.mxu0 0.0
    %5539 = vmatpush.xpose.msra.mxu0 0.0
    %5540 = vmatpush.xpose.msra.mxu0 0.0
    %5541 = vmatpush.xpose.msra.mxu0 0.0
    %5542 = vmatpush.xpose.msra.mxu0 0.0
    %5543 = vmatpush.xpose.msra.mxu0 0.0
    %5544 = vmatpush.xpose.msra.mxu0 0.0
    %5545 = vmatpush.xpose.msra.mxu0 0.0
    %5546 = vmatpush.xpose.msra.mxu0 0.0
    %5547 = vmatpush.xpose.msra.mxu0 0.0
    %5548 = vmatpush.xpose.msra.mxu0 0.0
    %5549 = vmatpush.xpose.msra.mxu0 %v4361
    %5550 = vmatpush.xpose.msra.mxu0 %v4358
    %5551 = vmatmul.f32.gmra.mxu0 %v5530
    %v5552 = vpop.f32.mrf.mxu0
    %v5553 = vadd.f32 0.0, %v5552
    %5554 = vmatmul.f32.gmra.mxu0 %v5533
    %v5555 = vpop.f32.mrf.mxu0
    %v5556 = vadd.f32 0.0, %v5555
    %5557 = vdwg.mxu0
    %v5558 = vmul.f32 %v5350, 0.31622776
    %v5559 = vmul.f32 %v5353, 0.31622776
    %v5560 = vmul.f32 %v5379, 0.31622776
    %v5561 = vmul.f32 %v5382, 0.31622776
    %v5562 = vmul.f32 %v5408, 0.31622776
    %v5563 = vmul.f32 %v5411, 0.31622776
    %v5564 = vmul.f32 %v5437, 0.31622776
    %v5565 = vmul.f32 %v5440, 0.31622776
    %v5566 = vmul.f32 %v5466, 0.31622776
    %v5567 = vmul.f32 %v5469, 0.31622776
    %v5568 = vmul.f32 %v5495, 0.31622776
    %v5569 = vmul.f32 %v5498, 0.31622776
    %v5570 = vmul.f32 %v5524, 0.31622776
    %v5571 = vmul.f32 %v5527, 0.31622776
    %v5572 = vmul.f32 %v5553, 0.31622776
    %v5573 = vmul.f32 %v5556, 0.31622776
    %v5574 = vsel %vm1150, %v5558, -1e+30
    %v5575 = vsel %vm1151, %v5559, -1e+30
    %v5576 = vsel %vm1150, %v5560, -1e+30
    %v5577 = vsel %vm1151, %v5561, -1e+30
    %v5578 = vsel %vm1150, %v5562, -1e+30
    %v5579 = vsel %vm1151, %v5563, -1e+30
    %v5580 = vsel %vm1150, %v5564, -1e+30
    %v5581 = vsel %vm1151, %v5565, -1e+30
    %v5582 = vsel %vm1150, %v5566, -1e+30
    %v5583 = vsel %vm1151, %v5567, -1e+30
    %v5584 = vsel %vm1150, %v5568, -1e+30
    %v5585 = vsel %vm1151, %v5569, -1e+30
    %v5586 = vsel %vm1150, %v5570, -1e+30
    %v5587 = vsel %vm1151, %v5571, -1e+30
    %v5588 = vsel %vm1150, %v5572, -1e+30
    %v5589 = vsel %vm1151, %v5573, -1e+30
    %v5590 = vsel %vm1168, %v5574, -inf
    %5591 = vmax.xlane.f32.xlu0 %v5590
    %v5592 = vpop.xlane.xlu0 %5591
    %v5593 = vsel %vm1168, %v5575, -inf
    %5594 = vmax.xlane.f32.xlu0 %v5593
    %v5595 = vpop.xlane.xlu0 %5594
    %v5596 = vsel %vm1168, %v5576, -inf
    %5597 = vmax.xlane.f32.xlu0 %v5596
    %v5598 = vpop.xlane.xlu0 %5597
    %v5599 = vsel %vm1168, %v5577, -inf
    %5600 = vmax.xlane.f32.xlu0 %v5599
    %v5601 = vpop.xlane.xlu0 %5600
    %v5602 = vsel %vm1168, %v5578, -inf
    %5603 = vmax.xlane.f32.xlu0 %v5602
    %v5604 = vpop.xlane.xlu0 %5603
    %v5605 = vsel %vm1168, %v5579, -inf
    %5606 = vmax.xlane.f32.xlu0 %v5605
    %v5607 = vpop.xlane.xlu0 %5606
    %v5608 = vsel %vm1168, %v5580, -inf
    %5609 = vmax.xlane.f32.xlu0 %v5608
    %v5610 = vpop.xlane.xlu0 %5609
    %v5611 = vsel %vm1168, %v5581, -inf
    %5612 = vmax.xlane.f32.xlu0 %v5611
    %v5613 = vpop.xlane.xlu0 %5612
    %v5614 = vsel %vm1168, %v5582, -inf
    %5615 = vmax.xlane.f32.xlu0 %v5614
    %v5616 = vpop.xlane.xlu0 %5615
    %v5617 = vsel %vm1168, %v5583, -inf
    %5618 = vmax.xlane.f32.xlu0 %v5617
    %v5619 = vpop.xlane.xlu0 %5618
    %v5620 = vsel %vm1168, %v5584, -inf
    %5621 = vmax.xlane.f32.xlu0 %v5620
    %v5622 = vpop.xlane.xlu0 %5621
    %v5623 = vsel %vm1168, %v5585, -inf
    %5624 = vmax.xlane.f32.xlu0 %v5623
    %v5625 = vpop.xlane.xlu0 %5624
    %v5626 = vsel %vm1168, %v5586, -inf
    %5627 = vmax.xlane.f32.xlu0 %v5626
    %v5628 = vpop.xlane.xlu0 %5627
    %v5629 = vsel %vm1168, %v5587, -inf
    %5630 = vmax.xlane.f32.xlu0 %v5629
    %v5631 = vpop.xlane.xlu0 %5630
    %v5632 = vsel %vm1168, %v5588, -inf
    %5633 = vmax.xlane.f32.xlu0 %v5632
    %v5634 = vpop.xlane.xlu0 %5633
    %v5635 = vsel %vm1168, %v5589, -inf
    %5636 = vmax.xlane.f32.xlu0 %v5635
    %v5637 = vpop.xlane.xlu0 %5636
    %v5638 = vsub.f32 %v5574, %v5592
    %v5639 = vsub.f32 %v5575, %v5595
    %v5640 = vsub.f32 %v5576, %v5598
    %v5641 = vsub.f32 %v5577, %v5601
    %v5642 = vsub.f32 %v5578, %v5604
    %v5643 = vsub.f32 %v5579, %v5607
    %v5644 = vsub.f32 %v5580, %v5610
    %v5645 = vsub.f32 %v5581, %v5613
    %v5646 = vsub.f32 %v5582, %v5616
    %v5647 = vsub.f32 %v5583, %v5619
    %v5648 = vsub.f32 %v5584, %v5622
    %v5649 = vsub.f32 %v5585, %v5625
    %v5650 = vsub.f32 %v5586, %v5628
    %v5651 = vsub.f32 %v5587, %v5631
    %v5652 = vsub.f32 %v5588, %v5634
    %v5653 = vsub.f32 %v5589, %v5637
    %v5654 = vmul.f32 %v5638, 1.442695
    %v5655 = vpow.pop %v5654
    %v5656 = vmul.f32 %v5639, 1.442695
    %v5657 = vpow.pop %v5656
    %v5658 = vmul.f32 %v5640, 1.442695
    %v5659 = vpow.pop %v5658
    %v5660 = vmul.f32 %v5641, 1.442695
    %v5661 = vpow.pop %v5660
    %v5662 = vmul.f32 %v5642, 1.442695
    %v5663 = vpow.pop %v5662
    %v5664 = vmul.f32 %v5643, 1.442695
    %v5665 = vpow.pop %v5664
    %v5666 = vmul.f32 %v5644, 1.442695
    %v5667 = vpow.pop %v5666
    %v5668 = vmul.f32 %v5645, 1.442695
    %v5669 = vpow.pop %v5668
    %v5670 = vmul.f32 %v5646, 1.442695
    %v5671 = vpow.pop %v5670
    %v5672 = vmul.f32 %v5647, 1.442695
    %v5673 = vpow.pop %v5672
    %v5674 = vmul.f32 %v5648, 1.442695
    %v5675 = vpow.pop %v5674
    %v5676 = vmul.f32 %v5649, 1.442695
    %v5677 = vpow.pop %v5676
    %v5678 = vmul.f32 %v5650, 1.442695
    %v5679 = vpow.pop %v5678
    %v5680 = vmul.f32 %v5651, 1.442695
    %v5681 = vpow.pop %v5680
    %v5682 = vmul.f32 %v5652, 1.442695
    %v5683 = vpow.pop %v5682
    %v5684 = vmul.f32 %v5653, 1.442695
    %v5685 = vpow.pop %v5684
    %v5686 = vsel %vm1168, %v5655, 0.0
    %5687 = vadd.xlane.f32.xlu0 %v5686
    %v5688 = vpop.xlane.xlu0 %5687
    %v5689 = vsel %vm1168, %v5657, 0.0
    %5690 = vadd.xlane.f32.xlu0 %v5689
    %v5691 = vpop.xlane.xlu0 %5690
    %v5692 = vsel %vm1168, %v5659, 0.0
    %5693 = vadd.xlane.f32.xlu0 %v5692
    %v5694 = vpop.xlane.xlu0 %5693
    %v5695 = vsel %vm1168, %v5661, 0.0
    %5696 = vadd.xlane.f32.xlu0 %v5695
    %v5697 = vpop.xlane.xlu0 %5696
    %v5698 = vsel %vm1168, %v5663, 0.0
    %5699 = vadd.xlane.f32.xlu0 %v5698
    %v5700 = vpop.xlane.xlu0 %5699
    %v5701 = vsel %vm1168, %v5665, 0.0
    %5702 = vadd.xlane.f32.xlu0 %v5701
    %v5703 = vpop.xlane.xlu0 %5702
    %v5704 = vsel %vm1168, %v5667, 0.0
    %5705 = vadd.xlane.f32.xlu0 %v5704
    %v5706 = vpop.xlane.xlu0 %5705
    %v5707 = vsel %vm1168, %v5669, 0.0
    %5708 = vadd.xlane.f32.xlu0 %v5707
    %v5709 = vpop.xlane.xlu0 %5708
    %v5710 = vsel %vm1168, %v5671, 0.0
    %5711 = vadd.xlane.f32.xlu0 %v5710
    %v5712 = vpop.xlane.xlu0 %5711
    %v5713 = vsel %vm1168, %v5673, 0.0
    %5714 = vadd.xlane.f32.xlu0 %v5713
    %v5715 = vpop.xlane.xlu0 %5714
    %v5716 = vsel %vm1168, %v5675, 0.0
    %5717 = vadd.xlane.f32.xlu0 %v5716
    %v5718 = vpop.xlane.xlu0 %5717
    %v5719 = vsel %vm1168, %v5677, 0.0
    %5720 = vadd.xlane.f32.xlu0 %v5719
    %v5721 = vpop.xlane.xlu0 %5720
    %v5722 = vsel %vm1168, %v5679, 0.0
    %5723 = vadd.xlane.f32.xlu0 %v5722
    %v5724 = vpop.xlane.xlu0 %5723
    %v5725 = vsel %vm1168, %v5681, 0.0
    %5726 = vadd.xlane.f32.xlu0 %v5725
    %v5727 = vpop.xlane.xlu0 %5726
    %v5728 = vsel %vm1168, %v5683, 0.0
    %5729 = vadd.xlane.f32.xlu0 %v5728
    %v5730 = vpop.xlane.xlu0 %5729
    %v5731 = vsel %vm1168, %v5685, 0.0
    %5732 = vadd.xlane.f32.xlu0 %v5731
    %v5733 = vpop.xlane.xlu0 %5732
    %v5734 = vrcp.pop %v5688
    %v5735 = vrcp.pop %v5691
    %v5736 = vrcp.pop %v5694
    %v5737 = vrcp.pop %v5697
    %v5738 = vrcp.pop %v5700
    %v5739 = vrcp.pop %v5703
    %v5740 = vrcp.pop %v5706
    %v5741 = vrcp.pop %v5709
    %v5742 = vrcp.pop %v5712
    %v5743 = vrcp.pop %v5715
    %v5744 = vrcp.pop %v5718
    %v5745 = vrcp.pop %v5721
    %v5746 = vrcp.pop %v5724
    %v5747 = vrcp.pop %v5727
    %v5748 = vrcp.pop %v5730
    %v5749 = vrcp.pop %v5733
    %v5750 = vmul.f32 %v5655, %v5734
    %v5751 = vmul.f32 %v5657, %v5735
    %v5752 = vmul.f32 %v5659, %v5736
    %v5753 = vmul.f32 %v5661, %v5737
    %v5754 = vmul.f32 %v5663, %v5738
    %v5755 = vmul.f32 %v5665, %v5739
    %v5756 = vmul.f32 %v5667, %v5740
    %v5757 = vmul.f32 %v5669, %v5741
    %v5758 = vmul.f32 %v5671, %v5742
    %v5759 = vmul.f32 %v5673, %v5743
    %v5760 = vmul.f32 %v5675, %v5744
    %v5761 = vmul.f32 %v5677, %v5745
    %v5762 = vmul.f32 %v5679, %v5746
    %v5763 = vmul.f32 %v5681, %v5747
    %v5764 = vmul.f32 %v5683, %v5748
    %v5765 = vmul.f32 %v5685, %v5749
    %v5767 = vsel %vm1168, %v5750, 0
    %v5770 = vsel %vm1168, %v5751, 0
    %5772 = vmatpush.msra.mxu0 0.0
    %5773 = vmatpush.msra.mxu0 0.0
    %5774 = vmatpush.msra.mxu0 0.0
    %5775 = vmatpush.msra.mxu0 0.0
    %5776 = vmatpush.msra.mxu0 0.0
    %5777 = vmatpush.msra.mxu0 0.0
    %5778 = vmatpush.msra.mxu0 0.0
    %5779 = vmatpush.msra.mxu0 0.0
    %5780 = vmatpush.msra.mxu0 0.0
    %5781 = vmatpush.msra.mxu0 0.0
    %5782 = vmatpush.msra.mxu0 0.0
    %5783 = vmatpush.msra.mxu0 0.0
    %5784 = vmatpush.msra.mxu0 0.0
    %5785 = vmatpush.msra.mxu0 0.0
    %5786 = vmatpush.msra.mxu0 %v5282
    %5787 = vmatpush.msra.mxu0 %v5279
    %5788 = vmatmul.f32.gmra.mxu0 %v5767
    %v5789 = vpop.f32.mrf.mxu0
    %v5790 = vadd.f32 0.0, %v5789
    %5791 = vmatmul.f32.gmra.mxu0 %v5770
    %v5792 = vpop.f32.mrf.mxu0
    %v5793 = vadd.f32 0.0, %v5792
    %5794 = vdwg.mxu0
    %v5796 = vsel %vm1168, %v5752, 0
    %v5799 = vsel %vm1168, %v5753, 0
    %5801 = vmatpush.msra.mxu0 0.0
    %5802 = vmatpush.msra.mxu0 0.0
    %5803 = vmatpush.msra.mxu0 0.0
    %5804 = vmatpush.msra.mxu0 0.0
    %5805 = vmatpush.msra.mxu0 0.0
    %5806 = vmatpush.msra.mxu0 0.0
    %5807 = vmatpush.msra.mxu0 0.0
    %5808 = vmatpush.msra.mxu0 0.0
    %5809 = vmatpush.msra.mxu0 0.0
    %5810 = vmatpush.msra.mxu0 0.0
    %5811 = vmatpush.msra.mxu0 0.0
    %5812 = vmatpush.msra.mxu0 0.0
    %5813 = vmatpush.msra.mxu0 0.0
    %5814 = vmatpush.msra.mxu0 0.0
    %5815 = vmatpush.msra.mxu0 %v5288
    %5816 = vmatpush.msra.mxu0 %v5285
    %5817 = vmatmul.f32.gmra.mxu0 %v5796
    %v5818 = vpop.f32.mrf.mxu0
    %v5819 = vadd.f32 0.0, %v5818
    %5820 = vmatmul.f32.gmra.mxu0 %v5799
    %v5821 = vpop.f32.mrf.mxu0
    %v5822 = vadd.f32 0.0, %v5821
    %5823 = vdwg.mxu0
    %v5825 = vsel %vm1168, %v5754, 0
    %v5828 = vsel %vm1168, %v5755, 0
    %5830 = vmatpush.msra.mxu0 0.0
    %5831 = vmatpush.msra.mxu0 0.0
    %5832 = vmatpush.msra.mxu0 0.0
    %5833 = vmatpush.msra.mxu0 0.0
    %5834 = vmatpush.msra.mxu0 0.0
    %5835 = vmatpush.msra.mxu0 0.0
    %5836 = vmatpush.msra.mxu0 0.0
    %5837 = vmatpush.msra.mxu0 0.0
    %5838 = vmatpush.msra.mxu0 0.0
    %5839 = vmatpush.msra.mxu0 0.0
    %5840 = vmatpush.msra.mxu0 0.0
    %5841 = vmatpush.msra.mxu0 0.0
    %5842 = vmatpush.msra.mxu0 0.0
    %5843 = vmatpush.msra.mxu0 0.0
    %5844 = vmatpush.msra.mxu0 %v5294
    %5845 = vmatpush.msra.mxu0 %v5291
    %5846 = vmatmul.f32.gmra.mxu0 %v5825
    %v5847 = vpop.f32.mrf.mxu0
    %v5848 = vadd.f32 0.0, %v5847
    %5849 = vmatmul.f32.gmra.mxu0 %v5828
    %v5850 = vpop.f32.mrf.mxu0
    %v5851 = vadd.f32 0.0, %v5850
    %5852 = vdwg.mxu0
    %v5854 = vsel %vm1168, %v5756, 0
    %v5857 = vsel %vm1168, %v5757, 0
    %5859 = vmatpush.msra.mxu0 0.0
    %5860 = vmatpush.msra.mxu0 0.0
    %5861 = vmatpush.msra.mxu0 0.0
    %5862 = vmatpush.msra.mxu0 0.0
    %5863 = vmatpush.msra.mxu0 0.0
    %5864 = vmatpush.msra.mxu0 0.0
    %5865 = vmatpush.msra.mxu0 0.0
    %5866 = vmatpush.msra.mxu0 0.0
    %5867 = vmatpush.msra.mxu0 0.0
    %5868 = vmatpush.msra.mxu0 0.0
    %5869 = vmatpush.msra.mxu0 0.0
    %5870 = vmatpush.msra.mxu0 0.0
    %5871 = vmatpush.msra.mxu0 0.0
    %5872 = vmatpush.msra.mxu0 0.0
    %5873 = vmatpush.msra.mxu0 %v5300
    %5874 = vmatpush.msra.mxu0 %v5297
    %5875 = vmatmul.f32.gmra.mxu0 %v5854
    %v5876 = vpop.f32.mrf.mxu0
    %v5877 = vadd.f32 0.0, %v5876
    %5878 = vmatmul.f32.gmra.mxu0 %v5857
    %v5879 = vpop.f32.mrf.mxu0
    %v5880 = vadd.f32 0.0, %v5879
    %5881 = vdwg.mxu0
    %v5883 = vsel %vm1168, %v5758, 0
    %v5886 = vsel %vm1168, %v5759, 0
    %5888 = vmatpush.msra.mxu0 0.0
    %5889 = vmatpush.msra.mxu0 0.0
    %5890 = vmatpush.msra.mxu0 0.0
    %5891 = vmatpush.msra.mxu0 0.0
    %5892 = vmatpush.msra.mxu0 0.0
    %5893 = vmatpush.msra.mxu0 0.0
    %5894 = vmatpush.msra.mxu0 0.0
    %5895 = vmatpush.msra.mxu0 0.0
    %5896 = vmatpush.msra.mxu0 0.0
    %5897 = vmatpush.msra.mxu0 0.0
    %5898 = vmatpush.msra.mxu0 0.0
    %5899 = vmatpush.msra.mxu0 0.0
    %5900 = vmatpush.msra.mxu0 0.0
    %5901 = vmatpush.msra.mxu0 0.0
    %5902 = vmatpush.msra.mxu0 %v5306
    %5903 = vmatpush.msra.mxu0 %v5303
    %5904 = vmatmul.f32.gmra.mxu0 %v5883
    %v5905 = vpop.f32.mrf.mxu0
    %v5906 = vadd.f32 0.0, %v5905
    %5907 = vmatmul.f32.gmra.mxu0 %v5886
    %v5908 = vpop.f32.mrf.mxu0
    %v5909 = vadd.f32 0.0, %v5908
    %5910 = vdwg.mxu0
    %v5912 = vsel %vm1168, %v5760, 0
    %v5915 = vsel %vm1168, %v5761, 0
    %5917 = vmatpush.msra.mxu0 0.0
    %5918 = vmatpush.msra.mxu0 0.0
    %5919 = vmatpush.msra.mxu0 0.0
    %5920 = vmatpush.msra.mxu0 0.0
    %5921 = vmatpush.msra.mxu0 0.0
    %5922 = vmatpush.msra.mxu0 0.0
    %5923 = vmatpush.msra.mxu0 0.0
    %5924 = vmatpush.msra.mxu0 0.0
    %5925 = vmatpush.msra.mxu0 0.0
    %5926 = vmatpush.msra.mxu0 0.0
    %5927 = vmatpush.msra.mxu0 0.0
    %5928 = vmatpush.msra.mxu0 0.0
    %5929 = vmatpush.msra.mxu0 0.0
    %5930 = vmatpush.msra.mxu0 0.0
    %5931 = vmatpush.msra.mxu0 %v5312
    %5932 = vmatpush.msra.mxu0 %v5309
    %5933 = vmatmul.f32.gmra.mxu0 %v5912
    %v5934 = vpop.f32.mrf.mxu0
    %v5935 = vadd.f32 0.0, %v5934
    %5936 = vmatmul.f32.gmra.mxu0 %v5915
    %v5937 = vpop.f32.mrf.mxu0
    %v5938 = vadd.f32 0.0, %v5937
    %5939 = vdwg.mxu0
    %v5941 = vsel %vm1168, %v5762, 0
    %v5944 = vsel %vm1168, %v5763, 0
    %5946 = vmatpush.msra.mxu0 0.0
    %5947 = vmatpush.msra.mxu0 0.0
    %5948 = vmatpush.msra.mxu0 0.0
    %5949 = vmatpush.msra.mxu0 0.0
    %5950 = vmatpush.msra.mxu0 0.0
    %5951 = vmatpush.msra.mxu0 0.0
    %5952 = vmatpush.msra.mxu0 0.0
    %5953 = vmatpush.msra.mxu0 0.0
    %5954 = vmatpush.msra.mxu0 0.0
    %5955 = vmatpush.msra.mxu0 0.0
    %5956 = vmatpush.msra.mxu0 0.0
    %5957 = vmatpush.msra.mxu0 0.0
    %5958 = vmatpush.msra.mxu0 0.0
    %5959 = vmatpush.msra.mxu0 0.0
    %5960 = vmatpush.msra.mxu0 %v5318
    %5961 = vmatpush.msra.mxu0 %v5315
    %5962 = vmatmul.f32.gmra.mxu0 %v5941
    %v5963 = vpop.f32.mrf.mxu0
    %v5964 = vadd.f32 0.0, %v5963
    %5965 = vmatmul.f32.gmra.mxu0 %v5944
    %v5966 = vpop.f32.mrf.mxu0
    %v5967 = vadd.f32 0.0, %v5966
    %5968 = vdwg.mxu0
    %v5970 = vsel %vm1168, %v5764, 0
    %v5973 = vsel %vm1168, %v5765, 0
    %5975 = vmatpush.msra.mxu0 0.0
    %5976 = vmatpush.msra.mxu0 0.0
    %5977 = vmatpush.msra.mxu0 0.0
    %5978 = vmatpush.msra.mxu0 0.0
    %5979 = vmatpush.msra.mxu0 0.0
    %5980 = vmatpush.msra.mxu0 0.0
    %5981 = vmatpush.msra.mxu0 0.0
    %5982 = vmatpush.msra.mxu0 0.0
    %5983 = vmatpush.msra.mxu0 0.0
    %5984 = vmatpush.msra.mxu0 0.0
    %5985 = vmatpush.msra.mxu0 0.0
    %5986 = vmatpush.msra.mxu0 0.0
    %5987 = vmatpush.msra.mxu0 0.0
    %5988 = vmatpush.msra.mxu0 0.0
    %5989 = vmatpush.msra.mxu0 %v5324
    %5990 = vmatpush.msra.mxu0 %v5321
    %5991 = vmatmul.f32.gmra.mxu0 %v5970
    %v5992 = vpop.f32.mrf.mxu0
    %v5993 = vadd.f32 0.0, %v5992
    %5994 = vmatmul.f32.gmra.mxu0 %v5973
    %v5995 = vpop.f32.mrf.mxu0
    %v5996 = vadd.f32 0.0, %v5995
    %5997 = vdwg.mxu0
    %v5998 = vadd.f32 %v5170, %v5790
    %v5999 = vadd.f32 %v5171, %v5793
    %v6000 = vadd.f32 %v5172, %v5819
    %v6001 = vadd.f32 %v5173, %v5822
    %v6002 = vadd.f32 %v5174, %v5848
    %v6003 = vadd.f32 %v5175, %v5851
    %v6004 = vadd.f32 %v5176, %v5877
    %v6005 = vadd.f32 %v5177, %v5880
    %v6006 = vadd.f32 %v5178, %v5906
    %v6007 = vadd.f32 %v5179, %v5909
    %v6008 = vadd.f32 %v5180, %v5935
    %v6009 = vadd.f32 %v5181, %v5938
    %v6010 = vadd.f32 %v5182, %v5964
    %v6011 = vadd.f32 %v5183, %v5967
    %v6012 = vadd.f32 %v5184, %v5993
    %v6013 = vadd.f32 %v5185, %v5996
    %s6014 = scalar_lea.vmem %s3, 160
    %v6015 = vld [vmem:[%s6014] sm:$0xff]
    %v6016 = vld [vmem:[%s6014 + $0x8] sm:$0xff]
    %v6017 = vld [vmem:[%s6014 + $0x10] sm:$0xff]
    %v6018 = vld [vmem:[%s6014 + $0x18] sm:$0xff]
    %6019 = vmatpush.msra.mxu0 0.0
    %6020 = vmatpush.msra.mxu0 0.0
    %6021 = vmatpush.msra.mxu0 0.0
    %6022 = vmatpush.msra.mxu0 0.0
    %6023 = vmatpush.msra.mxu0 0.0
    %6024 = vmatpush.msra.mxu0 0.0
    %6025 = vmatpush.msra.mxu0 0.0
    %6026 = vmatpush.msra.mxu0 0.0
    %6027 = vmatpush.msra.mxu0 0.0
    %6028 = vmatpush.msra.mxu0 0.0
    %6029 = vmatpush.msra.mxu0 0.0
    %6030 = vmatpush.msra.mxu0 0.0
    %6031 = vmatpush.msra.mxu0 %v6018
    %6032 = vmatpush.msra.mxu0 %v6017
    %6033 = vmatpush.msra.mxu0 %v6016
    %6034 = vmatpush.msra.mxu0 %v6015
    %6035 = vmatmul.f32.gmra.mxu0 %v4316
    %v6036 = vpop.f32.mrf.mxu0
    %v6037 = vadd.f32 0.0, %v6036
    %6038 = vmatmul.f32.gmra.mxu0 %v4319
    %v6039 = vpop.f32.mrf.mxu0
    %v6040 = vadd.f32 0.0, %v6039
    %6041 = vmatmul.f32.gmra.mxu0 %v4322
    %v6042 = vpop.f32.mrf.mxu0
    %v6043 = vadd.f32 0.0, %v6042
    %6044 = vmatmul.f32.gmra.mxu0 %v4325
    %v6045 = vpop.f32.mrf.mxu0
    %v6046 = vadd.f32 0.0, %v6045
    %6047 = vmatmul.f32.gmra.mxu0 %v4328
    %v6048 = vpop.f32.mrf.mxu0
    %v6049 = vadd.f32 0.0, %v6048
    %6050 = vmatmul.f32.gmra.mxu0 %v4331
    %v6051 = vpop.f32.mrf.mxu0
    %v6052 = vadd.f32 0.0, %v6051
    %6053 = vmatmul.f32.gmra.mxu0 %v4334
    %v6054 = vpop.f32.mrf.mxu0
    %v6055 = vadd.f32 0.0, %v6054
    %6056 = vmatmul.f32.gmra.mxu0 %v4337
    %v6057 = vpop.f32.mrf.mxu0
    %v6058 = vadd.f32 0.0, %v6057
    %6059 = vmatmul.f32.gmra.mxu0 %v4340
    %v6060 = vpop.f32.mrf.mxu0
    %v6061 = vadd.f32 0.0, %v6060
    %6062 = vmatmul.f32.gmra.mxu0 %v4343
    %v6063 = vpop.f32.mrf.mxu0
    %v6064 = vadd.f32 0.0, %v6063
    %6065 = vmatmul.f32.gmra.mxu0 %v4346
    %v6066 = vpop.f32.mrf.mxu0
    %v6067 = vadd.f32 0.0, %v6066
    %6068 = vmatmul.f32.gmra.mxu0 %v4349
    %v6069 = vpop.f32.mrf.mxu0
    %v6070 = vadd.f32 0.0, %v6069
    %6071 = vmatmul.f32.gmra.mxu0 %v4352
    %v6072 = vpop.f32.mrf.mxu0
    %v6073 = vadd.f32 0.0, %v6072
    %6074 = vmatmul.f32.gmra.mxu0 %v4355
    %v6075 = vpop.f32.mrf.mxu0
    %v6076 = vadd.f32 0.0, %v6075
    %6077 = vmatmul.f32.gmra.mxu0 %v4358
    %v6078 = vpop.f32.mrf.mxu0
    %v6079 = vadd.f32 0.0, %v6078
    %6080 = vmatmul.f32.gmra.mxu0 %v4361
    %v6081 = vpop.f32.mrf.mxu0
    %v6082 = vadd.f32 0.0, %v6081
    %6083 = vdwg.mxu0
    %s6084 = scalar_lea.vmem [#allocation2], 160
    %v6085 = vld [vmem:[%s6084] sm:$0xff]
    %v6086 = vld [vmem:[%s6084 + $0x8] sm:$0xff]
    %v6087 = vld [vmem:[%s6084 + $0x10] sm:$0xff]
    %v6088 = vld [vmem:[%s6084 + $0x18] sm:$0xff]
    %6089 = vmatpush.msra.mxu0 0.0
    %6090 = vmatpush.msra.mxu0 0.0
    %6091 = vmatpush.msra.mxu0 0.0
    %6092 = vmatpush.msra.mxu0 0.0
    %6093 = vmatpush.msra.mxu0 0.0
    %6094 = vmatpush.msra.mxu0 0.0
    %6095 = vmatpush.msra.mxu0 0.0
    %6096 = vmatpush.msra.mxu0 0.0
    %6097 = vmatpush.msra.mxu0 0.0
    %6098 = vmatpush.msra.mxu0 0.0
    %6099 = vmatpush.msra.mxu0 0.0
    %6100 = vmatpush.msra.mxu0 0.0
    %6101 = vmatpush.msra.mxu0 %v6088
    %6102 = vmatpush.msra.mxu0 %v6087
    %6103 = vmatpush.msra.mxu0 %v6086
    %6104 = vmatpush.msra.mxu0 %v6085
    %6105 = vmatmul.f32.gmra.mxu0 %v4316
    %v6106 = vpop.f32.mrf.mxu0
    %v6107 = vadd.f32 0.0, %v6106
    %6108 = vmatmul.f32.gmra.mxu0 %v4319
    %v6109 = vpop.f32.mrf.mxu0
    %v6110 = vadd.f32 0.0, %v6109
    %6111 = vmatmul.f32.gmra.mxu0 %v4322
    %v6112 = vpop.f32.mrf.mxu0
    %v6113 = vadd.f32 0.0, %v6112
    %6114 = vmatmul.f32.gmra.mxu0 %v4325
    %v6115 = vpop.f32.mrf.mxu0
    %v6116 = vadd.f32 0.0, %v6115
    %6117 = vmatmul.f32.gmra.mxu0 %v4328
    %v6118 = vpop.f32.mrf.mxu0
    %v6119 = vadd.f32 0.0, %v6118
    %6120 = vmatmul.f32.gmra.mxu0 %v4331
    %v6121 = vpop.f32.mrf.mxu0
    %v6122 = vadd.f32 0.0, %v6121
    %6123 = vmatmul.f32.gmra.mxu0 %v4334
    %v6124 = vpop.f32.mrf.mxu0
    %v6125 = vadd.f32 0.0, %v6124
    %6126 = vmatmul.f32.gmra.mxu0 %v4337
    %v6127 = vpop.f32.mrf.mxu0
    %v6128 = vadd.f32 0.0, %v6127
    %6129 = vmatmul.f32.gmra.mxu0 %v4340
    %v6130 = vpop.f32.mrf.mxu0
    %v6131 = vadd.f32 0.0, %v6130
    %6132 = vmatmul.f32.gmra.mxu0 %v4343
    %v6133 = vpop.f32.mrf.mxu0
    %v6134 = vadd.f32 0.0, %v6133
    %6135 = vmatmul.f32.gmra.mxu0 %v4346
    %v6136 = vpop.f32.mrf.mxu0
    %v6137 = vadd.f32 0.0, %v6136
    %6138 = vmatmul.f32.gmra.mxu0 %v4349
    %v6139 = vpop.f32.mrf.mxu0
    %v6140 = vadd.f32 0.0, %v6139
    %6141 = vmatmul.f32.gmra.mxu0 %v4352
    %v6142 = vpop.f32.mrf.mxu0
    %v6143 = vadd.f32 0.0, %v6142
    %6144 = vmatmul.f32.gmra.mxu0 %v4355
    %v6145 = vpop.f32.mrf.mxu0
    %v6146 = vadd.f32 0.0, %v6145
    %6147 = vmatmul.f32.gmra.mxu0 %v4358
    %v6148 = vpop.f32.mrf.mxu0
    %v6149 = vadd.f32 0.0, %v6148
    %6150 = vmatmul.f32.gmra.mxu0 %v4361
    %v6151 = vpop.f32.mrf.mxu0
    %v6152 = vadd.f32 0.0, %v6151
    %6153 = vdwg.mxu0
    %v6155 = vsel %vm296, %v6037, 0
    %v6158 = vsel %vm296, %v6040, 0
    %6160 = vmatpush.xpose.msra.mxu0 0.0
    %6161 = vmatpush.xpose.msra.mxu0 0.0
    %6162 = vmatpush.xpose.msra.mxu0 0.0
    %6163 = vmatpush.xpose.msra.mxu0 0.0
    %6164 = vmatpush.xpose.msra.mxu0 0.0
    %6165 = vmatpush.xpose.msra.mxu0 0.0
    %6166 = vmatpush.xpose.msra.mxu0 0.0
    %6167 = vmatpush.xpose.msra.mxu0 0.0
    %6168 = vmatpush.xpose.msra.mxu0 0.0
    %6169 = vmatpush.xpose.msra.mxu0 0.0
    %6170 = vmatpush.xpose.msra.mxu0 0.0
    %6171 = vmatpush.xpose.msra.mxu0 0.0
    %6172 = vmatpush.xpose.msra.mxu0 0.0
    %6173 = vmatpush.xpose.msra.mxu0 0.0
    %6174 = vmatpush.xpose.msra.mxu0 %v4319
    %6175 = vmatpush.xpose.msra.mxu0 %v4316
    %6176 = vmatmul.f32.gmra.mxu0 %v6155
    %v6177 = vpop.f32.mrf.mxu0
    %v6178 = vadd.f32 0.0, %v6177
    %6179 = vmatmul.f32.gmra.mxu0 %v6158
    %v6180 = vpop.f32.mrf.mxu0
    %v6181 = vadd.f32 0.0, %v6180
    %6182 = vdwg.mxu0
    %v6184 = vsel %vm296, %v6043, 0
    %v6187 = vsel %vm296, %v6046, 0
    %6189 = vmatpush.xpose.msra.mxu0 0.0
    %6190 = vmatpush.xpose.msra.mxu0 0.0
    %6191 = vmatpush.xpose.msra.mxu0 0.0
    %6192 = vmatpush.xpose.msra.mxu0 0.0
    %6193 = vmatpush.xpose.msra.mxu0 0.0
    %6194 = vmatpush.xpose.msra.mxu0 0.0
    %6195 = vmatpush.xpose.msra.mxu0 0.0
    %6196 = vmatpush.xpose.msra.mxu0 0.0
    %6197 = vmatpush.xpose.msra.mxu0 0.0
    %6198 = vmatpush.xpose.msra.mxu0 0.0
    %6199 = vmatpush.xpose.msra.mxu0 0.0
    %6200 = vmatpush.xpose.msra.mxu0 0.0
    %6201 = vmatpush.xpose.msra.mxu0 0.0
    %6202 = vmatpush.xpose.msra.mxu0 0.0
    %6203 = vmatpush.xpose.msra.mxu0 %v4325
    %6204 = vmatpush.xpose.msra.mxu0 %v4322
    %6205 = vmatmul.f32.gmra.mxu0 %v6184
    %v6206 = vpop.f32.mrf.mxu0
    %v6207 = vadd.f32 0.0, %v6206
    %6208 = vmatmul.f32.gmra.mxu0 %v6187
    %v6209 = vpop.f32.mrf.mxu0
    %v6210 = vadd.f32 0.0, %v6209
    %6211 = vdwg.mxu0
    %v6213 = vsel %vm296, %v6049, 0
    %v6216 = vsel %vm296, %v6052, 0
    %6218 = vmatpush.xpose.msra.mxu0 0.0
    %6219 = vmatpush.xpose.msra.mxu0 0.0
    %6220 = vmatpush.xpose.msra.mxu0 0.0
    %6221 = vmatpush.xpose.msra.mxu0 0.0
    %6222 = vmatpush.xpose.msra.mxu0 0.0
    %6223 = vmatpush.xpose.msra.mxu0 0.0
    %6224 = vmatpush.xpose.msra.mxu0 0.0
    %6225 = vmatpush.xpose.msra.mxu0 0.0
    %6226 = vmatpush.xpose.msra.mxu0 0.0
    %6227 = vmatpush.xpose.msra.mxu0 0.0
    %6228 = vmatpush.xpose.msra.mxu0 0.0
    %6229 = vmatpush.xpose.msra.mxu0 0.0
    %6230 = vmatpush.xpose.msra.mxu0 0.0
    %6231 = vmatpush.xpose.msra.mxu0 0.0
    %6232 = vmatpush.xpose.msra.mxu0 %v4331
    %6233 = vmatpush.xpose.msra.mxu0 %v4328
    %6234 = vmatmul.f32.gmra.mxu0 %v6213
    %v6235 = vpop.f32.mrf.mxu0
    %v6236 = vadd.f32 0.0, %v6235
    %6237 = vmatmul.f32.gmra.mxu0 %v6216
    %v6238 = vpop.f32.mrf.mxu0
    %v6239 = vadd.f32 0.0, %v6238
    %6240 = vdwg.mxu0
    %v6242 = vsel %vm296, %v6055, 0
    %v6245 = vsel %vm296, %v6058, 0
    %6247 = vmatpush.xpose.msra.mxu0 0.0
    %6248 = vmatpush.xpose.msra.mxu0 0.0
    %6249 = vmatpush.xpose.msra.mxu0 0.0
    %6250 = vmatpush.xpose.msra.mxu0 0.0
    %6251 = vmatpush.xpose.msra.mxu0 0.0
    %6252 = vmatpush.xpose.msra.mxu0 0.0
    %6253 = vmatpush.xpose.msra.mxu0 0.0
    %6254 = vmatpush.xpose.msra.mxu0 0.0
    %6255 = vmatpush.xpose.msra.mxu0 0.0
    %6256 = vmatpush.xpose.msra.mxu0 0.0
    %6257 = vmatpush.xpose.msra.mxu0 0.0
    %6258 = vmatpush.xpose.msra.mxu0 0.0
    %6259 = vmatpush.xpose.msra.mxu0 0.0
    %6260 = vmatpush.xpose.msra.mxu0 0.0
    %6261 = vmatpush.xpose.msra.mxu0 %v4337
    %6262 = vmatpush.xpose.msra.mxu0 %v4334
    %6263 = vmatmul.f32.gmra.mxu0 %v6242
    %v6264 = vpop.f32.mrf.mxu0
    %v6265 = vadd.f32 0.0, %v6264
    %6266 = vmatmul.f32.gmra.mxu0 %v6245
    %v6267 = vpop.f32.mrf.mxu0
    %v6268 = vadd.f32 0.0, %v6267
    %6269 = vdwg.mxu0
    %v6271 = vsel %vm296, %v6061, 0
    %v6274 = vsel %vm296, %v6064, 0
    %6276 = vmatpush.xpose.msra.mxu0 0.0
    %6277 = vmatpush.xpose.msra.mxu0 0.0
    %6278 = vmatpush.xpose.msra.mxu0 0.0
    %6279 = vmatpush.xpose.msra.mxu0 0.0
    %6280 = vmatpush.xpose.msra.mxu0 0.0
    %6281 = vmatpush.xpose.msra.mxu0 0.0
    %6282 = vmatpush.xpose.msra.mxu0 0.0
    %6283 = vmatpush.xpose.msra.mxu0 0.0
    %6284 = vmatpush.xpose.msra.mxu0 0.0
    %6285 = vmatpush.xpose.msra.mxu0 0.0
    %6286 = vmatpush.xpose.msra.mxu0 0.0
    %6287 = vmatpush.xpose.msra.mxu0 0.0
    %6288 = vmatpush.xpose.msra.mxu0 0.0
    %6289 = vmatpush.xpose.msra.mxu0 0.0
    %6290 = vmatpush.xpose.msra.mxu0 %v4343
    %6291 = vmatpush.xpose.msra.mxu0 %v4340
    %6292 = vmatmul.f32.gmra.mxu0 %v6271
    %v6293 = vpop.f32.mrf.mxu0
    %v6294 = vadd.f32 0.0, %v6293
    %6295 = vmatmul.f32.gmra.mxu0 %v6274
    %v6296 = vpop.f32.mrf.mxu0
    %v6297 = vadd.f32 0.0, %v6296
    %6298 = vdwg.mxu0
    %v6300 = vsel %vm296, %v6067, 0
    %v6303 = vsel %vm296, %v6070, 0
    %6305 = vmatpush.xpose.msra.mxu0 0.0
    %6306 = vmatpush.xpose.msra.mxu0 0.0
    %6307 = vmatpush.xpose.msra.mxu0 0.0
    %6308 = vmatpush.xpose.msra.mxu0 0.0
    %6309 = vmatpush.xpose.msra.mxu0 0.0
    %6310 = vmatpush.xpose.msra.mxu0 0.0
    %6311 = vmatpush.xpose.msra.mxu0 0.0
    %6312 = vmatpush.xpose.msra.mxu0 0.0
    %6313 = vmatpush.xpose.msra.mxu0 0.0
    %6314 = vmatpush.xpose.msra.mxu0 0.0
    %6315 = vmatpush.xpose.msra.mxu0 0.0
    %6316 = vmatpush.xpose.msra.mxu0 0.0
    %6317 = vmatpush.xpose.msra.mxu0 0.0
    %6318 = vmatpush.xpose.msra.mxu0 0.0
    %6319 = vmatpush.xpose.msra.mxu0 %v4349
    %6320 = vmatpush.xpose.msra.mxu0 %v4346
    %6321 = vmatmul.f32.gmra.mxu0 %v6300
    %v6322 = vpop.f32.mrf.mxu0
    %v6323 = vadd.f32 0.0, %v6322
    %6324 = vmatmul.f32.gmra.mxu0 %v6303
    %v6325 = vpop.f32.mrf.mxu0
    %v6326 = vadd.f32 0.0, %v6325
    %6327 = vdwg.mxu0
    %v6329 = vsel %vm296, %v6073, 0
    %v6332 = vsel %vm296, %v6076, 0
    %6334 = vmatpush.xpose.msra.mxu0 0.0
    %6335 = vmatpush.xpose.msra.mxu0 0.0
    %6336 = vmatpush.xpose.msra.mxu0 0.0
    %6337 = vmatpush.xpose.msra.mxu0 0.0
    %6338 = vmatpush.xpose.msra.mxu0 0.0
    %6339 = vmatpush.xpose.msra.mxu0 0.0
    %6340 = vmatpush.xpose.msra.mxu0 0.0
    %6341 = vmatpush.xpose.msra.mxu0 0.0
    %6342 = vmatpush.xpose.msra.mxu0 0.0
    %6343 = vmatpush.xpose.msra.mxu0 0.0
    %6344 = vmatpush.xpose.msra.mxu0 0.0
    %6345 = vmatpush.xpose.msra.mxu0 0.0
    %6346 = vmatpush.xpose.msra.mxu0 0.0
    %6347 = vmatpush.xpose.msra.mxu0 0.0
    %6348 = vmatpush.xpose.msra.mxu0 %v4355
    %6349 = vmatpush.xpose.msra.mxu0 %v4352
    %6350 = vmatmul.f32.gmra.mxu0 %v6329
    %v6351 = vpop.f32.mrf.mxu0
    %v6352 = vadd.f32 0.0, %v6351
    %6353 = vmatmul.f32.gmra.mxu0 %v6332
    %v6354 = vpop.f32.mrf.mxu0
    %v6355 = vadd.f32 0.0, %v6354
    %6356 = vdwg.mxu0
    %v6358 = vsel %vm296, %v6079, 0
    %v6361 = vsel %vm296, %v6082, 0
    %6363 = vmatpush.xpose.msra.mxu0 0.0
    %6364 = vmatpush.xpose.msra.mxu0 0.0
    %6365 = vmatpush.xpose.msra.mxu0 0.0
    %6366 = vmatpush.xpose.msra.mxu0 0.0
    %6367 = vmatpush.xpose.msra.mxu0 0.0
    %6368 = vmatpush.xpose.msra.mxu0 0.0
    %6369 = vmatpush.xpose.msra.mxu0 0.0
    %6370 = vmatpush.xpose.msra.mxu0 0.0
    %6371 = vmatpush.xpose.msra.mxu0 0.0
    %6372 = vmatpush.xpose.msra.mxu0 0.0
    %6373 = vmatpush.xpose.msra.mxu0 0.0
    %6374 = vmatpush.xpose.msra.mxu0 0.0
    %6375 = vmatpush.xpose.msra.mxu0 0.0
    %6376 = vmatpush.xpose.msra.mxu0 0.0
    %6377 = vmatpush.xpose.msra.mxu0 %v4361
    %6378 = vmatpush.xpose.msra.mxu0 %v4358
    %6379 = vmatmul.f32.gmra.mxu0 %v6358
    %v6380 = vpop.f32.mrf.mxu0
    %v6381 = vadd.f32 0.0, %v6380
    %6382 = vmatmul.f32.gmra.mxu0 %v6361
    %v6383 = vpop.f32.mrf.mxu0
    %v6384 = vadd.f32 0.0, %v6383
    %6385 = vdwg.mxu0
    %v6386 = vmul.f32 %v6178, 0.31622776
    %v6387 = vmul.f32 %v6181, 0.31622776
    %v6388 = vmul.f32 %v6207, 0.31622776
    %v6389 = vmul.f32 %v6210, 0.31622776
    %v6390 = vmul.f32 %v6236, 0.31622776
    %v6391 = vmul.f32 %v6239, 0.31622776
    %v6392 = vmul.f32 %v6265, 0.31622776
    %v6393 = vmul.f32 %v6268, 0.31622776
    %v6394 = vmul.f32 %v6294, 0.31622776
    %v6395 = vmul.f32 %v6297, 0.31622776
    %v6396 = vmul.f32 %v6323, 0.31622776
    %v6397 = vmul.f32 %v6326, 0.31622776
    %v6398 = vmul.f32 %v6352, 0.31622776
    %v6399 = vmul.f32 %v6355, 0.31622776
    %v6400 = vmul.f32 %v6381, 0.31622776
    %v6401 = vmul.f32 %v6384, 0.31622776
    %v6402 = vsel %vm1150, %v6386, -1e+30
    %v6403 = vsel %vm1151, %v6387, -1e+30
    %v6404 = vsel %vm1150, %v6388, -1e+30
    %v6405 = vsel %vm1151, %v6389, -1e+30
    %v6406 = vsel %vm1150, %v6390, -1e+30
    %v6407 = vsel %vm1151, %v6391, -1e+30
    %v6408 = vsel %vm1150, %v6392, -1e+30
    %v6409 = vsel %vm1151, %v6393, -1e+30
    %v6410 = vsel %vm1150, %v6394, -1e+30
    %v6411 = vsel %vm1151, %v6395, -1e+30
    %v6412 = vsel %vm1150, %v6396, -1e+30
    %v6413 = vsel %vm1151, %v6397, -1e+30
    %v6414 = vsel %vm1150, %v6398, -1e+30
    %v6415 = vsel %vm1151, %v6399, -1e+30
    %v6416 = vsel %vm1150, %v6400, -1e+30
    %v6417 = vsel %vm1151, %v6401, -1e+30
    %v6418 = vsel %vm1168, %v6402, -inf
    %6419 = vmax.xlane.f32.xlu0 %v6418
    %v6420 = vpop.xlane.xlu0 %6419
    %v6421 = vsel %vm1168, %v6403, -inf
    %6422 = vmax.xlane.f32.xlu0 %v6421
    %v6423 = vpop.xlane.xlu0 %6422
    %v6424 = vsel %vm1168, %v6404, -inf
    %6425 = vmax.xlane.f32.xlu0 %v6424
    %v6426 = vpop.xlane.xlu0 %6425
    %v6427 = vsel %vm1168, %v6405, -inf
    %6428 = vmax.xlane.f32.xlu0 %v6427
    %v6429 = vpop.xlane.xlu0 %6428
    %v6430 = vsel %vm1168, %v6406, -inf
    %6431 = vmax.xlane.f32.xlu0 %v6430
    %v6432 = vpop.xlane.xlu0 %6431
    %v6433 = vsel %vm1168, %v6407, -inf
    %6434 = vmax.xlane.f32.xlu0 %v6433
    %v6435 = vpop.xlane.xlu0 %6434
    %v6436 = vsel %vm1168, %v6408, -inf
    %6437 = vmax.xlane.f32.xlu0 %v6436
    %v6438 = vpop.xlane.xlu0 %6437
    %v6439 = vsel %vm1168, %v6409, -inf
    %6440 = vmax.xlane.f32.xlu0 %v6439
    %v6441 = vpop.xlane.xlu0 %6440
    %v6442 = vsel %vm1168, %v6410, -inf
    %6443 = vmax.xlane.f32.xlu0 %v6442
    %v6444 = vpop.xlane.xlu0 %6443
    %v6445 = vsel %vm1168, %v6411, -inf
    %6446 = vmax.xlane.f32.xlu0 %v6445
    %v6447 = vpop.xlane.xlu0 %6446
    %v6448 = vsel %vm1168, %v6412, -inf
    %6449 = vmax.xlane.f32.xlu0 %v6448
    %v6450 = vpop.xlane.xlu0 %6449
    %v6451 = vsel %vm1168, %v6413, -inf
    %6452 = vmax.xlane.f32.xlu0 %v6451
    %v6453 = vpop.xlane.xlu0 %6452
    %v6454 = vsel %vm1168, %v6414, -inf
    %6455 = vmax.xlane.f32.xlu0 %v6454
    %v6456 = vpop.xlane.xlu0 %6455
    %v6457 = vsel %vm1168, %v6415, -inf
    %6458 = vmax.xlane.f32.xlu0 %v6457
    %v6459 = vpop.xlane.xlu0 %6458
    %v6460 = vsel %vm1168, %v6416, -inf
    %6461 = vmax.xlane.f32.xlu0 %v6460
    %v6462 = vpop.xlane.xlu0 %6461
    %v6463 = vsel %vm1168, %v6417, -inf
    %6464 = vmax.xlane.f32.xlu0 %v6463
    %v6465 = vpop.xlane.xlu0 %6464
    %v6466 = vsub.f32 %v6402, %v6420
    %v6467 = vsub.f32 %v6403, %v6423
    %v6468 = vsub.f32 %v6404, %v6426
    %v6469 = vsub.f32 %v6405, %v6429
    %v6470 = vsub.f32 %v6406, %v6432
    %v6471 = vsub.f32 %v6407, %v6435
    %v6472 = vsub.f32 %v6408, %v6438
    %v6473 = vsub.f32 %v6409, %v6441
    %v6474 = vsub.f32 %v6410, %v6444
    %v6475 = vsub.f32 %v6411, %v6447
    %v6476 = vsub.f32 %v6412, %v6450
    %v6477 = vsub.f32 %v6413, %v6453
    %v6478 = vsub.f32 %v6414, %v6456
    %v6479 = vsub.f32 %v6415, %v6459
    %v6480 = vsub.f32 %v6416, %v6462
    %v6481 = vsub.f32 %v6417, %v6465
    %v6482 = vmul.f32 %v6466, 1.442695
    %v6483 = vpow.pop %v6482
    %v6484 = vmul.f32 %v6467, 1.442695
    %v6485 = vpow.pop %v6484
    %v6486 = vmul.f32 %v6468, 1.442695
    %v6487 = vpow.pop %v6486
    %v6488 = vmul.f32 %v6469, 1.442695
    %v6489 = vpow.pop %v6488
    %v6490 = vmul.f32 %v6470, 1.442695
    %v6491 = vpow.pop %v6490
    %v6492 = vmul.f32 %v6471, 1.442695
    %v6493 = vpow.pop %v6492
    %v6494 = vmul.f32 %v6472, 1.442695
    %v6495 = vpow.pop %v6494
    %v6496 = vmul.f32 %v6473, 1.442695
    %v6497 = vpow.pop %v6496
    %v6498 = vmul.f32 %v6474, 1.442695
    %v6499 = vpow.pop %v6498
    %v6500 = vmul.f32 %v6475, 1.442695
    %v6501 = vpow.pop %v6500
    %v6502 = vmul.f32 %v6476, 1.442695
    %v6503 = vpow.pop %v6502
    %v6504 = vmul.f32 %v6477, 1.442695
    %v6505 = vpow.pop %v6504
    %v6506 = vmul.f32 %v6478, 1.442695
    %v6507 = vpow.pop %v6506
    %v6508 = vmul.f32 %v6479, 1.442695
    %v6509 = vpow.pop %v6508
    %v6510 = vmul.f32 %v6480, 1.442695
    %v6511 = vpow.pop %v6510
    %v6512 = vmul.f32 %v6481, 1.442695
    %v6513 = vpow.pop %v6512
    %v6514 = vsel %vm1168, %v6483, 0.0
    %6515 = vadd.xlane.f32.xlu0 %v6514
    %v6516 = vpop.xlane.xlu0 %6515
    %v6517 = vsel %vm1168, %v6485, 0.0
    %6518 = vadd.xlane.f32.xlu0 %v6517
    %v6519 = vpop.xlane.xlu0 %6518
    %v6520 = vsel %vm1168, %v6487, 0.0
    %6521 = vadd.xlane.f32.xlu0 %v6520
    %v6522 = vpop.xlane.xlu0 %6521
    %v6523 = vsel %vm1168, %v6489, 0.0
    %6524 = vadd.xlane.f32.xlu0 %v6523
    %v6525 = vpop.xlane.xlu0 %6524
    %v6526 = vsel %vm1168, %v6491, 0.0
    %6527 = vadd.xlane.f32.xlu0 %v6526
    %v6528 = vpop.xlane.xlu0 %6527
    %v6529 = vsel %vm1168, %v6493, 0.0
    %6530 = vadd.xlane.f32.xlu0 %v6529
    %v6531 = vpop.xlane.xlu0 %6530
    %v6532 = vsel %vm1168, %v6495, 0.0
    %6533 = vadd.xlane.f32.xlu0 %v6532
    %v6534 = vpop.xlane.xlu0 %6533
    %v6535 = vsel %vm1168, %v6497, 0.0
    %6536 = vadd.xlane.f32.xlu0 %v6535
    %v6537 = vpop.xlane.xlu0 %6536
    %v6538 = vsel %vm1168, %v6499, 0.0
    %6539 = vadd.xlane.f32.xlu0 %v6538
    %v6540 = vpop.xlane.xlu0 %6539
    %v6541 = vsel %vm1168, %v6501, 0.0
    %6542 = vadd.xlane.f32.xlu0 %v6541
    %v6543 = vpop.xlane.xlu0 %6542
    %v6544 = vsel %vm1168, %v6503, 0.0
    %6545 = vadd.xlane.f32.xlu0 %v6544
    %v6546 = vpop.xlane.xlu0 %6545
    %v6547 = vsel %vm1168, %v6505, 0.0
    %6548 = vadd.xlane.f32.xlu0 %v6547
    %v6549 = vpop.xlane.xlu0 %6548
    %v6550 = vsel %vm1168, %v6507, 0.0
    %6551 = vadd.xlane.f32.xlu0 %v6550
    %v6552 = vpop.xlane.xlu0 %6551
    %v6553 = vsel %vm1168, %v6509, 0.0
    %6554 = vadd.xlane.f32.xlu0 %v6553
    %v6555 = vpop.xlane.xlu0 %6554
    %v6556 = vsel %vm1168, %v6511, 0.0
    %6557 = vadd.xlane.f32.xlu0 %v6556
    %v6558 = vpop.xlane.xlu0 %6557
    %v6559 = vsel %vm1168, %v6513, 0.0
    %6560 = vadd.xlane.f32.xlu0 %v6559
    %v6561 = vpop.xlane.xlu0 %6560
    %v6562 = vrcp.pop %v6516
    %v6563 = vrcp.pop %v6519
    %v6564 = vrcp.pop %v6522
    %v6565 = vrcp.pop %v6525
    %v6566 = vrcp.pop %v6528
    %v6567 = vrcp.pop %v6531
    %v6568 = vrcp.pop %v6534
    %v6569 = vrcp.pop %v6537
    %v6570 = vrcp.pop %v6540
    %v6571 = vrcp.pop %v6543
    %v6572 = vrcp.pop %v6546
    %v6573 = vrcp.pop %v6549
    %v6574 = vrcp.pop %v6552
    %v6575 = vrcp.pop %v6555
    %v6576 = vrcp.pop %v6558
    %v6577 = vrcp.pop %v6561
    %v6578 = vmul.f32 %v6483, %v6562
    %v6579 = vmul.f32 %v6485, %v6563
    %v6580 = vmul.f32 %v6487, %v6564
    %v6581 = vmul.f32 %v6489, %v6565
    %v6582 = vmul.f32 %v6491, %v6566
    %v6583 = vmul.f32 %v6493, %v6567
    %v6584 = vmul.f32 %v6495, %v6568
    %v6585 = vmul.f32 %v6497, %v6569
    %v6586 = vmul.f32 %v6499, %v6570
    %v6587 = vmul.f32 %v6501, %v6571
    %v6588 = vmul.f32 %v6503, %v6572
    %v6589 = vmul.f32 %v6505, %v6573
    %v6590 = vmul.f32 %v6507, %v6574
    %v6591 = vmul.f32 %v6509, %v6575
    %v6592 = vmul.f32 %v6511, %v6576
    %v6593 = vmul.f32 %v6513, %v6577
    %v6595 = vsel %vm1168, %v6578, 0
    %v6598 = vsel %vm1168, %v6579, 0
    %6600 = vmatpush.msra.mxu0 0.0
    %6601 = vmatpush.msra.mxu0 0.0
    %6602 = vmatpush.msra.mxu0 0.0
    %6603 = vmatpush.msra.mxu0 0.0
    %6604 = vmatpush.msra.mxu0 0.0
    %6605 = vmatpush.msra.mxu0 0.0
    %6606 = vmatpush.msra.mxu0 0.0
    %6607 = vmatpush.msra.mxu0 0.0
    %6608 = vmatpush.msra.mxu0 0.0
    %6609 = vmatpush.msra.mxu0 0.0
    %6610 = vmatpush.msra.mxu0 0.0
    %6611 = vmatpush.msra.mxu0 0.0
    %6612 = vmatpush.msra.mxu0 0.0
    %6613 = vmatpush.msra.mxu0 0.0
    %6614 = vmatpush.msra.mxu0 %v6110
    %6615 = vmatpush.msra.mxu0 %v6107
    %6616 = vmatmul.f32.gmra.mxu0 %v6595
    %v6617 = vpop.f32.mrf.mxu0
    %v6618 = vadd.f32 0.0, %v6617
    %6619 = vmatmul.f32.gmra.mxu0 %v6598
    %v6620 = vpop.f32.mrf.mxu0
    %v6621 = vadd.f32 0.0, %v6620
    %6622 = vdwg.mxu0
    %v6624 = vsel %vm1168, %v6580, 0
    %v6627 = vsel %vm1168, %v6581, 0
    %6629 = vmatpush.msra.mxu0 0.0
    %6630 = vmatpush.msra.mxu0 0.0
    %6631 = vmatpush.msra.mxu0 0.0
    %6632 = vmatpush.msra.mxu0 0.0
    %6633 = vmatpush.msra.mxu0 0.0
    %6634 = vmatpush.msra.mxu0 0.0
    %6635 = vmatpush.msra.mxu0 0.0
    %6636 = vmatpush.msra.mxu0 0.0
    %6637 = vmatpush.msra.mxu0 0.0
    %6638 = vmatpush.msra.mxu0 0.0
    %6639 = vmatpush.msra.mxu0 0.0
    %6640 = vmatpush.msra.mxu0 0.0
    %6641 = vmatpush.msra.mxu0 0.0
    %6642 = vmatpush.msra.mxu0 0.0
    %6643 = vmatpush.msra.mxu0 %v6116
    %6644 = vmatpush.msra.mxu0 %v6113
    %6645 = vmatmul.f32.gmra.mxu0 %v6624
    %v6646 = vpop.f32.mrf.mxu0
    %v6647 = vadd.f32 0.0, %v6646
    %6648 = vmatmul.f32.gmra.mxu0 %v6627
    %v6649 = vpop.f32.mrf.mxu0
    %v6650 = vadd.f32 0.0, %v6649
    %6651 = vdwg.mxu0
    %v6653 = vsel %vm1168, %v6582, 0
    %v6656 = vsel %vm1168, %v6583, 0
    %6658 = vmatpush.msra.mxu0 0.0
    %6659 = vmatpush.msra.mxu0 0.0
    %6660 = vmatpush.msra.mxu0 0.0
    %6661 = vmatpush.msra.mxu0 0.0
    %6662 = vmatpush.msra.mxu0 0.0
    %6663 = vmatpush.msra.mxu0 0.0
    %6664 = vmatpush.msra.mxu0 0.0
    %6665 = vmatpush.msra.mxu0 0.0
    %6666 = vmatpush.msra.mxu0 0.0
    %6667 = vmatpush.msra.mxu0 0.0
    %6668 = vmatpush.msra.mxu0 0.0
    %6669 = vmatpush.msra.mxu0 0.0
    %6670 = vmatpush.msra.mxu0 0.0
    %6671 = vmatpush.msra.mxu0 0.0
    %6672 = vmatpush.msra.mxu0 %v6122
    %6673 = vmatpush.msra.mxu0 %v6119
    %6674 = vmatmul.f32.gmra.mxu0 %v6653
    %v6675 = vpop.f32.mrf.mxu0
    %v6676 = vadd.f32 0.0, %v6675
    %6677 = vmatmul.f32.gmra.mxu0 %v6656
    %v6678 = vpop.f32.mrf.mxu0
    %v6679 = vadd.f32 0.0, %v6678
    %6680 = vdwg.mxu0
    %v6682 = vsel %vm1168, %v6584, 0
    %v6685 = vsel %vm1168, %v6585, 0
    %6687 = vmatpush.msra.mxu0 0.0
    %6688 = vmatpush.msra.mxu0 0.0
    %6689 = vmatpush.msra.mxu0 0.0
    %6690 = vmatpush.msra.mxu0 0.0
    %6691 = vmatpush.msra.mxu0 0.0
    %6692 = vmatpush.msra.mxu0 0.0
    %6693 = vmatpush.msra.mxu0 0.0
    %6694 = vmatpush.msra.mxu0 0.0
    %6695 = vmatpush.msra.mxu0 0.0
    %6696 = vmatpush.msra.mxu0 0.0
    %6697 = vmatpush.msra.mxu0 0.0
    %6698 = vmatpush.msra.mxu0 0.0
    %6699 = vmatpush.msra.mxu0 0.0
    %6700 = vmatpush.msra.mxu0 0.0
    %6701 = vmatpush.msra.mxu0 %v6128
    %6702 = vmatpush.msra.mxu0 %v6125
    %6703 = vmatmul.f32.gmra.mxu0 %v6682
    %v6704 = vpop.f32.mrf.mxu0
    %v6705 = vadd.f32 0.0, %v6704
    %6706 = vmatmul.f32.gmra.mxu0 %v6685
    %v6707 = vpop.f32.mrf.mxu0
    %v6708 = vadd.f32 0.0, %v6707
    %6709 = vdwg.mxu0
    %v6711 = vsel %vm1168, %v6586, 0
    %v6714 = vsel %vm1168, %v6587, 0
    %6716 = vmatpush.msra.mxu0 0.0
    %6717 = vmatpush.msra.mxu0 0.0
    %6718 = vmatpush.msra.mxu0 0.0
    %6719 = vmatpush.msra.mxu0 0.0
    %6720 = vmatpush.msra.mxu0 0.0
    %6721 = vmatpush.msra.mxu0 0.0
    %6722 = vmatpush.msra.mxu0 0.0
    %6723 = vmatpush.msra.mxu0 0.0
    %6724 = vmatpush.msra.mxu0 0.0
    %6725 = vmatpush.msra.mxu0 0.0
    %6726 = vmatpush.msra.mxu0 0.0
    %6727 = vmatpush.msra.mxu0 0.0
    %6728 = vmatpush.msra.mxu0 0.0
    %6729 = vmatpush.msra.mxu0 0.0
    %6730 = vmatpush.msra.mxu0 %v6134
    %6731 = vmatpush.msra.mxu0 %v6131
    %6732 = vmatmul.f32.gmra.mxu0 %v6711
    %v6733 = vpop.f32.mrf.mxu0
    %v6734 = vadd.f32 0.0, %v6733
    %6735 = vmatmul.f32.gmra.mxu0 %v6714
    %v6736 = vpop.f32.mrf.mxu0
    %v6737 = vadd.f32 0.0, %v6736
    %6738 = vdwg.mxu0
    %v6740 = vsel %vm1168, %v6588, 0
    %v6743 = vsel %vm1168, %v6589, 0
    %6745 = vmatpush.msra.mxu0 0.0
    %6746 = vmatpush.msra.mxu0 0.0
    %6747 = vmatpush.msra.mxu0 0.0
    %6748 = vmatpush.msra.mxu0 0.0
    %6749 = vmatpush.msra.mxu0 0.0
    %6750 = vmatpush.msra.mxu0 0.0
    %6751 = vmatpush.msra.mxu0 0.0
    %6752 = vmatpush.msra.mxu0 0.0
    %6753 = vmatpush.msra.mxu0 0.0
    %6754 = vmatpush.msra.mxu0 0.0
    %6755 = vmatpush.msra.mxu0 0.0
    %6756 = vmatpush.msra.mxu0 0.0
    %6757 = vmatpush.msra.mxu0 0.0
    %6758 = vmatpush.msra.mxu0 0.0
    %6759 = vmatpush.msra.mxu0 %v6140
    %6760 = vmatpush.msra.mxu0 %v6137
    %6761 = vmatmul.f32.gmra.mxu0 %v6740
    %v6762 = vpop.f32.mrf.mxu0
    %v6763 = vadd.f32 0.0, %v6762
    %6764 = vmatmul.f32.gmra.mxu0 %v6743
    %v6765 = vpop.f32.mrf.mxu0
    %v6766 = vadd.f32 0.0, %v6765
    %6767 = vdwg.mxu0
    %v6769 = vsel %vm1168, %v6590, 0
    %v6772 = vsel %vm1168, %v6591, 0
    %6774 = vmatpush.msra.mxu0 0.0
    %6775 = vmatpush.msra.mxu0 0.0
    %6776 = vmatpush.msra.mxu0 0.0
    %6777 = vmatpush.msra.mxu0 0.0
    %6778 = vmatpush.msra.mxu0 0.0
    %6779 = vmatpush.msra.mxu0 0.0
    %6780 = vmatpush.msra.mxu0 0.0
    %6781 = vmatpush.msra.mxu0 0.0
    %6782 = vmatpush.msra.mxu0 0.0
    %6783 = vmatpush.msra.mxu0 0.0
    %6784 = vmatpush.msra.mxu0 0.0
    %6785 = vmatpush.msra.mxu0 0.0
    %6786 = vmatpush.msra.mxu0 0.0
    %6787 = vmatpush.msra.mxu0 0.0
    %6788 = vmatpush.msra.mxu0 %v6146
    %6789 = vmatpush.msra.mxu0 %v6143
    %6790 = vmatmul.f32.gmra.mxu0 %v6769
    %v6791 = vpop.f32.mrf.mxu0
    %v6792 = vadd.f32 0.0, %v6791
    %6793 = vmatmul.f32.gmra.mxu0 %v6772
    %v6794 = vpop.f32.mrf.mxu0
    %v6795 = vadd.f32 0.0, %v6794
    %6796 = vdwg.mxu0
    %v6798 = vsel %vm1168, %v6592, 0
    %v6801 = vsel %vm1168, %v6593, 0
    %6803 = vmatpush.msra.mxu0 0.0
    %6804 = vmatpush.msra.mxu0 0.0
    %6805 = vmatpush.msra.mxu0 0.0
    %6806 = vmatpush.msra.mxu0 0.0
    %6807 = vmatpush.msra.mxu0 0.0
    %6808 = vmatpush.msra.mxu0 0.0
    %6809 = vmatpush.msra.mxu0 0.0
    %6810 = vmatpush.msra.mxu0 0.0
    %6811 = vmatpush.msra.mxu0 0.0
    %6812 = vmatpush.msra.mxu0 0.0
    %6813 = vmatpush.msra.mxu0 0.0
    %6814 = vmatpush.msra.mxu0 0.0
    %6815 = vmatpush.msra.mxu0 0.0
    %6816 = vmatpush.msra.mxu0 0.0
    %6817 = vmatpush.msra.mxu0 %v6152
    %6818 = vmatpush.msra.mxu0 %v6149
    %6819 = vmatmul.f32.gmra.mxu0 %v6798
    %v6820 = vpop.f32.mrf.mxu0
    %v6821 = vadd.f32 0.0, %v6820
    %6822 = vmatmul.f32.gmra.mxu0 %v6801
    %v6823 = vpop.f32.mrf.mxu0
    %v6824 = vadd.f32 0.0, %v6823
    %6825 = vdwg.mxu0
    %v6826 = vadd.f32 %v5998, %v6618
    %v6827 = vadd.f32 %v5999, %v6621
    %v6828 = vadd.f32 %v6000, %v6647
    %v6829 = vadd.f32 %v6001, %v6650
    %v6830 = vadd.f32 %v6002, %v6676
    %v6831 = vadd.f32 %v6003, %v6679
    %v6832 = vadd.f32 %v6004, %v6705
    %v6833 = vadd.f32 %v6005, %v6708
    %v6834 = vadd.f32 %v6006, %v6734
    %v6835 = vadd.f32 %v6007, %v6737
    %v6836 = vadd.f32 %v6008, %v6763
    %v6837 = vadd.f32 %v6009, %v6766
    %v6838 = vadd.f32 %v6010, %v6792
    %v6839 = vadd.f32 %v6011, %v6795
    %v6840 = vadd.f32 %v6012, %v6821
    %v6841 = vadd.f32 %v6013, %v6824
    %s6842 = scalar_lea.vmem %s12, 1
    %v6843 = vld [vmem:[%s6842] sm:$0x1]
    %s6844 = scalar_lea.vmem %s13, 1
    %v6845 = vld [vmem:[%s6844] sm:$0x1]
    %v6846 = vsel %vm296, %v6826, 0.0
    %6847 = vadd.xlane.f32.xlu0 %v6846
    %v6848 = vpop.xlane.xlu0 %6847
    %v6849 = vsel %vm296, %v6827, 0.0
    %6850 = vadd.xlane.f32.xlu0 %v6849
    %v6851 = vpop.xlane.xlu0 %6850
    %v6852 = vsel %vm296, %v6828, 0.0
    %6853 = vadd.xlane.f32.xlu0 %v6852
    %v6854 = vpop.xlane.xlu0 %6853
    %v6855 = vsel %vm296, %v6829, 0.0
    %6856 = vadd.xlane.f32.xlu0 %v6855
    %v6857 = vpop.xlane.xlu0 %6856
    %v6858 = vsel %vm296, %v6830, 0.0
    %6859 = vadd.xlane.f32.xlu0 %v6858
    %v6860 = vpop.xlane.xlu0 %6859
    %v6861 = vsel %vm296, %v6831, 0.0
    %6862 = vadd.xlane.f32.xlu0 %v6861
    %v6863 = vpop.xlane.xlu0 %6862
    %v6864 = vsel %vm296, %v6832, 0.0
    %6865 = vadd.xlane.f32.xlu0 %v6864
    %v6866 = vpop.xlane.xlu0 %6865
    %v6867 = vsel %vm296, %v6833, 0.0
    %6868 = vadd.xlane.f32.xlu0 %v6867
    %v6869 = vpop.xlane.xlu0 %6868
    %v6870 = vsel %vm296, %v6834, 0.0
    %6871 = vadd.xlane.f32.xlu0 %v6870
    %v6872 = vpop.xlane.xlu0 %6871
    %v6873 = vsel %vm296, %v6835, 0.0
    %6874 = vadd.xlane.f32.xlu0 %v6873
    %v6875 = vpop.xlane.xlu0 %6874
    %v6876 = vsel %vm296, %v6836, 0.0
    %6877 = vadd.xlane.f32.xlu0 %v6876
    %v6878 = vpop.xlane.xlu0 %6877
    %v6879 = vsel %vm296, %v6837, 0.0
    %6880 = vadd.xlane.f32.xlu0 %v6879
    %v6881 = vpop.xlane.xlu0 %6880
    %v6882 = vsel %vm296, %v6838, 0.0
    %6883 = vadd.xlane.f32.xlu0 %v6882
    %v6884 = vpop.xlane.xlu0 %6883
    %v6885 = vsel %vm296, %v6839, 0.0
    %6886 = vadd.xlane.f32.xlu0 %v6885
    %v6887 = vpop.xlane.xlu0 %6886
    %v6888 = vsel %vm296, %v6840, 0.0
    %6889 = vadd.xlane.f32.xlu0 %v6888
    %v6890 = vpop.xlane.xlu0 %6889
    %v6891 = vsel %vm296, %v6841, 0.0
    %6892 = vadd.xlane.f32.xlu0 %v6891
    %v6893 = vpop.xlane.xlu0 %6892
    %v6894 = vmul.f32 %v6848, %v351
    %v6895 = vmul.f32 %v6851, %v351
    %v6896 = vmul.f32 %v6854, %v351
    %v6897 = vmul.f32 %v6857, %v351
    %v6898 = vmul.f32 %v6860, %v351
    %v6899 = vmul.f32 %v6863, %v351
    %v6900 = vmul.f32 %v6866, %v351
    %v6901 = vmul.f32 %v6869, %v351
    %v6902 = vmul.f32 %v6872, %v351
    %v6903 = vmul.f32 %v6875, %v351
    %v6904 = vmul.f32 %v6878, %v351
    %v6905 = vmul.f32 %v6881, %v351
    %v6906 = vmul.f32 %v6884, %v351
    %v6907 = vmul.f32 %v6887, %v351
    %v6908 = vmul.f32 %v6890, %v351
    %v6909 = vmul.f32 %v6893, %v351
    %v6910 = vsub.f32 %v6826, %v6894
    %v6911 = vsub.f32 %v6827, %v6895
    %v6912 = vsub.f32 %v6828, %v6896
    %v6913 = vsub.f32 %v6829, %v6897
    %v6914 = vsub.f32 %v6830, %v6898
    %v6915 = vsub.f32 %v6831, %v6899
    %v6916 = vsub.f32 %v6832, %v6900
    %v6917 = vsub.f32 %v6833, %v6901
    %v6918 = vsub.f32 %v6834, %v6902
    %v6919 = vsub.f32 %v6835, %v6903
    %v6920 = vsub.f32 %v6836, %v6904
    %v6921 = vsub.f32 %v6837, %v6905
    %v6922 = vsub.f32 %v6838, %v6906
    %v6923 = vsub.f32 %v6839, %v6907
    %v6924 = vsub.f32 %v6840, %v6908
    %v6925 = vsub.f32 %v6841, %v6909
    %v6926 = vmul.f32 %v6910, %v6910
    %v6927 = vmul.f32 %v6911, %v6911
    %v6928 = vmul.f32 %v6912, %v6912
    %v6929 = vmul.f32 %v6913, %v6913
    %v6930 = vmul.f32 %v6914, %v6914
    %v6931 = vmul.f32 %v6915, %v6915
    %v6932 = vmul.f32 %v6916, %v6916
    %v6933 = vmul.f32 %v6917, %v6917
    %v6934 = vmul.f32 %v6918, %v6918
    %v6935 = vmul.f32 %v6919, %v6919
    %v6936 = vmul.f32 %v6920, %v6920
    %v6937 = vmul.f32 %v6921, %v6921
    %v6938 = vmul.f32 %v6922, %v6922
    %v6939 = vmul.f32 %v6923, %v6923
    %v6940 = vmul.f32 %v6924, %v6924
    %v6941 = vmul.f32 %v6925, %v6925
    %v6942 = vsel %vm296, %v6926, 0.0
    %6943 = vadd.xlane.f32.xlu0 %v6942
    %v6944 = vpop.xlane.xlu0 %6943
    %v6945 = vsel %vm296, %v6927, 0.0
    %6946 = vadd.xlane.f32.xlu0 %v6945
    %v6947 = vpop.xlane.xlu0 %6946
    %v6948 = vsel %vm296, %v6928, 0.0
    %6949 = vadd.xlane.f32.xlu0 %v6948
    %v6950 = vpop.xlane.xlu0 %6949
    %v6951 = vsel %vm296, %v6929, 0.0
    %6952 = vadd.xlane.f32.xlu0 %v6951
    %v6953 = vpop.xlane.xlu0 %6952
    %v6954 = vsel %vm296, %v6930, 0.0
    %6955 = vadd.xlane.f32.xlu0 %v6954
    %v6956 = vpop.xlane.xlu0 %6955
    %v6957 = vsel %vm296, %v6931, 0.0
    %6958 = vadd.xlane.f32.xlu0 %v6957
    %v6959 = vpop.xlane.xlu0 %6958
    %v6960 = vsel %vm296, %v6932, 0.0
    %6961 = vadd.xlane.f32.xlu0 %v6960
    %v6962 = vpop.xlane.xlu0 %6961
    %v6963 = vsel %vm296, %v6933, 0.0
    %6964 = vadd.xlane.f32.xlu0 %v6963
    %v6965 = vpop.xlane.xlu0 %6964
    %v6966 = vsel %vm296, %v6934, 0.0
    %6967 = vadd.xlane.f32.xlu0 %v6966
    %v6968 = vpop.xlane.xlu0 %6967
    %v6969 = vsel %vm296, %v6935, 0.0
    %6970 = vadd.xlane.f32.xlu0 %v6969
    %v6971 = vpop.xlane.xlu0 %6970
    %v6972 = vsel %vm296, %v6936, 0.0
    %6973 = vadd.xlane.f32.xlu0 %v6972
    %v6974 = vpop.xlane.xlu0 %6973
    %v6975 = vsel %vm296, %v6937, 0.0
    %6976 = vadd.xlane.f32.xlu0 %v6975
    %v6977 = vpop.xlane.xlu0 %6976
    %v6978 = vsel %vm296, %v6938, 0.0
    %6979 = vadd.xlane.f32.xlu0 %v6978
    %v6980 = vpop.xlane.xlu0 %6979
    %v6981 = vsel %vm296, %v6939, 0.0
    %6982 = vadd.xlane.f32.xlu0 %v6981
    %v6983 = vpop.xlane.xlu0 %6982
    %v6984 = vsel %vm296, %v6940, 0.0
    %6985 = vadd.xlane.f32.xlu0 %v6984
    %v6986 = vpop.xlane.xlu0 %6985
    %v6987 = vsel %vm296, %v6941, 0.0
    %6988 = vadd.xlane.f32.xlu0 %v6987
    %v6989 = vpop.xlane.xlu0 %6988
    %v6990 = vmul.f32 %v6944, %v351
    %v6991 = vmul.f32 %v6947, %v351
    %v6992 = vmul.f32 %v6950, %v351
    %v6993 = vmul.f32 %v6953, %v351
    %v6994 = vmul.f32 %v6956, %v351
    %v6995 = vmul.f32 %v6959, %v351
    %v6996 = vmul.f32 %v6962, %v351
    %v6997 = vmul.f32 %v6965, %v351
    %v6998 = vmul.f32 %v6968, %v351
    %v6999 = vmul.f32 %v6971, %v351
    %v7000 = vmul.f32 %v6974, %v351
    %v7001 = vmul.f32 %v6977, %v351
    %v7002 = vmul.f32 %v6980, %v351
    %v7003 = vmul.f32 %v6983, %v351
    %v7004 = vmul.f32 %v6986, %v351
    %v7005 = vmul.f32 %v6989, %v351
    %v7006 = vadd.f32 %v6990, 1e-05
    %v7007 = vadd.f32 %v6991, 1e-05
    %v7008 = vadd.f32 %v6992, 1e-05
    %v7009 = vadd.f32 %v6993, 1e-05
    %v7010 = vadd.f32 %v6994, 1e-05
    %v7011 = vadd.f32 %v6995, 1e-05
    %v7012 = vadd.f32 %v6996, 1e-05
    %v7013 = vadd.f32 %v6997, 1e-05
    %v7014 = vadd.f32 %v6998, 1e-05
    %v7015 = vadd.f32 %v6999, 1e-05
    %v7016 = vadd.f32 %v7000, 1e-05
    %v7017 = vadd.f32 %v7001, 1e-05
    %v7018 = vadd.f32 %v7002, 1e-05
    %v7019 = vadd.f32 %v7003, 1e-05
    %v7020 = vadd.f32 %v7004, 1e-05
    %v7021 = vadd.f32 %v7005, 1e-05
    %v7022 = vrsqrt.pop %v7006
    %v7023 = vmul.f32 %v7022, %v7006
    %v7024 = vmul.f32 %v7023, %v7022
    %v7025 = vmul.f32 0.5, %v7024
    %v7026 = vsub.f32 1.5, %v7025
    %v7027 = vmul.f32 %v7022, %v7026
    %vm7028 = vweird.f32 %v7006
    %vm7029 = vweird.f32 %v7022
    %vm7030 = vmor %vm7028, %vm7029
    %v7031 = vsel %vm7030, %v7022, %v7027
    %v7032 = vrsqrt.pop %v7007
    %v7033 = vmul.f32 %v7032, %v7007
    %v7034 = vmul.f32 %v7033, %v7032
    %v7035 = vmul.f32 0.5, %v7034
    %v7036 = vsub.f32 1.5, %v7035
    %v7037 = vmul.f32 %v7032, %v7036
    %vm7038 = vweird.f32 %v7007
    %vm7039 = vweird.f32 %v7032
    %vm7040 = vmor %vm7038, %vm7039
    %v7041 = vsel %vm7040, %v7032, %v7037
    %v7042 = vrsqrt.pop %v7008
    %v7043 = vmul.f32 %v7042, %v7008
    %v7044 = vmul.f32 %v7043, %v7042
    %v7045 = vmul.f32 0.5, %v7044
    %v7046 = vsub.f32 1.5, %v7045
    %v7047 = vmul.f32 %v7042, %v7046
    %vm7048 = vweird.f32 %v7008
    %vm7049 = vweird.f32 %v7042
    %vm7050 = vmor %vm7048, %vm7049
    %v7051 = vsel %vm7050, %v7042, %v7047
    %v7052 = vrsqrt.pop %v7009
    %v7053 = vmul.f32 %v7052, %v7009
    %v7054 = vmul.f32 %v7053, %v7052
    %v7055 = vmul.f32 0.5, %v7054
    %v7056 = vsub.f32 1.5, %v7055
    %v7057 = vmul.f32 %v7052, %v7056
    %vm7058 = vweird.f32 %v7009
    %vm7059 = vweird.f32 %v7052
    %vm7060 = vmor %vm7058, %vm7059
    %v7061 = vsel %vm7060, %v7052, %v7057
    %v7062 = vrsqrt.pop %v7010
    %v7063 = vmul.f32 %v7062, %v7010
    %v7064 = vmul.f32 %v7063, %v7062
    %v7065 = vmul.f32 0.5, %v7064
    %v7066 = vsub.f32 1.5, %v7065
    %v7067 = vmul.f32 %v7062, %v7066
    %vm7068 = vweird.f32 %v7010
    %vm7069 = vweird.f32 %v7062
    %vm7070 = vmor %vm7068, %vm7069
    %v7071 = vsel %vm7070, %v7062, %v7067
    %v7072 = vrsqrt.pop %v7011
    %v7073 = vmul.f32 %v7072, %v7011
    %v7074 = vmul.f32 %v7073, %v7072
    %v7075 = vmul.f32 0.5, %v7074
    %v7076 = vsub.f32 1.5, %v7075
    %v7077 = vmul.f32 %v7072, %v7076
    %vm7078 = vweird.f32 %v7011
    %vm7079 = vweird.f32 %v7072
    %vm7080 = vmor %vm7078, %vm7079
    %v7081 = vsel %vm7080, %v7072, %v7077
    %v7082 = vrsqrt.pop %v7012
    %v7083 = vmul.f32 %v7082, %v7012
    %v7084 = vmul.f32 %v7083, %v7082
    %v7085 = vmul.f32 0.5, %v7084
    %v7086 = vsub.f32 1.5, %v7085
    %v7087 = vmul.f32 %v7082, %v7086
    %vm7088 = vweird.f32 %v7012
    %vm7089 = vweird.f32 %v7082
    %vm7090 = vmor %vm7088, %vm7089
    %v7091 = vsel %vm7090, %v7082, %v7087
    %v7092 = vrsqrt.pop %v7013
    %v7093 = vmul.f32 %v7092, %v7013
    %v7094 = vmul.f32 %v7093, %v7092
    %v7095 = vmul.f32 0.5, %v7094
    %v7096 = vsub.f32 1.5, %v7095
    %v7097 = vmul.f32 %v7092, %v7096
    %vm7098 = vweird.f32 %v7013
    %vm7099 = vweird.f32 %v7092
    %vm7100 = vmor %vm7098, %vm7099
    %v7101 = vsel %vm7100, %v7092, %v7097
    %v7102 = vrsqrt.pop %v7014
    %v7103 = vmul.f32 %v7102, %v7014
    %v7104 = vmul.f32 %v7103, %v7102
    %v7105 = vmul.f32 0.5, %v7104
    %v7106 = vsub.f32 1.5, %v7105
    %v7107 = vmul.f32 %v7102, %v7106
    %vm7108 = vweird.f32 %v7014
    %vm7109 = vweird.f32 %v7102
    %vm7110 = vmor %vm7108, %vm7109
    %v7111 = vsel %vm7110, %v7102, %v7107
    %v7112 = vrsqrt.pop %v7015
    %v7113 = vmul.f32 %v7112, %v7015
    %v7114 = vmul.f32 %v7113, %v7112
    %v7115 = vmul.f32 0.5, %v7114
    %v7116 = vsub.f32 1.5, %v7115
    %v7117 = vmul.f32 %v7112, %v7116
    %vm7118 = vweird.f32 %v7015
    %vm7119 = vweird.f32 %v7112
    %vm7120 = vmor %vm7118, %vm7119
    %v7121 = vsel %vm7120, %v7112, %v7117
    %v7122 = vrsqrt.pop %v7016
    %v7123 = vmul.f32 %v7122, %v7016
    %v7124 = vmul.f32 %v7123, %v7122
    %v7125 = vmul.f32 0.5, %v7124
    %v7126 = vsub.f32 1.5, %v7125
    %v7127 = vmul.f32 %v7122, %v7126
    %vm7128 = vweird.f32 %v7016
    %vm7129 = vweird.f32 %v7122
    %vm7130 = vmor %vm7128, %vm7129
    %v7131 = vsel %vm7130, %v7122, %v7127
    %v7132 = vrsqrt.pop %v7017
    %v7133 = vmul.f32 %v7132, %v7017
    %v7134 = vmul.f32 %v7133, %v7132
    %v7135 = vmul.f32 0.5, %v7134
    %v7136 = vsub.f32 1.5, %v7135
    %v7137 = vmul.f32 %v7132, %v7136
    %vm7138 = vweird.f32 %v7017
    %vm7139 = vweird.f32 %v7132
    %vm7140 = vmor %vm7138, %vm7139
    %v7141 = vsel %vm7140, %v7132, %v7137
    %v7142 = vrsqrt.pop %v7018
    %v7143 = vmul.f32 %v7142, %v7018
    %v7144 = vmul.f32 %v7143, %v7142
    %v7145 = vmul.f32 0.5, %v7144
    %v7146 = vsub.f32 1.5, %v7145
    %v7147 = vmul.f32 %v7142, %v7146
    %vm7148 = vweird.f32 %v7018
    %vm7149 = vweird.f32 %v7142
    %vm7150 = vmor %vm7148, %vm7149
    %v7151 = vsel %vm7150, %v7142, %v7147
    %v7152 = vrsqrt.pop %v7019
    %v7153 = vmul.f32 %v7152, %v7019
    %v7154 = vmul.f32 %v7153, %v7152
    %v7155 = vmul.f32 0.5, %v7154
    %v7156 = vsub.f32 1.5, %v7155
    %v7157 = vmul.f32 %v7152, %v7156
    %vm7158 = vweird.f32 %v7019
    %vm7159 = vweird.f32 %v7152
    %vm7160 = vmor %vm7158, %vm7159
    %v7161 = vsel %vm7160, %v7152, %v7157
    %v7162 = vrsqrt.pop %v7020
    %v7163 = vmul.f32 %v7162, %v7020
    %v7164 = vmul.f32 %v7163, %v7162
    %v7165 = vmul.f32 0.5, %v7164
    %v7166 = vsub.f32 1.5, %v7165
    %v7167 = vmul.f32 %v7162, %v7166
    %vm7168 = vweird.f32 %v7020
    %vm7169 = vweird.f32 %v7162
    %vm7170 = vmor %vm7168, %vm7169
    %v7171 = vsel %vm7170, %v7162, %v7167
    %v7172 = vrsqrt.pop %v7021
    %v7173 = vmul.f32 %v7172, %v7021
    %v7174 = vmul.f32 %v7173, %v7172
    %v7175 = vmul.f32 0.5, %v7174
    %v7176 = vsub.f32 1.5, %v7175
    %v7177 = vmul.f32 %v7172, %v7176
    %vm7178 = vweird.f32 %v7021
    %vm7179 = vweird.f32 %v7172
    %vm7180 = vmor %vm7178, %vm7179
    %v7181 = vsel %vm7180, %v7172, %v7177
    %v7182 = vmul.f32 %v6910, %v7031
    %v7183 = vmul.f32 %v6911, %v7041
    %v7184 = vmul.f32 %v6912, %v7051
    %v7185 = vmul.f32 %v6913, %v7061
    %v7186 = vmul.f32 %v6914, %v7071
    %v7187 = vmul.f32 %v6915, %v7081
    %v7188 = vmul.f32 %v6916, %v7091
    %v7189 = vmul.f32 %v6917, %v7101
    %v7190 = vmul.f32 %v6918, %v7111
    %v7191 = vmul.f32 %v6919, %v7121
    %v7192 = vmul.f32 %v6920, %v7131
    %v7193 = vmul.f32 %v6921, %v7141
    %v7194 = vmul.f32 %v6922, %v7151
    %v7195 = vmul.f32 %v6923, %v7161
    %v7196 = vmul.f32 %v6924, %v7171
    %v7197 = vmul.f32 %v6925, %v7181
    %v7199 = vperm.slane %v6843, 0
    %v7201 = vmul.f32 %v7182, %v7199
    %v7202 = vmul.f32 %v7183, %v7199
    %v7203 = vmul.f32 %v7184, %v7199
    %v7204 = vmul.f32 %v7185, %v7199
    %v7205 = vmul.f32 %v7186, %v7199
    %v7206 = vmul.f32 %v7187, %v7199
    %v7207 = vmul.f32 %v7188, %v7199
    %v7208 = vmul.f32 %v7189, %v7199
    %v7209 = vmul.f32 %v7190, %v7199
    %v7210 = vmul.f32 %v7191, %v7199
    %v7211 = vmul.f32 %v7192, %v7199
    %v7212 = vmul.f32 %v7193, %v7199
    %v7213 = vmul.f32 %v7194, %v7199
    %v7214 = vmul.f32 %v7195, %v7199
    %v7215 = vmul.f32 %v7196, %v7199
    %v7216 = vmul.f32 %v7197, %v7199
    %v7218 = vperm.slane %v6845, 0
    %v7220 = vadd.f32 %v7201, %v7218
    %v7221 = vadd.f32 %v7202, %v7218
    %v7222 = vadd.f32 %v7203, %v7218
    %v7223 = vadd.f32 %v7204, %v7218
    %v7224 = vadd.f32 %v7205, %v7218
    %v7225 = vadd.f32 %v7206, %v7218
    %v7226 = vadd.f32 %v7207, %v7218
    %v7227 = vadd.f32 %v7208, %v7218
    %v7228 = vadd.f32 %v7209, %v7218
    %v7229 = vadd.f32 %v7210, %v7218
    %v7230 = vadd.f32 %v7211, %v7218
    %v7231 = vadd.f32 %v7212, %v7218
    %v7232 = vadd.f32 %v7213, %v7218
    %v7233 = vadd.f32 %v7214, %v7218
    %v7234 = vadd.f32 %v7215, %v7218
    %v7235 = vadd.f32 %v7216, %v7218
    %s7236 = scalar_lea.vmem %s6, 32
    %v7237 = vld [vmem:[%s7236] sm:$0xff]
    %v7238 = vld [vmem:[%s7236 + $0x8] sm:$0xff]
    %v7239 = vld [vmem:[%s7236 + $0x10] sm:$0xff]
    %v7240 = vld [vmem:[%s7236 + $0x18] sm:$0xff]
    %s7241 = scalar_lea.vmem %s7, 1
    %v7242 = vld [vmem:[%s7241] sm:$0x1]
    %v7244 = vperm.slane %v7242, 0
    %v7247 = vsel %vm296, %v7220, 0
    %v7250 = vsel %vm296, %v7221, 0
    %v7253 = vsel %vm296, %v7222, 0
    %v7256 = vsel %vm296, %v7223, 0
    %v7259 = vsel %vm296, %v7224, 0
    %v7262 = vsel %vm296, %v7225, 0
    %v7265 = vsel %vm296, %v7226, 0
    %v7268 = vsel %vm296, %v7227, 0
    %v7271 = vsel %vm296, %v7228, 0
    %v7274 = vsel %vm296, %v7229, 0
    %v7277 = vsel %vm296, %v7230, 0
    %v7280 = vsel %vm296, %v7231, 0
    %v7283 = vsel %vm296, %v7232, 0
    %v7286 = vsel %vm296, %v7233, 0
    %v7289 = vsel %vm296, %v7234, 0
    %v7292 = vsel %vm296, %v7235, 0
    %7294 = vmatpush.msra.mxu0 0.0
    %7295 = vmatpush.msra.mxu0 0.0
    %7296 = vmatpush.msra.mxu0 0.0
    %7297 = vmatpush.msra.mxu0 0.0
    %7298 = vmatpush.msra.mxu0 0.0
    %7299 = vmatpush.msra.mxu0 0.0
    %7300 = vmatpush.msra.mxu0 0.0
    %7301 = vmatpush.msra.mxu0 0.0
    %7302 = vmatpush.msra.mxu0 0.0
    %7303 = vmatpush.msra.mxu0 0.0
    %7304 = vmatpush.msra.mxu0 0.0
    %7305 = vmatpush.msra.mxu0 0.0
    %7306 = vmatpush.msra.mxu0 %v7240
    %7307 = vmatpush.msra.mxu0 %v7239
    %7308 = vmatpush.msra.mxu0 %v7238
    %7309 = vmatpush.msra.mxu0 %v7237
    %7310 = vmatmul.f32.gmra.mxu0 %v7247
    %v7311 = vpop.f32.mrf.mxu0
    %v7312 = vadd.f32 %v7244, %v7311
    %7313 = vmatmul.f32.gmra.mxu0 %v7250
    %v7314 = vpop.f32.mrf.mxu0
    %v7315 = vadd.f32 %v7244, %v7314
    %7316 = vmatmul.f32.gmra.mxu0 %v7253
    %v7317 = vpop.f32.mrf.mxu0
    %v7318 = vadd.f32 %v7244, %v7317
    %7319 = vmatmul.f32.gmra.mxu0 %v7256
    %v7320 = vpop.f32.mrf.mxu0
    %v7321 = vadd.f32 %v7244, %v7320
    %7322 = vmatmul.f32.gmra.mxu0 %v7259
    %v7323 = vpop.f32.mrf.mxu0
    %v7324 = vadd.f32 %v7244, %v7323
    %7325 = vmatmul.f32.gmra.mxu0 %v7262
    %v7326 = vpop.f32.mrf.mxu0
    %v7327 = vadd.f32 %v7244, %v7326
    %7328 = vmatmul.f32.gmra.mxu0 %v7265
    %v7329 = vpop.f32.mrf.mxu0
    %v7330 = vadd.f32 %v7244, %v7329
    %7331 = vmatmul.f32.gmra.mxu0 %v7268
    %v7332 = vpop.f32.mrf.mxu0
    %v7333 = vadd.f32 %v7244, %v7332
    %7334 = vmatmul.f32.gmra.mxu0 %v7271
    %v7335 = vpop.f32.mrf.mxu0
    %v7336 = vadd.f32 %v7244, %v7335
    %7337 = vmatmul.f32.gmra.mxu0 %v7274
    %v7338 = vpop.f32.mrf.mxu0
    %v7339 = vadd.f32 %v7244, %v7338
    %7340 = vmatmul.f32.gmra.mxu0 %v7277
    %v7341 = vpop.f32.mrf.mxu0
    %v7342 = vadd.f32 %v7244, %v7341
    %7343 = vmatmul.f32.gmra.mxu0 %v7280
    %v7344 = vpop.f32.mrf.mxu0
    %v7345 = vadd.f32 %v7244, %v7344
    %7346 = vmatmul.f32.gmra.mxu0 %v7283
    %v7347 = vpop.f32.mrf.mxu0
    %v7348 = vadd.f32 %v7244, %v7347
    %7349 = vmatmul.f32.gmra.mxu0 %v7286
    %v7350 = vpop.f32.mrf.mxu0
    %v7351 = vadd.f32 %v7244, %v7350
    %7352 = vmatmul.f32.gmra.mxu0 %v7289
    %v7353 = vpop.f32.mrf.mxu0
    %v7354 = vadd.f32 %v7244, %v7353
    %7355 = vmatmul.f32.gmra.mxu0 %v7292
    %v7356 = vpop.f32.mrf.mxu0
    %v7357 = vadd.f32 %v7244, %v7356
    %7358 = vdwg.mxu0
    %v7359 = vmax.f32 %v7312, 0.0
    %v7360 = vmax.f32 %v7315, 0.0
    %v7361 = vmax.f32 %v7318, 0.0
    %v7362 = vmax.f32 %v7321, 0.0
    %v7363 = vmax.f32 %v7324, 0.0
    %v7364 = vmax.f32 %v7327, 0.0
    %v7365 = vmax.f32 %v7330, 0.0
    %v7366 = vmax.f32 %v7333, 0.0
    %v7367 = vmax.f32 %v7336, 0.0
    %v7368 = vmax.f32 %v7339, 0.0
    %v7369 = vmax.f32 %v7342, 0.0
    %v7370 = vmax.f32 %v7345, 0.0
    %v7371 = vmax.f32 %v7348, 0.0
    %v7372 = vmax.f32 %v7351, 0.0
    %v7373 = vmax.f32 %v7354, 0.0
    %v7374 = vmax.f32 %v7357, 0.0
    %s7375 = scalar_lea.vmem %s8, 128
    %v7376 = vld [vmem:[%s7375] sm:$0xff]
    %v7377 = vld [vmem:[%s7375 + $0x8] sm:$0xff]
    %v7378 = vld [vmem:[%s7375 + $0x10] sm:$0xff]
    %v7379 = vld [vmem:[%s7375 + $0x18] sm:$0xff]
    %v7380 = vld [vmem:[%s7375 + $0x20] sm:$0xff]
    %v7381 = vld [vmem:[%s7375 + $0x28] sm:$0xff]
    %v7382 = vld [vmem:[%s7375 + $0x30] sm:$0xff]
    %v7383 = vld [vmem:[%s7375 + $0x38] sm:$0xff]
    %v7384 = vld [vmem:[%s7375 + $0x40] sm:$0xff]
    %v7385 = vld [vmem:[%s7375 + $0x48] sm:$0xff]
    %v7386 = vld [vmem:[%s7375 + $0x50] sm:$0xff]
    %v7387 = vld [vmem:[%s7375 + $0x58] sm:$0xff]
    %v7388 = vld [vmem:[%s7375 + $0x60] sm:$0xff]
    %v7389 = vld [vmem:[%s7375 + $0x68] sm:$0xff]
    %v7390 = vld [vmem:[%s7375 + $0x70] sm:$0xff]
    %v7391 = vld [vmem:[%s7375 + $0x78] sm:$0xff]
    %7392 = vmatpush.msra.mxu0 %v7391
    %7393 = vmatpush.msra.mxu0 %v7390
    %7394 = vmatpush.msra.mxu0 %v7389
    %7395 = vmatpush.msra.mxu0 %v7388
    %7396 = vmatpush.msra.mxu0 %v7387
    %7397 = vmatpush.msra.mxu0 %v7386
    %7398 = vmatpush.msra.mxu0 %v7385
    %7399 = vmatpush.msra.mxu0 %v7384
    %7400 = vmatpush.msra.mxu0 %v7383
    %7401 = vmatpush.msra.mxu0 %v7382
    %7402 = vmatpush.msra.mxu0 %v7381
    %7403 = vmatpush.msra.mxu0 %v7380
    %7404 = vmatpush.msra.mxu0 %v7379
    %7405 = vmatpush.msra.mxu0 %v7378
    %7406 = vmatpush.msra.mxu0 %v7377
    %7407 = vmatpush.msra.mxu0 %v7376
    %7408 = vmatmul.f32.gmra.mxu0 %v7359
    %v7409 = vpop.f32.mrf.mxu0
    %v7410 = vadd.f32 0.0, %v7409
    %7411 = vmatmul.f32.gmra.mxu0 %v7360
    %v7412 = vpop.f32.mrf.mxu0
    %v7413 = vadd.f32 0.0, %v7412
    %7414 = vmatmul.f32.gmra.mxu0 %v7361
    %v7415 = vpop.f32.mrf.mxu0
    %v7416 = vadd.f32 0.0, %v7415
    %7417 = vmatmul.f32.gmra.mxu0 %v7362
    %v7418 = vpop.f32.mrf.mxu0
    %v7419 = vadd.f32 0.0, %v7418
    %7420 = vmatmul.f32.gmra.mxu0 %v7363
    %v7421 = vpop.f32.mrf.mxu0
    %v7422 = vadd.f32 0.0, %v7421
    %7423 = vmatmul.f32.gmra.mxu0 %v7364
    %v7424 = vpop.f32.mrf.mxu0
    %v7425 = vadd.f32 0.0, %v7424
    %7426 = vmatmul.f32.gmra.mxu0 %v7365
    %v7427 = vpop.f32.mrf.mxu0
    %v7428 = vadd.f32 0.0, %v7427
    %7429 = vmatmul.f32.gmra.mxu0 %v7366
    %v7430 = vpop.f32.mrf.mxu0
    %v7431 = vadd.f32 0.0, %v7430
    %7432 = vmatmul.f32.gmra.mxu0 %v7367
    %v7433 = vpop.f32.mrf.mxu0
    %v7434 = vadd.f32 0.0, %v7433
    %7435 = vmatmul.f32.gmra.mxu0 %v7368
    %v7436 = vpop.f32.mrf.mxu0
    %v7437 = vadd.f32 0.0, %v7436
    %7438 = vmatmul.f32.gmra.mxu0 %v7369
    %v7439 = vpop.f32.mrf.mxu0
    %v7440 = vadd.f32 0.0, %v7439
    %7441 = vmatmul.f32.gmra.mxu0 %v7370
    %v7442 = vpop.f32.mrf.mxu0
    %v7443 = vadd.f32 0.0, %v7442
    %7444 = vmatmul.f32.gmra.mxu0 %v7371
    %v7445 = vpop.f32.mrf.mxu0
    %v7446 = vadd.f32 0.0, %v7445
    %7447 = vmatmul.f32.gmra.mxu0 %v7372
    %v7448 = vpop.f32.mrf.mxu0
    %v7449 = vadd.f32 0.0, %v7448
    %7450 = vmatmul.f32.gmra.mxu0 %v7373
    %v7451 = vpop.f32.mrf.mxu0
    %v7452 = vadd.f32 0.0, %v7451
    %7453 = vmatmul.f32.gmra.mxu0 %v7374
    %v7454 = vpop.f32.mrf.mxu0
    %v7455 = vadd.f32 0.0, %v7454
    %7456 = vdwg.mxu0
    %v7457 = vadd.f32 %v6826, %v7410
    %v7458 = vadd.f32 %v6827, %v7413
    %v7459 = vadd.f32 %v6828, %v7416
    %v7460 = vadd.f32 %v6829, %v7419
    %v7461 = vadd.f32 %v6830, %v7422
    %v7462 = vadd.f32 %v6831, %v7425
    %v7463 = vadd.f32 %v6832, %v7428
    %v7464 = vadd.f32 %v6833, %v7431
    %v7465 = vadd.f32 %v6834, %v7434
    %v7466 = vadd.f32 %v6835, %v7437
    %v7467 = vadd.f32 %v6836, %v7440
    %v7468 = vadd.f32 %v6837, %v7443
    %v7469 = vadd.f32 %v6838, %v7446
    %v7470 = vadd.f32 %v6839, %v7449
    %v7471 = vadd.f32 %v6840, %v7452
    %v7472 = vadd.f32 %v6841, %v7455
    %s7473 = scalar_lea.vmem %s9, 1
    %v7474 = vld [vmem:[%s7473] sm:$0x1]
    %v7476 = vperm.slane %v7474, 0
    %v7478 = vadd.f32 %v7457, %v7476
    %v7479 = vadd.f32 %v7458, %v7476
    %v7480 = vadd.f32 %v7459, %v7476
    %v7481 = vadd.f32 %v7460, %v7476
    %v7482 = vadd.f32 %v7461, %v7476
    %v7483 = vadd.f32 %v7462, %v7476
    %v7484 = vadd.f32 %v7463, %v7476
    %v7485 = vadd.f32 %v7464, %v7476
    %v7486 = vadd.f32 %v7465, %v7476
    %v7487 = vadd.f32 %v7466, %v7476
    %v7488 = vadd.f32 %v7467, %v7476
    %v7489 = vadd.f32 %v7468, %v7476
    %v7490 = vadd.f32 %v7469, %v7476
    %v7491 = vadd.f32 %v7470, %v7476
    %v7492 = vadd.f32 %v7471, %v7476
    %v7493 = vadd.f32 %v7472, %v7476
    %s7494 = scalar_lea.vmem %s10, 2
    %v7495 = vld [vmem:[%s7494] sm:$0x1]
    %s7496 = scalar_lea.vmem %s11, 2
    %v7497 = vld [vmem:[%s7496] sm:$0x1]
    %v7498 = vsel %vm296, %v7478, 0.0
    %7499 = vadd.xlane.f32.xlu0 %v7498
    %v7500 = vpop.xlane.xlu0 %7499
    %v7501 = vsel %vm296, %v7479, 0.0
    %7502 = vadd.xlane.f32.xlu0 %v7501
    %v7503 = vpop.xlane.xlu0 %7502
    %v7504 = vsel %vm296, %v7480, 0.0
    %7505 = vadd.xlane.f32.xlu0 %v7504
    %v7506 = vpop.xlane.xlu0 %7505
    %v7507 = vsel %vm296, %v7481, 0.0
    %7508 = vadd.xlane.f32.xlu0 %v7507
    %v7509 = vpop.xlane.xlu0 %7508
    %v7510 = vsel %vm296, %v7482, 0.0
    %7511 = vadd.xlane.f32.xlu0 %v7510
    %v7512 = vpop.xlane.xlu0 %7511
    %v7513 = vsel %vm296, %v7483, 0.0
    %7514 = vadd.xlane.f32.xlu0 %v7513
    %v7515 = vpop.xlane.xlu0 %7514
    %v7516 = vsel %vm296, %v7484, 0.0
    %7517 = vadd.xlane.f32.xlu0 %v7516
    %v7518 = vpop.xlane.xlu0 %7517
    %v7519 = vsel %vm296, %v7485, 0.0
    %7520 = vadd.xlane.f32.xlu0 %v7519
    %v7521 = vpop.xlane.xlu0 %7520
    %v7522 = vsel %vm296, %v7486, 0.0
    %7523 = vadd.xlane.f32.xlu0 %v7522
    %v7524 = vpop.xlane.xlu0 %7523
    %v7525 = vsel %vm296, %v7487, 0.0
    %7526 = vadd.xlane.f32.xlu0 %v7525
    %v7527 = vpop.xlane.xlu0 %7526
    %v7528 = vsel %vm296, %v7488, 0.0
    %7529 = vadd.xlane.f32.xlu0 %v7528
    %v7530 = vpop.xlane.xlu0 %7529
    %v7531 = vsel %vm296, %v7489, 0.0
    %7532 = vadd.xlane.f32.xlu0 %v7531
    %v7533 = vpop.xlane.xlu0 %7532
    %v7534 = vsel %vm296, %v7490, 0.0
    %7535 = vadd.xlane.f32.xlu0 %v7534
    %v7536 = vpop.xlane.xlu0 %7535
    %v7537 = vsel %vm296, %v7491, 0.0
    %7538 = vadd.xlane.f32.xlu0 %v7537
    %v7539 = vpop.xlane.xlu0 %7538
    %v7540 = vsel %vm296, %v7492, 0.0
    %7541 = vadd.xlane.f32.xlu0 %v7540
    %v7542 = vpop.xlane.xlu0 %7541
    %v7543 = vsel %vm296, %v7493, 0.0
    %7544 = vadd.xlane.f32.xlu0 %v7543
    %v7545 = vpop.xlane.xlu0 %7544
    %v7546 = vmul.f32 %v7500, %v351
    %v7547 = vmul.f32 %v7503, %v351
    %v7548 = vmul.f32 %v7506, %v351
    %v7549 = vmul.f32 %v7509, %v351
    %v7550 = vmul.f32 %v7512, %v351
    %v7551 = vmul.f32 %v7515, %v351
    %v7552 = vmul.f32 %v7518, %v351
    %v7553 = vmul.f32 %v7521, %v351
    %v7554 = vmul.f32 %v7524, %v351
    %v7555 = vmul.f32 %v7527, %v351
    %v7556 = vmul.f32 %v7530, %v351
    %v7557 = vmul.f32 %v7533, %v351
    %v7558 = vmul.f32 %v7536, %v351
    %v7559 = vmul.f32 %v7539, %v351
    %v7560 = vmul.f32 %v7542, %v351
    %v7561 = vmul.f32 %v7545, %v351
    %v7562 = vsub.f32 %v7478, %v7546
    %v7563 = vsub.f32 %v7479, %v7547
    %v7564 = vsub.f32 %v7480, %v7548
    %v7565 = vsub.f32 %v7481, %v7549
    %v7566 = vsub.f32 %v7482, %v7550
    %v7567 = vsub.f32 %v7483, %v7551
    %v7568 = vsub.f32 %v7484, %v7552
    %v7569 = vsub.f32 %v7485, %v7553
    %v7570 = vsub.f32 %v7486, %v7554
    %v7571 = vsub.f32 %v7487, %v7555
    %v7572 = vsub.f32 %v7488, %v7556
    %v7573 = vsub.f32 %v7489, %v7557
    %v7574 = vsub.f32 %v7490, %v7558
    %v7575 = vsub.f32 %v7491, %v7559
    %v7576 = vsub.f32 %v7492, %v7560
    %v7577 = vsub.f32 %v7493, %v7561
    %v7578 = vmul.f32 %v7562, %v7562
    %v7579 = vmul.f32 %v7563, %v7563
    %v7580 = vmul.f32 %v7564, %v7564
    %v7581 = vmul.f32 %v7565, %v7565
    %v7582 = vmul.f32 %v7566, %v7566
    %v7583 = vmul.f32 %v7567, %v7567
    %v7584 = vmul.f32 %v7568, %v7568
    %v7585 = vmul.f32 %v7569, %v7569
    %v7586 = vmul.f32 %v7570, %v7570
    %v7587 = vmul.f32 %v7571, %v7571
    %v7588 = vmul.f32 %v7572, %v7572
    %v7589 = vmul.f32 %v7573, %v7573
    %v7590 = vmul.f32 %v7574, %v7574
    %v7591 = vmul.f32 %v7575, %v7575
    %v7592 = vmul.f32 %v7576, %v7576
    %v7593 = vmul.f32 %v7577, %v7577
    %v7594 = vsel %vm296, %v7578, 0.0
    %7595 = vadd.xlane.f32.xlu0 %v7594
    %v7596 = vpop.xlane.xlu0 %7595
    %v7597 = vsel %vm296, %v7579, 0.0
    %7598 = vadd.xlane.f32.xlu0 %v7597
    %v7599 = vpop.xlane.xlu0 %7598
    %v7600 = vsel %vm296, %v7580, 0.0
    %7601 = vadd.xlane.f32.xlu0 %v7600
    %v7602 = vpop.xlane.xlu0 %7601
    %v7603 = vsel %vm296, %v7581, 0.0
    %7604 = vadd.xlane.f32.xlu0 %v7603
    %v7605 = vpop.xlane.xlu0 %7604
    %v7606 = vsel %vm296, %v7582, 0.0
    %7607 = vadd.xlane.f32.xlu0 %v7606
    %v7608 = vpop.xlane.xlu0 %7607
    %v7609 = vsel %vm296, %v7583, 0.0
    %7610 = vadd.xlane.f32.xlu0 %v7609
    %v7611 = vpop.xlane.xlu0 %7610
    %v7612 = vsel %vm296, %v7584, 0.0
    %7613 = vadd.xlane.f32.xlu0 %v7612
    %v7614 = vpop.xlane.xlu0 %7613
    %v7615 = vsel %vm296, %v7585, 0.0
    %7616 = vadd.xlane.f32.xlu0 %v7615
    %v7617 = vpop.xlane.xlu0 %7616
    %v7618 = vsel %vm296, %v7586, 0.0
    %7619 = vadd.xlane.f32.xlu0 %v7618
    %v7620 = vpop.xlane.xlu0 %7619
    %v7621 = vsel %vm296, %v7587, 0.0
    %7622 = vadd.xlane.f32.xlu0 %v7621
    %v7623 = vpop.xlane.xlu0 %7622
    %v7624 = vsel %vm296, %v7588, 0.0
    %7625 = vadd.xlane.f32.xlu0 %v7624
    %v7626 = vpop.xlane.xlu0 %7625
    %v7627 = vsel %vm296, %v7589, 0.0
    %7628 = vadd.xlane.f32.xlu0 %v7627
    %v7629 = vpop.xlane.xlu0 %7628
    %v7630 = vsel %vm296, %v7590, 0.0
    %7631 = vadd.xlane.f32.xlu0 %v7630
    %v7632 = vpop.xlane.xlu0 %7631
    %v7633 = vsel %vm296, %v7591, 0.0
    %7634 = vadd.xlane.f32.xlu0 %v7633
    %v7635 = vpop.xlane.xlu0 %7634
    %v7636 = vsel %vm296, %v7592, 0.0
    %7637 = vadd.xlane.f32.xlu0 %v7636
    %v7638 = vpop.xlane.xlu0 %7637
    %v7639 = vsel %vm296, %v7593, 0.0
    %7640 = vadd.xlane.f32.xlu0 %v7639
    %v7641 = vpop.xlane.xlu0 %7640
    %v7642 = vmul.f32 %v7596, %v351
    %v7643 = vmul.f32 %v7599, %v351
    %v7644 = vmul.f32 %v7602, %v351
    %v7645 = vmul.f32 %v7605, %v351
    %v7646 = vmul.f32 %v7608, %v351
    %v7647 = vmul.f32 %v7611, %v351
    %v7648 = vmul.f32 %v7614, %v351
    %v7649 = vmul.f32 %v7617, %v351
    %v7650 = vmul.f32 %v7620, %v351
    %v7651 = vmul.f32 %v7623, %v351
    %v7652 = vmul.f32 %v7626, %v351
    %v7653 = vmul.f32 %v7629, %v351
    %v7654 = vmul.f32 %v7632, %v351
    %v7655 = vmul.f32 %v7635, %v351
    %v7656 = vmul.f32 %v7638, %v351
    %v7657 = vmul.f32 %v7641, %v351
    %v7658 = vadd.f32 %v7642, 1e-05
    %v7659 = vadd.f32 %v7643, 1e-05
    %v7660 = vadd.f32 %v7644, 1e-05
    %v7661 = vadd.f32 %v7645, 1e-05
    %v7662 = vadd.f32 %v7646, 1e-05
    %v7663 = vadd.f32 %v7647, 1e-05
    %v7664 = vadd.f32 %v7648, 1e-05
    %v7665 = vadd.f32 %v7649, 1e-05
    %v7666 = vadd.f32 %v7650, 1e-05
    %v7667 = vadd.f32 %v7651, 1e-05
    %v7668 = vadd.f32 %v7652, 1e-05
    %v7669 = vadd.f32 %v7653, 1e-05
    %v7670 = vadd.f32 %v7654, 1e-05
    %v7671 = vadd.f32 %v7655, 1e-05
    %v7672 = vadd.f32 %v7656, 1e-05
    %v7673 = vadd.f32 %v7657, 1e-05
    %v7674 = vrsqrt.pop %v7658
    %v7675 = vmul.f32 %v7674, %v7658
    %v7676 = vmul.f32 %v7675, %v7674
    %v7677 = vmul.f32 0.5, %v7676
    %v7678 = vsub.f32 1.5, %v7677
    %v7679 = vmul.f32 %v7674, %v7678
    %vm7680 = vweird.f32 %v7658
    %vm7681 = vweird.f32 %v7674
    %vm7682 = vmor %vm7680, %vm7681
    %v7683 = vsel %vm7682, %v7674, %v7679
    %v7684 = vrsqrt.pop %v7659
    %v7685 = vmul.f32 %v7684, %v7659
    %v7686 = vmul.f32 %v7685, %v7684
    %v7687 = vmul.f32 0.5, %v7686
    %v7688 = vsub.f32 1.5, %v7687
    %v7689 = vmul.f32 %v7684, %v7688
    %vm7690 = vweird.f32 %v7659
    %vm7691 = vweird.f32 %v7684
    %vm7692 = vmor %vm7690, %vm7691
    %v7693 = vsel %vm7692, %v7684, %v7689
    %v7694 = vrsqrt.pop %v7660
    %v7695 = vmul.f32 %v7694, %v7660
    %v7696 = vmul.f32 %v7695, %v7694
    %v7697 = vmul.f32 0.5, %v7696
    %v7698 = vsub.f32 1.5, %v7697
    %v7699 = vmul.f32 %v7694, %v7698
    %vm7700 = vweird.f32 %v7660
    %vm7701 = vweird.f32 %v7694
    %vm7702 = vmor %vm7700, %vm7701
    %v7703 = vsel %vm7702, %v7694, %v7699
    %v7704 = vrsqrt.pop %v7661
    %v7705 = vmul.f32 %v7704, %v7661
    %v7706 = vmul.f32 %v7705, %v7704
    %v7707 = vmul.f32 0.5, %v7706
    %v7708 = vsub.f32 1.5, %v7707
    %v7709 = vmul.f32 %v7704, %v7708
    %vm7710 = vweird.f32 %v7661
    %vm7711 = vweird.f32 %v7704
    %vm7712 = vmor %vm7710, %vm7711
    %v7713 = vsel %vm7712, %v7704, %v7709
    %v7714 = vrsqrt.pop %v7662
    %v7715 = vmul.f32 %v7714, %v7662
    %v7716 = vmul.f32 %v7715, %v7714
    %v7717 = vmul.f32 0.5, %v7716
    %v7718 = vsub.f32 1.5, %v7717
    %v7719 = vmul.f32 %v7714, %v7718
    %vm7720 = vweird.f32 %v7662
    %vm7721 = vweird.f32 %v7714
    %vm7722 = vmor %vm7720, %vm7721
    %v7723 = vsel %vm7722, %v7714, %v7719
    %v7724 = vrsqrt.pop %v7663
    %v7725 = vmul.f32 %v7724, %v7663
    %v7726 = vmul.f32 %v7725, %v7724
    %v7727 = vmul.f32 0.5, %v7726
    %v7728 = vsub.f32 1.5, %v7727
    %v7729 = vmul.f32 %v7724, %v7728
    %vm7730 = vweird.f32 %v7663
    %vm7731 = vweird.f32 %v7724
    %vm7732 = vmor %vm7730, %vm7731
    %v7733 = vsel %vm7732, %v7724, %v7729
    %v7734 = vrsqrt.pop %v7664
    %v7735 = vmul.f32 %v7734, %v7664
    %v7736 = vmul.f32 %v7735, %v7734
    %v7737 = vmul.f32 0.5, %v7736
    %v7738 = vsub.f32 1.5, %v7737
    %v7739 = vmul.f32 %v7734, %v7738
    %vm7740 = vweird.f32 %v7664
    %vm7741 = vweird.f32 %v7734
    %vm7742 = vmor %vm7740, %vm7741
    %v7743 = vsel %vm7742, %v7734, %v7739
    %v7744 = vrsqrt.pop %v7665
    %v7745 = vmul.f32 %v7744, %v7665
    %v7746 = vmul.f32 %v7745, %v7744
    %v7747 = vmul.f32 0.5, %v7746
    %v7748 = vsub.f32 1.5, %v7747
    %v7749 = vmul.f32 %v7744, %v7748
    %vm7750 = vweird.f32 %v7665
    %vm7751 = vweird.f32 %v7744
    %vm7752 = vmor %vm7750, %vm7751
    %v7753 = vsel %vm7752, %v7744, %v7749
    %v7754 = vrsqrt.pop %v7666
    %v7755 = vmul.f32 %v7754, %v7666
    %v7756 = vmul.f32 %v7755, %v7754
    %v7757 = vmul.f32 0.5, %v7756
    %v7758 = vsub.f32 1.5, %v7757
    %v7759 = vmul.f32 %v7754, %v7758
    %vm7760 = vweird.f32 %v7666
    %vm7761 = vweird.f32 %v7754
    %vm7762 = vmor %vm7760, %vm7761
    %v7763 = vsel %vm7762, %v7754, %v7759
    %v7764 = vrsqrt.pop %v7667
    %v7765 = vmul.f32 %v7764, %v7667
    %v7766 = vmul.f32 %v7765, %v7764
    %v7767 = vmul.f32 0.5, %v7766
    %v7768 = vsub.f32 1.5, %v7767
    %v7769 = vmul.f32 %v7764, %v7768
    %vm7770 = vweird.f32 %v7667
    %vm7771 = vweird.f32 %v7764
    %vm7772 = vmor %vm7770, %vm7771
    %v7773 = vsel %vm7772, %v7764, %v7769
    %v7774 = vrsqrt.pop %v7668
    %v7775 = vmul.f32 %v7774, %v7668
    %v7776 = vmul.f32 %v7775, %v7774
    %v7777 = vmul.f32 0.5, %v7776
    %v7778 = vsub.f32 1.5, %v7777
    %v7779 = vmul.f32 %v7774, %v7778
    %vm7780 = vweird.f32 %v7668
    %vm7781 = vweird.f32 %v7774
    %vm7782 = vmor %vm7780, %vm7781
    %v7783 = vsel %vm7782, %v7774, %v7779
    %v7784 = vrsqrt.pop %v7669
    %v7785 = vmul.f32 %v7784, %v7669
    %v7786 = vmul.f32 %v7785, %v7784
    %v7787 = vmul.f32 0.5, %v7786
    %v7788 = vsub.f32 1.5, %v7787
    %v7789 = vmul.f32 %v7784, %v7788
    %vm7790 = vweird.f32 %v7669
    %vm7791 = vweird.f32 %v7784
    %vm7792 = vmor %vm7790, %vm7791
    %v7793 = vsel %vm7792, %v7784, %v7789
    %v7794 = vrsqrt.pop %v7670
    %v7795 = vmul.f32 %v7794, %v7670
    %v7796 = vmul.f32 %v7795, %v7794
    %v7797 = vmul.f32 0.5, %v7796
    %v7798 = vsub.f32 1.5, %v7797
    %v7799 = vmul.f32 %v7794, %v7798
    %vm7800 = vweird.f32 %v7670
    %vm7801 = vweird.f32 %v7794
    %vm7802 = vmor %vm7800, %vm7801
    %v7803 = vsel %vm7802, %v7794, %v7799
    %v7804 = vrsqrt.pop %v7671
    %v7805 = vmul.f32 %v7804, %v7671
    %v7806 = vmul.f32 %v7805, %v7804
    %v7807 = vmul.f32 0.5, %v7806
    %v7808 = vsub.f32 1.5, %v7807
    %v7809 = vmul.f32 %v7804, %v7808
    %vm7810 = vweird.f32 %v7671
    %vm7811 = vweird.f32 %v7804
    %vm7812 = vmor %vm7810, %vm7811
    %v7813 = vsel %vm7812, %v7804, %v7809
    %v7814 = vrsqrt.pop %v7672
    %v7815 = vmul.f32 %v7814, %v7672
    %v7816 = vmul.f32 %v7815, %v7814
    %v7817 = vmul.f32 0.5, %v7816
    %v7818 = vsub.f32 1.5, %v7817
    %v7819 = vmul.f32 %v7814, %v7818
    %vm7820 = vweird.f32 %v7672
    %vm7821 = vweird.f32 %v7814
    %vm7822 = vmor %vm7820, %vm7821
    %v7823 = vsel %vm7822, %v7814, %v7819
    %v7824 = vrsqrt.pop %v7673
    %v7825 = vmul.f32 %v7824, %v7673
    %v7826 = vmul.f32 %v7825, %v7824
    %v7827 = vmul.f32 0.5, %v7826
    %v7828 = vsub.f32 1.5, %v7827
    %v7829 = vmul.f32 %v7824, %v7828
    %vm7830 = vweird.f32 %v7673
    %vm7831 = vweird.f32 %v7824
    %vm7832 = vmor %vm7830, %vm7831
    %v7833 = vsel %vm7832, %v7824, %v7829
    %v7834 = vmul.f32 %v7562, %v7683
    %v7835 = vmul.f32 %v7563, %v7693
    %v7836 = vmul.f32 %v7564, %v7703
    %v7837 = vmul.f32 %v7565, %v7713
    %v7838 = vmul.f32 %v7566, %v7723
    %v7839 = vmul.f32 %v7567, %v7733
    %v7840 = vmul.f32 %v7568, %v7743
    %v7841 = vmul.f32 %v7569, %v7753
    %v7842 = vmul.f32 %v7570, %v7763
    %v7843 = vmul.f32 %v7571, %v7773
    %v7844 = vmul.f32 %v7572, %v7783
    %v7845 = vmul.f32 %v7573, %v7793
    %v7846 = vmul.f32 %v7574, %v7803
    %v7847 = vmul.f32 %v7575, %v7813
    %v7848 = vmul.f32 %v7576, %v7823
    %v7849 = vmul.f32 %v7577, %v7833
    %v7851 = vperm.slane %v7495, 0
    %v7853 = vmul.f32 %v7834, %v7851
    %v7854 = vmul.f32 %v7835, %v7851
    %v7855 = vmul.f32 %v7836, %v7851
    %v7856 = vmul.f32 %v7837, %v7851
    %v7857 = vmul.f32 %v7838, %v7851
    %v7858 = vmul.f32 %v7839, %v7851
    %v7859 = vmul.f32 %v7840, %v7851
    %v7860 = vmul.f32 %v7841, %v7851
    %v7861 = vmul.f32 %v7842, %v7851
    %v7862 = vmul.f32 %v7843, %v7851
    %v7863 = vmul.f32 %v7844, %v7851
    %v7864 = vmul.f32 %v7845, %v7851
    %v7865 = vmul.f32 %v7846, %v7851
    %v7866 = vmul.f32 %v7847, %v7851
    %v7867 = vmul.f32 %v7848, %v7851
    %v7868 = vmul.f32 %v7849, %v7851
    %v7870 = vperm.slane %v7497, 0
    %v7872 = vadd.f32 %v7853, %v7870
    %v7873 = vadd.f32 %v7854, %v7870
    %v7874 = vadd.f32 %v7855, %v7870
    %v7875 = vadd.f32 %v7856, %v7870
    %v7876 = vadd.f32 %v7857, %v7870
    %v7877 = vadd.f32 %v7858, %v7870
    %v7878 = vadd.f32 %v7859, %v7870
    %v7879 = vadd.f32 %v7860, %v7870
    %v7880 = vadd.f32 %v7861, %v7870
    %v7881 = vadd.f32 %v7862, %v7870
    %v7882 = vadd.f32 %v7863, %v7870
    %v7883 = vadd.f32 %v7864, %v7870
    %v7884 = vadd.f32 %v7865, %v7870
    %v7885 = vadd.f32 %v7866, %v7870
    %v7886 = vadd.f32 %v7867, %v7870
    %v7887 = vadd.f32 %v7868, %v7870
    %s7888 = scalar_lea.vmem %s5, 2
    %v7889 = vld [vmem:[%s7888] sm:$0x1]
    %v7891 = vperm.slane %v7889, 0
    %v7893 = vadd.f32 %v7478, %v7891
    %v7894 = vadd.f32 %v7479, %v7891
    %v7895 = vadd.f32 %v7480, %v7891
    %v7896 = vadd.f32 %v7481, %v7891
    %v7897 = vadd.f32 %v7482, %v7891
    %v7898 = vadd.f32 %v7483, %v7891
    %v7899 = vadd.f32 %v7484, %v7891
    %v7900 = vadd.f32 %v7485, %v7891
    %v7901 = vadd.f32 %v7486, %v7891
    %v7902 = vadd.f32 %v7487, %v7891
    %v7903 = vadd.f32 %v7488, %v7891
    %v7904 = vadd.f32 %v7489, %v7891
    %v7905 = vadd.f32 %v7490, %v7891
    %v7906 = vadd.f32 %v7491, %v7891
    %v7907 = vadd.f32 %v7492, %v7891
    %v7908 = vadd.f32 %v7493, %v7891
    %s7909 = scalar_lea.vmem %s3, 192
    %v7910 = vld [vmem:[%s7909] sm:$0xff]
    %v7911 = vld [vmem:[%s7909 + $0x8] sm:$0xff]
    %v7912 = vld [vmem:[%s7909 + $0x10] sm:$0xff]
    %v7913 = vld [vmem:[%s7909 + $0x18] sm:$0xff]
    %v7915 = vsel %vm296, %v7872, 0
    %v7918 = vsel %vm296, %v7873, 0
    %v7921 = vsel %vm296, %v7874, 0
    %v7924 = vsel %vm296, %v7875, 0
    %v7927 = vsel %vm296, %v7876, 0
    %v7930 = vsel %vm296, %v7877, 0
    %v7933 = vsel %vm296, %v7878, 0
    %v7936 = vsel %vm296, %v7879, 0
    %v7939 = vsel %vm296, %v7880, 0
    %v7942 = vsel %vm296, %v7881, 0
    %v7945 = vsel %vm296, %v7882, 0
    %v7948 = vsel %vm296, %v7883, 0
    %v7951 = vsel %vm296, %v7884, 0
    %v7954 = vsel %vm296, %v7885, 0
    %v7957 = vsel %vm296, %v7886, 0
    %v7960 = vsel %vm296, %v7887, 0
    %7962 = vmatpush.msra.mxu0 0.0
    %7963 = vmatpush.msra.mxu0 0.0
    %7964 = vmatpush.msra.mxu0 0.0
    %7965 = vmatpush.msra.mxu0 0.0
    %7966 = vmatpush.msra.mxu0 0.0
    %7967 = vmatpush.msra.mxu0 0.0
    %7968 = vmatpush.msra.mxu0 0.0
    %7969 = vmatpush.msra.mxu0 0.0
    %7970 = vmatpush.msra.mxu0 0.0
    %7971 = vmatpush.msra.mxu0 0.0
    %7972 = vmatpush.msra.mxu0 0.0
    %7973 = vmatpush.msra.mxu0 0.0
    %7974 = vmatpush.msra.mxu0 %v7913
    %7975 = vmatpush.msra.mxu0 %v7912
    %7976 = vmatpush.msra.mxu0 %v7911
    %7977 = vmatpush.msra.mxu0 %v7910
    %7978 = vmatmul.f32.gmra.mxu0 %v7915
    %v7979 = vpop.f32.mrf.mxu0
    %v7980 = vadd.f32 0.0, %v7979
    %7981 = vmatmul.f32.gmra.mxu0 %v7918
    %v7982 = vpop.f32.mrf.mxu0
    %v7983 = vadd.f32 0.0, %v7982
    %7984 = vmatmul.f32.gmra.mxu0 %v7921
    %v7985 = vpop.f32.mrf.mxu0
    %v7986 = vadd.f32 0.0, %v7985
    %7987 = vmatmul.f32.gmra.mxu0 %v7924
    %v7988 = vpop.f32.mrf.mxu0
    %v7989 = vadd.f32 0.0, %v7988
    %7990 = vmatmul.f32.gmra.mxu0 %v7927
    %v7991 = vpop.f32.mrf.mxu0
    %v7992 = vadd.f32 0.0, %v7991
    %7993 = vmatmul.f32.gmra.mxu0 %v7930
    %v7994 = vpop.f32.mrf.mxu0
    %v7995 = vadd.f32 0.0, %v7994
    %7996 = vmatmul.f32.gmra.mxu0 %v7933
    %v7997 = vpop.f32.mrf.mxu0
    %v7998 = vadd.f32 0.0, %v7997
    %7999 = vmatmul.f32.gmra.mxu0 %v7936
    %v8000 = vpop.f32.mrf.mxu0
    %v8001 = vadd.f32 0.0, %v8000
    %8002 = vmatmul.f32.gmra.mxu0 %v7939
    %v8003 = vpop.f32.mrf.mxu0
    %v8004 = vadd.f32 0.0, %v8003
    %8005 = vmatmul.f32.gmra.mxu0 %v7942
    %v8006 = vpop.f32.mrf.mxu0
    %v8007 = vadd.f32 0.0, %v8006
    %8008 = vmatmul.f32.gmra.mxu0 %v7945
    %v8009 = vpop.f32.mrf.mxu0
    %v8010 = vadd.f32 0.0, %v8009
    %8011 = vmatmul.f32.gmra.mxu0 %v7948
    %v8012 = vpop.f32.mrf.mxu0
    %v8013 = vadd.f32 0.0, %v8012
    %8014 = vmatmul.f32.gmra.mxu0 %v7951
    %v8015 = vpop.f32.mrf.mxu0
    %v8016 = vadd.f32 0.0, %v8015
    %8017 = vmatmul.f32.gmra.mxu0 %v7954
    %v8018 = vpop.f32.mrf.mxu0
    %v8019 = vadd.f32 0.0, %v8018
    %8020 = vmatmul.f32.gmra.mxu0 %v7957
    %v8021 = vpop.f32.mrf.mxu0
    %v8022 = vadd.f32 0.0, %v8021
    %8023 = vmatmul.f32.gmra.mxu0 %v7960
    %v8024 = vpop.f32.mrf.mxu0
    %v8025 = vadd.f32 0.0, %v8024
    %8026 = vdwg.mxu0
    %s8027 = scalar_lea.vmem [#allocation2], 192
    %v8028 = vld [vmem:[%s8027] sm:$0xff]
    %v8029 = vld [vmem:[%s8027 + $0x8] sm:$0xff]
    %v8030 = vld [vmem:[%s8027 + $0x10] sm:$0xff]
    %v8031 = vld [vmem:[%s8027 + $0x18] sm:$0xff]
    %8032 = vmatpush.msra.mxu0 0.0
    %8033 = vmatpush.msra.mxu0 0.0
    %8034 = vmatpush.msra.mxu0 0.0
    %8035 = vmatpush.msra.mxu0 0.0
    %8036 = vmatpush.msra.mxu0 0.0
    %8037 = vmatpush.msra.mxu0 0.0
    %8038 = vmatpush.msra.mxu0 0.0
    %8039 = vmatpush.msra.mxu0 0.0
    %8040 = vmatpush.msra.mxu0 0.0
    %8041 = vmatpush.msra.mxu0 0.0
    %8042 = vmatpush.msra.mxu0 0.0
    %8043 = vmatpush.msra.mxu0 0.0
    %8044 = vmatpush.msra.mxu0 %v8031
    %8045 = vmatpush.msra.mxu0 %v8030
    %8046 = vmatpush.msra.mxu0 %v8029
    %8047 = vmatpush.msra.mxu0 %v8028
    %8048 = vmatmul.f32.gmra.mxu0 %v7915
    %v8049 = vpop.f32.mrf.mxu0
    %v8050 = vadd.f32 0.0, %v8049
    %8051 = vmatmul.f32.gmra.mxu0 %v7918
    %v8052 = vpop.f32.mrf.mxu0
    %v8053 = vadd.f32 0.0, %v8052
    %8054 = vmatmul.f32.gmra.mxu0 %v7921
    %v8055 = vpop.f32.mrf.mxu0
    %v8056 = vadd.f32 0.0, %v8055
    %8057 = vmatmul.f32.gmra.mxu0 %v7924
    %v8058 = vpop.f32.mrf.mxu0
    %v8059 = vadd.f32 0.0, %v8058
    %8060 = vmatmul.f32.gmra.mxu0 %v7927
    %v8061 = vpop.f32.mrf.mxu0
    %v8062 = vadd.f32 0.0, %v8061
    %8063 = vmatmul.f32.gmra.mxu0 %v7930
    %v8064 = vpop.f32.mrf.mxu0
    %v8065 = vadd.f32 0.0, %v8064
    %8066 = vmatmul.f32.gmra.mxu0 %v7933
    %v8067 = vpop.f32.mrf.mxu0
    %v8068 = vadd.f32 0.0, %v8067
    %8069 = vmatmul.f32.gmra.mxu0 %v7936
    %v8070 = vpop.f32.mrf.mxu0
    %v8071 = vadd.f32 0.0, %v8070
    %8072 = vmatmul.f32.gmra.mxu0 %v7939
    %v8073 = vpop.f32.mrf.mxu0
    %v8074 = vadd.f32 0.0, %v8073
    %8075 = vmatmul.f32.gmra.mxu0 %v7942
    %v8076 = vpop.f32.mrf.mxu0
    %v8077 = vadd.f32 0.0, %v8076
    %8078 = vmatmul.f32.gmra.mxu0 %v7945
    %v8079 = vpop.f32.mrf.mxu0
    %v8080 = vadd.f32 0.0, %v8079
    %8081 = vmatmul.f32.gmra.mxu0 %v7948
    %v8082 = vpop.f32.mrf.mxu0
    %v8083 = vadd.f32 0.0, %v8082
    %8084 = vmatmul.f32.gmra.mxu0 %v7951
    %v8085 = vpop.f32.mrf.mxu0
    %v8086 = vadd.f32 0.0, %v8085
    %8087 = vmatmul.f32.gmra.mxu0 %v7954
    %v8088 = vpop.f32.mrf.mxu0
    %v8089 = vadd.f32 0.0, %v8088
    %8090 = vmatmul.f32.gmra.mxu0 %v7957
    %v8091 = vpop.f32.mrf.mxu0
    %v8092 = vadd.f32 0.0, %v8091
    %8093 = vmatmul.f32.gmra.mxu0 %v7960
    %v8094 = vpop.f32.mrf.mxu0
    %v8095 = vadd.f32 0.0, %v8094
    %8096 = vdwg.mxu0
    %v8098 = vsel %vm296, %v7980, 0
    %v8101 = vsel %vm296, %v7983, 0
    %8103 = vmatpush.xpose.msra.mxu0 0.0
    %8104 = vmatpush.xpose.msra.mxu0 0.0
    %8105 = vmatpush.xpose.msra.mxu0 0.0
    %8106 = vmatpush.xpose.msra.mxu0 0.0
    %8107 = vmatpush.xpose.msra.mxu0 0.0
    %8108 = vmatpush.xpose.msra.mxu0 0.0
    %8109 = vmatpush.xpose.msra.mxu0 0.0
    %8110 = vmatpush.xpose.msra.mxu0 0.0
    %8111 = vmatpush.xpose.msra.mxu0 0.0
    %8112 = vmatpush.xpose.msra.mxu0 0.0
    %8113 = vmatpush.xpose.msra.mxu0 0.0
    %8114 = vmatpush.xpose.msra.mxu0 0.0
    %8115 = vmatpush.xpose.msra.mxu0 0.0
    %8116 = vmatpush.xpose.msra.mxu0 0.0
    %8117 = vmatpush.xpose.msra.mxu0 %v7918
    %8118 = vmatpush.xpose.msra.mxu0 %v7915
    %8119 = vmatmul.f32.gmra.mxu0 %v8098
    %v8120 = vpop.f32.mrf.mxu0
    %v8121 = vadd.f32 0.0, %v8120
    %8122 = vmatmul.f32.gmra.mxu0 %v8101
    %v8123 = vpop.f32.mrf.mxu0
    %v8124 = vadd.f32 0.0, %v8123
    %8125 = vdwg.mxu0
    %v8127 = vsel %vm296, %v7986, 0
    %v8130 = vsel %vm296, %v7989, 0
    %8132 = vmatpush.xpose.msra.mxu0 0.0
    %8133 = vmatpush.xpose.msra.mxu0 0.0
    %8134 = vmatpush.xpose.msra.mxu0 0.0
    %8135 = vmatpush.xpose.msra.mxu0 0.0
    %8136 = vmatpush.xpose.msra.mxu0 0.0
    %8137 = vmatpush.xpose.msra.mxu0 0.0
    %8138 = vmatpush.xpose.msra.mxu0 0.0
    %8139 = vmatpush.xpose.msra.mxu0 0.0
    %8140 = vmatpush.xpose.msra.mxu0 0.0
    %8141 = vmatpush.xpose.msra.mxu0 0.0
    %8142 = vmatpush.xpose.msra.mxu0 0.0
    %8143 = vmatpush.xpose.msra.mxu0 0.0
    %8144 = vmatpush.xpose.msra.mxu0 0.0
    %8145 = vmatpush.xpose.msra.mxu0 0.0
    %8146 = vmatpush.xpose.msra.mxu0 %v7924
    %8147 = vmatpush.xpose.msra.mxu0 %v7921
    %8148 = vmatmul.f32.gmra.mxu0 %v8127
    %v8149 = vpop.f32.mrf.mxu0
    %v8150 = vadd.f32 0.0, %v8149
    %8151 = vmatmul.f32.gmra.mxu0 %v8130
    %v8152 = vpop.f32.mrf.mxu0
    %v8153 = vadd.f32 0.0, %v8152
    %8154 = vdwg.mxu0
    %v8156 = vsel %vm296, %v7992, 0
    %v8159 = vsel %vm296, %v7995, 0
    %8161 = vmatpush.xpose.msra.mxu0 0.0
    %8162 = vmatpush.xpose.msra.mxu0 0.0
    %8163 = vmatpush.xpose.msra.mxu0 0.0
    %8164 = vmatpush.xpose.msra.mxu0 0.0
    %8165 = vmatpush.xpose.msra.mxu0 0.0
    %8166 = vmatpush.xpose.msra.mxu0 0.0
    %8167 = vmatpush.xpose.msra.mxu0 0.0
    %8168 = vmatpush.xpose.msra.mxu0 0.0
    %8169 = vmatpush.xpose.msra.mxu0 0.0
    %8170 = vmatpush.xpose.msra.mxu0 0.0
    %8171 = vmatpush.xpose.msra.mxu0 0.0
    %8172 = vmatpush.xpose.msra.mxu0 0.0
    %8173 = vmatpush.xpose.msra.mxu0 0.0
    %8174 = vmatpush.xpose.msra.mxu0 0.0
    %8175 = vmatpush.xpose.msra.mxu0 %v7930
    %8176 = vmatpush.xpose.msra.mxu0 %v7927
    %8177 = vmatmul.f32.gmra.mxu0 %v8156
    %v8178 = vpop.f32.mrf.mxu0
    %v8179 = vadd.f32 0.0, %v8178
    %8180 = vmatmul.f32.gmra.mxu0 %v8159
    %v8181 = vpop.f32.mrf.mxu0
    %v8182 = vadd.f32 0.0, %v8181
    %8183 = vdwg.mxu0
    %v8185 = vsel %vm296, %v7998, 0
    %v8188 = vsel %vm296, %v8001, 0
    %8190 = vmatpush.xpose.msra.mxu0 0.0
    %8191 = vmatpush.xpose.msra.mxu0 0.0
    %8192 = vmatpush.xpose.msra.mxu0 0.0
    %8193 = vmatpush.xpose.msra.mxu0 0.0
    %8194 = vmatpush.xpose.msra.mxu0 0.0
    %8195 = vmatpush.xpose.msra.mxu0 0.0
    %8196 = vmatpush.xpose.msra.mxu0 0.0
    %8197 = vmatpush.xpose.msra.mxu0 0.0
    %8198 = vmatpush.xpose.msra.mxu0 0.0
    %8199 = vmatpush.xpose.msra.mxu0 0.0
    %8200 = vmatpush.xpose.msra.mxu0 0.0
    %8201 = vmatpush.xpose.msra.mxu0 0.0
    %8202 = vmatpush.xpose.msra.mxu0 0.0
    %8203 = vmatpush.xpose.msra.mxu0 0.0
    %8204 = vmatpush.xpose.msra.mxu0 %v7936
    %8205 = vmatpush.xpose.msra.mxu0 %v7933
    %8206 = vmatmul.f32.gmra.mxu0 %v8185
    %v8207 = vpop.f32.mrf.mxu0
    %v8208 = vadd.f32 0.0, %v8207
    %8209 = vmatmul.f32.gmra.mxu0 %v8188
    %v8210 = vpop.f32.mrf.mxu0
    %v8211 = vadd.f32 0.0, %v8210
    %8212 = vdwg.mxu0
    %v8214 = vsel %vm296, %v8004, 0
    %v8217 = vsel %vm296, %v8007, 0
    %8219 = vmatpush.xpose.msra.mxu0 0.0
    %8220 = vmatpush.xpose.msra.mxu0 0.0
    %8221 = vmatpush.xpose.msra.mxu0 0.0
    %8222 = vmatpush.xpose.msra.mxu0 0.0
    %8223 = vmatpush.xpose.msra.mxu0 0.0
    %8224 = vmatpush.xpose.msra.mxu0 0.0
    %8225 = vmatpush.xpose.msra.mxu0 0.0
    %8226 = vmatpush.xpose.msra.mxu0 0.0
    %8227 = vmatpush.xpose.msra.mxu0 0.0
    %8228 = vmatpush.xpose.msra.mxu0 0.0
    %8229 = vmatpush.xpose.msra.mxu0 0.0
    %8230 = vmatpush.xpose.msra.mxu0 0.0
    %8231 = vmatpush.xpose.msra.mxu0 0.0
    %8232 = vmatpush.xpose.msra.mxu0 0.0
    %8233 = vmatpush.xpose.msra.mxu0 %v7942
    %8234 = vmatpush.xpose.msra.mxu0 %v7939
    %8235 = vmatmul.f32.gmra.mxu0 %v8214
    %v8236 = vpop.f32.mrf.mxu0
    %v8237 = vadd.f32 0.0, %v8236
    %8238 = vmatmul.f32.gmra.mxu0 %v8217
    %v8239 = vpop.f32.mrf.mxu0
    %v8240 = vadd.f32 0.0, %v8239
    %8241 = vdwg.mxu0
    %v8243 = vsel %vm296, %v8010, 0
    %v8246 = vsel %vm296, %v8013, 0
    %8248 = vmatpush.xpose.msra.mxu0 0.0
    %8249 = vmatpush.xpose.msra.mxu0 0.0
    %8250 = vmatpush.xpose.msra.mxu0 0.0
    %8251 = vmatpush.xpose.msra.mxu0 0.0
    %8252 = vmatpush.xpose.msra.mxu0 0.0
    %8253 = vmatpush.xpose.msra.mxu0 0.0
    %8254 = vmatpush.xpose.msra.mxu0 0.0
    %8255 = vmatpush.xpose.msra.mxu0 0.0
    %8256 = vmatpush.xpose.msra.mxu0 0.0
    %8257 = vmatpush.xpose.msra.mxu0 0.0
    %8258 = vmatpush.xpose.msra.mxu0 0.0
    %8259 = vmatpush.xpose.msra.mxu0 0.0
    %8260 = vmatpush.xpose.msra.mxu0 0.0
    %8261 = vmatpush.xpose.msra.mxu0 0.0
    %8262 = vmatpush.xpose.msra.mxu0 %v7948
    %8263 = vmatpush.xpose.msra.mxu0 %v7945
    %8264 = vmatmul.f32.gmra.mxu0 %v8243
    %v8265 = vpop.f32.mrf.mxu0
    %v8266 = vadd.f32 0.0, %v8265
    %8267 = vmatmul.f32.gmra.mxu0 %v8246
    %v8268 = vpop.f32.mrf.mxu0
    %v8269 = vadd.f32 0.0, %v8268
    %8270 = vdwg.mxu0
    %v8272 = vsel %vm296, %v8016, 0
    %v8275 = vsel %vm296, %v8019, 0
    %8277 = vmatpush.xpose.msra.mxu0 0.0
    %8278 = vmatpush.xpose.msra.mxu0 0.0
    %8279 = vmatpush.xpose.msra.mxu0 0.0
    %8280 = vmatpush.xpose.msra.mxu0 0.0
    %8281 = vmatpush.xpose.msra.mxu0 0.0
    %8282 = vmatpush.xpose.msra.mxu0 0.0
    %8283 = vmatpush.xpose.msra.mxu0 0.0
    %8284 = vmatpush.xpose.msra.mxu0 0.0
    %8285 = vmatpush.xpose.msra.mxu0 0.0
    %8286 = vmatpush.xpose.msra.mxu0 0.0
    %8287 = vmatpush.xpose.msra.mxu0 0.0
    %8288 = vmatpush.xpose.msra.mxu0 0.0
    %8289 = vmatpush.xpose.msra.mxu0 0.0
    %8290 = vmatpush.xpose.msra.mxu0 0.0
    %8291 = vmatpush.xpose.msra.mxu0 %v7954
    %8292 = vmatpush.xpose.msra.mxu0 %v7951
    %8293 = vmatmul.f32.gmra.mxu0 %v8272
    %v8294 = vpop.f32.mrf.mxu0
    %v8295 = vadd.f32 0.0, %v8294
    %8296 = vmatmul.f32.gmra.mxu0 %v8275
    %v8297 = vpop.f32.mrf.mxu0
    %v8298 = vadd.f32 0.0, %v8297
    %8299 = vdwg.mxu0
    %v8301 = vsel %vm296, %v8022, 0
    %v8304 = vsel %vm296, %v8025, 0
    %8306 = vmatpush.xpose.msra.mxu0 0.0
    %8307 = vmatpush.xpose.msra.mxu0 0.0
    %8308 = vmatpush.xpose.msra.mxu0 0.0
    %8309 = vmatpush.xpose.msra.mxu0 0.0
    %8310 = vmatpush.xpose.msra.mxu0 0.0
    %8311 = vmatpush.xpose.msra.mxu0 0.0
    %8312 = vmatpush.xpose.msra.mxu0 0.0
    %8313 = vmatpush.xpose.msra.mxu0 0.0
    %8314 = vmatpush.xpose.msra.mxu0 0.0
    %8315 = vmatpush.xpose.msra.mxu0 0.0
    %8316 = vmatpush.xpose.msra.mxu0 0.0
    %8317 = vmatpush.xpose.msra.mxu0 0.0
    %8318 = vmatpush.xpose.msra.mxu0 0.0
    %8319 = vmatpush.xpose.msra.mxu0 0.0
    %8320 = vmatpush.xpose.msra.mxu0 %v7960
    %8321 = vmatpush.xpose.msra.mxu0 %v7957
    %8322 = vmatmul.f32.gmra.mxu0 %v8301
    %v8323 = vpop.f32.mrf.mxu0
    %v8324 = vadd.f32 0.0, %v8323
    %8325 = vmatmul.f32.gmra.mxu0 %v8304
    %v8326 = vpop.f32.mrf.mxu0
    %v8327 = vadd.f32 0.0, %v8326
    %8328 = vdwg.mxu0
    %v8329 = vmul.f32 %v8121, 0.31622776
    %v8330 = vmul.f32 %v8124, 0.31622776
    %v8331 = vmul.f32 %v8150, 0.31622776
    %v8332 = vmul.f32 %v8153, 0.31622776
    %v8333 = vmul.f32 %v8179, 0.31622776
    %v8334 = vmul.f32 %v8182, 0.31622776
    %v8335 = vmul.f32 %v8208, 0.31622776
    %v8336 = vmul.f32 %v8211, 0.31622776
    %v8337 = vmul.f32 %v8237, 0.31622776
    %v8338 = vmul.f32 %v8240, 0.31622776
    %v8339 = vmul.f32 %v8266, 0.31622776
    %v8340 = vmul.f32 %v8269, 0.31622776
    %v8341 = vmul.f32 %v8295, 0.31622776
    %v8342 = vmul.f32 %v8298, 0.31622776
    %v8343 = vmul.f32 %v8324, 0.31622776
    %v8344 = vmul.f32 %v8327, 0.31622776
    %v8345 = vsel %vm1150, %v8329, -1e+30
    %v8346 = vsel %vm1151, %v8330, -1e+30
    %v8347 = vsel %vm1150, %v8331, -1e+30
    %v8348 = vsel %vm1151, %v8332, -1e+30
    %v8349 = vsel %vm1150, %v8333, -1e+30
    %v8350 = vsel %vm1151, %v8334, -1e+30
    %v8351 = vsel %vm1150, %v8335, -1e+30
    %v8352 = vsel %vm1151, %v8336, -1e+30
    %v8353 = vsel %vm1150, %v8337, -1e+30
    %v8354 = vsel %vm1151, %v8338, -1e+30
    %v8355 = vsel %vm1150, %v8339, -1e+30
    %v8356 = vsel %vm1151, %v8340, -1e+30
    %v8357 = vsel %vm1150, %v8341, -1e+30
    %v8358 = vsel %vm1151, %v8342, -1e+30
    %v8359 = vsel %vm1150, %v8343, -1e+30
    %v8360 = vsel %vm1151, %v8344, -1e+30
    %v8361 = vsel %vm1168, %v8345, -inf
    %8362 = vmax.xlane.f32.xlu0 %v8361
    %v8363 = vpop.xlane.xlu0 %8362
    %v8364 = vsel %vm1168, %v8346, -inf
    %8365 = vmax.xlane.f32.xlu0 %v8364
    %v8366 = vpop.xlane.xlu0 %8365
    %v8367 = vsel %vm1168, %v8347, -inf
    %8368 = vmax.xlane.f32.xlu0 %v8367
    %v8369 = vpop.xlane.xlu0 %8368
    %v8370 = vsel %vm1168, %v8348, -inf
    %8371 = vmax.xlane.f32.xlu0 %v8370
    %v8372 = vpop.xlane.xlu0 %8371
    %v8373 = vsel %vm1168, %v8349, -inf
    %8374 = vmax.xlane.f32.xlu0 %v8373
    %v8375 = vpop.xlane.xlu0 %8374
    %v8376 = vsel %vm1168, %v8350, -inf
    %8377 = vmax.xlane.f32.xlu0 %v8376
    %v8378 = vpop.xlane.xlu0 %8377
    %v8379 = vsel %vm1168, %v8351, -inf
    %8380 = vmax.xlane.f32.xlu0 %v8379
    %v8381 = vpop.xlane.xlu0 %8380
    %v8382 = vsel %vm1168, %v8352, -inf
    %8383 = vmax.xlane.f32.xlu0 %v8382
    %v8384 = vpop.xlane.xlu0 %8383
    %v8385 = vsel %vm1168, %v8353, -inf
    %8386 = vmax.xlane.f32.xlu0 %v8385
    %v8387 = vpop.xlane.xlu0 %8386
    %v8388 = vsel %vm1168, %v8354, -inf
    %8389 = vmax.xlane.f32.xlu0 %v8388
    %v8390 = vpop.xlane.xlu0 %8389
    %v8391 = vsel %vm1168, %v8355, -inf
    %8392 = vmax.xlane.f32.xlu0 %v8391
    %v8393 = vpop.xlane.xlu0 %8392
    %v8394 = vsel %vm1168, %v8356, -inf
    %8395 = vmax.xlane.f32.xlu0 %v8394
    %v8396 = vpop.xlane.xlu0 %8395
    %v8397 = vsel %vm1168, %v8357, -inf
    %8398 = vmax.xlane.f32.xlu0 %v8397
    %v8399 = vpop.xlane.xlu0 %8398
    %v8400 = vsel %vm1168, %v8358, -inf
    %8401 = vmax.xlane.f32.xlu0 %v8400
    %v8402 = vpop.xlane.xlu0 %8401
    %v8403 = vsel %vm1168, %v8359, -inf
    %8404 = vmax.xlane.f32.xlu0 %v8403
    %v8405 = vpop.xlane.xlu0 %8404
    %v8406 = vsel %vm1168, %v8360, -inf
    %8407 = vmax.xlane.f32.xlu0 %v8406
    %v8408 = vpop.xlane.xlu0 %8407
    %v8409 = vsub.f32 %v8345, %v8363
    %v8410 = vsub.f32 %v8346, %v8366
    %v8411 = vsub.f32 %v8347, %v8369
    %v8412 = vsub.f32 %v8348, %v8372
    %v8413 = vsub.f32 %v8349, %v8375
    %v8414 = vsub.f32 %v8350, %v8378
    %v8415 = vsub.f32 %v8351, %v8381
    %v8416 = vsub.f32 %v8352, %v8384
    %v8417 = vsub.f32 %v8353, %v8387
    %v8418 = vsub.f32 %v8354, %v8390
    %v8419 = vsub.f32 %v8355, %v8393
    %v8420 = vsub.f32 %v8356, %v8396
    %v8421 = vsub.f32 %v8357, %v8399
    %v8422 = vsub.f32 %v8358, %v8402
    %v8423 = vsub.f32 %v8359, %v8405
    %v8424 = vsub.f32 %v8360, %v8408
    %v8425 = vmul.f32 %v8409, 1.442695
    %v8426 = vpow.pop %v8425
    %v8427 = vmul.f32 %v8410, 1.442695
    %v8428 = vpow.pop %v8427
    %v8429 = vmul.f32 %v8411, 1.442695
    %v8430 = vpow.pop %v8429
    %v8431 = vmul.f32 %v8412, 1.442695
    %v8432 = vpow.pop %v8431
    %v8433 = vmul.f32 %v8413, 1.442695
    %v8434 = vpow.pop %v8433
    %v8435 = vmul.f32 %v8414, 1.442695
    %v8436 = vpow.pop %v8435
    %v8437 = vmul.f32 %v8415, 1.442695
    %v8438 = vpow.pop %v8437
    %v8439 = vmul.f32 %v8416, 1.442695
    %v8440 = vpow.pop %v8439
    %v8441 = vmul.f32 %v8417, 1.442695
    %v8442 = vpow.pop %v8441
    %v8443 = vmul.f32 %v8418, 1.442695
    %v8444 = vpow.pop %v8443
    %v8445 = vmul.f32 %v8419, 1.442695
    %v8446 = vpow.pop %v8445
    %v8447 = vmul.f32 %v8420, 1.442695
    %v8448 = vpow.pop %v8447
    %v8449 = vmul.f32 %v8421, 1.442695
    %v8450 = vpow.pop %v8449
    %v8451 = vmul.f32 %v8422, 1.442695
    %v8452 = vpow.pop %v8451
    %v8453 = vmul.f32 %v8423, 1.442695
    %v8454 = vpow.pop %v8453
    %v8455 = vmul.f32 %v8424, 1.442695
    %v8456 = vpow.pop %v8455
    %v8457 = vsel %vm1168, %v8426, 0.0
    %8458 = vadd.xlane.f32.xlu0 %v8457
    %v8459 = vpop.xlane.xlu0 %8458
    %v8460 = vsel %vm1168, %v8428, 0.0
    %8461 = vadd.xlane.f32.xlu0 %v8460
    %v8462 = vpop.xlane.xlu0 %8461
    %v8463 = vsel %vm1168, %v8430, 0.0
    %8464 = vadd.xlane.f32.xlu0 %v8463
    %v8465 = vpop.xlane.xlu0 %8464
    %v8466 = vsel %vm1168, %v8432, 0.0
    %8467 = vadd.xlane.f32.xlu0 %v8466
    %v8468 = vpop.xlane.xlu0 %8467
    %v8469 = vsel %vm1168, %v8434, 0.0
    %8470 = vadd.xlane.f32.xlu0 %v8469
    %v8471 = vpop.xlane.xlu0 %8470
    %v8472 = vsel %vm1168, %v8436, 0.0
    %8473 = vadd.xlane.f32.xlu0 %v8472
    %v8474 = vpop.xlane.xlu0 %8473
    %v8475 = vsel %vm1168, %v8438, 0.0
    %8476 = vadd.xlane.f32.xlu0 %v8475
    %v8477 = vpop.xlane.xlu0 %8476
    %v8478 = vsel %vm1168, %v8440, 0.0
    %8479 = vadd.xlane.f32.xlu0 %v8478
    %v8480 = vpop.xlane.xlu0 %8479
    %v8481 = vsel %vm1168, %v8442, 0.0
    %8482 = vadd.xlane.f32.xlu0 %v8481
    %v8483 = vpop.xlane.xlu0 %8482
    %v8484 = vsel %vm1168, %v8444, 0.0
    %8485 = vadd.xlane.f32.xlu0 %v8484
    %v8486 = vpop.xlane.xlu0 %8485
    %v8487 = vsel %vm1168, %v8446, 0.0
    %8488 = vadd.xlane.f32.xlu0 %v8487
    %v8489 = vpop.xlane.xlu0 %8488
    %v8490 = vsel %vm1168, %v8448, 0.0
    %8491 = vadd.xlane.f32.xlu0 %v8490
    %v8492 = vpop.xlane.xlu0 %8491
    %v8493 = vsel %vm1168, %v8450, 0.0
    %8494 = vadd.xlane.f32.xlu0 %v8493
    %v8495 = vpop.xlane.xlu0 %8494
    %v8496 = vsel %vm1168, %v8452, 0.0
    %8497 = vadd.xlane.f32.xlu0 %v8496
    %v8498 = vpop.xlane.xlu0 %8497
    %v8499 = vsel %vm1168, %v8454, 0.0
    %8500 = vadd.xlane.f32.xlu0 %v8499
    %v8501 = vpop.xlane.xlu0 %8500
    %v8502 = vsel %vm1168, %v8456, 0.0
    %8503 = vadd.xlane.f32.xlu0 %v8502
    %v8504 = vpop.xlane.xlu0 %8503
    %v8505 = vrcp.pop %v8459
    %v8506 = vrcp.pop %v8462
    %v8507 = vrcp.pop %v8465
    %v8508 = vrcp.pop %v8468
    %v8509 = vrcp.pop %v8471
    %v8510 = vrcp.pop %v8474
    %v8511 = vrcp.pop %v8477
    %v8512 = vrcp.pop %v8480
    %v8513 = vrcp.pop %v8483
    %v8514 = vrcp.pop %v8486
    %v8515 = vrcp.pop %v8489
    %v8516 = vrcp.pop %v8492
    %v8517 = vrcp.pop %v8495
    %v8518 = vrcp.pop %v8498
    %v8519 = vrcp.pop %v8501
    %v8520 = vrcp.pop %v8504
    %v8521 = vmul.f32 %v8426, %v8505
    %v8522 = vmul.f32 %v8428, %v8506
    %v8523 = vmul.f32 %v8430, %v8507
    %v8524 = vmul.f32 %v8432, %v8508
    %v8525 = vmul.f32 %v8434, %v8509
    %v8526 = vmul.f32 %v8436, %v8510
    %v8527 = vmul.f32 %v8438, %v8511
    %v8528 = vmul.f32 %v8440, %v8512
    %v8529 = vmul.f32 %v8442, %v8513
    %v8530 = vmul.f32 %v8444, %v8514
    %v8531 = vmul.f32 %v8446, %v8515
    %v8532 = vmul.f32 %v8448, %v8516
    %v8533 = vmul.f32 %v8450, %v8517
    %v8534 = vmul.f32 %v8452, %v8518
    %v8535 = vmul.f32 %v8454, %v8519
    %v8536 = vmul.f32 %v8456, %v8520
    %v8538 = vsel %vm1168, %v8521, 0
    %v8541 = vsel %vm1168, %v8522, 0
    %8543 = vmatpush.msra.mxu0 0.0
    %8544 = vmatpush.msra.mxu0 0.0
    %8545 = vmatpush.msra.mxu0 0.0
    %8546 = vmatpush.msra.mxu0 0.0
    %8547 = vmatpush.msra.mxu0 0.0
    %8548 = vmatpush.msra.mxu0 0.0
    %8549 = vmatpush.msra.mxu0 0.0
    %8550 = vmatpush.msra.mxu0 0.0
    %8551 = vmatpush.msra.mxu0 0.0
    %8552 = vmatpush.msra.mxu0 0.0
    %8553 = vmatpush.msra.mxu0 0.0
    %8554 = vmatpush.msra.mxu0 0.0
    %8555 = vmatpush.msra.mxu0 0.0
    %8556 = vmatpush.msra.mxu0 0.0
    %8557 = vmatpush.msra.mxu0 %v8053
    %8558 = vmatpush.msra.mxu0 %v8050
    %8559 = vmatmul.f32.gmra.mxu0 %v8538
    %v8560 = vpop.f32.mrf.mxu0
    %v8561 = vadd.f32 0.0, %v8560
    %8562 = vmatmul.f32.gmra.mxu0 %v8541
    %v8563 = vpop.f32.mrf.mxu0
    %v8564 = vadd.f32 0.0, %v8563
    %8565 = vdwg.mxu0
    %v8567 = vsel %vm1168, %v8523, 0
    %v8570 = vsel %vm1168, %v8524, 0
    %8572 = vmatpush.msra.mxu0 0.0
    %8573 = vmatpush.msra.mxu0 0.0
    %8574 = vmatpush.msra.mxu0 0.0
    %8575 = vmatpush.msra.mxu0 0.0
    %8576 = vmatpush.msra.mxu0 0.0
    %8577 = vmatpush.msra.mxu0 0.0
    %8578 = vmatpush.msra.mxu0 0.0
    %8579 = vmatpush.msra.mxu0 0.0
    %8580 = vmatpush.msra.mxu0 0.0
    %8581 = vmatpush.msra.mxu0 0.0
    %8582 = vmatpush.msra.mxu0 0.0
    %8583 = vmatpush.msra.mxu0 0.0
    %8584 = vmatpush.msra.mxu0 0.0
    %8585 = vmatpush.msra.mxu0 0.0
    %8586 = vmatpush.msra.mxu0 %v8059
    %8587 = vmatpush.msra.mxu0 %v8056
    %8588 = vmatmul.f32.gmra.mxu0 %v8567
    %v8589 = vpop.f32.mrf.mxu0
    %v8590 = vadd.f32 0.0, %v8589
    %8591 = vmatmul.f32.gmra.mxu0 %v8570
    %v8592 = vpop.f32.mrf.mxu0
    %v8593 = vadd.f32 0.0, %v8592
    %8594 = vdwg.mxu0
    %v8596 = vsel %vm1168, %v8525, 0
    %v8599 = vsel %vm1168, %v8526, 0
    %8601 = vmatpush.msra.mxu0 0.0
    %8602 = vmatpush.msra.mxu0 0.0
    %8603 = vmatpush.msra.mxu0 0.0
    %8604 = vmatpush.msra.mxu0 0.0
    %8605 = vmatpush.msra.mxu0 0.0
    %8606 = vmatpush.msra.mxu0 0.0
    %8607 = vmatpush.msra.mxu0 0.0
    %8608 = vmatpush.msra.mxu0 0.0
    %8609 = vmatpush.msra.mxu0 0.0
    %8610 = vmatpush.msra.mxu0 0.0
    %8611 = vmatpush.msra.mxu0 0.0
    %8612 = vmatpush.msra.mxu0 0.0
    %8613 = vmatpush.msra.mxu0 0.0
    %8614 = vmatpush.msra.mxu0 0.0
    %8615 = vmatpush.msra.mxu0 %v8065
    %8616 = vmatpush.msra.mxu0 %v8062
    %8617 = vmatmul.f32.gmra.mxu0 %v8596
    %v8618 = vpop.f32.mrf.mxu0
    %v8619 = vadd.f32 0.0, %v8618
    %8620 = vmatmul.f32.gmra.mxu0 %v8599
    %v8621 = vpop.f32.mrf.mxu0
    %v8622 = vadd.f32 0.0, %v8621
    %8623 = vdwg.mxu0
    %v8625 = vsel %vm1168, %v8527, 0
    %v8628 = vsel %vm1168, %v8528, 0
    %8630 = vmatpush.msra.mxu0 0.0
    %8631 = vmatpush.msra.mxu0 0.0
    %8632 = vmatpush.msra.mxu0 0.0
    %8633 = vmatpush.msra.mxu0 0.0
    %8634 = vmatpush.msra.mxu0 0.0
    %8635 = vmatpush.msra.mxu0 0.0
    %8636 = vmatpush.msra.mxu0 0.0
    %8637 = vmatpush.msra.mxu0 0.0
    %8638 = vmatpush.msra.mxu0 0.0
    %8639 = vmatpush.msra.mxu0 0.0
    %8640 = vmatpush.msra.mxu0 0.0
    %8641 = vmatpush.msra.mxu0 0.0
    %8642 = vmatpush.msra.mxu0 0.0
    %8643 = vmatpush.msra.mxu0 0.0
    %8644 = vmatpush.msra.mxu0 %v8071
    %8645 = vmatpush.msra.mxu0 %v8068
    %8646 = vmatmul.f32.gmra.mxu0 %v8625
    %v8647 = vpop.f32.mrf.mxu0
    %v8648 = vadd.f32 0.0, %v8647
    %8649 = vmatmul.f32.gmra.mxu0 %v8628
    %v8650 = vpop.f32.mrf.mxu0
    %v8651 = vadd.f32 0.0, %v8650
    %8652 = vdwg.mxu0
    %v8654 = vsel %vm1168, %v8529, 0
    %v8657 = vsel %vm1168, %v8530, 0
    %8659 = vmatpush.msra.mxu0 0.0
    %8660 = vmatpush.msra.mxu0 0.0
    %8661 = vmatpush.msra.mxu0 0.0
    %8662 = vmatpush.msra.mxu0 0.0
    %8663 = vmatpush.msra.mxu0 0.0
    %8664 = vmatpush.msra.mxu0 0.0
    %8665 = vmatpush.msra.mxu0 0.0
    %8666 = vmatpush.msra.mxu0 0.0
    %8667 = vmatpush.msra.mxu0 0.0
    %8668 = vmatpush.msra.mxu0 0.0
    %8669 = vmatpush.msra.mxu0 0.0
    %8670 = vmatpush.msra.mxu0 0.0
    %8671 = vmatpush.msra.mxu0 0.0
    %8672 = vmatpush.msra.mxu0 0.0
    %8673 = vmatpush.msra.mxu0 %v8077
    %8674 = vmatpush.msra.mxu0 %v8074
    %8675 = vmatmul.f32.gmra.mxu0 %v8654
    %v8676 = vpop.f32.mrf.mxu0
    %v8677 = vadd.f32 0.0, %v8676
    %8678 = vmatmul.f32.gmra.mxu0 %v8657
    %v8679 = vpop.f32.mrf.mxu0
    %v8680 = vadd.f32 0.0, %v8679
    %8681 = vdwg.mxu0
    %v8683 = vsel %vm1168, %v8531, 0
    %v8686 = vsel %vm1168, %v8532, 0
    %8688 = vmatpush.msra.mxu0 0.0
    %8689 = vmatpush.msra.mxu0 0.0
    %8690 = vmatpush.msra.mxu0 0.0
    %8691 = vmatpush.msra.mxu0 0.0
    %8692 = vmatpush.msra.mxu0 0.0
    %8693 = vmatpush.msra.mxu0 0.0
    %8694 = vmatpush.msra.mxu0 0.0
    %8695 = vmatpush.msra.mxu0 0.0
    %8696 = vmatpush.msra.mxu0 0.0
    %8697 = vmatpush.msra.mxu0 0.0
    %8698 = vmatpush.msra.mxu0 0.0
    %8699 = vmatpush.msra.mxu0 0.0
    %8700 = vmatpush.msra.mxu0 0.0
    %8701 = vmatpush.msra.mxu0 0.0
    %8702 = vmatpush.msra.mxu0 %v8083
    %8703 = vmatpush.msra.mxu0 %v8080
    %8704 = vmatmul.f32.gmra.mxu0 %v8683
    %v8705 = vpop.f32.mrf.mxu0
    %v8706 = vadd.f32 0.0, %v8705
    %8707 = vmatmul.f32.gmra.mxu0 %v8686
    %v8708 = vpop.f32.mrf.mxu0
    %v8709 = vadd.f32 0.0, %v8708
    %8710 = vdwg.mxu0
    %v8712 = vsel %vm1168, %v8533, 0
    %v8715 = vsel %vm1168, %v8534, 0
    %8717 = vmatpush.msra.mxu0 0.0
    %8718 = vmatpush.msra.mxu0 0.0
    %8719 = vmatpush.msra.mxu0 0.0
    %8720 = vmatpush.msra.mxu0 0.0
    %8721 = vmatpush.msra.mxu0 0.0
    %8722 = vmatpush.msra.mxu0 0.0
    %8723 = vmatpush.msra.mxu0 0.0
    %8724 = vmatpush.msra.mxu0 0.0
    %8725 = vmatpush.msra.mxu0 0.0
    %8726 = vmatpush.msra.mxu0 0.0
    %8727 = vmatpush.msra.mxu0 0.0
    %8728 = vmatpush.msra.mxu0 0.0
    %8729 = vmatpush.msra.mxu0 0.0
    %8730 = vmatpush.msra.mxu0 0.0
    %8731 = vmatpush.msra.mxu0 %v8089
    %8732 = vmatpush.msra.mxu0 %v8086
    %8733 = vmatmul.f32.gmra.mxu0 %v8712
    %v8734 = vpop.f32.mrf.mxu0
    %v8735 = vadd.f32 0.0, %v8734
    %8736 = vmatmul.f32.gmra.mxu0 %v8715
    %v8737 = vpop.f32.mrf.mxu0
    %v8738 = vadd.f32 0.0, %v8737
    %8739 = vdwg.mxu0
    %v8741 = vsel %vm1168, %v8535, 0
    %v8744 = vsel %vm1168, %v8536, 0
    %8746 = vmatpush.msra.mxu0 0.0
    %8747 = vmatpush.msra.mxu0 0.0
    %8748 = vmatpush.msra.mxu0 0.0
    %8749 = vmatpush.msra.mxu0 0.0
    %8750 = vmatpush.msra.mxu0 0.0
    %8751 = vmatpush.msra.mxu0 0.0
    %8752 = vmatpush.msra.mxu0 0.0
    %8753 = vmatpush.msra.mxu0 0.0
    %8754 = vmatpush.msra.mxu0 0.0
    %8755 = vmatpush.msra.mxu0 0.0
    %8756 = vmatpush.msra.mxu0 0.0
    %8757 = vmatpush.msra.mxu0 0.0
    %8758 = vmatpush.msra.mxu0 0.0
    %8759 = vmatpush.msra.mxu0 0.0
    %8760 = vmatpush.msra.mxu0 %v8095
    %8761 = vmatpush.msra.mxu0 %v8092
    %8762 = vmatmul.f32.gmra.mxu0 %v8741
    %v8763 = vpop.f32.mrf.mxu0
    %v8764 = vadd.f32 0.0, %v8763
    %8765 = vmatmul.f32.gmra.mxu0 %v8744
    %v8766 = vpop.f32.mrf.mxu0
    %v8767 = vadd.f32 0.0, %v8766
    %8768 = vdwg.mxu0
    %v8769 = vadd.f32 %v7893, %v8561
    %v8770 = vadd.f32 %v7894, %v8564
    %v8771 = vadd.f32 %v7895, %v8590
    %v8772 = vadd.f32 %v7896, %v8593
    %v8773 = vadd.f32 %v7897, %v8619
    %v8774 = vadd.f32 %v7898, %v8622
    %v8775 = vadd.f32 %v7899, %v8648
    %v8776 = vadd.f32 %v7900, %v8651
    %v8777 = vadd.f32 %v7901, %v8677
    %v8778 = vadd.f32 %v7902, %v8680
    %v8779 = vadd.f32 %v7903, %v8706
    %v8780 = vadd.f32 %v7904, %v8709
    %v8781 = vadd.f32 %v7905, %v8735
    %v8782 = vadd.f32 %v7906, %v8738
    %v8783 = vadd.f32 %v7907, %v8764
    %v8784 = vadd.f32 %v7908, %v8767
    %s8785 = scalar_lea.vmem %s3, 224
    %v8786 = vld [vmem:[%s8785] sm:$0xff]
    %v8787 = vld [vmem:[%s8785 + $0x8] sm:$0xff]
    %v8788 = vld [vmem:[%s8785 + $0x10] sm:$0xff]
    %v8789 = vld [vmem:[%s8785 + $0x18] sm:$0xff]
    %8790 = vmatpush.msra.mxu0 0.0
    %8791 = vmatpush.msra.mxu0 0.0
    %8792 = vmatpush.msra.mxu0 0.0
    %8793 = vmatpush.msra.mxu0 0.0
    %8794 = vmatpush.msra.mxu0 0.0
    %8795 = vmatpush.msra.mxu0 0.0
    %8796 = vmatpush.msra.mxu0 0.0
    %8797 = vmatpush.msra.mxu0 0.0
    %8798 = vmatpush.msra.mxu0 0.0
    %8799 = vmatpush.msra.mxu0 0.0
    %8800 = vmatpush.msra.mxu0 0.0
    %8801 = vmatpush.msra.mxu0 0.0
    %8802 = vmatpush.msra.mxu0 %v8789
    %8803 = vmatpush.msra.mxu0 %v8788
    %8804 = vmatpush.msra.mxu0 %v8787
    %8805 = vmatpush.msra.mxu0 %v8786
    %8806 = vmatmul.f32.gmra.mxu0 %v7915
    %v8807 = vpop.f32.mrf.mxu0
    %v8808 = vadd.f32 0.0, %v8807
    %8809 = vmatmul.f32.gmra.mxu0 %v7918
    %v8810 = vpop.f32.mrf.mxu0
    %v8811 = vadd.f32 0.0, %v8810
    %8812 = vmatmul.f32.gmra.mxu0 %v7921
    %v8813 = vpop.f32.mrf.mxu0
    %v8814 = vadd.f32 0.0, %v8813
    %8815 = vmatmul.f32.gmra.mxu0 %v7924
    %v8816 = vpop.f32.mrf.mxu0
    %v8817 = vadd.f32 0.0, %v8816
    %8818 = vmatmul.f32.gmra.mxu0 %v7927
    %v8819 = vpop.f32.mrf.mxu0
    %v8820 = vadd.f32 0.0, %v8819
    %8821 = vmatmul.f32.gmra.mxu0 %v7930
    %v8822 = vpop.f32.mrf.mxu0
    %v8823 = vadd.f32 0.0, %v8822
    %8824 = vmatmul.f32.gmra.mxu0 %v7933
    %v8825 = vpop.f32.mrf.mxu0
    %v8826 = vadd.f32 0.0, %v8825
    %8827 = vmatmul.f32.gmra.mxu0 %v7936
    %v8828 = vpop.f32.mrf.mxu0
    %v8829 = vadd.f32 0.0, %v8828
    %8830 = vmatmul.f32.gmra.mxu0 %v7939
    %v8831 = vpop.f32.mrf.mxu0
    %v8832 = vadd.f32 0.0, %v8831
    %8833 = vmatmul.f32.gmra.mxu0 %v7942
    %v8834 = vpop.f32.mrf.mxu0
    %v8835 = vadd.f32 0.0, %v8834
    %8836 = vmatmul.f32.gmra.mxu0 %v7945
    %v8837 = vpop.f32.mrf.mxu0
    %v8838 = vadd.f32 0.0, %v8837
    %8839 = vmatmul.f32.gmra.mxu0 %v7948
    %v8840 = vpop.f32.mrf.mxu0
    %v8841 = vadd.f32 0.0, %v8840
    %8842 = vmatmul.f32.gmra.mxu0 %v7951
    %v8843 = vpop.f32.mrf.mxu0
    %v8844 = vadd.f32 0.0, %v8843
    %8845 = vmatmul.f32.gmra.mxu0 %v7954
    %v8846 = vpop.f32.mrf.mxu0
    %v8847 = vadd.f32 0.0, %v8846
    %8848 = vmatmul.f32.gmra.mxu0 %v7957
    %v8849 = vpop.f32.mrf.mxu0
    %v8850 = vadd.f32 0.0, %v8849
    %8851 = vmatmul.f32.gmra.mxu0 %v7960
    %v8852 = vpop.f32.mrf.mxu0
    %v8853 = vadd.f32 0.0, %v8852
    %8854 = vdwg.mxu0
    %s8855 = scalar_lea.vmem [#allocation2], 224
    %v8856 = vld [vmem:[%s8855] sm:$0xff]
    %v8857 = vld [vmem:[%s8855 + $0x8] sm:$0xff]
    %v8858 = vld [vmem:[%s8855 + $0x10] sm:$0xff]
    %v8859 = vld [vmem:[%s8855 + $0x18] sm:$0xff]
    %8860 = vmatpush.msra.mxu0 0.0
    %8861 = vmatpush.msra.mxu0 0.0
    %8862 = vmatpush.msra.mxu0 0.0
    %8863 = vmatpush.msra.mxu0 0.0
    %8864 = vmatpush.msra.mxu0 0.0
    %8865 = vmatpush.msra.mxu0 0.0
    %8866 = vmatpush.msra.mxu0 0.0
    %8867 = vmatpush.msra.mxu0 0.0
    %8868 = vmatpush.msra.mxu0 0.0
    %8869 = vmatpush.msra.mxu0 0.0
    %8870 = vmatpush.msra.mxu0 0.0
    %8871 = vmatpush.msra.mxu0 0.0
    %8872 = vmatpush.msra.mxu0 %v8859
    %8873 = vmatpush.msra.mxu0 %v8858
    %8874 = vmatpush.msra.mxu0 %v8857
    %8875 = vmatpush.msra.mxu0 %v8856
    %8876 = vmatmul.f32.gmra.mxu0 %v7915
    %v8877 = vpop.f32.mrf.mxu0
    %v8878 = vadd.f32 0.0, %v8877
    %8879 = vmatmul.f32.gmra.mxu0 %v7918
    %v8880 = vpop.f32.mrf.mxu0
    %v8881 = vadd.f32 0.0, %v8880
    %8882 = vmatmul.f32.gmra.mxu0 %v7921
    %v8883 = vpop.f32.mrf.mxu0
    %v8884 = vadd.f32 0.0, %v8883
    %8885 = vmatmul.f32.gmra.mxu0 %v7924
    %v8886 = vpop.f32.mrf.mxu0
    %v8887 = vadd.f32 0.0, %v8886
    %8888 = vmatmul.f32.gmra.mxu0 %v7927
    %v8889 = vpop.f32.mrf.mxu0
    %v8890 = vadd.f32 0.0, %v8889
    %8891 = vmatmul.f32.gmra.mxu0 %v7930
    %v8892 = vpop.f32.mrf.mxu0
    %v8893 = vadd.f32 0.0, %v8892
    %8894 = vmatmul.f32.gmra.mxu0 %v7933
    %v8895 = vpop.f32.mrf.mxu0
    %v8896 = vadd.f32 0.0, %v8895
    %8897 = vmatmul.f32.gmra.mxu0 %v7936
    %v8898 = vpop.f32.mrf.mxu0
    %v8899 = vadd.f32 0.0, %v8898
    %8900 = vmatmul.f32.gmra.mxu0 %v7939
    %v8901 = vpop.f32.mrf.mxu0
    %v8902 = vadd.f32 0.0, %v8901
    %8903 = vmatmul.f32.gmra.mxu0 %v7942
    %v8904 = vpop.f32.mrf.mxu0
    %v8905 = vadd.f32 0.0, %v8904
    %8906 = vmatmul.f32.gmra.mxu0 %v7945
    %v8907 = vpop.f32.mrf.mxu0
    %v8908 = vadd.f32 0.0, %v8907
    %8909 = vmatmul.f32.gmra.mxu0 %v7948
    %v8910 = vpop.f32.mrf.mxu0
    %v8911 = vadd.f32 0.0, %v8910
    %8912 = vmatmul.f32.gmra.mxu0 %v7951
    %v8913 = vpop.f32.mrf.mxu0
    %v8914 = vadd.f32 0.0, %v8913
    %8915 = vmatmul.f32.gmra.mxu0 %v7954
    %v8916 = vpop.f32.mrf.mxu0
    %v8917 = vadd.f32 0.0, %v8916
    %8918 = vmatmul.f32.gmra.mxu0 %v7957
    %v8919 = vpop.f32.mrf.mxu0
    %v8920 = vadd.f32 0.0, %v8919
    %8921 = vmatmul.f32.gmra.mxu0 %v7960
    %v8922 = vpop.f32.mrf.mxu0
    %v8923 = vadd.f32 0.0, %v8922
    %8924 = vdwg.mxu0
    %v8926 = vsel %vm296, %v8808, 0
    %v8929 = vsel %vm296, %v8811, 0
    %8931 = vmatpush.xpose.msra.mxu0 0.0
    %8932 = vmatpush.xpose.msra.mxu0 0.0
    %8933 = vmatpush.xpose.msra.mxu0 0.0
    %8934 = vmatpush.xpose.msra.mxu0 0.0
    %8935 = vmatpush.xpose.msra.mxu0 0.0
    %8936 = vmatpush.xpose.msra.mxu0 0.0
    %8937 = vmatpush.xpose.msra.mxu0 0.0
    %8938 = vmatpush.xpose.msra.mxu0 0.0
    %8939 = vmatpush.xpose.msra.mxu0 0.0
    %8940 = vmatpush.xpose.msra.mxu0 0.0
    %8941 = vmatpush.xpose.msra.mxu0 0.0
    %8942 = vmatpush.xpose.msra.mxu0 0.0
    %8943 = vmatpush.xpose.msra.mxu0 0.0
    %8944 = vmatpush.xpose.msra.mxu0 0.0
    %8945 = vmatpush.xpose.msra.mxu0 %v7918
    %8946 = vmatpush.xpose.msra.mxu0 %v7915
    %8947 = vmatmul.f32.gmra.mxu0 %v8926
    %v8948 = vpop.f32.mrf.mxu0
    %v8949 = vadd.f32 0.0, %v8948
    %8950 = vmatmul.f32.gmra.mxu0 %v8929
    %v8951 = vpop.f32.mrf.mxu0
    %v8952 = vadd.f32 0.0, %v8951
    %8953 = vdwg.mxu0
    %v8955 = vsel %vm296, %v8814, 0
    %v8958 = vsel %vm296, %v8817, 0
    %8960 = vmatpush.xpose.msra.mxu0 0.0
    %8961 = vmatpush.xpose.msra.mxu0 0.0
    %8962 = vmatpush.xpose.msra.mxu0 0.0
    %8963 = vmatpush.xpose.msra.mxu0 0.0
    %8964 = vmatpush.xpose.msra.mxu0 0.0
    %8965 = vmatpush.xpose.msra.mxu0 0.0
    %8966 = vmatpush.xpose.msra.mxu0 0.0
    %8967 = vmatpush.xpose.msra.mxu0 0.0
    %8968 = vmatpush.xpose.msra.mxu0 0.0
    %8969 = vmatpush.xpose.msra.mxu0 0.0
    %8970 = vmatpush.xpose.msra.mxu0 0.0
    %8971 = vmatpush.xpose.msra.mxu0 0.0
    %8972 = vmatpush.xpose.msra.mxu0 0.0
    %8973 = vmatpush.xpose.msra.mxu0 0.0
    %8974 = vmatpush.xpose.msra.mxu0 %v7924
    %8975 = vmatpush.xpose.msra.mxu0 %v7921
    %8976 = vmatmul.f32.gmra.mxu0 %v8955
    %v8977 = vpop.f32.mrf.mxu0
    %v8978 = vadd.f32 0.0, %v8977
    %8979 = vmatmul.f32.gmra.mxu0 %v8958
    %v8980 = vpop.f32.mrf.mxu0
    %v8981 = vadd.f32 0.0, %v8980
    %8982 = vdwg.mxu0
    %v8984 = vsel %vm296, %v8820, 0
    %v8987 = vsel %vm296, %v8823, 0
    %8989 = vmatpush.xpose.msra.mxu0 0.0
    %8990 = vmatpush.xpose.msra.mxu0 0.0
    %8991 = vmatpush.xpose.msra.mxu0 0.0
    %8992 = vmatpush.xpose.msra.mxu0 0.0
    %8993 = vmatpush.xpose.msra.mxu0 0.0
    %8994 = vmatpush.xpose.msra.mxu0 0.0
    %8995 = vmatpush.xpose.msra.mxu0 0.0
    %8996 = vmatpush.xpose.msra.mxu0 0.0
    %8997 = vmatpush.xpose.msra.mxu0 0.0
    %8998 = vmatpush.xpose.msra.mxu0 0.0
    %8999 = vmatpush.xpose.msra.mxu0 0.0
    %9000 = vmatpush.xpose.msra.mxu0 0.0
    %9001 = vmatpush.xpose.msra.mxu0 0.0
    %9002 = vmatpush.xpose.msra.mxu0 0.0
    %9003 = vmatpush.xpose.msra.mxu0 %v7930
    %9004 = vmatpush.xpose.msra.mxu0 %v7927
    %9005 = vmatmul.f32.gmra.mxu0 %v8984
    %v9006 = vpop.f32.mrf.mxu0
    %v9007 = vadd.f32 0.0, %v9006
    %9008 = vmatmul.f32.gmra.mxu0 %v8987
    %v9009 = vpop.f32.mrf.mxu0
    %v9010 = vadd.f32 0.0, %v9009
    %9011 = vdwg.mxu0
    %v9013 = vsel %vm296, %v8826, 0
    %v9016 = vsel %vm296, %v8829, 0
    %9018 = vmatpush.xpose.msra.mxu0 0.0
    %9019 = vmatpush.xpose.msra.mxu0 0.0
    %9020 = vmatpush.xpose.msra.mxu0 0.0
    %9021 = vmatpush.xpose.msra.mxu0 0.0
    %9022 = vmatpush.xpose.msra.mxu0 0.0
    %9023 = vmatpush.xpose.msra.mxu0 0.0
    %9024 = vmatpush.xpose.msra.mxu0 0.0
    %9025 = vmatpush.xpose.msra.mxu0 0.0
    %9026 = vmatpush.xpose.msra.mxu0 0.0
    %9027 = vmatpush.xpose.msra.mxu0 0.0
    %9028 = vmatpush.xpose.msra.mxu0 0.0
    %9029 = vmatpush.xpose.msra.mxu0 0.0
    %9030 = vmatpush.xpose.msra.mxu0 0.0
    %9031 = vmatpush.xpose.msra.mxu0 0.0
    %9032 = vmatpush.xpose.msra.mxu0 %v7936
    %9033 = vmatpush.xpose.msra.mxu0 %v7933
    %9034 = vmatmul.f32.gmra.mxu0 %v9013
    %v9035 = vpop.f32.mrf.mxu0
    %v9036 = vadd.f32 0.0, %v9035
    %9037 = vmatmul.f32.gmra.mxu0 %v9016
    %v9038 = vpop.f32.mrf.mxu0
    %v9039 = vadd.f32 0.0, %v9038
    %9040 = vdwg.mxu0
    %v9042 = vsel %vm296, %v8832, 0
    %v9045 = vsel %vm296, %v8835, 0
    %9047 = vmatpush.xpose.msra.mxu0 0.0
    %9048 = vmatpush.xpose.msra.mxu0 0.0
    %9049 = vmatpush.xpose.msra.mxu0 0.0
    %9050 = vmatpush.xpose.msra.mxu0 0.0
    %9051 = vmatpush.xpose.msra.mxu0 0.0
    %9052 = vmatpush.xpose.msra.mxu0 0.0
    %9053 = vmatpush.xpose.msra.mxu0 0.0
    %9054 = vmatpush.xpose.msra.mxu0 0.0
    %9055 = vmatpush.xpose.msra.mxu0 0.0
    %9056 = vmatpush.xpose.msra.mxu0 0.0
    %9057 = vmatpush.xpose.msra.mxu0 0.0
    %9058 = vmatpush.xpose.msra.mxu0 0.0
    %9059 = vmatpush.xpose.msra.mxu0 0.0
    %9060 = vmatpush.xpose.msra.mxu0 0.0
    %9061 = vmatpush.xpose.msra.mxu0 %v7942
    %9062 = vmatpush.xpose.msra.mxu0 %v7939
    %9063 = vmatmul.f32.gmra.mxu0 %v9042
    %v9064 = vpop.f32.mrf.mxu0
    %v9065 = vadd.f32 0.0, %v9064
    %9066 = vmatmul.f32.gmra.mxu0 %v9045
    %v9067 = vpop.f32.mrf.mxu0
    %v9068 = vadd.f32 0.0, %v9067
    %9069 = vdwg.mxu0
    %v9071 = vsel %vm296, %v8838, 0
    %v9074 = vsel %vm296, %v8841, 0
    %9076 = vmatpush.xpose.msra.mxu0 0.0
    %9077 = vmatpush.xpose.msra.mxu0 0.0
    %9078 = vmatpush.xpose.msra.mxu0 0.0
    %9079 = vmatpush.xpose.msra.mxu0 0.0
    %9080 = vmatpush.xpose.msra.mxu0 0.0
    %9081 = vmatpush.xpose.msra.mxu0 0.0
    %9082 = vmatpush.xpose.msra.mxu0 0.0
    %9083 = vmatpush.xpose.msra.mxu0 0.0
    %9084 = vmatpush.xpose.msra.mxu0 0.0
    %9085 = vmatpush.xpose.msra.mxu0 0.0
    %9086 = vmatpush.xpose.msra.mxu0 0.0
    %9087 = vmatpush.xpose.msra.mxu0 0.0
    %9088 = vmatpush.xpose.msra.mxu0 0.0
    %9089 = vmatpush.xpose.msra.mxu0 0.0
    %9090 = vmatpush.xpose.msra.mxu0 %v7948
    %9091 = vmatpush.xpose.msra.mxu0 %v7945
    %9092 = vmatmul.f32.gmra.mxu0 %v9071
    %v9093 = vpop.f32.mrf.mxu0
    %v9094 = vadd.f32 0.0, %v9093
    %9095 = vmatmul.f32.gmra.mxu0 %v9074
    %v9096 = vpop.f32.mrf.mxu0
    %v9097 = vadd.f32 0.0, %v9096
    %9098 = vdwg.mxu0
    %v9100 = vsel %vm296, %v8844, 0
    %v9103 = vsel %vm296, %v8847, 0
    %9105 = vmatpush.xpose.msra.mxu0 0.0
    %9106 = vmatpush.xpose.msra.mxu0 0.0
    %9107 = vmatpush.xpose.msra.mxu0 0.0
    %9108 = vmatpush.xpose.msra.mxu0 0.0
    %9109 = vmatpush.xpose.msra.mxu0 0.0
    %9110 = vmatpush.xpose.msra.mxu0 0.0
    %9111 = vmatpush.xpose.msra.mxu0 0.0
    %9112 = vmatpush.xpose.msra.mxu0 0.0
    %9113 = vmatpush.xpose.msra.mxu0 0.0
    %9114 = vmatpush.xpose.msra.mxu0 0.0
    %9115 = vmatpush.xpose.msra.mxu0 0.0
    %9116 = vmatpush.xpose.msra.mxu0 0.0
    %9117 = vmatpush.xpose.msra.mxu0 0.0
    %9118 = vmatpush.xpose.msra.mxu0 0.0
    %9119 = vmatpush.xpose.msra.mxu0 %v7954
    %9120 = vmatpush.xpose.msra.mxu0 %v7951
    %9121 = vmatmul.f32.gmra.mxu0 %v9100
    %v9122 = vpop.f32.mrf.mxu0
    %v9123 = vadd.f32 0.0, %v9122
    %9124 = vmatmul.f32.gmra.mxu0 %v9103
    %v9125 = vpop.f32.mrf.mxu0
    %v9126 = vadd.f32 0.0, %v9125
    %9127 = vdwg.mxu0
    %v9129 = vsel %vm296, %v8850, 0
    %v9132 = vsel %vm296, %v8853, 0
    %9134 = vmatpush.xpose.msra.mxu0 0.0
    %9135 = vmatpush.xpose.msra.mxu0 0.0
    %9136 = vmatpush.xpose.msra.mxu0 0.0
    %9137 = vmatpush.xpose.msra.mxu0 0.0
    %9138 = vmatpush.xpose.msra.mxu0 0.0
    %9139 = vmatpush.xpose.msra.mxu0 0.0
    %9140 = vmatpush.xpose.msra.mxu0 0.0
    %9141 = vmatpush.xpose.msra.mxu0 0.0
    %9142 = vmatpush.xpose.msra.mxu0 0.0
    %9143 = vmatpush.xpose.msra.mxu0 0.0
    %9144 = vmatpush.xpose.msra.mxu0 0.0
    %9145 = vmatpush.xpose.msra.mxu0 0.0
    %9146 = vmatpush.xpose.msra.mxu0 0.0
    %9147 = vmatpush.xpose.msra.mxu0 0.0
    %9148 = vmatpush.xpose.msra.mxu0 %v7960
    %9149 = vmatpush.xpose.msra.mxu0 %v7957
    %9150 = vmatmul.f32.gmra.mxu0 %v9129
    %v9151 = vpop.f32.mrf.mxu0
    %v9152 = vadd.f32 0.0, %v9151
    %9153 = vmatmul.f32.gmra.mxu0 %v9132
    %v9154 = vpop.f32.mrf.mxu0
    %v9155 = vadd.f32 0.0, %v9154
    %9156 = vdwg.mxu0
    %v9157 = vmul.f32 %v8949, 0.31622776
    %v9158 = vmul.f32 %v8952, 0.31622776
    %v9159 = vmul.f32 %v8978, 0.31622776
    %v9160 = vmul.f32 %v8981, 0.31622776
    %v9161 = vmul.f32 %v9007, 0.31622776
    %v9162 = vmul.f32 %v9010, 0.31622776
    %v9163 = vmul.f32 %v9036, 0.31622776
    %v9164 = vmul.f32 %v9039, 0.31622776
    %v9165 = vmul.f32 %v9065, 0.31622776
    %v9166 = vmul.f32 %v9068, 0.31622776
    %v9167 = vmul.f32 %v9094, 0.31622776
    %v9168 = vmul.f32 %v9097, 0.31622776
    %v9169 = vmul.f32 %v9123, 0.31622776
    %v9170 = vmul.f32 %v9126, 0.31622776
    %v9171 = vmul.f32 %v9152, 0.31622776
    %v9172 = vmul.f32 %v9155, 0.31622776
    %v9173 = vsel %vm1150, %v9157, -1e+30
    %v9174 = vsel %vm1151, %v9158, -1e+30
    %v9175 = vsel %vm1150, %v9159, -1e+30
    %v9176 = vsel %vm1151, %v9160, -1e+30
    %v9177 = vsel %vm1150, %v9161, -1e+30
    %v9178 = vsel %vm1151, %v9162, -1e+30
    %v9179 = vsel %vm1150, %v9163, -1e+30
    %v9180 = vsel %vm1151, %v9164, -1e+30
    %v9181 = vsel %vm1150, %v9165, -1e+30
    %v9182 = vsel %vm1151, %v9166, -1e+30
    %v9183 = vsel %vm1150, %v9167, -1e+30
    %v9184 = vsel %vm1151, %v9168, -1e+30
    %v9185 = vsel %vm1150, %v9169, -1e+30
    %v9186 = vsel %vm1151, %v9170, -1e+30
    %v9187 = vsel %vm1150, %v9171, -1e+30
    %v9188 = vsel %vm1151, %v9172, -1e+30
    %v9189 = vsel %vm1168, %v9173, -inf
    %9190 = vmax.xlane.f32.xlu0 %v9189
    %v9191 = vpop.xlane.xlu0 %9190
    %v9192 = vsel %vm1168, %v9174, -inf
    %9193 = vmax.xlane.f32.xlu0 %v9192
    %v9194 = vpop.xlane.xlu0 %9193
    %v9195 = vsel %vm1168, %v9175, -inf
    %9196 = vmax.xlane.f32.xlu0 %v9195
    %v9197 = vpop.xlane.xlu0 %9196
    %v9198 = vsel %vm1168, %v9176, -inf
    %9199 = vmax.xlane.f32.xlu0 %v9198
    %v9200 = vpop.xlane.xlu0 %9199
    %v9201 = vsel %vm1168, %v9177, -inf
    %9202 = vmax.xlane.f32.xlu0 %v9201
    %v9203 = vpop.xlane.xlu0 %9202
    %v9204 = vsel %vm1168, %v9178, -inf
    %9205 = vmax.xlane.f32.xlu0 %v9204
    %v9206 = vpop.xlane.xlu0 %9205
    %v9207 = vsel %vm1168, %v9179, -inf
    %9208 = vmax.xlane.f32.xlu0 %v9207
    %v9209 = vpop.xlane.xlu0 %9208
    %v9210 = vsel %vm1168, %v9180, -inf
    %9211 = vmax.xlane.f32.xlu0 %v9210
    %v9212 = vpop.xlane.xlu0 %9211
    %v9213 = vsel %vm1168, %v9181, -inf
    %9214 = vmax.xlane.f32.xlu0 %v9213
    %v9215 = vpop.xlane.xlu0 %9214
    %v9216 = vsel %vm1168, %v9182, -inf
    %9217 = vmax.xlane.f32.xlu0 %v9216
    %v9218 = vpop.xlane.xlu0 %9217
    %v9219 = vsel %vm1168, %v9183, -inf
    %9220 = vmax.xlane.f32.xlu0 %v9219
    %v9221 = vpop.xlane.xlu0 %9220
    %v9222 = vsel %vm1168, %v9184, -inf
    %9223 = vmax.xlane.f32.xlu0 %v9222
    %v9224 = vpop.xlane.xlu0 %9223
    %v9225 = vsel %vm1168, %v9185, -inf
    %9226 = vmax.xlane.f32.xlu0 %v9225
    %v9227 = vpop.xlane.xlu0 %9226
    %v9228 = vsel %vm1168, %v9186, -inf
    %9229 = vmax.xlane.f32.xlu0 %v9228
    %v9230 = vpop.xlane.xlu0 %9229
    %v9231 = vsel %vm1168, %v9187, -inf
    %9232 = vmax.xlane.f32.xlu0 %v9231
    %v9233 = vpop.xlane.xlu0 %9232
    %v9234 = vsel %vm1168, %v9188, -inf
    %9235 = vmax.xlane.f32.xlu0 %v9234
    %v9236 = vpop.xlane.xlu0 %9235
    %v9237 = vsub.f32 %v9173, %v9191
    %v9238 = vsub.f32 %v9174, %v9194
    %v9239 = vsub.f32 %v9175, %v9197
    %v9240 = vsub.f32 %v9176, %v9200
    %v9241 = vsub.f32 %v9177, %v9203
    %v9242 = vsub.f32 %v9178, %v9206
    %v9243 = vsub.f32 %v9179, %v9209
    %v9244 = vsub.f32 %v9180, %v9212
    %v9245 = vsub.f32 %v9181, %v9215
    %v9246 = vsub.f32 %v9182, %v9218
    %v9247 = vsub.f32 %v9183, %v9221
    %v9248 = vsub.f32 %v9184, %v9224
    %v9249 = vsub.f32 %v9185, %v9227
    %v9250 = vsub.f32 %v9186, %v9230
    %v9251 = vsub.f32 %v9187, %v9233
    %v9252 = vsub.f32 %v9188, %v9236
    %v9253 = vmul.f32 %v9237, 1.442695
    %v9254 = vpow.pop %v9253
    %v9255 = vmul.f32 %v9238, 1.442695
    %v9256 = vpow.pop %v9255
    %v9257 = vmul.f32 %v9239, 1.442695
    %v9258 = vpow.pop %v9257
    %v9259 = vmul.f32 %v9240, 1.442695
    %v9260 = vpow.pop %v9259
    %v9261 = vmul.f32 %v9241, 1.442695
    %v9262 = vpow.pop %v9261
    %v9263 = vmul.f32 %v9242, 1.442695
    %v9264 = vpow.pop %v9263
    %v9265 = vmul.f32 %v9243, 1.442695
    %v9266 = vpow.pop %v9265
    %v9267 = vmul.f32 %v9244, 1.442695
    %v9268 = vpow.pop %v9267
    %v9269 = vmul.f32 %v9245, 1.442695
    %v9270 = vpow.pop %v9269
    %v9271 = vmul.f32 %v9246, 1.442695
    %v9272 = vpow.pop %v9271
    %v9273 = vmul.f32 %v9247, 1.442695
    %v9274 = vpow.pop %v9273
    %v9275 = vmul.f32 %v9248, 1.442695
    %v9276 = vpow.pop %v9275
    %v9277 = vmul.f32 %v9249, 1.442695
    %v9278 = vpow.pop %v9277
    %v9279 = vmul.f32 %v9250, 1.442695
    %v9280 = vpow.pop %v9279
    %v9281 = vmul.f32 %v9251, 1.442695
    %v9282 = vpow.pop %v9281
    %v9283 = vmul.f32 %v9252, 1.442695
    %v9284 = vpow.pop %v9283
    %v9285 = vsel %vm1168, %v9254, 0.0
    %9286 = vadd.xlane.f32.xlu0 %v9285
    %v9287 = vpop.xlane.xlu0 %9286
    %v9288 = vsel %vm1168, %v9256, 0.0
    %9289 = vadd.xlane.f32.xlu0 %v9288
    %v9290 = vpop.xlane.xlu0 %9289
    %v9291 = vsel %vm1168, %v9258, 0.0
    %9292 = vadd.xlane.f32.xlu0 %v9291
    %v9293 = vpop.xlane.xlu0 %9292
    %v9294 = vsel %vm1168, %v9260, 0.0
    %9295 = vadd.xlane.f32.xlu0 %v9294
    %v9296 = vpop.xlane.xlu0 %9295
    %v9297 = vsel %vm1168, %v9262, 0.0
    %9298 = vadd.xlane.f32.xlu0 %v9297
    %v9299 = vpop.xlane.xlu0 %9298
    %v9300 = vsel %vm1168, %v9264, 0.0
    %9301 = vadd.xlane.f32.xlu0 %v9300
    %v9302 = vpop.xlane.xlu0 %9301
    %v9303 = vsel %vm1168, %v9266, 0.0
    %9304 = vadd.xlane.f32.xlu0 %v9303
    %v9305 = vpop.xlane.xlu0 %9304
    %v9306 = vsel %vm1168, %v9268, 0.0
    %9307 = vadd.xlane.f32.xlu0 %v9306
    %v9308 = vpop.xlane.xlu0 %9307
    %v9309 = vsel %vm1168, %v9270, 0.0
    %9310 = vadd.xlane.f32.xlu0 %v9309
    %v9311 = vpop.xlane.xlu0 %9310
    %v9312 = vsel %vm1168, %v9272, 0.0
    %9313 = vadd.xlane.f32.xlu0 %v9312
    %v9314 = vpop.xlane.xlu0 %9313
    %v9315 = vsel %vm1168, %v9274, 0.0
    %9316 = vadd.xlane.f32.xlu0 %v9315
    %v9317 = vpop.xlane.xlu0 %9316
    %v9318 = vsel %vm1168, %v9276, 0.0
    %9319 = vadd.xlane.f32.xlu0 %v9318
    %v9320 = vpop.xlane.xlu0 %9319
    %v9321 = vsel %vm1168, %v9278, 0.0
    %9322 = vadd.xlane.f32.xlu0 %v9321
    %v9323 = vpop.xlane.xlu0 %9322
    %v9324 = vsel %vm1168, %v9280, 0.0
    %9325 = vadd.xlane.f32.xlu0 %v9324
    %v9326 = vpop.xlane.xlu0 %9325
    %v9327 = vsel %vm1168, %v9282, 0.0
    %9328 = vadd.xlane.f32.xlu0 %v9327
    %v9329 = vpop.xlane.xlu0 %9328
    %v9330 = vsel %vm1168, %v9284, 0.0
    %9331 = vadd.xlane.f32.xlu0 %v9330
    %v9332 = vpop.xlane.xlu0 %9331
    %v9333 = vrcp.pop %v9287
    %v9334 = vrcp.pop %v9290
    %v9335 = vrcp.pop %v9293
    %v9336 = vrcp.pop %v9296
    %v9337 = vrcp.pop %v9299
    %v9338 = vrcp.pop %v9302
    %v9339 = vrcp.pop %v9305
    %v9340 = vrcp.pop %v9308
    %v9341 = vrcp.pop %v9311
    %v9342 = vrcp.pop %v9314
    %v9343 = vrcp.pop %v9317
    %v9344 = vrcp.pop %v9320
    %v9345 = vrcp.pop %v9323
    %v9346 = vrcp.pop %v9326
    %v9347 = vrcp.pop %v9329
    %v9348 = vrcp.pop %v9332
    %v9349 = vmul.f32 %v9254, %v9333
    %v9350 = vmul.f32 %v9256, %v9334
    %v9351 = vmul.f32 %v9258, %v9335
    %v9352 = vmul.f32 %v9260, %v9336
    %v9353 = vmul.f32 %v9262, %v9337
    %v9354 = vmul.f32 %v9264, %v9338
    %v9355 = vmul.f32 %v9266, %v9339
    %v9356 = vmul.f32 %v9268, %v9340
    %v9357 = vmul.f32 %v9270, %v9341
    %v9358 = vmul.f32 %v9272, %v9342
    %v9359 = vmul.f32 %v9274, %v9343
    %v9360 = vmul.f32 %v9276, %v9344
    %v9361 = vmul.f32 %v9278, %v9345
    %v9362 = vmul.f32 %v9280, %v9346
    %v9363 = vmul.f32 %v9282, %v9347
    %v9364 = vmul.f32 %v9284, %v9348
    %v9366 = vsel %vm1168, %v9349, 0
    %v9369 = vsel %vm1168, %v9350, 0
    %9371 = vmatpush.msra.mxu0 0.0
    %9372 = vmatpush.msra.mxu0 0.0
    %9373 = vmatpush.msra.mxu0 0.0
    %9374 = vmatpush.msra.mxu0 0.0
    %9375 = vmatpush.msra.mxu0 0.0
    %9376 = vmatpush.msra.mxu0 0.0
    %9377 = vmatpush.msra.mxu0 0.0
    %9378 = vmatpush.msra.mxu0 0.0
    %9379 = vmatpush.msra.mxu0 0.0
    %9380 = vmatpush.msra.mxu0 0.0
    %9381 = vmatpush.msra.mxu0 0.0
    %9382 = vmatpush.msra.mxu0 0.0
    %9383 = vmatpush.msra.mxu0 0.0
    %9384 = vmatpush.msra.mxu0 0.0
    %9385 = vmatpush.msra.mxu0 %v8881
    %9386 = vmatpush.msra.mxu0 %v8878
    %9387 = vmatmul.f32.gmra.mxu0 %v9366
    %v9388 = vpop.f32.mrf.mxu0
    %v9389 = vadd.f32 0.0, %v9388
    %9390 = vmatmul.f32.gmra.mxu0 %v9369
    %v9391 = vpop.f32.mrf.mxu0
    %v9392 = vadd.f32 0.0, %v9391
    %9393 = vdwg.mxu0
    %v9395 = vsel %vm1168, %v9351, 0
    %v9398 = vsel %vm1168, %v9352, 0
    %9400 = vmatpush.msra.mxu0 0.0
    %9401 = vmatpush.msra.mxu0 0.0
    %9402 = vmatpush.msra.mxu0 0.0
    %9403 = vmatpush.msra.mxu0 0.0
    %9404 = vmatpush.msra.mxu0 0.0
    %9405 = vmatpush.msra.mxu0 0.0
    %9406 = vmatpush.msra.mxu0 0.0
    %9407 = vmatpush.msra.mxu0 0.0
    %9408 = vmatpush.msra.mxu0 0.0
    %9409 = vmatpush.msra.mxu0 0.0
    %9410 = vmatpush.msra.mxu0 0.0
    %9411 = vmatpush.msra.mxu0 0.0
    %9412 = vmatpush.msra.mxu0 0.0
    %9413 = vmatpush.msra.mxu0 0.0
    %9414 = vmatpush.msra.mxu0 %v8887
    %9415 = vmatpush.msra.mxu0 %v8884
    %9416 = vmatmul.f32.gmra.mxu0 %v9395
    %v9417 = vpop.f32.mrf.mxu0
    %v9418 = vadd.f32 0.0, %v9417
    %9419 = vmatmul.f32.gmra.mxu0 %v9398
    %v9420 = vpop.f32.mrf.mxu0
    %v9421 = vadd.f32 0.0, %v9420
    %9422 = vdwg.mxu0
    %v9424 = vsel %vm1168, %v9353, 0
    %v9427 = vsel %vm1168, %v9354, 0
    %9429 = vmatpush.msra.mxu0 0.0
    %9430 = vmatpush.msra.mxu0 0.0
    %9431 = vmatpush.msra.mxu0 0.0
    %9432 = vmatpush.msra.mxu0 0.0
    %9433 = vmatpush.msra.mxu0 0.0
    %9434 = vmatpush.msra.mxu0 0.0
    %9435 = vmatpush.msra.mxu0 0.0
    %9436 = vmatpush.msra.mxu0 0.0
    %9437 = vmatpush.msra.mxu0 0.0
    %9438 = vmatpush.msra.mxu0 0.0
    %9439 = vmatpush.msra.mxu0 0.0
    %9440 = vmatpush.msra.mxu0 0.0
    %9441 = vmatpush.msra.mxu0 0.0
    %9442 = vmatpush.msra.mxu0 0.0
    %9443 = vmatpush.msra.mxu0 %v8893
    %9444 = vmatpush.msra.mxu0 %v8890
    %9445 = vmatmul.f32.gmra.mxu0 %v9424
    %v9446 = vpop.f32.mrf.mxu0
    %v9447 = vadd.f32 0.0, %v9446
    %9448 = vmatmul.f32.gmra.mxu0 %v9427
    %v9449 = vpop.f32.mrf.mxu0
    %v9450 = vadd.f32 0.0, %v9449
    %9451 = vdwg.mxu0
    %v9453 = vsel %vm1168, %v9355, 0
    %v9456 = vsel %vm1168, %v9356, 0
    %9458 = vmatpush.msra.mxu0 0.0
    %9459 = vmatpush.msra.mxu0 0.0
    %9460 = vmatpush.msra.mxu0 0.0
    %9461 = vmatpush.msra.mxu0 0.0
    %9462 = vmatpush.msra.mxu0 0.0
    %9463 = vmatpush.msra.mxu0 0.0
    %9464 = vmatpush.msra.mxu0 0.0
    %9465 = vmatpush.msra.mxu0 0.0
    %9466 = vmatpush.msra.mxu0 0.0
    %9467 = vmatpush.msra.mxu0 0.0
    %9468 = vmatpush.msra.mxu0 0.0
    %9469 = vmatpush.msra.mxu0 0.0
    %9470 = vmatpush.msra.mxu0 0.0
    %9471 = vmatpush.msra.mxu0 0.0
    %9472 = vmatpush.msra.mxu0 %v8899
    %9473 = vmatpush.msra.mxu0 %v8896
    %9474 = vmatmul.f32.gmra.mxu0 %v9453
    %v9475 = vpop.f32.mrf.mxu0
    %v9476 = vadd.f32 0.0, %v9475
    %9477 = vmatmul.f32.gmra.mxu0 %v9456
    %v9478 = vpop.f32.mrf.mxu0
    %v9479 = vadd.f32 0.0, %v9478
    %9480 = vdwg.mxu0
    %v9482 = vsel %vm1168, %v9357, 0
    %v9485 = vsel %vm1168, %v9358, 0
    %9487 = vmatpush.msra.mxu0 0.0
    %9488 = vmatpush.msra.mxu0 0.0
    %9489 = vmatpush.msra.mxu0 0.0
    %9490 = vmatpush.msra.mxu0 0.0
    %9491 = vmatpush.msra.mxu0 0.0
    %9492 = vmatpush.msra.mxu0 0.0
    %9493 = vmatpush.msra.mxu0 0.0
    %9494 = vmatpush.msra.mxu0 0.0
    %9495 = vmatpush.msra.mxu0 0.0
    %9496 = vmatpush.msra.mxu0 0.0
    %9497 = vmatpush.msra.mxu0 0.0
    %9498 = vmatpush.msra.mxu0 0.0
    %9499 = vmatpush.msra.mxu0 0.0
    %9500 = vmatpush.msra.mxu0 0.0
    %9501 = vmatpush.msra.mxu0 %v8905
    %9502 = vmatpush.msra.mxu0 %v8902
    %9503 = vmatmul.f32.gmra.mxu0 %v9482
    %v9504 = vpop.f32.mrf.mxu0
    %v9505 = vadd.f32 0.0, %v9504
    %9506 = vmatmul.f32.gmra.mxu0 %v9485
    %v9507 = vpop.f32.mrf.mxu0
    %v9508 = vadd.f32 0.0, %v9507
    %9509 = vdwg.mxu0
    %v9511 = vsel %vm1168, %v9359, 0
    %v9514 = vsel %vm1168, %v9360, 0
    %9516 = vmatpush.msra.mxu0 0.0
    %9517 = vmatpush.msra.mxu0 0.0
    %9518 = vmatpush.msra.mxu0 0.0
    %9519 = vmatpush.msra.mxu0 0.0
    %9520 = vmatpush.msra.mxu0 0.0
    %9521 = vmatpush.msra.mxu0 0.0
    %9522 = vmatpush.msra.mxu0 0.0
    %9523 = vmatpush.msra.mxu0 0.0
    %9524 = vmatpush.msra.mxu0 0.0
    %9525 = vmatpush.msra.mxu0 0.0
    %9526 = vmatpush.msra.mxu0 0.0
    %9527 = vmatpush.msra.mxu0 0.0
    %9528 = vmatpush.msra.mxu0 0.0
    %9529 = vmatpush.msra.mxu0 0.0
    %9530 = vmatpush.msra.mxu0 %v8911
    %9531 = vmatpush.msra.mxu0 %v8908
    %9532 = vmatmul.f32.gmra.mxu0 %v9511
    %v9533 = vpop.f32.mrf.mxu0
    %v9534 = vadd.f32 0.0, %v9533
    %9535 = vmatmul.f32.gmra.mxu0 %v9514
    %v9536 = vpop.f32.mrf.mxu0
    %v9537 = vadd.f32 0.0, %v9536
    %9538 = vdwg.mxu0
    %v9540 = vsel %vm1168, %v9361, 0
    %v9543 = vsel %vm1168, %v9362, 0
    %9545 = vmatpush.msra.mxu0 0.0
    %9546 = vmatpush.msra.mxu0 0.0
    %9547 = vmatpush.msra.mxu0 0.0
    %9548 = vmatpush.msra.mxu0 0.0
    %9549 = vmatpush.msra.mxu0 0.0
    %9550 = vmatpush.msra.mxu0 0.0
    %9551 = vmatpush.msra.mxu0 0.0
    %9552 = vmatpush.msra.mxu0 0.0
    %9553 = vmatpush.msra.mxu0 0.0
    %9554 = vmatpush.msra.mxu0 0.0
    %9555 = vmatpush.msra.mxu0 0.0
    %9556 = vmatpush.msra.mxu0 0.0
    %9557 = vmatpush.msra.mxu0 0.0
    %9558 = vmatpush.msra.mxu0 0.0
    %9559 = vmatpush.msra.mxu0 %v8917
    %9560 = vmatpush.msra.mxu0 %v8914
    %9561 = vmatmul.f32.gmra.mxu0 %v9540
    %v9562 = vpop.f32.mrf.mxu0
    %v9563 = vadd.f32 0.0, %v9562
    %9564 = vmatmul.f32.gmra.mxu0 %v9543
    %v9565 = vpop.f32.mrf.mxu0
    %v9566 = vadd.f32 0.0, %v9565
    %9567 = vdwg.mxu0
    %v9569 = vsel %vm1168, %v9363, 0
    %v9572 = vsel %vm1168, %v9364, 0
    %9574 = vmatpush.msra.mxu0 0.0
    %9575 = vmatpush.msra.mxu0 0.0
    %9576 = vmatpush.msra.mxu0 0.0
    %9577 = vmatpush.msra.mxu0 0.0
    %9578 = vmatpush.msra.mxu0 0.0
    %9579 = vmatpush.msra.mxu0 0.0
    %9580 = vmatpush.msra.mxu0 0.0
    %9581 = vmatpush.msra.mxu0 0.0
    %9582 = vmatpush.msra.mxu0 0.0
    %9583 = vmatpush.msra.mxu0 0.0
    %9584 = vmatpush.msra.mxu0 0.0
    %9585 = vmatpush.msra.mxu0 0.0
    %9586 = vmatpush.msra.mxu0 0.0
    %9587 = vmatpush.msra.mxu0 0.0
    %9588 = vmatpush.msra.mxu0 %v8923
    %9589 = vmatpush.msra.mxu0 %v8920
    %9590 = vmatmul.f32.gmra.mxu0 %v9569
    %v9591 = vpop.f32.mrf.mxu0
    %v9592 = vadd.f32 0.0, %v9591
    %9593 = vmatmul.f32.gmra.mxu0 %v9572
    %v9594 = vpop.f32.mrf.mxu0
    %v9595 = vadd.f32 0.0, %v9594
    %9596 = vdwg.mxu0
    %v9597 = vadd.f32 %v8769, %v9389
    %v9598 = vadd.f32 %v8770, %v9392
    %v9599 = vadd.f32 %v8771, %v9418
    %v9600 = vadd.f32 %v8772, %v9421
    %v9601 = vadd.f32 %v8773, %v9447
    %v9602 = vadd.f32 %v8774, %v9450
    %v9603 = vadd.f32 %v8775, %v9476
    %v9604 = vadd.f32 %v8776, %v9479
    %v9605 = vadd.f32 %v8777, %v9505
    %v9606 = vadd.f32 %v8778, %v9508
    %v9607 = vadd.f32 %v8779, %v9534
    %v9608 = vadd.f32 %v8780, %v9537
    %v9609 = vadd.f32 %v8781, %v9563
    %v9610 = vadd.f32 %v8782, %v9566
    %v9611 = vadd.f32 %v8783, %v9592
    %v9612 = vadd.f32 %v8784, %v9595
    %s9613 = scalar_lea.vmem %s3, 256
    %v9614 = vld [vmem:[%s9613] sm:$0xff]
    %v9615 = vld [vmem:[%s9613 + $0x8] sm:$0xff]
    %v9616 = vld [vmem:[%s9613 + $0x10] sm:$0xff]
    %v9617 = vld [vmem:[%s9613 + $0x18] sm:$0xff]
    %9618 = vmatpush.msra.mxu0 0.0
    %9619 = vmatpush.msra.mxu0 0.0
    %9620 = vmatpush.msra.mxu0 0.0
    %9621 = vmatpush.msra.mxu0 0.0
    %9622 = vmatpush.msra.mxu0 0.0
    %9623 = vmatpush.msra.mxu0 0.0
    %9624 = vmatpush.msra.mxu0 0.0
    %9625 = vmatpush.msra.mxu0 0.0
    %9626 = vmatpush.msra.mxu0 0.0
    %9627 = vmatpush.msra.mxu0 0.0
    %9628 = vmatpush.msra.mxu0 0.0
    %9629 = vmatpush.msra.mxu0 0.0
    %9630 = vmatpush.msra.mxu0 %v9617
    %9631 = vmatpush.msra.mxu0 %v9616
    %9632 = vmatpush.msra.mxu0 %v9615
    %9633 = vmatpush.msra.mxu0 %v9614
    %9634 = vmatmul.f32.gmra.mxu0 %v7915
    %v9635 = vpop.f32.mrf.mxu0
    %v9636 = vadd.f32 0.0, %v9635
    %9637 = vmatmul.f32.gmra.mxu0 %v7918
    %v9638 = vpop.f32.mrf.mxu0
    %v9639 = vadd.f32 0.0, %v9638
    %9640 = vmatmul.f32.gmra.mxu0 %v7921
    %v9641 = vpop.f32.mrf.mxu0
    %v9642 = vadd.f32 0.0, %v9641
    %9643 = vmatmul.f32.gmra.mxu0 %v7924
    %v9644 = vpop.f32.mrf.mxu0
    %v9645 = vadd.f32 0.0, %v9644
    %9646 = vmatmul.f32.gmra.mxu0 %v7927
    %v9647 = vpop.f32.mrf.mxu0
    %v9648 = vadd.f32 0.0, %v9647
    %9649 = vmatmul.f32.gmra.mxu0 %v7930
    %v9650 = vpop.f32.mrf.mxu0
    %v9651 = vadd.f32 0.0, %v9650
    %9652 = vmatmul.f32.gmra.mxu0 %v7933
    %v9653 = vpop.f32.mrf.mxu0
    %v9654 = vadd.f32 0.0, %v9653
    %9655 = vmatmul.f32.gmra.mxu0 %v7936
    %v9656 = vpop.f32.mrf.mxu0
    %v9657 = vadd.f32 0.0, %v9656
    %9658 = vmatmul.f32.gmra.mxu0 %v7939
    %v9659 = vpop.f32.mrf.mxu0
    %v9660 = vadd.f32 0.0, %v9659
    %9661 = vmatmul.f32.gmra.mxu0 %v7942
    %v9662 = vpop.f32.mrf.mxu0
    %v9663 = vadd.f32 0.0, %v9662
    %9664 = vmatmul.f32.gmra.mxu0 %v7945
    %v9665 = vpop.f32.mrf.mxu0
    %v9666 = vadd.f32 0.0, %v9665
    %9667 = vmatmul.f32.gmra.mxu0 %v7948
    %v9668 = vpop.f32.mrf.mxu0
    %v9669 = vadd.f32 0.0, %v9668
    %9670 = vmatmul.f32.gmra.mxu0 %v7951
    %v9671 = vpop.f32.mrf.mxu0
    %v9672 = vadd.f32 0.0, %v9671
    %9673 = vmatmul.f32.gmra.mxu0 %v7954
    %v9674 = vpop.f32.mrf.mxu0
    %v9675 = vadd.f32 0.0, %v9674
    %9676 = vmatmul.f32.gmra.mxu0 %v7957
    %v9677 = vpop.f32.mrf.mxu0
    %v9678 = vadd.f32 0.0, %v9677
    %9679 = vmatmul.f32.gmra.mxu0 %v7960
    %v9680 = vpop.f32.mrf.mxu0
    %v9681 = vadd.f32 0.0, %v9680
    %9682 = vdwg.mxu0
    %s9683 = scalar_lea.vmem [#allocation2], 256
    %v9684 = vld [vmem:[%s9683] sm:$0xff]
    %v9685 = vld [vmem:[%s9683 + $0x8] sm:$0xff]
    %v9686 = vld [vmem:[%s9683 + $0x10] sm:$0xff]
    %v9687 = vld [vmem:[%s9683 + $0x18] sm:$0xff]
    %9688 = vmatpush.msra.mxu0 0.0
    %9689 = vmatpush.msra.mxu0 0.0
    %9690 = vmatpush.msra.mxu0 0.0
    %9691 = vmatpush.msra.mxu0 0.0
    %9692 = vmatpush.msra.mxu0 0.0
    %9693 = vmatpush.msra.mxu0 0.0
    %9694 = vmatpush.msra.mxu0 0.0
    %9695 = vmatpush.msra.mxu0 0.0
    %9696 = vmatpush.msra.mxu0 0.0
    %9697 = vmatpush.msra.mxu0 0.0
    %9698 = vmatpush.msra.mxu0 0.0
    %9699 = vmatpush.msra.mxu0 0.0
    %9700 = vmatpush.msra.mxu0 %v9687
    %9701 = vmatpush.msra.mxu0 %v9686
    %9702 = vmatpush.msra.mxu0 %v9685
    %9703 = vmatpush.msra.mxu0 %v9684
    %9704 = vmatmul.f32.gmra.mxu0 %v7915
    %v9705 = vpop.f32.mrf.mxu0
    %v9706 = vadd.f32 0.0, %v9705
    %9707 = vmatmul.f32.gmra.mxu0 %v7918
    %v9708 = vpop.f32.mrf.mxu0
    %v9709 = vadd.f32 0.0, %v9708
    %9710 = vmatmul.f32.gmra.mxu0 %v7921
    %v9711 = vpop.f32.mrf.mxu0
    %v9712 = vadd.f32 0.0, %v9711
    %9713 = vmatmul.f32.gmra.mxu0 %v7924
    %v9714 = vpop.f32.mrf.mxu0
    %v9715 = vadd.f32 0.0, %v9714
    %9716 = vmatmul.f32.gmra.mxu0 %v7927
    %v9717 = vpop.f32.mrf.mxu0
    %v9718 = vadd.f32 0.0, %v9717
    %9719 = vmatmul.f32.gmra.mxu0 %v7930
    %v9720 = vpop.f32.mrf.mxu0
    %v9721 = vadd.f32 0.0, %v9720
    %9722 = vmatmul.f32.gmra.mxu0 %v7933
    %v9723 = vpop.f32.mrf.mxu0
    %v9724 = vadd.f32 0.0, %v9723
    %9725 = vmatmul.f32.gmra.mxu0 %v7936
    %v9726 = vpop.f32.mrf.mxu0
    %v9727 = vadd.f32 0.0, %v9726
    %9728 = vmatmul.f32.gmra.mxu0 %v7939
    %v9729 = vpop.f32.mrf.mxu0
    %v9730 = vadd.f32 0.0, %v9729
    %9731 = vmatmul.f32.gmra.mxu0 %v7942
    %v9732 = vpop.f32.mrf.mxu0
    %v9733 = vadd.f32 0.0, %v9732
    %9734 = vmatmul.f32.gmra.mxu0 %v7945
    %v9735 = vpop.f32.mrf.mxu0
    %v9736 = vadd.f32 0.0, %v9735
    %9737 = vmatmul.f32.gmra.mxu0 %v7948
    %v9738 = vpop.f32.mrf.mxu0
    %v9739 = vadd.f32 0.0, %v9738
    %9740 = vmatmul.f32.gmra.mxu0 %v7951
    %v9741 = vpop.f32.mrf.mxu0
    %v9742 = vadd.f32 0.0, %v9741
    %9743 = vmatmul.f32.gmra.mxu0 %v7954
    %v9744 = vpop.f32.mrf.mxu0
    %v9745 = vadd.f32 0.0, %v9744
    %9746 = vmatmul.f32.gmra.mxu0 %v7957
    %v9747 = vpop.f32.mrf.mxu0
    %v9748 = vadd.f32 0.0, %v9747
    %9749 = vmatmul.f32.gmra.mxu0 %v7960
    %v9750 = vpop.f32.mrf.mxu0
    %v9751 = vadd.f32 0.0, %v9750
    %9752 = vdwg.mxu0
    %v9754 = vsel %vm296, %v9636, 0
    %v9757 = vsel %vm296, %v9639, 0
    %9759 = vmatpush.xpose.msra.mxu0 0.0
    %9760 = vmatpush.xpose.msra.mxu0 0.0
    %9761 = vmatpush.xpose.msra.mxu0 0.0
    %9762 = vmatpush.xpose.msra.mxu0 0.0
    %9763 = vmatpush.xpose.msra.mxu0 0.0
    %9764 = vmatpush.xpose.msra.mxu0 0.0
    %9765 = vmatpush.xpose.msra.mxu0 0.0
    %9766 = vmatpush.xpose.msra.mxu0 0.0
    %9767 = vmatpush.xpose.msra.mxu0 0.0
    %9768 = vmatpush.xpose.msra.mxu0 0.0
    %9769 = vmatpush.xpose.msra.mxu0 0.0
    %9770 = vmatpush.xpose.msra.mxu0 0.0
    %9771 = vmatpush.xpose.msra.mxu0 0.0
    %9772 = vmatpush.xpose.msra.mxu0 0.0
    %9773 = vmatpush.xpose.msra.mxu0 %v7918
    %9774 = vmatpush.xpose.msra.mxu0 %v7915
    %9775 = vmatmul.f32.gmra.mxu0 %v9754
    %v9776 = vpop.f32.mrf.mxu0
    %v9777 = vadd.f32 0.0, %v9776
    %9778 = vmatmul.f32.gmra.mxu0 %v9757
    %v9779 = vpop.f32.mrf.mxu0
    %v9780 = vadd.f32 0.0, %v9779
    %9781 = vdwg.mxu0
    %v9783 = vsel %vm296, %v9642, 0
    %v9786 = vsel %vm296, %v9645, 0
    %9788 = vmatpush.xpose.msra.mxu0 0.0
    %9789 = vmatpush.xpose.msra.mxu0 0.0
    %9790 = vmatpush.xpose.msra.mxu0 0.0
    %9791 = vmatpush.xpose.msra.mxu0 0.0
    %9792 = vmatpush.xpose.msra.mxu0 0.0
    %9793 = vmatpush.xpose.msra.mxu0 0.0
    %9794 = vmatpush.xpose.msra.mxu0 0.0
    %9795 = vmatpush.xpose.msra.mxu0 0.0
    %9796 = vmatpush.xpose.msra.mxu0 0.0
    %9797 = vmatpush.xpose.msra.mxu0 0.0
    %9798 = vmatpush.xpose.msra.mxu0 0.0
    %9799 = vmatpush.xpose.msra.mxu0 0.0
    %9800 = vmatpush.xpose.msra.mxu0 0.0
    %9801 = vmatpush.xpose.msra.mxu0 0.0
    %9802 = vmatpush.xpose.msra.mxu0 %v7924
    %9803 = vmatpush.xpose.msra.mxu0 %v7921
    %9804 = vmatmul.f32.gmra.mxu0 %v9783
    %v9805 = vpop.f32.mrf.mxu0
    %v9806 = vadd.f32 0.0, %v9805
    %9807 = vmatmul.f32.gmra.mxu0 %v9786
    %v9808 = vpop.f32.mrf.mxu0
    %v9809 = vadd.f32 0.0, %v9808
    %9810 = vdwg.mxu0
    %v9812 = vsel %vm296, %v9648, 0
    %v9815 = vsel %vm296, %v9651, 0
    %9817 = vmatpush.xpose.msra.mxu0 0.0
    %9818 = vmatpush.xpose.msra.mxu0 0.0
    %9819 = vmatpush.xpose.msra.mxu0 0.0
    %9820 = vmatpush.xpose.msra.mxu0 0.0
    %9821 = vmatpush.xpose.msra.mxu0 0.0
    %9822 = vmatpush.xpose.msra.mxu0 0.0
    %9823 = vmatpush.xpose.msra.mxu0 0.0
    %9824 = vmatpush.xpose.msra.mxu0 0.0
    %9825 = vmatpush.xpose.msra.mxu0 0.0
    %9826 = vmatpush.xpose.msra.mxu0 0.0
    %9827 = vmatpush.xpose.msra.mxu0 0.0
    %9828 = vmatpush.xpose.msra.mxu0 0.0
    %9829 = vmatpush.xpose.msra.mxu0 0.0
    %9830 = vmatpush.xpose.msra.mxu0 0.0
    %9831 = vmatpush.xpose.msra.mxu0 %v7930
    %9832 = vmatpush.xpose.msra.mxu0 %v7927
    %9833 = vmatmul.f32.gmra.mxu0 %v9812
    %v9834 = vpop.f32.mrf.mxu0
    %v9835 = vadd.f32 0.0, %v9834
    %9836 = vmatmul.f32.gmra.mxu0 %v9815
    %v9837 = vpop.f32.mrf.mxu0
    %v9838 = vadd.f32 0.0, %v9837
    %9839 = vdwg.mxu0
    %v9841 = vsel %vm296, %v9654, 0
    %v9844 = vsel %vm296, %v9657, 0
    %9846 = vmatpush.xpose.msra.mxu0 0.0
    %9847 = vmatpush.xpose.msra.mxu0 0.0
    %9848 = vmatpush.xpose.msra.mxu0 0.0
    %9849 = vmatpush.xpose.msra.mxu0 0.0
    %9850 = vmatpush.xpose.msra.mxu0 0.0
    %9851 = vmatpush.xpose.msra.mxu0 0.0
    %9852 = vmatpush.xpose.msra.mxu0 0.0
    %9853 = vmatpush.xpose.msra.mxu0 0.0
    %9854 = vmatpush.xpose.msra.mxu0 0.0
    %9855 = vmatpush.xpose.msra.mxu0 0.0
    %9856 = vmatpush.xpose.msra.mxu0 0.0
    %9857 = vmatpush.xpose.msra.mxu0 0.0
    %9858 = vmatpush.xpose.msra.mxu0 0.0
    %9859 = vmatpush.xpose.msra.mxu0 0.0
    %9860 = vmatpush.xpose.msra.mxu0 %v7936
    %9861 = vmatpush.xpose.msra.mxu0 %v7933
    %9862 = vmatmul.f32.gmra.mxu0 %v9841
    %v9863 = vpop.f32.mrf.mxu0
    %v9864 = vadd.f32 0.0, %v9863
    %9865 = vmatmul.f32.gmra.mxu0 %v9844
    %v9866 = vpop.f32.mrf.mxu0
    %v9867 = vadd.f32 0.0, %v9866
    %9868 = vdwg.mxu0
    %v9870 = vsel %vm296, %v9660, 0
    %v9873 = vsel %vm296, %v9663, 0
    %9875 = vmatpush.xpose.msra.mxu0 0.0
    %9876 = vmatpush.xpose.msra.mxu0 0.0
    %9877 = vmatpush.xpose.msra.mxu0 0.0
    %9878 = vmatpush.xpose.msra.mxu0 0.0
    %9879 = vmatpush.xpose.msra.mxu0 0.0
    %9880 = vmatpush.xpose.msra.mxu0 0.0
    %9881 = vmatpush.xpose.msra.mxu0 0.0
    %9882 = vmatpush.xpose.msra.mxu0 0.0
    %9883 = vmatpush.xpose.msra.mxu0 0.0
    %9884 = vmatpush.xpose.msra.mxu0 0.0
    %9885 = vmatpush.xpose.msra.mxu0 0.0
    %9886 = vmatpush.xpose.msra.mxu0 0.0
    %9887 = vmatpush.xpose.msra.mxu0 0.0
    %9888 = vmatpush.xpose.msra.mxu0 0.0
    %9889 = vmatpush.xpose.msra.mxu0 %v7942
    %9890 = vmatpush.xpose.msra.mxu0 %v7939
    %9891 = vmatmul.f32.gmra.mxu0 %v9870
    %v9892 = vpop.f32.mrf.mxu0
    %v9893 = vadd.f32 0.0, %v9892
    %9894 = vmatmul.f32.gmra.mxu0 %v9873
    %v9895 = vpop.f32.mrf.mxu0
    %v9896 = vadd.f32 0.0, %v9895
    %9897 = vdwg.mxu0
    %v9899 = vsel %vm296, %v9666, 0
    %v9902 = vsel %vm296, %v9669, 0
    %9904 = vmatpush.xpose.msra.mxu0 0.0
    %9905 = vmatpush.xpose.msra.mxu0 0.0
    %9906 = vmatpush.xpose.msra.mxu0 0.0
    %9907 = vmatpush.xpose.msra.mxu0 0.0
    %9908 = vmatpush.xpose.msra.mxu0 0.0
    %9909 = vmatpush.xpose.msra.mxu0 0.0
    %9910 = vmatpush.xpose.msra.mxu0 0.0
    %9911 = vmatpush.xpose.msra.mxu0 0.0
    %9912 = vmatpush.xpose.msra.mxu0 0.0
    %9913 = vmatpush.xpose.msra.mxu0 0.0
    %9914 = vmatpush.xpose.msra.mxu0 0.0
    %9915 = vmatpush.xpose.msra.mxu0 0.0
    %9916 = vmatpush.xpose.msra.mxu0 0.0
    %9917 = vmatpush.xpose.msra.mxu0 0.0
    %9918 = vmatpush.xpose.msra.mxu0 %v7948
    %9919 = vmatpush.xpose.msra.mxu0 %v7945
    %9920 = vmatmul.f32.gmra.mxu0 %v9899
    %v9921 = vpop.f32.mrf.mxu0
    %v9922 = vadd.f32 0.0, %v9921
    %9923 = vmatmul.f32.gmra.mxu0 %v9902
    %v9924 = vpop.f32.mrf.mxu0
    %v9925 = vadd.f32 0.0, %v9924
    %9926 = vdwg.mxu0
    %v9928 = vsel %vm296, %v9672, 0
    %v9931 = vsel %vm296, %v9675, 0
    %9933 = vmatpush.xpose.msra.mxu0 0.0
    %9934 = vmatpush.xpose.msra.mxu0 0.0
    %9935 = vmatpush.xpose.msra.mxu0 0.0
    %9936 = vmatpush.xpose.msra.mxu0 0.0
    %9937 = vmatpush.xpose.msra.mxu0 0.0
    %9938 = vmatpush.xpose.msra.mxu0 0.0
    %9939 = vmatpush.xpose.msra.mxu0 0.0
    %9940 = vmatpush.xpose.msra.mxu0 0.0
    %9941 = vmatpush.xpose.msra.mxu0 0.0
    %9942 = vmatpush.xpose.msra.mxu0 0.0
    %9943 = vmatpush.xpose.msra.mxu0 0.0
    %9944 = vmatpush.xpose.msra.mxu0 0.0
    %9945 = vmatpush.xpose.msra.mxu0 0.0
    %9946 = vmatpush.xpose.msra.mxu0 0.0
    %9947 = vmatpush.xpose.msra.mxu0 %v7954
    %9948 = vmatpush.xpose.msra.mxu0 %v7951
    %9949 = vmatmul.f32.gmra.mxu0 %v9928
    %v9950 = vpop.f32.mrf.mxu0
    %v9951 = vadd.f32 0.0, %v9950
    %9952 = vmatmul.f32.gmra.mxu0 %v9931
    %v9953 = vpop.f32.mrf.mxu0
    %v9954 = vadd.f32 0.0, %v9953
    %9955 = vdwg.mxu0
    %v9957 = vsel %vm296, %v9678, 0
    %v9960 = vsel %vm296, %v9681, 0
    %9962 = vmatpush.xpose.msra.mxu0 0.0
    %9963 = vmatpush.xpose.msra.mxu0 0.0
    %9964 = vmatpush.xpose.msra.mxu0 0.0
    %9965 = vmatpush.xpose.msra.mxu0 0.0
    %9966 = vmatpush.xpose.msra.mxu0 0.0
    %9967 = vmatpush.xpose.msra.mxu0 0.0
    %9968 = vmatpush.xpose.msra.mxu0 0.0
    %9969 = vmatpush.xpose.msra.mxu0 0.0
    %9970 = vmatpush.xpose.msra.mxu0 0.0
    %9971 = vmatpush.xpose.msra.mxu0 0.0
    %9972 = vmatpush.xpose.msra.mxu0 0.0
    %9973 = vmatpush.xpose.msra.mxu0 0.0
    %9974 = vmatpush.xpose.msra.mxu0 0.0
    %9975 = vmatpush.xpose.msra.mxu0 0.0
    %9976 = vmatpush.xpose.msra.mxu0 %v7960
    %9977 = vmatpush.xpose.msra.mxu0 %v7957
    %9978 = vmatmul.f32.gmra.mxu0 %v9957
    %v9979 = vpop.f32.mrf.mxu0
    %v9980 = vadd.f32 0.0, %v9979
    %9981 = vmatmul.f32.gmra.mxu0 %v9960
    %v9982 = vpop.f32.mrf.mxu0
    %v9983 = vadd.f32 0.0, %v9982
    %9984 = vdwg.mxu0
    %v9985 = vmul.f32 %v9777, 0.31622776
    %v9986 = vmul.f32 %v9780, 0.31622776
    %v9987 = vmul.f32 %v9806, 0.31622776
    %v9988 = vmul.f32 %v9809, 0.31622776
    %v9989 = vmul.f32 %v9835, 0.31622776
    %v9990 = vmul.f32 %v9838, 0.31622776
    %v9991 = vmul.f32 %v9864, 0.31622776
    %v9992 = vmul.f32 %v9867, 0.31622776
    %v9993 = vmul.f32 %v9893, 0.31622776
    %v9994 = vmul.f32 %v9896, 0.31622776
    %v9995 = vmul.f32 %v9922, 0.31622776
    %v9996 = vmul.f32 %v9925, 0.31622776
    %v9997 = vmul.f32 %v9951, 0.31622776
    %v9998 = vmul.f32 %v9954, 0.31622776
    %v9999 = vmul.f32 %v9980, 0.31622776
    %v10000 = vmul.f32 %v9983, 0.31622776
    %v10001 = vsel %vm1150, %v9985, -1e+30
    %v10002 = vsel %vm1151, %v9986, -1e+30
    %v10003 = vsel %vm1150, %v9987, -1e+30
    %v10004 = vsel %vm1151, %v9988, -1e+30
    %v10005 = vsel %vm1150, %v9989, -1e+30
    %v10006 = vsel %vm1151, %v9990, -1e+30
    %v10007 = vsel %vm1150, %v9991, -1e+30
    %v10008 = vsel %vm1151, %v9992, -1e+30
    %v10009 = vsel %vm1150, %v9993, -1e+30
    %v10010 = vsel %vm1151, %v9994, -1e+30
    %v10011 = vsel %vm1150, %v9995, -1e+30
    %v10012 = vsel %vm1151, %v9996, -1e+30
    %v10013 = vsel %vm1150, %v9997, -1e+30
    %v10014 = vsel %vm1151, %v9998, -1e+30
    %v10015 = vsel %vm1150, %v9999, -1e+30
    %v10016 = vsel %vm1151, %v10000, -1e+30
    %v10017 = vsel %vm1168, %v10001, -inf
    %10018 = vmax.xlane.f32.xlu0 %v10017
    %v10019 = vpop.xlane.xlu0 %10018
    %v10020 = vsel %vm1168, %v10002, -inf
    %10021 = vmax.xlane.f32.xlu0 %v10020
    %v10022 = vpop.xlane.xlu0 %10021
    %v10023 = vsel %vm1168, %v10003, -inf
    %10024 = vmax.xlane.f32.xlu0 %v10023
    %v10025 = vpop.xlane.xlu0 %10024
    %v10026 = vsel %vm1168, %v10004, -inf
    %10027 = vmax.xlane.f32.xlu0 %v10026
    %v10028 = vpop.xlane.xlu0 %10027
    %v10029 = vsel %vm1168, %v10005, -inf
    %10030 = vmax.xlane.f32.xlu0 %v10029
    %v10031 = vpop.xlane.xlu0 %10030
    %v10032 = vsel %vm1168, %v10006, -inf
    %10033 = vmax.xlane.f32.xlu0 %v10032
    %v10034 = vpop.xlane.xlu0 %10033
    %v10035 = vsel %vm1168, %v10007, -inf
    %10036 = vmax.xlane.f32.xlu0 %v10035
    %v10037 = vpop.xlane.xlu0 %10036
    %v10038 = vsel %vm1168, %v10008, -inf
    %10039 = vmax.xlane.f32.xlu0 %v10038
    %v10040 = vpop.xlane.xlu0 %10039
    %v10041 = vsel %vm1168, %v10009, -inf
    %10042 = vmax.xlane.f32.xlu0 %v10041
    %v10043 = vpop.xlane.xlu0 %10042
    %v10044 = vsel %vm1168, %v10010, -inf
    %10045 = vmax.xlane.f32.xlu0 %v10044
    %v10046 = vpop.xlane.xlu0 %10045
    %v10047 = vsel %vm1168, %v10011, -inf
    %10048 = vmax.xlane.f32.xlu0 %v10047
    %v10049 = vpop.xlane.xlu0 %10048
    %v10050 = vsel %vm1168, %v10012, -inf
    %10051 = vmax.xlane.f32.xlu0 %v10050
    %v10052 = vpop.xlane.xlu0 %10051
    %v10053 = vsel %vm1168, %v10013, -inf
    %10054 = vmax.xlane.f32.xlu0 %v10053
    %v10055 = vpop.xlane.xlu0 %10054
    %v10056 = vsel %vm1168, %v10014, -inf
    %10057 = vmax.xlane.f32.xlu0 %v10056
    %v10058 = vpop.xlane.xlu0 %10057
    %v10059 = vsel %vm1168, %v10015, -inf
    %10060 = vmax.xlane.f32.xlu0 %v10059
    %v10061 = vpop.xlane.xlu0 %10060
    %v10062 = vsel %vm1168, %v10016, -inf
    %10063 = vmax.xlane.f32.xlu0 %v10062
    %v10064 = vpop.xlane.xlu0 %10063
    %v10065 = vsub.f32 %v10001, %v10019
    %v10066 = vsub.f32 %v10002, %v10022
    %v10067 = vsub.f32 %v10003, %v10025
    %v10068 = vsub.f32 %v10004, %v10028
    %v10069 = vsub.f32 %v10005, %v10031
    %v10070 = vsub.f32 %v10006, %v10034
    %v10071 = vsub.f32 %v10007, %v10037
    %v10072 = vsub.f32 %v10008, %v10040
    %v10073 = vsub.f32 %v10009, %v10043
    %v10074 = vsub.f32 %v10010, %v10046
    %v10075 = vsub.f32 %v10011, %v10049
    %v10076 = vsub.f32 %v10012, %v10052
    %v10077 = vsub.f32 %v10013, %v10055
    %v10078 = vsub.f32 %v10014, %v10058
    %v10079 = vsub.f32 %v10015, %v10061
    %v10080 = vsub.f32 %v10016, %v10064
    %v10081 = vmul.f32 %v10065, 1.442695
    %v10082 = vpow.pop %v10081
    %v10083 = vmul.f32 %v10066, 1.442695
    %v10084 = vpow.pop %v10083
    %v10085 = vmul.f32 %v10067, 1.442695
    %v10086 = vpow.pop %v10085
    %v10087 = vmul.f32 %v10068, 1.442695
    %v10088 = vpow.pop %v10087
    %v10089 = vmul.f32 %v10069, 1.442695
    %v10090 = vpow.pop %v10089
    %v10091 = vmul.f32 %v10070, 1.442695
    %v10092 = vpow.pop %v10091
    %v10093 = vmul.f32 %v10071, 1.442695
    %v10094 = vpow.pop %v10093
    %v10095 = vmul.f32 %v10072, 1.442695
    %v10096 = vpow.pop %v10095
    %v10097 = vmul.f32 %v10073, 1.442695
    %v10098 = vpow.pop %v10097
    %v10099 = vmul.f32 %v10074, 1.442695
    %v10100 = vpow.pop %v10099
    %v10101 = vmul.f32 %v10075, 1.442695
    %v10102 = vpow.pop %v10101
    %v10103 = vmul.f32 %v10076, 1.442695
    %v10104 = vpow.pop %v10103
    %v10105 = vmul.f32 %v10077, 1.442695
    %v10106 = vpow.pop %v10105
    %v10107 = vmul.f32 %v10078, 1.442695
    %v10108 = vpow.pop %v10107
    %v10109 = vmul.f32 %v10079, 1.442695
    %v10110 = vpow.pop %v10109
    %v10111 = vmul.f32 %v10080, 1.442695
    %v10112 = vpow.pop %v10111
    %v10113 = vsel %vm1168, %v10082, 0.0
    %10114 = vadd.xlane.f32.xlu0 %v10113
    %v10115 = vpop.xlane.xlu0 %10114
    %v10116 = vsel %vm1168, %v10084, 0.0
    %10117 = vadd.xlane.f32.xlu0 %v10116
    %v10118 = vpop.xlane.xlu0 %10117
    %v10119 = vsel %vm1168, %v10086, 0.0
    %10120 = vadd.xlane.f32.xlu0 %v10119
    %v10121 = vpop.xlane.xlu0 %10120
    %v10122 = vsel %vm1168, %v10088, 0.0
    %10123 = vadd.xlane.f32.xlu0 %v10122
    %v10124 = vpop.xlane.xlu0 %10123
    %v10125 = vsel %vm1168, %v10090, 0.0
    %10126 = vadd.xlane.f32.xlu0 %v10125
    %v10127 = vpop.xlane.xlu0 %10126
    %v10128 = vsel %vm1168, %v10092, 0.0
    %10129 = vadd.xlane.f32.xlu0 %v10128
    %v10130 = vpop.xlane.xlu0 %10129
    %v10131 = vsel %vm1168, %v10094, 0.0
    %10132 = vadd.xlane.f32.xlu0 %v10131
    %v10133 = vpop.xlane.xlu0 %10132
    %v10134 = vsel %vm1168, %v10096, 0.0
    %10135 = vadd.xlane.f32.xlu0 %v10134
    %v10136 = vpop.xlane.xlu0 %10135
    %v10137 = vsel %vm1168, %v10098, 0.0
    %10138 = vadd.xlane.f32.xlu0 %v10137
    %v10139 = vpop.xlane.xlu0 %10138
    %v10140 = vsel %vm1168, %v10100, 0.0
    %10141 = vadd.xlane.f32.xlu0 %v10140
    %v10142 = vpop.xlane.xlu0 %10141
    %v10143 = vsel %vm1168, %v10102, 0.0
    %10144 = vadd.xlane.f32.xlu0 %v10143
    %v10145 = vpop.xlane.xlu0 %10144
    %v10146 = vsel %vm1168, %v10104, 0.0
    %10147 = vadd.xlane.f32.xlu0 %v10146
    %v10148 = vpop.xlane.xlu0 %10147
    %v10149 = vsel %vm1168, %v10106, 0.0
    %10150 = vadd.xlane.f32.xlu0 %v10149
    %v10151 = vpop.xlane.xlu0 %10150
    %v10152 = vsel %vm1168, %v10108, 0.0
    %10153 = vadd.xlane.f32.xlu0 %v10152
    %v10154 = vpop.xlane.xlu0 %10153
    %v10155 = vsel %vm1168, %v10110, 0.0
    %10156 = vadd.xlane.f32.xlu0 %v10155
    %v10157 = vpop.xlane.xlu0 %10156
    %v10158 = vsel %vm1168, %v10112, 0.0
    %10159 = vadd.xlane.f32.xlu0 %v10158
    %v10160 = vpop.xlane.xlu0 %10159
    %v10161 = vrcp.pop %v10115
    %v10162 = vrcp.pop %v10118
    %v10163 = vrcp.pop %v10121
    %v10164 = vrcp.pop %v10124
    %v10165 = vrcp.pop %v10127
    %v10166 = vrcp.pop %v10130
    %v10167 = vrcp.pop %v10133
    %v10168 = vrcp.pop %v10136
    %v10169 = vrcp.pop %v10139
    %v10170 = vrcp.pop %v10142
    %v10171 = vrcp.pop %v10145
    %v10172 = vrcp.pop %v10148
    %v10173 = vrcp.pop %v10151
    %v10174 = vrcp.pop %v10154
    %v10175 = vrcp.pop %v10157
    %v10176 = vrcp.pop %v10160
    %v10177 = vmul.f32 %v10082, %v10161
    %v10178 = vmul.f32 %v10084, %v10162
    %v10179 = vmul.f32 %v10086, %v10163
    %v10180 = vmul.f32 %v10088, %v10164
    %v10181 = vmul.f32 %v10090, %v10165
    %v10182 = vmul.f32 %v10092, %v10166
    %v10183 = vmul.f32 %v10094, %v10167
    %v10184 = vmul.f32 %v10096, %v10168
    %v10185 = vmul.f32 %v10098, %v10169
    %v10186 = vmul.f32 %v10100, %v10170
    %v10187 = vmul.f32 %v10102, %v10171
    %v10188 = vmul.f32 %v10104, %v10172
    %v10189 = vmul.f32 %v10106, %v10173
    %v10190 = vmul.f32 %v10108, %v10174
    %v10191 = vmul.f32 %v10110, %v10175
    %v10192 = vmul.f32 %v10112, %v10176
    %v10194 = vsel %vm1168, %v10177, 0
    %v10197 = vsel %vm1168, %v10178, 0
    %10199 = vmatpush.msra.mxu0 0.0
    %10200 = vmatpush.msra.mxu0 0.0
    %10201 = vmatpush.msra.mxu0 0.0
    %10202 = vmatpush.msra.mxu0 0.0
    %10203 = vmatpush.msra.mxu0 0.0
    %10204 = vmatpush.msra.mxu0 0.0
    %10205 = vmatpush.msra.mxu0 0.0
    %10206 = vmatpush.msra.mxu0 0.0
    %10207 = vmatpush.msra.mxu0 0.0
    %10208 = vmatpush.msra.mxu0 0.0
    %10209 = vmatpush.msra.mxu0 0.0
    %10210 = vmatpush.msra.mxu0 0.0
    %10211 = vmatpush.msra.mxu0 0.0
    %10212 = vmatpush.msra.mxu0 0.0
    %10213 = vmatpush.msra.mxu0 %v9709
    %10214 = vmatpush.msra.mxu0 %v9706
    %10215 = vmatmul.f32.gmra.mxu0 %v10194
    %v10216 = vpop.f32.mrf.mxu0
    %v10217 = vadd.f32 0.0, %v10216
    %10218 = vmatmul.f32.gmra.mxu0 %v10197
    %v10219 = vpop.f32.mrf.mxu0
    %v10220 = vadd.f32 0.0, %v10219
    %10221 = vdwg.mxu0
    %v10223 = vsel %vm1168, %v10179, 0
    %v10226 = vsel %vm1168, %v10180, 0
    %10228 = vmatpush.msra.mxu0 0.0
    %10229 = vmatpush.msra.mxu0 0.0
    %10230 = vmatpush.msra.mxu0 0.0
    %10231 = vmatpush.msra.mxu0 0.0
    %10232 = vmatpush.msra.mxu0 0.0
    %10233 = vmatpush.msra.mxu0 0.0
    %10234 = vmatpush.msra.mxu0 0.0
    %10235 = vmatpush.msra.mxu0 0.0
    %10236 = vmatpush.msra.mxu0 0.0
    %10237 = vmatpush.msra.mxu0 0.0
    %10238 = vmatpush.msra.mxu0 0.0
    %10239 = vmatpush.msra.mxu0 0.0
    %10240 = vmatpush.msra.mxu0 0.0
    %10241 = vmatpush.msra.mxu0 0.0
    %10242 = vmatpush.msra.mxu0 %v9715
    %10243 = vmatpush.msra.mxu0 %v9712
    %10244 = vmatmul.f32.gmra.mxu0 %v10223
    %v10245 = vpop.f32.mrf.mxu0
    %v10246 = vadd.f32 0.0, %v10245
    %10247 = vmatmul.f32.gmra.mxu0 %v10226
    %v10248 = vpop.f32.mrf.mxu0
    %v10249 = vadd.f32 0.0, %v10248
    %10250 = vdwg.mxu0
    %v10252 = vsel %vm1168, %v10181, 0
    %v10255 = vsel %vm1168, %v10182, 0
    %10257 = vmatpush.msra.mxu0 0.0
    %10258 = vmatpush.msra.mxu0 0.0
    %10259 = vmatpush.msra.mxu0 0.0
    %10260 = vmatpush.msra.mxu0 0.0
    %10261 = vmatpush.msra.mxu0 0.0
    %10262 = vmatpush.msra.mxu0 0.0
    %10263 = vmatpush.msra.mxu0 0.0
    %10264 = vmatpush.msra.mxu0 0.0
    %10265 = vmatpush.msra.mxu0 0.0
    %10266 = vmatpush.msra.mxu0 0.0
    %10267 = vmatpush.msra.mxu0 0.0
    %10268 = vmatpush.msra.mxu0 0.0
    %10269 = vmatpush.msra.mxu0 0.0
    %10270 = vmatpush.msra.mxu0 0.0
    %10271 = vmatpush.msra.mxu0 %v9721
    %10272 = vmatpush.msra.mxu0 %v9718
    %10273 = vmatmul.f32.gmra.mxu0 %v10252
    %v10274 = vpop.f32.mrf.mxu0
    %v10275 = vadd.f32 0.0, %v10274
    %10276 = vmatmul.f32.gmra.mxu0 %v10255
    %v10277 = vpop.f32.mrf.mxu0
    %v10278 = vadd.f32 0.0, %v10277
    %10279 = vdwg.mxu0
    %v10281 = vsel %vm1168, %v10183, 0
    %v10284 = vsel %vm1168, %v10184, 0
    %10286 = vmatpush.msra.mxu0 0.0
    %10287 = vmatpush.msra.mxu0 0.0
    %10288 = vmatpush.msra.mxu0 0.0
    %10289 = vmatpush.msra.mxu0 0.0
    %10290 = vmatpush.msra.mxu0 0.0
    %10291 = vmatpush.msra.mxu0 0.0
    %10292 = vmatpush.msra.mxu0 0.0
    %10293 = vmatpush.msra.mxu0 0.0
    %10294 = vmatpush.msra.mxu0 0.0
    %10295 = vmatpush.msra.mxu0 0.0
    %10296 = vmatpush.msra.mxu0 0.0
    %10297 = vmatpush.msra.mxu0 0.0
    %10298 = vmatpush.msra.mxu0 0.0
    %10299 = vmatpush.msra.mxu0 0.0
    %10300 = vmatpush.msra.mxu0 %v9727
    %10301 = vmatpush.msra.mxu0 %v9724
    %10302 = vmatmul.f32.gmra.mxu0 %v10281
    %v10303 = vpop.f32.mrf.mxu0
    %v10304 = vadd.f32 0.0, %v10303
    %10305 = vmatmul.f32.gmra.mxu0 %v10284
    %v10306 = vpop.f32.mrf.mxu0
    %v10307 = vadd.f32 0.0, %v10306
    %10308 = vdwg.mxu0
    %v10310 = vsel %vm1168, %v10185, 0
    %v10313 = vsel %vm1168, %v10186, 0
    %10315 = vmatpush.msra.mxu0 0.0
    %10316 = vmatpush.msra.mxu0 0.0
    %10317 = vmatpush.msra.mxu0 0.0
    %10318 = vmatpush.msra.mxu0 0.0
    %10319 = vmatpush.msra.mxu0 0.0
    %10320 = vmatpush.msra.mxu0 0.0
    %10321 = vmatpush.msra.mxu0 0.0
    %10322 = vmatpush.msra.mxu0 0.0
    %10323 = vmatpush.msra.mxu0 0.0
    %10324 = vmatpush.msra.mxu0 0.0
    %10325 = vmatpush.msra.mxu0 0.0
    %10326 = vmatpush.msra.mxu0 0.0
    %10327 = vmatpush.msra.mxu0 0.0
    %10328 = vmatpush.msra.mxu0 0.0
    %10329 = vmatpush.msra.mxu0 %v9733
    %10330 = vmatpush.msra.mxu0 %v9730
    %10331 = vmatmul.f32.gmra.mxu0 %v10310
    %v10332 = vpop.f32.mrf.mxu0
    %v10333 = vadd.f32 0.0, %v10332
    %10334 = vmatmul.f32.gmra.mxu0 %v10313
    %v10335 = vpop.f32.mrf.mxu0
    %v10336 = vadd.f32 0.0, %v10335
    %10337 = vdwg.mxu0
    %v10339 = vsel %vm1168, %v10187, 0
    %v10342 = vsel %vm1168, %v10188, 0
    %10344 = vmatpush.msra.mxu0 0.0
    %10345 = vmatpush.msra.mxu0 0.0
    %10346 = vmatpush.msra.mxu0 0.0
    %10347 = vmatpush.msra.mxu0 0.0
    %10348 = vmatpush.msra.mxu0 0.0
    %10349 = vmatpush.msra.mxu0 0.0
    %10350 = vmatpush.msra.mxu0 0.0
    %10351 = vmatpush.msra.mxu0 0.0
    %10352 = vmatpush.msra.mxu0 0.0
    %10353 = vmatpush.msra.mxu0 0.0
    %10354 = vmatpush.msra.mxu0 0.0
    %10355 = vmatpush.msra.mxu0 0.0
    %10356 = vmatpush.msra.mxu0 0.0
    %10357 = vmatpush.msra.mxu0 0.0
    %10358 = vmatpush.msra.mxu0 %v9739
    %10359 = vmatpush.msra.mxu0 %v9736
    %10360 = vmatmul.f32.gmra.mxu0 %v10339
    %v10361 = vpop.f32.mrf.mxu0
    %v10362 = vadd.f32 0.0, %v10361
    %10363 = vmatmul.f32.gmra.mxu0 %v10342
    %v10364 = vpop.f32.mrf.mxu0
    %v10365 = vadd.f32 0.0, %v10364
    %10366 = vdwg.mxu0
    %v10368 = vsel %vm1168, %v10189, 0
    %v10371 = vsel %vm1168, %v10190, 0
    %10373 = vmatpush.msra.mxu0 0.0
    %10374 = vmatpush.msra.mxu0 0.0
    %10375 = vmatpush.msra.mxu0 0.0
    %10376 = vmatpush.msra.mxu0 0.0
    %10377 = vmatpush.msra.mxu0 0.0
    %10378 = vmatpush.msra.mxu0 0.0
    %10379 = vmatpush.msra.mxu0 0.0
    %10380 = vmatpush.msra.mxu0 0.0
    %10381 = vmatpush.msra.mxu0 0.0
    %10382 = vmatpush.msra.mxu0 0.0
    %10383 = vmatpush.msra.mxu0 0.0
    %10384 = vmatpush.msra.mxu0 0.0
    %10385 = vmatpush.msra.mxu0 0.0
    %10386 = vmatpush.msra.mxu0 0.0
    %10387 = vmatpush.msra.mxu0 %v9745
    %10388 = vmatpush.msra.mxu0 %v9742
    %10389 = vmatmul.f32.gmra.mxu0 %v10368
    %v10390 = vpop.f32.mrf.mxu0
    %v10391 = vadd.f32 0.0, %v10390
    %10392 = vmatmul.f32.gmra.mxu0 %v10371
    %v10393 = vpop.f32.mrf.mxu0
    %v10394 = vadd.f32 0.0, %v10393
    %10395 = vdwg.mxu0
    %v10397 = vsel %vm1168, %v10191, 0
    %v10400 = vsel %vm1168, %v10192, 0
    %10402 = vmatpush.msra.mxu0 0.0
    %10403 = vmatpush.msra.mxu0 0.0
    %10404 = vmatpush.msra.mxu0 0.0
    %10405 = vmatpush.msra.mxu0 0.0
    %10406 = vmatpush.msra.mxu0 0.0
    %10407 = vmatpush.msra.mxu0 0.0
    %10408 = vmatpush.msra.mxu0 0.0
    %10409 = vmatpush.msra.mxu0 0.0
    %10410 = vmatpush.msra.mxu0 0.0
    %10411 = vmatpush.msra.mxu0 0.0
    %10412 = vmatpush.msra.mxu0 0.0
    %10413 = vmatpush.msra.mxu0 0.0
    %10414 = vmatpush.msra.mxu0 0.0
    %10415 = vmatpush.msra.mxu0 0.0
    %10416 = vmatpush.msra.mxu0 %v9751
    %10417 = vmatpush.msra.mxu0 %v9748
    %10418 = vmatmul.f32.gmra.mxu0 %v10397
    %v10419 = vpop.f32.mrf.mxu0
    %v10420 = vadd.f32 0.0, %v10419
    %10421 = vmatmul.f32.gmra.mxu0 %v10400
    %v10422 = vpop.f32.mrf.mxu0
    %v10423 = vadd.f32 0.0, %v10422
    %10424 = vdwg.mxu0
    %v10425 = vadd.f32 %v9597, %v10217
    %v10426 = vadd.f32 %v9598, %v10220
    %v10427 = vadd.f32 %v9599, %v10246
    %v10428 = vadd.f32 %v9600, %v10249
    %v10429 = vadd.f32 %v9601, %v10275
    %v10430 = vadd.f32 %v9602, %v10278
    %v10431 = vadd.f32 %v9603, %v10304
    %v10432 = vadd.f32 %v9604, %v10307
    %v10433 = vadd.f32 %v9605, %v10333
    %v10434 = vadd.f32 %v9606, %v10336
    %v10435 = vadd.f32 %v9607, %v10362
    %v10436 = vadd.f32 %v9608, %v10365
    %v10437 = vadd.f32 %v9609, %v10391
    %v10438 = vadd.f32 %v9610, %v10394
    %v10439 = vadd.f32 %v9611, %v10420
    %v10440 = vadd.f32 %v9612, %v10423
    %s10441 = scalar_lea.vmem %s12, 2
    %v10442 = vld [vmem:[%s10441] sm:$0x1]
    %s10443 = scalar_lea.vmem %s13, 2
    %v10444 = vld [vmem:[%s10443] sm:$0x1]
    %v10445 = vsel %vm296, %v10425, 0.0
    %10446 = vadd.xlane.f32.xlu0 %v10445
    %v10447 = vpop.xlane.xlu0 %10446
    %v10448 = vsel %vm296, %v10426, 0.0
    %10449 = vadd.xlane.f32.xlu0 %v10448
    %v10450 = vpop.xlane.xlu0 %10449
    %v10451 = vsel %vm296, %v10427, 0.0
    %10452 = vadd.xlane.f32.xlu0 %v10451
    %v10453 = vpop.xlane.xlu0 %10452
    %v10454 = vsel %vm296, %v10428, 0.0
    %10455 = vadd.xlane.f32.xlu0 %v10454
    %v10456 = vpop.xlane.xlu0 %10455
    %v10457 = vsel %vm296, %v10429, 0.0
    %10458 = vadd.xlane.f32.xlu0 %v10457
    %v10459 = vpop.xlane.xlu0 %10458
    %v10460 = vsel %vm296, %v10430, 0.0
    %10461 = vadd.xlane.f32.xlu0 %v10460
    %v10462 = vpop.xlane.xlu0 %10461
    %v10463 = vsel %vm296, %v10431, 0.0
    %10464 = vadd.xlane.f32.xlu0 %v10463
    %v10465 = vpop.xlane.xlu0 %10464
    %v10466 = vsel %vm296, %v10432, 0.0
    %10467 = vadd.xlane.f32.xlu0 %v10466
    %v10468 = vpop.xlane.xlu0 %10467
    %v10469 = vsel %vm296, %v10433, 0.0
    %10470 = vadd.xlane.f32.xlu0 %v10469
    %v10471 = vpop.xlane.xlu0 %10470
    %v10472 = vsel %vm296, %v10434, 0.0
    %10473 = vadd.xlane.f32.xlu0 %v10472
    %v10474 = vpop.xlane.xlu0 %10473
    %v10475 = vsel %vm296, %v10435, 0.0
    %10476 = vadd.xlane.f32.xlu0 %v10475
    %v10477 = vpop.xlane.xlu0 %10476
    %v10478 = vsel %vm296, %v10436, 0.0
    %10479 = vadd.xlane.f32.xlu0 %v10478
    %v10480 = vpop.xlane.xlu0 %10479
    %v10481 = vsel %vm296, %v10437, 0.0
    %10482 = vadd.xlane.f32.xlu0 %v10481
    %v10483 = vpop.xlane.xlu0 %10482
    %v10484 = vsel %vm296, %v10438, 0.0
    %10485 = vadd.xlane.f32.xlu0 %v10484
    %v10486 = vpop.xlane.xlu0 %10485
    %v10487 = vsel %vm296, %v10439, 0.0
    %10488 = vadd.xlane.f32.xlu0 %v10487
    %v10489 = vpop.xlane.xlu0 %10488
    %v10490 = vsel %vm296, %v10440, 0.0
    %10491 = vadd.xlane.f32.xlu0 %v10490
    %v10492 = vpop.xlane.xlu0 %10491
    %v10493 = vmul.f32 %v10447, %v351
    %v10494 = vmul.f32 %v10450, %v351
    %v10495 = vmul.f32 %v10453, %v351
    %v10496 = vmul.f32 %v10456, %v351
    %v10497 = vmul.f32 %v10459, %v351
    %v10498 = vmul.f32 %v10462, %v351
    %v10499 = vmul.f32 %v10465, %v351
    %v10500 = vmul.f32 %v10468, %v351
    %v10501 = vmul.f32 %v10471, %v351
    %v10502 = vmul.f32 %v10474, %v351
    %v10503 = vmul.f32 %v10477, %v351
    %v10504 = vmul.f32 %v10480, %v351
    %v10505 = vmul.f32 %v10483, %v351
    %v10506 = vmul.f32 %v10486, %v351
    %v10507 = vmul.f32 %v10489, %v351
    %v10508 = vmul.f32 %v10492, %v351
    %v10509 = vsub.f32 %v10425, %v10493
    %v10510 = vsub.f32 %v10426, %v10494
    %v10511 = vsub.f32 %v10427, %v10495
    %v10512 = vsub.f32 %v10428, %v10496
    %v10513 = vsub.f32 %v10429, %v10497
    %v10514 = vsub.f32 %v10430, %v10498
    %v10515 = vsub.f32 %v10431, %v10499
    %v10516 = vsub.f32 %v10432, %v10500
    %v10517 = vsub.f32 %v10433, %v10501
    %v10518 = vsub.f32 %v10434, %v10502
    %v10519 = vsub.f32 %v10435, %v10503
    %v10520 = vsub.f32 %v10436, %v10504
    %v10521 = vsub.f32 %v10437, %v10505
    %v10522 = vsub.f32 %v10438, %v10506
    %v10523 = vsub.f32 %v10439, %v10507
    %v10524 = vsub.f32 %v10440, %v10508
    %v10525 = vmul.f32 %v10509, %v10509
    %v10526 = vmul.f32 %v10510, %v10510
    %v10527 = vmul.f32 %v10511, %v10511
    %v10528 = vmul.f32 %v10512, %v10512
    %v10529 = vmul.f32 %v10513, %v10513
    %v10530 = vmul.f32 %v10514, %v10514
    %v10531 = vmul.f32 %v10515, %v10515
    %v10532 = vmul.f32 %v10516, %v10516
    %v10533 = vmul.f32 %v10517, %v10517
    %v10534 = vmul.f32 %v10518, %v10518
    %v10535 = vmul.f32 %v10519, %v10519
    %v10536 = vmul.f32 %v10520, %v10520
    %v10537 = vmul.f32 %v10521, %v10521
    %v10538 = vmul.f32 %v10522, %v10522
    %v10539 = vmul.f32 %v10523, %v10523
    %v10540 = vmul.f32 %v10524, %v10524
    %v10541 = vsel %vm296, %v10525, 0.0
    %10542 = vadd.xlane.f32.xlu0 %v10541
    %v10543 = vpop.xlane.xlu0 %10542
    %v10544 = vsel %vm296, %v10526, 0.0
    %10545 = vadd.xlane.f32.xlu0 %v10544
    %v10546 = vpop.xlane.xlu0 %10545
    %v10547 = vsel %vm296, %v10527, 0.0
    %10548 = vadd.xlane.f32.xlu0 %v10547
    %v10549 = vpop.xlane.xlu0 %10548
    %v10550 = vsel %vm296, %v10528, 0.0
    %10551 = vadd.xlane.f32.xlu0 %v10550
    %v10552 = vpop.xlane.xlu0 %10551
    %v10553 = vsel %vm296, %v10529, 0.0
    %10554 = vadd.xlane.f32.xlu0 %v10553
    %v10555 = vpop.xlane.xlu0 %10554
    %v10556 = vsel %vm296, %v10530, 0.0
    %10557 = vadd.xlane.f32.xlu0 %v10556
    %v10558 = vpop.xlane.xlu0 %10557
    %v10559 = vsel %vm296, %v10531, 0.0
    %10560 = vadd.xlane.f32.xlu0 %v10559
    %v10561 = vpop.xlane.xlu0 %10560
    %v10562 = vsel %vm296, %v10532, 0.0
    %10563 = vadd.xlane.f32.xlu0 %v10562
    %v10564 = vpop.xlane.xlu0 %10563
    %v10565 = vsel %vm296, %v10533, 0.0
    %10566 = vadd.xlane.f32.xlu0 %v10565
    %v10567 = vpop.xlane.xlu0 %10566
    %v10568 = vsel %vm296, %v10534, 0.0
    %10569 = vadd.xlane.f32.xlu0 %v10568
    %v10570 = vpop.xlane.xlu0 %10569
    %v10571 = vsel %vm296, %v10535, 0.0
    %10572 = vadd.xlane.f32.xlu0 %v10571
    %v10573 = vpop.xlane.xlu0 %10572
    %v10574 = vsel %vm296, %v10536, 0.0
    %10575 = vadd.xlane.f32.xlu0 %v10574
    %v10576 = vpop.xlane.xlu0 %10575
    %v10577 = vsel %vm296, %v10537, 0.0
    %10578 = vadd.xlane.f32.xlu0 %v10577
    %v10579 = vpop.xlane.xlu0 %10578
    %v10580 = vsel %vm296, %v10538, 0.0
    %10581 = vadd.xlane.f32.xlu0 %v10580
    %v10582 = vpop.xlane.xlu0 %10581
    %v10583 = vsel %vm296, %v10539, 0.0
    %10584 = vadd.xlane.f32.xlu0 %v10583
    %v10585 = vpop.xlane.xlu0 %10584
    %v10586 = vsel %vm296, %v10540, 0.0
    %10587 = vadd.xlane.f32.xlu0 %v10586
    %v10588 = vpop.xlane.xlu0 %10587
    %v10589 = vmul.f32 %v10543, %v351
    %v10590 = vmul.f32 %v10546, %v351
    %v10591 = vmul.f32 %v10549, %v351
    %v10592 = vmul.f32 %v10552, %v351
    %v10593 = vmul.f32 %v10555, %v351
    %v10594 = vmul.f32 %v10558, %v351
    %v10595 = vmul.f32 %v10561, %v351
    %v10596 = vmul.f32 %v10564, %v351
    %v10597 = vmul.f32 %v10567, %v351
    %v10598 = vmul.f32 %v10570, %v351
    %v10599 = vmul.f32 %v10573, %v351
    %v10600 = vmul.f32 %v10576, %v351
    %v10601 = vmul.f32 %v10579, %v351
    %v10602 = vmul.f32 %v10582, %v351
    %v10603 = vmul.f32 %v10585, %v351
    %v10604 = vmul.f32 %v10588, %v351
    %v10605 = vadd.f32 %v10589, 1e-05
    %v10606 = vadd.f32 %v10590, 1e-05
    %v10607 = vadd.f32 %v10591, 1e-05
    %v10608 = vadd.f32 %v10592, 1e-05
    %v10609 = vadd.f32 %v10593, 1e-05
    %v10610 = vadd.f32 %v10594, 1e-05
    %v10611 = vadd.f32 %v10595, 1e-05
    %v10612 = vadd.f32 %v10596, 1e-05
    %v10613 = vadd.f32 %v10597, 1e-05
    %v10614 = vadd.f32 %v10598, 1e-05
    %v10615 = vadd.f32 %v10599, 1e-05
    %v10616 = vadd.f32 %v10600, 1e-05
    %v10617 = vadd.f32 %v10601, 1e-05
    %v10618 = vadd.f32 %v10602, 1e-05
    %v10619 = vadd.f32 %v10603, 1e-05
    %v10620 = vadd.f32 %v10604, 1e-05
    %v10621 = vrsqrt.pop %v10605
    %v10622 = vmul.f32 %v10621, %v10605
    %v10623 = vmul.f32 %v10622, %v10621
    %v10624 = vmul.f32 0.5, %v10623
    %v10625 = vsub.f32 1.5, %v10624
    %v10626 = vmul.f32 %v10621, %v10625
    %vm10627 = vweird.f32 %v10605
    %vm10628 = vweird.f32 %v10621
    %vm10629 = vmor %vm10627, %vm10628
    %v10630 = vsel %vm10629, %v10621, %v10626
    %v10631 = vrsqrt.pop %v10606
    %v10632 = vmul.f32 %v10631, %v10606
    %v10633 = vmul.f32 %v10632, %v10631
    %v10634 = vmul.f32 0.5, %v10633
    %v10635 = vsub.f32 1.5, %v10634
    %v10636 = vmul.f32 %v10631, %v10635
    %vm10637 = vweird.f32 %v10606
    %vm10638 = vweird.f32 %v10631
    %vm10639 = vmor %vm10637, %vm10638
    %v10640 = vsel %vm10639, %v10631, %v10636
    %v10641 = vrsqrt.pop %v10607
    %v10642 = vmul.f32 %v10641, %v10607
    %v10643 = vmul.f32 %v10642, %v10641
    %v10644 = vmul.f32 0.5, %v10643
    %v10645 = vsub.f32 1.5, %v10644
    %v10646 = vmul.f32 %v10641, %v10645
    %vm10647 = vweird.f32 %v10607
    %vm10648 = vweird.f32 %v10641
    %vm10649 = vmor %vm10647, %vm10648
    %v10650 = vsel %vm10649, %v10641, %v10646
    %v10651 = vrsqrt.pop %v10608
    %v10652 = vmul.f32 %v10651, %v10608
    %v10653 = vmul.f32 %v10652, %v10651
    %v10654 = vmul.f32 0.5, %v10653
    %v10655 = vsub.f32 1.5, %v10654
    %v10656 = vmul.f32 %v10651, %v10655
    %vm10657 = vweird.f32 %v10608
    %vm10658 = vweird.f32 %v10651
    %vm10659 = vmor %vm10657, %vm10658
    %v10660 = vsel %vm10659, %v10651, %v10656
    %v10661 = vrsqrt.pop %v10609
    %v10662 = vmul.f32 %v10661, %v10609
    %v10663 = vmul.f32 %v10662, %v10661
    %v10664 = vmul.f32 0.5, %v10663
    %v10665 = vsub.f32 1.5, %v10664
    %v10666 = vmul.f32 %v10661, %v10665
    %vm10667 = vweird.f32 %v10609
    %vm10668 = vweird.f32 %v10661
    %vm10669 = vmor %vm10667, %vm10668
    %v10670 = vsel %vm10669, %v10661, %v10666
    %v10671 = vrsqrt.pop %v10610
    %v10672 = vmul.f32 %v10671, %v10610
    %v10673 = vmul.f32 %v10672, %v10671
    %v10674 = vmul.f32 0.5, %v10673
    %v10675 = vsub.f32 1.5, %v10674
    %v10676 = vmul.f32 %v10671, %v10675
    %vm10677 = vweird.f32 %v10610
    %vm10678 = vweird.f32 %v10671
    %vm10679 = vmor %vm10677, %vm10678
    %v10680 = vsel %vm10679, %v10671, %v10676
    %v10681 = vrsqrt.pop %v10611
    %v10682 = vmul.f32 %v10681, %v10611
    %v10683 = vmul.f32 %v10682, %v10681
    %v10684 = vmul.f32 0.5, %v10683
    %v10685 = vsub.f32 1.5, %v10684
    %v10686 = vmul.f32 %v10681, %v10685
    %vm10687 = vweird.f32 %v10611
    %vm10688 = vweird.f32 %v10681
    %vm10689 = vmor %vm10687, %vm10688
    %v10690 = vsel %vm10689, %v10681, %v10686
    %v10691 = vrsqrt.pop %v10612
    %v10692 = vmul.f32 %v10691, %v10612
    %v10693 = vmul.f32 %v10692, %v10691
    %v10694 = vmul.f32 0.5, %v10693
    %v10695 = vsub.f32 1.5, %v10694
    %v10696 = vmul.f32 %v10691, %v10695
    %vm10697 = vweird.f32 %v10612
    %vm10698 = vweird.f32 %v10691
    %vm10699 = vmor %vm10697, %vm10698
    %v10700 = vsel %vm10699, %v10691, %v10696
    %v10701 = vrsqrt.pop %v10613
    %v10702 = vmul.f32 %v10701, %v10613
    %v10703 = vmul.f32 %v10702, %v10701
    %v10704 = vmul.f32 0.5, %v10703
    %v10705 = vsub.f32 1.5, %v10704
    %v10706 = vmul.f32 %v10701, %v10705
    %vm10707 = vweird.f32 %v10613
    %vm10708 = vweird.f32 %v10701
    %vm10709 = vmor %vm10707, %vm10708
    %v10710 = vsel %vm10709, %v10701, %v10706
    %v10711 = vrsqrt.pop %v10614
    %v10712 = vmul.f32 %v10711, %v10614
    %v10713 = vmul.f32 %v10712, %v10711
    %v10714 = vmul.f32 0.5, %v10713
    %v10715 = vsub.f32 1.5, %v10714
    %v10716 = vmul.f32 %v10711, %v10715
    %vm10717 = vweird.f32 %v10614
    %vm10718 = vweird.f32 %v10711
    %vm10719 = vmor %vm10717, %vm10718
    %v10720 = vsel %vm10719, %v10711, %v10716
    %v10721 = vrsqrt.pop %v10615
    %v10722 = vmul.f32 %v10721, %v10615
    %v10723 = vmul.f32 %v10722, %v10721
    %v10724 = vmul.f32 0.5, %v10723
    %v10725 = vsub.f32 1.5, %v10724
    %v10726 = vmul.f32 %v10721, %v10725
    %vm10727 = vweird.f32 %v10615
    %vm10728 = vweird.f32 %v10721
    %vm10729 = vmor %vm10727, %vm10728
    %v10730 = vsel %vm10729, %v10721, %v10726
    %v10731 = vrsqrt.pop %v10616
    %v10732 = vmul.f32 %v10731, %v10616
    %v10733 = vmul.f32 %v10732, %v10731
    %v10734 = vmul.f32 0.5, %v10733
    %v10735 = vsub.f32 1.5, %v10734
    %v10736 = vmul.f32 %v10731, %v10735
    %vm10737 = vweird.f32 %v10616
    %vm10738 = vweird.f32 %v10731
    %vm10739 = vmor %vm10737, %vm10738
    %v10740 = vsel %vm10739, %v10731, %v10736
    %v10741 = vrsqrt.pop %v10617
    %v10742 = vmul.f32 %v10741, %v10617
    %v10743 = vmul.f32 %v10742, %v10741
    %v10744 = vmul.f32 0.5, %v10743
    %v10745 = vsub.f32 1.5, %v10744
    %v10746 = vmul.f32 %v10741, %v10745
    %vm10747 = vweird.f32 %v10617
    %vm10748 = vweird.f32 %v10741
    %vm10749 = vmor %vm10747, %vm10748
    %v10750 = vsel %vm10749, %v10741, %v10746
    %v10751 = vrsqrt.pop %v10618
    %v10752 = vmul.f32 %v10751, %v10618
    %v10753 = vmul.f32 %v10752, %v10751
    %v10754 = vmul.f32 0.5, %v10753
    %v10755 = vsub.f32 1.5, %v10754
    %v10756 = vmul.f32 %v10751, %v10755
    %vm10757 = vweird.f32 %v10618
    %vm10758 = vweird.f32 %v10751
    %vm10759 = vmor %vm10757, %vm10758
    %v10760 = vsel %vm10759, %v10751, %v10756
    %v10761 = vrsqrt.pop %v10619
    %v10762 = vmul.f32 %v10761, %v10619
    %v10763 = vmul.f32 %v10762, %v10761
    %v10764 = vmul.f32 0.5, %v10763
    %v10765 = vsub.f32 1.5, %v10764
    %v10766 = vmul.f32 %v10761, %v10765
    %vm10767 = vweird.f32 %v10619
    %vm10768 = vweird.f32 %v10761
    %vm10769 = vmor %vm10767, %vm10768
    %v10770 = vsel %vm10769, %v10761, %v10766
    %v10771 = vrsqrt.pop %v10620
    %v10772 = vmul.f32 %v10771, %v10620
    %v10773 = vmul.f32 %v10772, %v10771
    %v10774 = vmul.f32 0.5, %v10773
    %v10775 = vsub.f32 1.5, %v10774
    %v10776 = vmul.f32 %v10771, %v10775
    %vm10777 = vweird.f32 %v10620
    %vm10778 = vweird.f32 %v10771
    %vm10779 = vmor %vm10777, %vm10778
    %v10780 = vsel %vm10779, %v10771, %v10776
    %v10781 = vmul.f32 %v10509, %v10630
    %v10782 = vmul.f32 %v10510, %v10640
    %v10783 = vmul.f32 %v10511, %v10650
    %v10784 = vmul.f32 %v10512, %v10660
    %v10785 = vmul.f32 %v10513, %v10670
    %v10786 = vmul.f32 %v10514, %v10680
    %v10787 = vmul.f32 %v10515, %v10690
    %v10788 = vmul.f32 %v10516, %v10700
    %v10789 = vmul.f32 %v10517, %v10710
    %v10790 = vmul.f32 %v10518, %v10720
    %v10791 = vmul.f32 %v10519, %v10730
    %v10792 = vmul.f32 %v10520, %v10740
    %v10793 = vmul.f32 %v10521, %v10750
    %v10794 = vmul.f32 %v10522, %v10760
    %v10795 = vmul.f32 %v10523, %v10770
    %v10796 = vmul.f32 %v10524, %v10780
    %v10798 = vperm.slane %v10442, 0
    %v10800 = vmul.f32 %v10781, %v10798
    %v10801 = vmul.f32 %v10782, %v10798
    %v10802 = vmul.f32 %v10783, %v10798
    %v10803 = vmul.f32 %v10784, %v10798
    %v10804 = vmul.f32 %v10785, %v10798
    %v10805 = vmul.f32 %v10786, %v10798
    %v10806 = vmul.f32 %v10787, %v10798
    %v10807 = vmul.f32 %v10788, %v10798
    %v10808 = vmul.f32 %v10789, %v10798
    %v10809 = vmul.f32 %v10790, %v10798
    %v10810 = vmul.f32 %v10791, %v10798
    %v10811 = vmul.f32 %v10792, %v10798
    %v10812 = vmul.f32 %v10793, %v10798
    %v10813 = vmul.f32 %v10794, %v10798
    %v10814 = vmul.f32 %v10795, %v10798
    %v10815 = vmul.f32 %v10796, %v10798
    %v10817 = vperm.slane %v10444, 0
    %v10819 = vadd.f32 %v10800, %v10817
    %v10820 = vadd.f32 %v10801, %v10817
    %v10821 = vadd.f32 %v10802, %v10817
    %v10822 = vadd.f32 %v10803, %v10817
    %v10823 = vadd.f32 %v10804, %v10817
    %v10824 = vadd.f32 %v10805, %v10817
    %v10825 = vadd.f32 %v10806, %v10817
    %v10826 = vadd.f32 %v10807, %v10817
    %v10827 = vadd.f32 %v10808, %v10817
    %v10828 = vadd.f32 %v10809, %v10817
    %v10829 = vadd.f32 %v10810, %v10817
    %v10830 = vadd.f32 %v10811, %v10817
    %v10831 = vadd.f32 %v10812, %v10817
    %v10832 = vadd.f32 %v10813, %v10817
    %v10833 = vadd.f32 %v10814, %v10817
    %v10834 = vadd.f32 %v10815, %v10817
    %s10835 = scalar_lea.vmem %s6, 64
    %v10836 = vld [vmem:[%s10835] sm:$0xff]
    %v10837 = vld [vmem:[%s10835 + $0x8] sm:$0xff]
    %v10838 = vld [vmem:[%s10835 + $0x10] sm:$0xff]
    %v10839 = vld [vmem:[%s10835 + $0x18] sm:$0xff]
    %s10840 = scalar_lea.vmem %s7, 2
    %v10841 = vld [vmem:[%s10840] sm:$0x1]
    %v10843 = vperm.slane %v10841, 0
    %v10846 = vsel %vm296, %v10819, 0
    %v10849 = vsel %vm296, %v10820, 0
    %v10852 = vsel %vm296, %v10821, 0
    %v10855 = vsel %vm296, %v10822, 0
    %v10858 = vsel %vm296, %v10823, 0
    %v10861 = vsel %vm296, %v10824, 0
    %v10864 = vsel %vm296, %v10825, 0
    %v10867 = vsel %vm296, %v10826, 0
    %v10870 = vsel %vm296, %v10827, 0
    %v10873 = vsel %vm296, %v10828, 0
    %v10876 = vsel %vm296, %v10829, 0
    %v10879 = vsel %vm296, %v10830, 0
    %v10882 = vsel %vm296, %v10831, 0
    %v10885 = vsel %vm296, %v10832, 0
    %v10888 = vsel %vm296, %v10833, 0
    %v10891 = vsel %vm296, %v10834, 0
    %10893 = vmatpush.msra.mxu0 0.0
    %10894 = vmatpush.msra.mxu0 0.0
    %10895 = vmatpush.msra.mxu0 0.0
    %10896 = vmatpush.msra.mxu0 0.0
    %10897 = vmatpush.msra.mxu0 0.0
    %10898 = vmatpush.msra.mxu0 0.0
    %10899 = vmatpush.msra.mxu0 0.0
    %10900 = vmatpush.msra.mxu0 0.0
    %10901 = vmatpush.msra.mxu0 0.0
    %10902 = vmatpush.msra.mxu0 0.0
    %10903 = vmatpush.msra.mxu0 0.0
    %10904 = vmatpush.msra.mxu0 0.0
    %10905 = vmatpush.msra.mxu0 %v10839
    %10906 = vmatpush.msra.mxu0 %v10838
    %10907 = vmatpush.msra.mxu0 %v10837
    %10908 = vmatpush.msra.mxu0 %v10836
    %10909 = vmatmul.f32.gmra.mxu0 %v10846
    %v10910 = vpop.f32.mrf.mxu0
    %v10911 = vadd.f32 %v10843, %v10910
    %10912 = vmatmul.f32.gmra.mxu0 %v10849
    %v10913 = vpop.f32.mrf.mxu0
    %v10914 = vadd.f32 %v10843, %v10913
    %10915 = vmatmul.f32.gmra.mxu0 %v10852
    %v10916 = vpop.f32.mrf.mxu0
    %v10917 = vadd.f32 %v10843, %v10916
    %10918 = vmatmul.f32.gmra.mxu0 %v10855
    %v10919 = vpop.f32.mrf.mxu0
    %v10920 = vadd.f32 %v10843, %v10919
    %10921 = vmatmul.f32.gmra.mxu0 %v10858
    %v10922 = vpop.f32.mrf.mxu0
    %v10923 = vadd.f32 %v10843, %v10922
    %10924 = vmatmul.f32.gmra.mxu0 %v10861
    %v10925 = vpop.f32.mrf.mxu0
    %v10926 = vadd.f32 %v10843, %v10925
    %10927 = vmatmul.f32.gmra.mxu0 %v10864
    %v10928 = vpop.f32.mrf.mxu0
    %v10929 = vadd.f32 %v10843, %v10928
    %10930 = vmatmul.f32.gmra.mxu0 %v10867
    %v10931 = vpop.f32.mrf.mxu0
    %v10932 = vadd.f32 %v10843, %v10931
    %10933 = vmatmul.f32.gmra.mxu0 %v10870
    %v10934 = vpop.f32.mrf.mxu0
    %v10935 = vadd.f32 %v10843, %v10934
    %10936 = vmatmul.f32.gmra.mxu0 %v10873
    %v10937 = vpop.f32.mrf.mxu0
    %v10938 = vadd.f32 %v10843, %v10937
    %10939 = vmatmul.f32.gmra.mxu0 %v10876
    %v10940 = vpop.f32.mrf.mxu0
    %v10941 = vadd.f32 %v10843, %v10940
    %10942 = vmatmul.f32.gmra.mxu0 %v10879
    %v10943 = vpop.f32.mrf.mxu0
    %v10944 = vadd.f32 %v10843, %v10943
    %10945 = vmatmul.f32.gmra.mxu0 %v10882
    %v10946 = vpop.f32.mrf.mxu0
    %v10947 = vadd.f32 %v10843, %v10946
    %10948 = vmatmul.f32.gmra.mxu0 %v10885
    %v10949 = vpop.f32.mrf.mxu0
    %v10950 = vadd.f32 %v10843, %v10949
    %10951 = vmatmul.f32.gmra.mxu0 %v10888
    %v10952 = vpop.f32.mrf.mxu0
    %v10953 = vadd.f32 %v10843, %v10952
    %10954 = vmatmul.f32.gmra.mxu0 %v10891
    %v10955 = vpop.f32.mrf.mxu0
    %v10956 = vadd.f32 %v10843, %v10955
    %10957 = vdwg.mxu0
    %v10958 = vmax.f32 %v10911, 0.0
    %v10959 = vmax.f32 %v10914, 0.0
    %v10960 = vmax.f32 %v10917, 0.0
    %v10961 = vmax.f32 %v10920, 0.0
    %v10962 = vmax.f32 %v10923, 0.0
    %v10963 = vmax.f32 %v10926, 0.0
    %v10964 = vmax.f32 %v10929, 0.0
    %v10965 = vmax.f32 %v10932, 0.0
    %v10966 = vmax.f32 %v10935, 0.0
    %v10967 = vmax.f32 %v10938, 0.0
    %v10968 = vmax.f32 %v10941, 0.0
    %v10969 = vmax.f32 %v10944, 0.0
    %v10970 = vmax.f32 %v10947, 0.0
    %v10971 = vmax.f32 %v10950, 0.0
    %v10972 = vmax.f32 %v10953, 0.0
    %v10973 = vmax.f32 %v10956, 0.0
    %s10974 = scalar_lea.vmem %s8, 256
    %v10975 = vld [vmem:[%s10974] sm:$0xff]
    %v10976 = vld [vmem:[%s10974 + $0x8] sm:$0xff]
    %v10977 = vld [vmem:[%s10974 + $0x10] sm:$0xff]
    %v10978 = vld [vmem:[%s10974 + $0x18] sm:$0xff]
    %v10979 = vld [vmem:[%s10974 + $0x20] sm:$0xff]
    %v10980 = vld [vmem:[%s10974 + $0x28] sm:$0xff]
    %v10981 = vld [vmem:[%s10974 + $0x30] sm:$0xff]
    %v10982 = vld [vmem:[%s10974 + $0x38] sm:$0xff]
    %v10983 = vld [vmem:[%s10974 + $0x40] sm:$0xff]
    %v10984 = vld [vmem:[%s10974 + $0x48] sm:$0xff]
    %v10985 = vld [vmem:[%s10974 + $0x50] sm:$0xff]
    %v10986 = vld [vmem:[%s10974 + $0x58] sm:$0xff]
    %v10987 = vld [vmem:[%s10974 + $0x60] sm:$0xff]
    %v10988 = vld [vmem:[%s10974 + $0x68] sm:$0xff]
    %v10989 = vld [vmem:[%s10974 + $0x70] sm:$0xff]
    %v10990 = vld [vmem:[%s10974 + $0x78] sm:$0xff]
    %10991 = vmatpush.msra.mxu0 %v10990
    %10992 = vmatpush.msra.mxu0 %v10989
    %10993 = vmatpush.msra.mxu0 %v10988
    %10994 = vmatpush.msra.mxu0 %v10987
    %10995 = vmatpush.msra.mxu0 %v10986
    %10996 = vmatpush.msra.mxu0 %v10985
    %10997 = vmatpush.msra.mxu0 %v10984
    %10998 = vmatpush.msra.mxu0 %v10983
    %10999 = vmatpush.msra.mxu0 %v10982
    %11000 = vmatpush.msra.mxu0 %v10981
    %11001 = vmatpush.msra.mxu0 %v10980
    %11002 = vmatpush.msra.mxu0 %v10979
    %11003 = vmatpush.msra.mxu0 %v10978
    %11004 = vmatpush.msra.mxu0 %v10977
    %11005 = vmatpush.msra.mxu0 %v10976
    %11006 = vmatpush.msra.mxu0 %v10975
    %11007 = vmatmul.f32.gmra.mxu0 %v10958
    %v11008 = vpop.f32.mrf.mxu0
    %v11009 = vadd.f32 0.0, %v11008
    %11010 = vmatmul.f32.gmra.mxu0 %v10959
    %v11011 = vpop.f32.mrf.mxu0
    %v11012 = vadd.f32 0.0, %v11011
    %11013 = vmatmul.f32.gmra.mxu0 %v10960
    %v11014 = vpop.f32.mrf.mxu0
    %v11015 = vadd.f32 0.0, %v11014
    %11016 = vmatmul.f32.gmra.mxu0 %v10961
    %v11017 = vpop.f32.mrf.mxu0
    %v11018 = vadd.f32 0.0, %v11017
    %11019 = vmatmul.f32.gmra.mxu0 %v10962
    %v11020 = vpop.f32.mrf.mxu0
    %v11021 = vadd.f32 0.0, %v11020
    %11022 = vmatmul.f32.gmra.mxu0 %v10963
    %v11023 = vpop.f32.mrf.mxu0
    %v11024 = vadd.f32 0.0, %v11023
    %11025 = vmatmul.f32.gmra.mxu0 %v10964
    %v11026 = vpop.f32.mrf.mxu0
    %v11027 = vadd.f32 0.0, %v11026
    %11028 = vmatmul.f32.gmra.mxu0 %v10965
    %v11029 = vpop.f32.mrf.mxu0
    %v11030 = vadd.f32 0.0, %v11029
    %11031 = vmatmul.f32.gmra.mxu0 %v10966
    %v11032 = vpop.f32.mrf.mxu0
    %v11033 = vadd.f32 0.0, %v11032
    %11034 = vmatmul.f32.gmra.mxu0 %v10967
    %v11035 = vpop.f32.mrf.mxu0
    %v11036 = vadd.f32 0.0, %v11035
    %11037 = vmatmul.f32.gmra.mxu0 %v10968
    %v11038 = vpop.f32.mrf.mxu0
    %v11039 = vadd.f32 0.0, %v11038
    %11040 = vmatmul.f32.gmra.mxu0 %v10969
    %v11041 = vpop.f32.mrf.mxu0
    %v11042 = vadd.f32 0.0, %v11041
    %11043 = vmatmul.f32.gmra.mxu0 %v10970
    %v11044 = vpop.f32.mrf.mxu0
    %v11045 = vadd.f32 0.0, %v11044
    %11046 = vmatmul.f32.gmra.mxu0 %v10971
    %v11047 = vpop.f32.mrf.mxu0
    %v11048 = vadd.f32 0.0, %v11047
    %11049 = vmatmul.f32.gmra.mxu0 %v10972
    %v11050 = vpop.f32.mrf.mxu0
    %v11051 = vadd.f32 0.0, %v11050
    %11052 = vmatmul.f32.gmra.mxu0 %v10973
    %v11053 = vpop.f32.mrf.mxu0
    %v11054 = vadd.f32 0.0, %v11053
    %11055 = vdwg.mxu0
    %v11056 = vadd.f32 %v10425, %v11009
    %v11057 = vadd.f32 %v10426, %v11012
    %v11058 = vadd.f32 %v10427, %v11015
    %v11059 = vadd.f32 %v10428, %v11018
    %v11060 = vadd.f32 %v10429, %v11021
    %v11061 = vadd.f32 %v10430, %v11024
    %v11062 = vadd.f32 %v10431, %v11027
    %v11063 = vadd.f32 %v10432, %v11030
    %v11064 = vadd.f32 %v10433, %v11033
    %v11065 = vadd.f32 %v10434, %v11036
    %v11066 = vadd.f32 %v10435, %v11039
    %v11067 = vadd.f32 %v10436, %v11042
    %v11068 = vadd.f32 %v10437, %v11045
    %v11069 = vadd.f32 %v10438, %v11048
    %v11070 = vadd.f32 %v10439, %v11051
    %v11071 = vadd.f32 %v10440, %v11054
    %s11072 = scalar_lea.vmem %s9, 2
    %v11073 = vld [vmem:[%s11072] sm:$0x1]
    %v11075 = vperm.slane %v11073, 0
    %v11077 = vadd.f32 %v11056, %v11075
    %v11078 = vadd.f32 %v11057, %v11075
    %v11079 = vadd.f32 %v11058, %v11075
    %v11080 = vadd.f32 %v11059, %v11075
    %v11081 = vadd.f32 %v11060, %v11075
    %v11082 = vadd.f32 %v11061, %v11075
    %v11083 = vadd.f32 %v11062, %v11075
    %v11084 = vadd.f32 %v11063, %v11075
    %v11085 = vadd.f32 %v11064, %v11075
    %v11086 = vadd.f32 %v11065, %v11075
    %v11087 = vadd.f32 %v11066, %v11075
    %v11088 = vadd.f32 %v11067, %v11075
    %v11089 = vadd.f32 %v11068, %v11075
    %v11090 = vadd.f32 %v11069, %v11075
    %v11091 = vadd.f32 %v11070, %v11075
    %v11092 = vadd.f32 %v11071, %v11075
    %v11093 = vld [vmem:[%s14] sm:$0x1]
    %v11094 = vld [vmem:[%s15] sm:$0x1]
    %v11095 = vsel %vm296, %v11077, 0.0
    %11096 = vadd.xlane.f32.xlu0 %v11095
    %v11097 = vpop.xlane.xlu0 %11096
    %v11098 = vsel %vm296, %v11078, 0.0
    %11099 = vadd.xlane.f32.xlu0 %v11098
    %v11100 = vpop.xlane.xlu0 %11099
    %v11101 = vsel %vm296, %v11079, 0.0
    %11102 = vadd.xlane.f32.xlu0 %v11101
    %v11103 = vpop.xlane.xlu0 %11102
    %v11104 = vsel %vm296, %v11080, 0.0
    %11105 = vadd.xlane.f32.xlu0 %v11104
    %v11106 = vpop.xlane.xlu0 %11105
    %v11107 = vsel %vm296, %v11081, 0.0
    %11108 = vadd.xlane.f32.xlu0 %v11107
    %v11109 = vpop.xlane.xlu0 %11108
    %v11110 = vsel %vm296, %v11082, 0.0
    %11111 = vadd.xlane.f32.xlu0 %v11110
    %v11112 = vpop.xlane.xlu0 %11111
    %v11113 = vsel %vm296, %v11083, 0.0
    %11114 = vadd.xlane.f32.xlu0 %v11113
    %v11115 = vpop.xlane.xlu0 %11114
    %v11116 = vsel %vm296, %v11084, 0.0
    %11117 = vadd.xlane.f32.xlu0 %v11116
    %v11118 = vpop.xlane.xlu0 %11117
    %v11119 = vsel %vm296, %v11085, 0.0
    %11120 = vadd.xlane.f32.xlu0 %v11119
    %v11121 = vpop.xlane.xlu0 %11120
    %v11122 = vsel %vm296, %v11086, 0.0
    %11123 = vadd.xlane.f32.xlu0 %v11122
    %v11124 = vpop.xlane.xlu0 %11123
    %v11125 = vsel %vm296, %v11087, 0.0
    %11126 = vadd.xlane.f32.xlu0 %v11125
    %v11127 = vpop.xlane.xlu0 %11126
    %v11128 = vsel %vm296, %v11088, 0.0
    %11129 = vadd.xlane.f32.xlu0 %v11128
    %v11130 = vpop.xlane.xlu0 %11129
    %v11131 = vsel %vm296, %v11089, 0.0
    %11132 = vadd.xlane.f32.xlu0 %v11131
    %v11133 = vpop.xlane.xlu0 %11132
    %v11134 = vsel %vm296, %v11090, 0.0
    %11135 = vadd.xlane.f32.xlu0 %v11134
    %v11136 = vpop.xlane.xlu0 %11135
    %v11137 = vsel %vm296, %v11091, 0.0
    %11138 = vadd.xlane.f32.xlu0 %v11137
    %v11139 = vpop.xlane.xlu0 %11138
    %v11140 = vsel %vm296, %v11092, 0.0
    %11141 = vadd.xlane.f32.xlu0 %v11140
    %v11142 = vpop.xlane.xlu0 %11141
    %v11143 = vmul.f32 %v11097, %v351
    %v11144 = vmul.f32 %v11100, %v351
    %v11145 = vmul.f32 %v11103, %v351
    %v11146 = vmul.f32 %v11106, %v351
    %v11147 = vmul.f32 %v11109, %v351
    %v11148 = vmul.f32 %v11112, %v351
    %v11149 = vmul.f32 %v11115, %v351
    %v11150 = vmul.f32 %v11118, %v351
    %v11151 = vmul.f32 %v11121, %v351
    %v11152 = vmul.f32 %v11124, %v351
    %v11153 = vmul.f32 %v11127, %v351
    %v11154 = vmul.f32 %v11130, %v351
    %v11155 = vmul.f32 %v11133, %v351
    %v11156 = vmul.f32 %v11136, %v351
    %v11157 = vmul.f32 %v11139, %v351
    %v11158 = vmul.f32 %v11142, %v351
    %v11159 = vsub.f32 %v11077, %v11143
    %v11160 = vsub.f32 %v11078, %v11144
    %v11161 = vsub.f32 %v11079, %v11145
    %v11162 = vsub.f32 %v11080, %v11146
    %v11163 = vsub.f32 %v11081, %v11147
    %v11164 = vsub.f32 %v11082, %v11148
    %v11165 = vsub.f32 %v11083, %v11149
    %v11166 = vsub.f32 %v11084, %v11150
    %v11167 = vsub.f32 %v11085, %v11151
    %v11168 = vsub.f32 %v11086, %v11152
    %v11169 = vsub.f32 %v11087, %v11153
    %v11170 = vsub.f32 %v11088, %v11154
    %v11171 = vsub.f32 %v11089, %v11155
    %v11172 = vsub.f32 %v11090, %v11156
    %v11173 = vsub.f32 %v11091, %v11157
    %v11174 = vsub.f32 %v11092, %v11158
    %v11175 = vmul.f32 %v11159, %v11159
    %v11176 = vmul.f32 %v11160, %v11160
    %v11177 = vmul.f32 %v11161, %v11161
    %v11178 = vmul.f32 %v11162, %v11162
    %v11179 = vmul.f32 %v11163, %v11163
    %v11180 = vmul.f32 %v11164, %v11164
    %v11181 = vmul.f32 %v11165, %v11165
    %v11182 = vmul.f32 %v11166, %v11166
    %v11183 = vmul.f32 %v11167, %v11167
    %v11184 = vmul.f32 %v11168, %v11168
    %v11185 = vmul.f32 %v11169, %v11169
    %v11186 = vmul.f32 %v11170, %v11170
    %v11187 = vmul.f32 %v11171, %v11171
    %v11188 = vmul.f32 %v11172, %v11172
    %v11189 = vmul.f32 %v11173, %v11173
    %v11190 = vmul.f32 %v11174, %v11174
    %v11191 = vsel %vm296, %v11175, 0.0
    %11192 = vadd.xlane.f32.xlu0 %v11191
    %v11193 = vpop.xlane.xlu0 %11192
    %v11194 = vsel %vm296, %v11176, 0.0
    %11195 = vadd.xlane.f32.xlu0 %v11194
    %v11196 = vpop.xlane.xlu0 %11195
    %v11197 = vsel %vm296, %v11177, 0.0
    %11198 = vadd.xlane.f32.xlu0 %v11197
    %v11199 = vpop.xlane.xlu0 %11198
    %v11200 = vsel %vm296, %v11178, 0.0
    %11201 = vadd.xlane.f32.xlu0 %v11200
    %v11202 = vpop.xlane.xlu0 %11201
    %v11203 = vsel %vm296, %v11179, 0.0
    %11204 = vadd.xlane.f32.xlu0 %v11203
    %v11205 = vpop.xlane.xlu0 %11204
    %v11206 = vsel %vm296, %v11180, 0.0
    %11207 = vadd.xlane.f32.xlu0 %v11206
    %v11208 = vpop.xlane.xlu0 %11207
    %v11209 = vsel %vm296, %v11181, 0.0
    %11210 = vadd.xlane.f32.xlu0 %v11209
    %v11211 = vpop.xlane.xlu0 %11210
    %v11212 = vsel %vm296, %v11182, 0.0
    %11213 = vadd.xlane.f32.xlu0 %v11212
    %v11214 = vpop.xlane.xlu0 %11213
    %v11215 = vsel %vm296, %v11183, 0.0
    %11216 = vadd.xlane.f32.xlu0 %v11215
    %v11217 = vpop.xlane.xlu0 %11216
    %v11218 = vsel %vm296, %v11184, 0.0
    %11219 = vadd.xlane.f32.xlu0 %v11218
    %v11220 = vpop.xlane.xlu0 %11219
    %v11221 = vsel %vm296, %v11185, 0.0
    %11222 = vadd.xlane.f32.xlu0 %v11221
    %v11223 = vpop.xlane.xlu0 %11222
    %v11224 = vsel %vm296, %v11186, 0.0
    %11225 = vadd.xlane.f32.xlu0 %v11224
    %v11226 = vpop.xlane.xlu0 %11225
    %v11227 = vsel %vm296, %v11187, 0.0
    %11228 = vadd.xlane.f32.xlu0 %v11227
    %v11229 = vpop.xlane.xlu0 %11228
    %v11230 = vsel %vm296, %v11188, 0.0
    %11231 = vadd.xlane.f32.xlu0 %v11230
    %v11232 = vpop.xlane.xlu0 %11231
    %v11233 = vsel %vm296, %v11189, 0.0
    %11234 = vadd.xlane.f32.xlu0 %v11233
    %v11235 = vpop.xlane.xlu0 %11234
    %v11236 = vsel %vm296, %v11190, 0.0
    %11237 = vadd.xlane.f32.xlu0 %v11236
    %v11238 = vpop.xlane.xlu0 %11237
    %v11239 = vmul.f32 %v11193, %v351
    %v11240 = vmul.f32 %v11196, %v351
    %v11241 = vmul.f32 %v11199, %v351
    %v11242 = vmul.f32 %v11202, %v351
    %v11243 = vmul.f32 %v11205, %v351
    %v11244 = vmul.f32 %v11208, %v351
    %v11245 = vmul.f32 %v11211, %v351
    %v11246 = vmul.f32 %v11214, %v351
    %v11247 = vmul.f32 %v11217, %v351
    %v11248 = vmul.f32 %v11220, %v351
    %v11249 = vmul.f32 %v11223, %v351
    %v11250 = vmul.f32 %v11226, %v351
    %v11251 = vmul.f32 %v11229, %v351
    %v11252 = vmul.f32 %v11232, %v351
    %v11253 = vmul.f32 %v11235, %v351
    %v11254 = vmul.f32 %v11238, %v351
    %v11255 = vadd.f32 %v11239, 1e-05
    %v11256 = vadd.f32 %v11240, 1e-05
    %v11257 = vadd.f32 %v11241, 1e-05
    %v11258 = vadd.f32 %v11242, 1e-05
    %v11259 = vadd.f32 %v11243, 1e-05
    %v11260 = vadd.f32 %v11244, 1e-05
    %v11261 = vadd.f32 %v11245, 1e-05
    %v11262 = vadd.f32 %v11246, 1e-05
    %v11263 = vadd.f32 %v11247, 1e-05
    %v11264 = vadd.f32 %v11248, 1e-05
    %v11265 = vadd.f32 %v11249, 1e-05
    %v11266 = vadd.f32 %v11250, 1e-05
    %v11267 = vadd.f32 %v11251, 1e-05
    %v11268 = vadd.f32 %v11252, 1e-05
    %v11269 = vadd.f32 %v11253, 1e-05
    %v11270 = vadd.f32 %v11254, 1e-05
    %v11271 = vrsqrt.pop %v11255
    %v11272 = vmul.f32 %v11271, %v11255
    %v11273 = vmul.f32 %v11272, %v11271
    %v11274 = vmul.f32 0.5, %v11273
    %v11275 = vsub.f32 1.5, %v11274
    %v11276 = vmul.f32 %v11271, %v11275
    %vm11277 = vweird.f32 %v11255
    %vm11278 = vweird.f32 %v11271
    %vm11279 = vmor %vm11277, %vm11278
    %v11280 = vsel %vm11279, %v11271, %v11276
    %v11281 = vrsqrt.pop %v11256
    %v11282 = vmul.f32 %v11281, %v11256
    %v11283 = vmul.f32 %v11282, %v11281
    %v11284 = vmul.f32 0.5, %v11283
    %v11285 = vsub.f32 1.5, %v11284
    %v11286 = vmul.f32 %v11281, %v11285
    %vm11287 = vweird.f32 %v11256
    %vm11288 = vweird.f32 %v11281
    %vm11289 = vmor %vm11287, %vm11288
    %v11290 = vsel %vm11289, %v11281, %v11286
    %v11291 = vrsqrt.pop %v11257
    %v11292 = vmul.f32 %v11291, %v11257
    %v11293 = vmul.f32 %v11292, %v11291
    %v11294 = vmul.f32 0.5, %v11293
    %v11295 = vsub.f32 1.5, %v11294
    %v11296 = vmul.f32 %v11291, %v11295
    %vm11297 = vweird.f32 %v11257
    %vm11298 = vweird.f32 %v11291
    %vm11299 = vmor %vm11297, %vm11298
    %v11300 = vsel %vm11299, %v11291, %v11296
    %v11301 = vrsqrt.pop %v11258
    %v11302 = vmul.f32 %v11301, %v11258
    %v11303 = vmul.f32 %v11302, %v11301
    %v11304 = vmul.f32 0.5, %v11303
    %v11305 = vsub.f32 1.5, %v11304
    %v11306 = vmul.f32 %v11301, %v11305
    %vm11307 = vweird.f32 %v11258
    %vm11308 = vweird.f32 %v11301
    %vm11309 = vmor %vm11307, %vm11308
    %v11310 = vsel %vm11309, %v11301, %v11306
    %v11311 = vrsqrt.pop %v11259
    %v11312 = vmul.f32 %v11311, %v11259
    %v11313 = vmul.f32 %v11312, %v11311
    %v11314 = vmul.f32 0.5, %v11313
    %v11315 = vsub.f32 1.5, %v11314
    %v11316 = vmul.f32 %v11311, %v11315
    %vm11317 = vweird.f32 %v11259
    %vm11318 = vweird.f32 %v11311
    %vm11319 = vmor %vm11317, %vm11318
    %v11320 = vsel %vm11319, %v11311, %v11316
    %v11321 = vrsqrt.pop %v11260
    %v11322 = vmul.f32 %v11321, %v11260
    %v11323 = vmul.f32 %v11322, %v11321
    %v11324 = vmul.f32 0.5, %v11323
    %v11325 = vsub.f32 1.5, %v11324
    %v11326 = vmul.f32 %v11321, %v11325
    %vm11327 = vweird.f32 %v11260
    %vm11328 = vweird.f32 %v11321
    %vm11329 = vmor %vm11327, %vm11328
    %v11330 = vsel %vm11329, %v11321, %v11326
    %v11331 = vrsqrt.pop %v11261
    %v11332 = vmul.f32 %v11331, %v11261
    %v11333 = vmul.f32 %v11332, %v11331
    %v11334 = vmul.f32 0.5, %v11333
    %v11335 = vsub.f32 1.5, %v11334
    %v11336 = vmul.f32 %v11331, %v11335
    %vm11337 = vweird.f32 %v11261
    %vm11338 = vweird.f32 %v11331
    %vm11339 = vmor %vm11337, %vm11338
    %v11340 = vsel %vm11339, %v11331, %v11336
    %v11341 = vrsqrt.pop %v11262
    %v11342 = vmul.f32 %v11341, %v11262
    %v11343 = vmul.f32 %v11342, %v11341
    %v11344 = vmul.f32 0.5, %v11343
    %v11345 = vsub.f32 1.5, %v11344
    %v11346 = vmul.f32 %v11341, %v11345
    %vm11347 = vweird.f32 %v11262
    %vm11348 = vweird.f32 %v11341
    %vm11349 = vmor %vm11347, %vm11348
    %v11350 = vsel %vm11349, %v11341, %v11346
    %v11351 = vrsqrt.pop %v11263
    %v11352 = vmul.f32 %v11351, %v11263
    %v11353 = vmul.f32 %v11352, %v11351
    %v11354 = vmul.f32 0.5, %v11353
    %v11355 = vsub.f32 1.5, %v11354
    %v11356 = vmul.f32 %v11351, %v11355
    %vm11357 = vweird.f32 %v11263
    %vm11358 = vweird.f32 %v11351
    %vm11359 = vmor %vm11357, %vm11358
    %v11360 = vsel %vm11359, %v11351, %v11356
    %v11361 = vrsqrt.pop %v11264
    %v11362 = vmul.f32 %v11361, %v11264
    %v11363 = vmul.f32 %v11362, %v11361
    %v11364 = vmul.f32 0.5, %v11363
    %v11365 = vsub.f32 1.5, %v11364
    %v11366 = vmul.f32 %v11361, %v11365
    %vm11367 = vweird.f32 %v11264
    %vm11368 = vweird.f32 %v11361
    %vm11369 = vmor %vm11367, %vm11368
    %v11370 = vsel %vm11369, %v11361, %v11366
    %v11371 = vrsqrt.pop %v11265
    %v11372 = vmul.f32 %v11371, %v11265
    %v11373 = vmul.f32 %v11372, %v11371
    %v11374 = vmul.f32 0.5, %v11373
    %v11375 = vsub.f32 1.5, %v11374
    %v11376 = vmul.f32 %v11371, %v11375
    %vm11377 = vweird.f32 %v11265
    %vm11378 = vweird.f32 %v11371
    %vm11379 = vmor %vm11377, %vm11378
    %v11380 = vsel %vm11379, %v11371, %v11376
    %v11381 = vrsqrt.pop %v11266
    %v11382 = vmul.f32 %v11381, %v11266
    %v11383 = vmul.f32 %v11382, %v11381
    %v11384 = vmul.f32 0.5, %v11383
    %v11385 = vsub.f32 1.5, %v11384
    %v11386 = vmul.f32 %v11381, %v11385
    %vm11387 = vweird.f32 %v11266
    %vm11388 = vweird.f32 %v11381
    %vm11389 = vmor %vm11387, %vm11388
    %v11390 = vsel %vm11389, %v11381, %v11386
    %v11391 = vrsqrt.pop %v11267
    %v11392 = vmul.f32 %v11391, %v11267
    %v11393 = vmul.f32 %v11392, %v11391
    %v11394 = vmul.f32 0.5, %v11393
    %v11395 = vsub.f32 1.5, %v11394
    %v11396 = vmul.f32 %v11391, %v11395
    %vm11397 = vweird.f32 %v11267
    %vm11398 = vweird.f32 %v11391
    %vm11399 = vmor %vm11397, %vm11398
    %v11400 = vsel %vm11399, %v11391, %v11396
    %v11401 = vrsqrt.pop %v11268
    %v11402 = vmul.f32 %v11401, %v11268
    %v11403 = vmul.f32 %v11402, %v11401
    %v11404 = vmul.f32 0.5, %v11403
    %v11405 = vsub.f32 1.5, %v11404
    %v11406 = vmul.f32 %v11401, %v11405
    %vm11407 = vweird.f32 %v11268
    %vm11408 = vweird.f32 %v11401
    %vm11409 = vmor %vm11407, %vm11408
    %v11410 = vsel %vm11409, %v11401, %v11406
    %v11411 = vrsqrt.pop %v11269
    %v11412 = vmul.f32 %v11411, %v11269
    %v11413 = vmul.f32 %v11412, %v11411
    %v11414 = vmul.f32 0.5, %v11413
    %v11415 = vsub.f32 1.5, %v11414
    %v11416 = vmul.f32 %v11411, %v11415
    %vm11417 = vweird.f32 %v11269
    %vm11418 = vweird.f32 %v11411
    %vm11419 = vmor %vm11417, %vm11418
    %v11420 = vsel %vm11419, %v11411, %v11416
    %v11421 = vrsqrt.pop %v11270
    %v11422 = vmul.f32 %v11421, %v11270
    %v11423 = vmul.f32 %v11422, %v11421
    %v11424 = vmul.f32 0.5, %v11423
    %v11425 = vsub.f32 1.5, %v11424
    %v11426 = vmul.f32 %v11421, %v11425
    %vm11427 = vweird.f32 %v11270
    %vm11428 = vweird.f32 %v11421
    %vm11429 = vmor %vm11427, %vm11428
    %v11430 = vsel %vm11429, %v11421, %v11426
    %v11431 = vmul.f32 %v11159, %v11280
    %v11432 = vmul.f32 %v11160, %v11290
    %v11433 = vmul.f32 %v11161, %v11300
    %v11434 = vmul.f32 %v11162, %v11310
    %v11435 = vmul.f32 %v11163, %v11320
    %v11436 = vmul.f32 %v11164, %v11330
    %v11437 = vmul.f32 %v11165, %v11340
    %v11438 = vmul.f32 %v11166, %v11350
    %v11439 = vmul.f32 %v11167, %v11360
    %v11440 = vmul.f32 %v11168, %v11370
    %v11441 = vmul.f32 %v11169, %v11380
    %v11442 = vmul.f32 %v11170, %v11390
    %v11443 = vmul.f32 %v11171, %v11400
    %v11444 = vmul.f32 %v11172, %v11410
    %v11445 = vmul.f32 %v11173, %v11420
    %v11446 = vmul.f32 %v11174, %v11430
    %v11448 = vperm.slane %v11093, 0
    %v11450 = vmul.f32 %v11431, %v11448
    %v11451 = vmul.f32 %v11432, %v11448
    %v11452 = vmul.f32 %v11433, %v11448
    %v11453 = vmul.f32 %v11434, %v11448
    %v11454 = vmul.f32 %v11435, %v11448
    %v11455 = vmul.f32 %v11436, %v11448
    %v11456 = vmul.f32 %v11437, %v11448
    %v11457 = vmul.f32 %v11438, %v11448
    %v11458 = vmul.f32 %v11439, %v11448
    %v11459 = vmul.f32 %v11440, %v11448
    %v11460 = vmul.f32 %v11441, %v11448
    %v11461 = vmul.f32 %v11442, %v11448
    %v11462 = vmul.f32 %v11443, %v11448
    %v11463 = vmul.f32 %v11444, %v11448
    %v11464 = vmul.f32 %v11445, %v11448
    %v11465 = vmul.f32 %v11446, %v11448
    %v11467 = vperm.slane %v11094, 0
    %v11469 = vadd.f32 %v11450, %v11467
    %v11470 = vadd.f32 %v11451, %v11467
    %v11471 = vadd.f32 %v11452, %v11467
    %v11472 = vadd.f32 %v11453, %v11467
    %v11473 = vadd.f32 %v11454, %v11467
    %v11474 = vadd.f32 %v11455, %v11467
    %v11475 = vadd.f32 %v11456, %v11467
    %v11476 = vadd.f32 %v11457, %v11467
    %v11477 = vadd.f32 %v11458, %v11467
    %v11478 = vadd.f32 %v11459, %v11467
    %v11479 = vadd.f32 %v11460, %v11467
    %v11480 = vadd.f32 %v11461, %v11467
    %v11481 = vadd.f32 %v11462, %v11467
    %v11482 = vadd.f32 %v11463, %v11467
    %v11483 = vadd.f32 %v11464, %v11467
    %v11484 = vadd.f32 %v11465, %v11467
    %v11485 = vld [vmem:[%s16] sm:$0xff]
    %v11486 = vld [vmem:[%s16 + $0x8] sm:$0xff]
    %v11487 = vld [vmem:[%s16 + $0x10] sm:$0xff]
    %v11488 = vld [vmem:[%s16 + $0x18] sm:$0xff]
    %v11489 = vld [vmem:[%s17] sm:$0x1]
    %v11491 = vperm.slane %v11489, 0
    %v11494 = vsel %vm296, %v11469, 0
    %v11497 = vsel %vm296, %v11470, 0
    %v11500 = vsel %vm296, %v11471, 0
    %v11503 = vsel %vm296, %v11472, 0
    %v11506 = vsel %vm296, %v11473, 0
    %v11509 = vsel %vm296, %v11474, 0
    %v11512 = vsel %vm296, %v11475, 0
    %v11515 = vsel %vm296, %v11476, 0
    %v11518 = vsel %vm296, %v11477, 0
    %v11521 = vsel %vm296, %v11478, 0
    %v11524 = vsel %vm296, %v11479, 0
    %v11527 = vsel %vm296, %v11480, 0
    %v11530 = vsel %vm296, %v11481, 0
    %v11533 = vsel %vm296, %v11482, 0
    %v11536 = vsel %vm296, %v11483, 0
    %v11539 = vsel %vm296, %v11484, 0
    %11541 = vmatpush.msra.mxu0 0.0
    %11542 = vmatpush.msra.mxu0 0.0
    %11543 = vmatpush.msra.mxu0 0.0
    %11544 = vmatpush.msra.mxu0 0.0
    %11545 = vmatpush.msra.mxu0 0.0
    %11546 = vmatpush.msra.mxu0 0.0
    %11547 = vmatpush.msra.mxu0 0.0
    %11548 = vmatpush.msra.mxu0 0.0
    %11549 = vmatpush.msra.mxu0 0.0
    %11550 = vmatpush.msra.mxu0 0.0
    %11551 = vmatpush.msra.mxu0 0.0
    %11552 = vmatpush.msra.mxu0 0.0
    %11553 = vmatpush.msra.mxu0 %v11488
    %11554 = vmatpush.msra.mxu0 %v11487
    %11555 = vmatpush.msra.mxu0 %v11486
    %11556 = vmatpush.msra.mxu0 %v11485
    %11557 = vmatmul.f32.gmra.mxu0 %v11494
    %v11558 = vpop.f32.mrf.mxu0
    %v11559 = vadd.f32 %v11491, %v11558
    %11560 = vmatmul.f32.gmra.mxu0 %v11497
    %v11561 = vpop.f32.mrf.mxu0
    %v11562 = vadd.f32 %v11491, %v11561
    %11563 = vmatmul.f32.gmra.mxu0 %v11500
    %v11564 = vpop.f32.mrf.mxu0
    %v11565 = vadd.f32 %v11491, %v11564
    %11566 = vmatmul.f32.gmra.mxu0 %v11503
    %v11567 = vpop.f32.mrf.mxu0
    %v11568 = vadd.f32 %v11491, %v11567
    %11569 = vmatmul.f32.gmra.mxu0 %v11506
    %v11570 = vpop.f32.mrf.mxu0
    %v11571 = vadd.f32 %v11491, %v11570
    %11572 = vmatmul.f32.gmra.mxu0 %v11509
    %v11573 = vpop.f32.mrf.mxu0
    %v11574 = vadd.f32 %v11491, %v11573
    %11575 = vmatmul.f32.gmra.mxu0 %v11512
    %v11576 = vpop.f32.mrf.mxu0
    %v11577 = vadd.f32 %v11491, %v11576
    %11578 = vmatmul.f32.gmra.mxu0 %v11515
    %v11579 = vpop.f32.mrf.mxu0
    %v11580 = vadd.f32 %v11491, %v11579
    %11581 = vmatmul.f32.gmra.mxu0 %v11518
    %v11582 = vpop.f32.mrf.mxu0
    %v11583 = vadd.f32 %v11491, %v11582
    %11584 = vmatmul.f32.gmra.mxu0 %v11521
    %v11585 = vpop.f32.mrf.mxu0
    %v11586 = vadd.f32 %v11491, %v11585
    %11587 = vmatmul.f32.gmra.mxu0 %v11524
    %v11588 = vpop.f32.mrf.mxu0
    %v11589 = vadd.f32 %v11491, %v11588
    %11590 = vmatmul.f32.gmra.mxu0 %v11527
    %v11591 = vpop.f32.mrf.mxu0
    %v11592 = vadd.f32 %v11491, %v11591
    %11593 = vmatmul.f32.gmra.mxu0 %v11530
    %v11594 = vpop.f32.mrf.mxu0
    %v11595 = vadd.f32 %v11491, %v11594
    %11596 = vmatmul.f32.gmra.mxu0 %v11533
    %v11597 = vpop.f32.mrf.mxu0
    %v11598 = vadd.f32 %v11491, %v11597
    %11599 = vmatmul.f32.gmra.mxu0 %v11536
    %v11600 = vpop.f32.mrf.mxu0
    %v11601 = vadd.f32 %v11491, %v11600
    %11602 = vmatmul.f32.gmra.mxu0 %v11539
    %v11603 = vpop.f32.mrf.mxu0
    %v11604 = vadd.f32 %v11491, %v11603
    %11605 = vdwg.mxu0
    %11606 = vst [vmem:[#allocation5] sm:$0xff] %v11559
    %11607 = vst [vmem:[#allocation5 + $0x8] sm:$0xff] %v11562
    %11608 = vst [vmem:[#allocation5 + $0x10] sm:$0xff] %v11565
    %11609 = vst [vmem:[#allocation5 + $0x18] sm:$0xff] %v11568
    %11610 = vst [vmem:[#allocation5 + $0x20] sm:$0xff] %v11571
    %11611 = vst [vmem:[#allocation5 + $0x28] sm:$0xff] %v11574
    %11612 = vst [vmem:[#allocation5 + $0x30] sm:$0xff] %v11577
    %11613 = vst [vmem:[#allocation5 + $0x38] sm:$0xff] %v11580
    %11614 = vst [vmem:[#allocation5 + $0x40] sm:$0xff] %v11583
    %11615 = vst [vmem:[#allocation5 + $0x48] sm:$0xff] %v11586
    %11616 = vst [vmem:[#allocation5 + $0x50] sm:$0xff] %v11589
    %11617 = vst [vmem:[#allocation5 + $0x58] sm:$0xff] %v11592
    %11618 = vst [vmem:[#allocation5 + $0x60] sm:$0xff] %v11595
    %11619 = vst [vmem:[#allocation5 + $0x68] sm:$0xff] %v11598
    %11620 = vst [vmem:[#allocation5 + $0x70] sm:$0xff] %v11601
    %11621 = vst [vmem:[#allocation5 + $0x78] sm:$0xff] %v11604
    // Predicated region
    $region78: #{tpu_custom_call.1} parent=1 // pred_check
      _
    $region79: #{tpu_custom_call.1} parent=1 // pred_check_branch
      %11623 = sbr.rel (0) target = $region81
    $region80: #{tpu_custom_call.1} parent=1 // pred_region
      %11625 = vsyncadd [#allocation4], 0
      %s11626 = sshll.u32 [#allocation5], 4
      %s11627 = int_to_ptr.vmem [resolvable:$true] %s11626
      %s11628 = sshll.u32 %s18, 4
      %s11629 = int_to_ptr.hbm [resolvable:$true] %s11628
      %11634 = dma.vmem_to_hbm [thread:$0]  %s11627, 2048, %s11629, [#allocation4], 128, 128, 8
    $region81: #{tpu_custom_call.1} parent=1 // pred_fallthru
      _
    // Predicated region
    $region82: #{tpu_custom_call.1} parent=1 // pred_check
      _
    $region83: #{tpu_custom_call.1} parent=1 // pred_check_branch
      %11636 = sbr.rel (0) target = $region85
    $region84: #{tpu_custom_call.1} parent=1 // pred_region
      %11638 = dma.done [#allocation4], 2048
    $region85: #{tpu_custom_call.1} parent=1 // pred_fallthru
      _
    %11639 = vsyncpa [#allocation3], 1
    %11640 = vsyncpa [#allocation4], 1

</llo_original>
